<compile_context>
chip_gen: v6e
topology: v6e:2x2x1
jax: 0.10.0
libtpu: 0.0.40
codegen_flags: <defaults>
</compile_context>

<pallas_src>
import numpy as np
import jax
import jax.numpy as jnp
from jax.experimental import pallas as pl
from jax.experimental.pallas import tpu as pltpu

HIDDEN = 32
_SUB = 8          # sublane alignment for the per-sample axis
_LANE = 128       # lane alignment for packed weight segments


def _round_up(x, m):
    return (x + m - 1) // m * m


# ----------------------------- parameter init --------------------------------

def _linear_init(key, fan_in, fan_out):
    kw, kb = jax.random.split(key)
    w = jax.random.normal(kw, (fan_in, fan_out), jnp.float32) / jnp.sqrt(float(fan_in))
    b = jax.random.normal(kb, (fan_out,), jnp.float32) * 0.01
    return {'w': w, 'b': b}


def _mlp2_init(key, in_c, hid_c, out_c):
    k1, k2 = jax.random.split(key)
    return {'l1': _linear_init(k1, in_c, hid_c), 'l2': _linear_init(k2, hid_c, out_c)}


def _conv_init(key, cin, cout, k):
    kw, kb = jax.random.split(key)
    w = jax.random.normal(kw, (cout, cin, k, k), jnp.float32) / jnp.sqrt(float(cin * k * k))
    b = jax.random.normal(kb, (cout,), jnp.float32) * 0.01
    return {'w': w, 'b': b}


def init_params(key, scalar_shape, food_shape, food_relation_shape, thorn_relation_shape,
                clone_shape, clone_relation_shape, hidden_shape, encode_shape,
                action_type_shape):
    # TODO(synk): initializers differ from torch defaults; irrelevant for loaded checkpoints.
    keys = jax.random.split(key, 13)
    h = hidden_shape
    params = {}
    params['scalar_enc'] = _mlp2_init(keys[0], scalar_shape, h // 4, h)

    kernel_size = [5, 3, 3, 3, 1]
    stride = [4, 2, 2, 2, 1]
    shape = [h // 4, h // 2, h // 2, h, h]
    conv_layers = []
    cin = food_shape
    ck = jax.random.split(keys[1], len(kernel_size))
    for i in range(len(kernel_size)):
        lp = _conv_init(ck[i], cin, shape[i], kernel_size[i])
        lp['stride'] = stride[i]
        lp['pad'] = kernel_size[i] // 2
        conv_layers.append(lp)
        cin = shape[i]
    params['food_conv'] = conv_layers

    params['food_rel_enc'] = _mlp2_init(keys[2], food_relation_shape, h // 2, h)
    params['thorn_rel_enc'] = _mlp2_init(keys[3], thorn_relation_shape, h // 4, h)
    params['clone_enc'] = _mlp2_init(keys[4], clone_shape, h // 4, h)
    params['clone_rel_enc'] = _mlp2_init(keys[5], clone_relation_shape, h // 4, h)

    params['gcn1'] = {
        'thorn': _linear_init(keys[6], 2 * h, h),
        'clone': _linear_init(keys[7], 3 * h, h),
        'agg': _linear_init(keys[8], 4 * h, h),
    }
    # TODO(synk): gcn_2 exists in the torch module but forward() never calls it -> not materialized.

    params['agg_enc'] = _mlp2_init(keys[9], 3 * h, h, encode_shape)

    # DiscreteHead(32, action_type_shape, layer_num=2): MLP(32,32,32,2) + Linear(32, A)
    params['head'] = {
        'l1': _linear_init(keys[10], 32, 32),
        'l2': _linear_init(keys[11], 32, 32),
        'l3': _linear_init(keys[12], 32, action_type_shape),
    }
    return params


# ------------------------- weight / constant preparation ---------------------

def _conv_to_dense(w, b, stride, pad, hi, wi):
    """Fold a Conv2d into a dense matrix acting on the flattened (Cin*Hi*Wi) input."""
    w = np.asarray(w, np.float32)
    b = np.asarray(b, np.float32)
    cout, cin, k, _ = w.shape
    ho = (hi + 2 * pad - k) // stride + 1
    wo = (wi + 2 * pad - k) // stride + 1
    dense = np.zeros((cin * hi * wi, cout * ho * wo), np.float32)
    for oy in range(ho):
        for ox in range(wo):
            col0 = oy * wo + ox
            for ky in range(k):
                iy = oy * stride - pad + ky
                if iy < 0 or iy >= hi:
                    continue
                for kx in range(k):
                    ix = ox * stride - pad + kx
                    if ix < 0 or ix >= wi:
                        continue
                    for ci in range(cin):
                        dense[ci * hi * wi + iy * wi + ix,
                              np.arange(cout) * ho * wo + col0] = w[:, ci, ky, kx]
    bias = np.repeat(b, ho * wo).astype(np.float32)
    return dense, bias, ho, wo


class _Packer:
    """Packs many small (rows <= max_rows) matrices into one lane-aligned buffer."""

    def __init__(self, max_rows):
        self.max_rows = max_rows
        self.cols = 0
        self.entries = {}          # name -> (rows, col_off, cols)
        self._blocks = []

    def add(self, name, w):
        w = np.asarray(w, np.float32)
        assert w.ndim == 2 and w.shape[0] <= self.max_rows and name not in self.entries
        self.entries[name] = (w.shape[0], self.cols, w.shape[1])
        self._blocks.append((self.cols, w))
        self.cols += _round_up(w.shape[1], _LANE)   # 128-aligned segments -> tile-local slices

    def finalize(self):
        buf = np.zeros((self.max_rows, max(self.cols, _LANE)), np.float32)
        for off, w in self._blocks:
            buf[:w.shape[0], off:off + w.shape[1]] = w
        return jnp.asarray(buf)


# ------------------------------ fused Pallas kernel ---------------------------

def _build_kernel(*, c, t, tb, h, w_entries, b_entries, wsrc, conv_names, n_big):
    n_data = 8

    def kernel(*refs):
        (scalar_ref, food_ref, fr_ref, tr_ref, cl_ref, cr_ref,
         tm_ref, cm_ref, wpack_ref, bpack_ref) = refs[:n_data + 2]
        big_refs = refs[n_data + 2:n_data + 2 + n_big]
        out_ref = refs[n_data + 2 + n_big]

        def dot(a, b):
            return jnp.dot(a, b, preferred_element_type=jnp.float32)

        def W(name):
            kind, idx = wsrc[name]
            if kind == 'big':
                return big_refs[idx][...]
            rows, off, cols = w_entries[name]
            return wpack_ref[0:rows, off:off + cols]

        def B(name):
            _, off, cols = b_entries[name]
            return bpack_ref[0:1, off:off + cols]

        def lin(x, name, relu=True):
            y = dot(x, W(name)) + B(name)
            return jnp.maximum(y, 0.0) if relu else y

        def mlp2(x, name):
            return lin(lin(x, name + '_l1'), name + '_l2')

        # ---------------- encoders ----------------
        s_enc = mlp2(scalar_ref[...], 'scalar')                        # (tb, h)

        f = food_ref[...]                                              # (tb, Cin*H*W)
        for nm in conv_names:                                          # conv stack as dense matmuls
            f = lin(f, nm)
        food_enc = f                                                   # (tb, h); spatial already 1x1

        fr_enc = mlp2(fr_ref[...].reshape(c * tb, -1), 'food_rel')     # (c*tb, h), rows (i, b)
        cl_enc = mlp2(cl_ref[...].reshape(c * tb, -1), 'clone')        # (c*tb, h)

        # Fused shared-LHS projections of the clone encoding:
        #   [thorn clone_i | clone clone_i | clone clone_j | agg clone] (+ packed biases)
        combo = lin(cl_enc, 'gcn_pack', relu=False)                    # (c*tb, 4h)
        t_ci = combo[:, 0:h].reshape(c, tb, h)
        c_ci = combo[:, h:2 * h].reshape(c, tb, h)
        cj_all = combo[:, 2 * h:3 * h]                                 # (c*tb, h)
        a_cl = combo[:, 3 * h:4 * h]                                   # (c*tb, h), includes agg bias

        tm = tm_ref[...]                                               # (tb, t) lane-packed mask
        cm = cm_ref[...]                                               # (tb, c) lane-packed mask

        # ---------------- RelationGCN (gcn_1) ----------------
        w_tr = W('gcn_thorn')
        thorn_agg = None
        for j in range(t):                     # blockwise encode + project + mask + max
            enc_j = mlp2(tr_ref[j * c:(j + 1) * c].reshape(c * tb, -1), 'thorn_rel')
            blk = jnp.maximum(t_ci + dot(enc_j, w_tr).reshape(c, tb, h), 0.0)
            blk = blk * tm[:, j:j + 1][None]
            thorn_agg = blk if thorn_agg is None else jnp.maximum(thorn_agg, blk)

        w_cr = W('gcn_clone')
        clone_agg = None
        for j in range(c):
            enc_j = mlp2(cr_ref[j * c:(j + 1) * c].reshape(c * tb, -1), 'clone_rel')
            cj_j = cj_all[j * tb:(j + 1) * tb][None]                   # clone_j broadcast (no psel)
            blk = jnp.maximum(c_ci + cj_j + dot(enc_j, w_cr).reshape(c, tb, h), 0.0)
            blk = blk * cm[:, j:j + 1][None]
            clone_agg = blk if clone_agg is None else jnp.maximum(clone_agg, blk)

        upd = jnp.maximum(a_cl
                          + dot(fr_enc, W('gcn_agg_fr'))
                          + dot(thorn_agg.reshape(c * tb, h), W('gcn_agg_th'))
                          + dot(clone_agg.reshape(c * tb, h), W('gcn_agg_cl')), 0.0)
        clone_new = (cl_enc + upd).reshape(c, tb, h)                   # residual, rows (i, b)

        # clone = clone * clone_mask ; max over clone index i
        cl_max = None
        for i in range(c):
            blk = clone_new[i] * cm[:, i:i + 1]
            cl_max = blk if cl_max is None else jnp.maximum(cl_max, blk)   # (tb, h)

        # ---------------- aggregation encoder + DiscreteHead ----------------
        enc = jnp.maximum(dot(s_enc, W('agg_s')) + dot(food_enc, W('agg_f'))
                          + dot(cl_max, W('agg_c')) + B('agg_l1'), 0.0)
        enc = lin(enc, 'agg_l2')
        x = lin(lin(enc, 'head_l1'), 'head_l2')
        out_ref[...] = lin(x, 'head_l3', relu=False)                   # lane-padded logits

    return kernel


# ------------------------------ wrapper builders ------------------------------

def _make_forward(*, kernel, c, t, tb, bpad, n_out):
    grid = (bpad // tb,)
    cparams = pltpu.CompilerParams(dimension_semantics=("parallel",),
                                   vmem_limit_bytes=32 * 1024 * 1024)

    @jax.jit
    def forward(weights, scalar, food, food_relation, thorn_relation, thorn_mask,
                clone, clone_relation, clone_mask):
        bn = scalar.shape[0]
        pad = bpad - bn
        assert pad >= 0, "prepare_model was built for fewer rows than were passed"

        def padb(x):
            x = x.astype(jnp.float32)
            return jnp.pad(x, ((0, pad),) + ((0, 0),) * (x.ndim - 1))

        scalar_p = padb(scalar)
        food_p = padb(food).reshape(bpad, -1)
        # TODO(synk): these transposes could move into BlockSpec index_maps on the
        # original (b, c, t, D) layouts to save HBM round trips at huge batch sizes.
        fr = jnp.transpose(padb(food_relation), (1, 0, 2))                         # (c, bp, Dfr)
        tr = jnp.transpose(padb(thorn_relation), (2, 1, 0, 3)).reshape(t * c, bpad, -1)
        cl = jnp.transpose(padb(clone), (1, 0, 2))                                 # (c, bp, Dc)
        cr = jnp.transpose(padb(clone_relation), (2, 1, 0, 3)).reshape(c * c, bpad, -1)
        tm = padb(thorn_mask)                                                      # (bp, t)
        cm = padb(clone_mask)                                                      # (bp, c)
        data = (scalar_p, food_p, fr, tr, cl, cr, tm, cm)

        def batch2d(x):
            return pl.BlockSpec((tb, x.shape[1]), lambda i: (i, 0))

        def batch3d(x):
            return pl.BlockSpec((x.shape[0], tb, x.shape[2]), lambda i: (0, i, 0))

        def resident(x):
            return pl.BlockSpec(x.shape, lambda i: (0,) * x.ndim)

        in_specs = [batch2d(scalar_p), batch2d(food_p), batch3d(fr), batch3d(tr),
                    batch3d(cl), batch3d(cr), batch2d(tm), batch2d(cm)]
        in_specs += [resident(w) for w in weights]

        return pl.pallas_call(
            kernel,
            out_shape=jax.ShapeDtypeStruct((bpad, n_out), jnp.float32),
            grid=grid,
            in_specs=in_specs,
            out_specs=pl.BlockSpec((tb, n_out), lambda i: (i, 0)),
            compiler_params=cparams,
        )(*data, *weights)

    return forward


def prepare_model(params, *, food_hw, player_rows, clone_num, thorn_num, batch_block=128):
    h = HIDDEN
    c, t = int(clone_num), int(thorn_num)

    tb = min(_round_up(batch_block, _SUB), _round_up(max(player_rows, 1), _SUB))
    bpad = _round_up(max(player_rows, 1), tb)

    n_act = int(np.asarray(params['head']['l3']['w']).shape[1])
    n_out = _round_up(n_act, _LANE)                 # lane-dense logits -> unmasked output store

    wpk = _Packer(h)                                # every packed weight has fan_in <= hidden
    bpk = _Packer(1)
    big = []
    wsrc = {}

    def add_w(name, w):
        w = np.asarray(w, np.float32)
        if w.shape[0] <= wpk.max_rows:
            wpk.add(name, w)
            wsrc[name] = ('pack', 0)
        else:
            wsrc[name] = ('big', len(big))
            big.append(jnp.asarray(w))

    def add_b(name, b):
        bpk.add(name, np.asarray(b, np.float32).reshape(1, -1))

    def add_lin(name, p):
        add_w(name, p['w'])
        add_b(name, p['b'])

    add_lin('scalar_l1', params['scalar_enc']['l1'])
    add_lin('scalar_l2', params['scalar_enc']['l2'])

    # Food conv stack folded into dense matmuls acting on the flattened map.
    # TODO(synk): for much larger food_hw keep the conv as a tiled im2col matmul
    # (the dense fold grows ~quartically with spatial size and is mostly zeros).
    hi = wi = food_hw
    conv_names = []
    for i, lp in enumerate(params['food_conv']):
        dw, db, hi, wi = _conv_to_dense(lp['w'], lp['b'], lp['stride'], lp['pad'], hi, wi)
        name = 'conv%d' % (i + 1)
        add_w(name, dw)
        add_b(name, db)
        conv_names.append(name)
    # With the module's strides a 16x16 food map collapses to 1x1, so torch's spatial
    # max after the encoder is a no-op; assert so a mismatch cannot be silent.
    assert hi == 1 and wi == 1, "food conv stack must reduce the spatial extent to 1x1"

    for nm, key in (('food_rel', 'food_rel_enc'), ('thorn_rel', 'thorn_rel_enc'),
                    ('clone', 'clone_enc'), ('clone_rel', 'clone_rel_enc')):
        add_lin(nm + '_l1', params[key]['l1'])
        add_lin(nm + '_l2', params[key]['l2'])

    # RelationGCN split weights; segment order matches the torch cat order.
    wt, bt = np.asarray(params['gcn1']['thorn']['w']), np.asarray(params['gcn1']['thorn']['b'])
    wc, bc = np.asarray(params['gcn1']['clone']['w']), np.asarray(params['gcn1']['clone']['b'])
    wa, ba = np.asarray(params['gcn1']['agg']['w']), np.asarray(params['gcn1']['agg']['b'])
    # Shared-LHS fusion: four clone-encoding projections in one (h, 4h) matmul.
    add_w('gcn_pack', np.concatenate([wt[:h], wc[:h], wc[h:2 * h], wa[:h]], axis=1))
    add_b('gcn_pack', np.concatenate([bt, bc, np.zeros(h, np.float32), ba]))
    add_w('gcn_thorn', wt[h:2 * h])
    add_w('gcn_clone', wc[2 * h:3 * h])
    add_w('gcn_agg_fr', wa[h:2 * h])
    add_w('gcn_agg_th', wa[2 * h:3 * h])
    add_w('gcn_agg_cl', wa[3 * h:4 * h])

    wg = np.asarray(params['agg_enc']['l1']['w'])   # concat order: [scalar | food | clone]
    add_w('agg_s', wg[:h])
    add_w('agg_f', wg[h:2 * h])
    add_w('agg_c', wg[2 * h:3 * h])
    add_b('agg_l1', params['agg_enc']['l1']['b'])
    add_lin('agg_l2', params['agg_enc']['l2'])

    add_lin('head_l1', params['head']['l1'])
    add_lin('head_l2', params['head']['l2'])
    w3 = np.zeros((np.asarray(params['head']['l3']['w']).shape[0], n_out), np.float32)
    w3[:, :n_act] = np.asarray(params['head']['l3']['w'])
    b3 = np.zeros((n_out,), np.float32)
    b3[:n_act] = np.asarray(params['head']['l3']['b'])
    add_w('head_l3', w3)
    add_b('head_l3', b3)

    weights = (wpk.finalize(), bpk.finalize()) + tuple(big)

    kernel = _build_kernel(c=c, t=t, tb=tb, h=h,
                           w_entries=dict(wpk.entries), b_entries=dict(bpk.entries),
                           wsrc=dict(wsrc), conv_names=tuple(conv_names), n_big=len(big))
    forward = _make_forward(kernel=kernel, c=c, t=t, tb=tb, bpad=bpad, n_out=n_out)

    return {'forward': forward, 'weights': weights, 'n_act': n_act, 'bp': bpad}


def gobigger_forward(model, inputs):
    B = inputs['batch']
    A = inputs['player_num_per_team']
    bn = B * A
    out = model['forward'](
        model['weights'],
        inputs['scalar'], inputs['food'], inputs['food_relation'], inputs['thorn_relation'],
        inputs['thorn_mask'], inputs['clone'], inputs['clone_relation'], inputs['clone_mask'])
    n_act = model['n_act']
    logit = out[:bn, :n_act].reshape(B, A, n_act)
    return {'logit': logit}


# ---------------------------------- main ---------------------------------------

if __name__ == "__main__":
    B, A = 2, 2                      # batch, player_num_per_team
    bn = B * A
    scalar_shape = 5
    food_shape = 2                   # conv input channels
    food_relation_shape = 3
    thorn_relation_shape = 3
    clone_shape = 6
    clone_relation_shape = 4
    hidden_shape = HIDDEN            # 32
    encode_shape = 32                # DiscreteHead expects 32-d input
    action_type_shape = 16
    c, t = 8, 4                      # clone / thorn counts
    Hs = Ws = 16                     # food spatial size

    key = jax.random.PRNGKey(0)
    kp, kd = jax.random.split(key)
    params = init_params(kp, scalar_shape, food_shape, food_relation_shape,
                         thorn_relation_shape, clone_shape, clone_relation_shape,
                         hidden_shape, encode_shape, action_type_shape)
    model = prepare_model(params, food_hw=Hs, player_rows=bn, clone_num=c, thorn_num=t)

    ks = jax.random.split(kd, 8)
    thorn_len = jax.random.randint(ks[4], (bn, 1), 1, t + 1)
    clone_len = jax.random.randint(ks[7], (bn, 1), 1, c + 1)
    inputs = {
        'scalar': jax.random.normal(ks[0], (bn, scalar_shape), jnp.float32),
        'food': jax.random.normal(ks[1], (bn, food_shape, Hs, Ws), jnp.float32),
        'food_relation': jax.random.normal(ks[2], (bn, c, food_relation_shape), jnp.float32),
        'thorn_relation': jax.random.normal(ks[3], (bn, c, t, thorn_relation_shape), jnp.float32),
        'thorn_mask': (jnp.arange(t)[None, :] < thorn_len).astype(jnp.float32),
        'clone': jax.random.normal(ks[5], (bn, c, clone_shape), jnp.float32),
        'clone_relation': jax.random.normal(ks[6], (bn, c, c, clone_relation_shape), jnp.float32),
        'clone_mask': (jnp.arange(c)[None, :] < clone_len).astype(jnp.float32),
        'batch': B,
        'player_num_per_team': A,
    }

    out = gobigger_forward(model, inputs)
    logit = jax.block_until_ready(out['logit'])
    assert logit.shape == (B, A, action_type_shape), logit.shape
    assert logit.dtype == jnp.float32
    assert bool(jnp.all(jnp.isfinite(logit)))
    print("KERNEL_OK")
</pallas_src>

<mosaic_0001>
module attributes {stable_mosaic.version = 11 : i64} {
  func.func @kernel(%arg0: i32, %arg1: memref<8x5xf32, #tpu.memory_space<vmem>>, %arg2: memref<8x512xf32, #tpu.memory_space<vmem>>, %arg3: memref<8x8x3xf32, #tpu.memory_space<vmem>>, %arg4: memref<32x8x3xf32, #tpu.memory_space<vmem>>, %arg5: memref<8x8x6xf32, #tpu.memory_space<vmem>>, %arg6: memref<64x8x4xf32, #tpu.memory_space<vmem>>, %arg7: memref<8x4xf32, #tpu.memory_space<vmem>>, %arg8: memref<8x8xf32, #tpu.memory_space<vmem>>, %arg9: memref<32x3200xf32, #tpu.memory_space<vmem>>, %arg10: memref<1x2688xf32, #tpu.memory_space<vmem>>, %arg11: memref<512x128xf32, #tpu.memory_space<vmem>>, %arg12: memref<128x64xf32, #tpu.memory_space<vmem>>, %arg13: memref<64x16xf32, #tpu.memory_space<vmem>>, %arg14: memref<8x128xf32, #tpu.memory_space<vmem>>) attributes {dimension_semantics = [#tpu.dimension_semantics<parallel>], iteration_bounds = array<i64: 1>, scalar_prefetch = 0 : i64, scratch_operands = 0 : i64, tpu.core_type = #tpu.core_type<tc>, window_params = [{transform_indices = @transform_0, window_bounds = array<i64: 8, 5>}, {transform_indices = @transform_1, window_bounds = array<i64: 8, 512>}, {transform_indices = @transform_2, window_bounds = array<i64: 8, 8, 3>}, {transform_indices = @transform_3, window_bounds = array<i64: 32, 8, 3>}, {transform_indices = @transform_4, window_bounds = array<i64: 8, 8, 6>}, {transform_indices = @transform_5, window_bounds = array<i64: 64, 8, 4>}, {transform_indices = @transform_6, window_bounds = array<i64: 8, 4>}, {transform_indices = @transform_7, window_bounds = array<i64: 8, 8>}, {pipeline_mode = #tpu.pipeline_mode<synchronous>, transform_indices = @transform_8, window_bounds = array<i64: 32, 3200>}, {pipeline_mode = #tpu.pipeline_mode<synchronous>, transform_indices = @transform_9, window_bounds = array<i64: 1, 2688>}, {pipeline_mode = #tpu.pipeline_mode<synchronous>, transform_indices = @transform_10, window_bounds = array<i64: 512, 128>}, {pipeline_mode = #tpu.pipeline_mode<synchronous>, transform_indices = @transform_11, window_bounds = array<i64: 128, 64>}, {pipeline_mode = #tpu.pipeline_mode<synchronous>, transform_indices = @transform_12, window_bounds = array<i64: 64, 16>}, {transform_indices = @transform_13, window_bounds = array<i64: 8, 128>}]} {
    %c0 = arith.constant 0 : index
    %c0_0 = arith.constant 0 : index
    %0 = vector.load %arg1[%c0, %c0_0] : memref<8x5xf32, #tpu.memory_space<vmem>>, vector<8x5xf32>
    %c0_1 = arith.constant 0 : index
    %c0_2 = arith.constant 0 : index
    %1 = vector.load %arg9[%c0_1, %c0_2] : memref<32x3200xf32, #tpu.memory_space<vmem>>, vector<5x8xf32>
    %cst = arith.constant dense<0.000000e+00> : vector<8x8xf32>
    %2 = tpu.matmul %0, %1, %cst {dimension_numbers = #tpu.dot_dimension_numbers<[1], [0], [0], [1], [0, 0, 1, 1], [], []>} : vector<8x5xf32>, vector<5x8xf32>, vector<8x8xf32> -> vector<8x8xf32>
    %c0_3 = arith.constant 0 : index
    %c0_4 = arith.constant 0 : index
    %3 = vector.load %arg10[%c0_3, %c0_4] : memref<1x2688xf32, #tpu.memory_space<vmem>>, vector<1x8xf32>
    %4 = vector.broadcast %3 : vector<1x8xf32> to vector<8x8xf32>
    %5 = arith.addf %2, %4 : vector<8x8xf32>
    %cst_5 = arith.constant 0.000000e+00 : f32
    %6 = vector.broadcast %cst_5 : f32 to vector<8x8xf32>
    %7 = arith.maximumf %5, %6 : vector<8x8xf32>
    %c0_6 = arith.constant 0 : index
    %c128 = arith.constant 128 : index
    %8 = vector.load %arg9[%c0_6, %c128] : memref<32x3200xf32, #tpu.memory_space<vmem>>, vector<8x32xf32>
    %cst_7 = arith.constant dense<0.000000e+00> : vector<8x32xf32>
    %9 = tpu.matmul %7, %8, %cst_7 {dimension_numbers = #tpu.dot_dimension_numbers<[1], [0], [0], [1], [0, 0, 1, 1], [], []>} : vector<8x8xf32>, vector<8x32xf32>, vector<8x32xf32> -> vector<8x32xf32>
    %c0_8 = arith.constant 0 : index
    %c128_9 = arith.constant 128 : index
    %10 = vector.load %arg10[%c0_8, %c128_9] : memref<1x2688xf32, #tpu.memory_space<vmem>>, vector<1x32xf32>
    %11 = vector.broadcast %10 : vector<1x32xf32> to vector<8x32xf32>
    %12 = arith.addf %9, %11 : vector<8x32xf32>
    %cst_10 = arith.constant 0.000000e+00 : f32
    %13 = vector.broadcast %cst_10 : f32 to vector<8x32xf32>
    %14 = arith.maximumf %12, %13 : vector<8x32xf32>
    %c0_11 = arith.constant 0 : index
    %c0_12 = arith.constant 0 : index
    %15 = vector.load %arg2[%c0_11, %c0_12] : memref<8x512xf32, #tpu.memory_space<vmem>>, vector<8x512xf32>
    %c0_13 = arith.constant 0 : index
    %c0_14 = arith.constant 0 : index
    %16 = vector.load %arg11[%c0_13, %c0_14] : memref<512x128xf32, #tpu.memory_space<vmem>>, vector<512x128xf32>
    %cst_15 = arith.constant dense<0.000000e+00> : vector<8x128xf32>
    %17 = tpu.matmul %15, %16, %cst_15 {dimension_numbers = #tpu.dot_dimension_numbers<[1], [0], [0], [1], [0, 0, 1, 1], [], []>} : vector<8x512xf32>, vector<512x128xf32>, vector<8x128xf32> -> vector<8x128xf32>
    %c0_16 = arith.constant 0 : index
    %c256 = arith.constant 256 : index
    %18 = vector.load %arg10[%c0_16, %c256] : memref<1x2688xf32, #tpu.memory_space<vmem>>, vector<1x128xf32>
    %19 = vector.broadcast %18 : vector<1x128xf32> to vector<8x128xf32>
    %20 = arith.addf %17, %19 : vector<8x128xf32>
    %cst_17 = arith.constant 0.000000e+00 : f32
    %21 = vector.broadcast %cst_17 : f32 to vector<8x128xf32>
    %22 = arith.maximumf %20, %21 : vector<8x128xf32>
    %c0_18 = arith.constant 0 : index
    %c0_19 = arith.constant 0 : index
    %23 = vector.load %arg12[%c0_18, %c0_19] : memref<128x64xf32, #tpu.memory_space<vmem>>, vector<128x64xf32>
    %cst_20 = arith.constant dense<0.000000e+00> : vector<8x64xf32>
    %24 = tpu.matmul %22, %23, %cst_20 {dimension_numbers = #tpu.dot_dimension_numbers<[1], [0], [0], [1], [0, 0, 1, 1], [], []>} : vector<8x128xf32>, vector<128x64xf32>, vector<8x64xf32> -> vector<8x64xf32>
    %c0_21 = arith.constant 0 : index
    %c384 = arith.constant 384 : index
    %25 = vector.load %arg10[%c0_21, %c384] : memref<1x2688xf32, #tpu.memory_space<vmem>>, vector<1x64xf32>
    %26 = vector.broadcast %25 : vector<1x64xf32> to vector<8x64xf32>
    %27 = arith.addf %24, %26 : vector<8x64xf32>
    %cst_22 = arith.constant 0.000000e+00 : f32
    %28 = vector.broadcast %cst_22 : f32 to vector<8x64xf32>
    %29 = arith.maximumf %27, %28 : vector<8x64xf32>
    %c0_23 = arith.constant 0 : index
    %c0_24 = arith.constant 0 : index
    %30 = vector.load %arg13[%c0_23, %c0_24] : memref<64x16xf32, #tpu.memory_space<vmem>>, vector<64x16xf32>
    %cst_25 = arith.constant dense<0.000000e+00> : vector<8x16xf32>
    %31 = tpu.matmul %29, %30, %cst_25 {dimension_numbers = #tpu.dot_dimension_numbers<[1], [0], [0], [1], [0, 0, 1, 1], [], []>} : vector<8x64xf32>, vector<64x16xf32>, vector<8x16xf32> -> vector<8x16xf32>
    %c0_26 = arith.constant 0 : index
    %c512 = arith.constant 512 : index
    %32 = vector.load %arg10[%c0_26, %c512] : memref<1x2688xf32, #tpu.memory_space<vmem>>, vector<1x16xf32>
    %33 = vector.broadcast %32 : vector<1x16xf32> to vector<8x16xf32>
    %34 = arith.addf %31, %33 : vector<8x16xf32>
    %cst_27 = arith.constant 0.000000e+00 : f32
    %35 = vector.broadcast %cst_27 : f32 to vector<8x16xf32>
    %36 = arith.maximumf %34, %35 : vector<8x16xf32>
    %c0_28 = arith.constant 0 : index
    %c256_29 = arith.constant 256 : index
    %37 = vector.load %arg9[%c0_28, %c256_29] : memref<32x3200xf32, #tpu.memory_space<vmem>>, vector<16x32xf32>
    %cst_30 = arith.constant dense<0.000000e+00> : vector<8x32xf32>
    %38 = tpu.matmul %36, %37, %cst_30 {dimension_numbers = #tpu.dot_dimension_numbers<[1], [0], [0], [1], [0, 0, 1, 1], [], []>} : vector<8x16xf32>, vector<16x32xf32>, vector<8x32xf32> -> vector<8x32xf32>
    %c0_31 = arith.constant 0 : index
    %c640 = arith.constant 640 : index
    %39 = vector.load %arg10[%c0_31, %c640] : memref<1x2688xf32, #tpu.memory_space<vmem>>, vector<1x32xf32>
    %40 = vector.broadcast %39 : vector<1x32xf32> to vector<8x32xf32>
    %41 = arith.addf %38, %40 : vector<8x32xf32>
    %cst_32 = arith.constant 0.000000e+00 : f32
    %42 = vector.broadcast %cst_32 : f32 to vector<8x32xf32>
    %43 = arith.maximumf %41, %42 : vector<8x32xf32>
    %c0_33 = arith.constant 0 : index
    %c384_34 = arith.constant 384 : index
    %44 = vector.load %arg9[%c0_33, %c384_34] : memref<32x3200xf32, #tpu.memory_space<vmem>>, vector<32x32xf32>
    %cst_35 = arith.constant dense<0.000000e+00> : vector<8x32xf32>
    %45 = tpu.matmul %43, %44, %cst_35 {dimension_numbers = #tpu.dot_dimension_numbers<[1], [0], [0], [1], [0, 0, 1, 1], [], []>} : vector<8x32xf32>, vector<32x32xf32>, vector<8x32xf32> -> vector<8x32xf32>
    %c0_36 = arith.constant 0 : index
    %c768 = arith.constant 768 : index
    %46 = vector.load %arg10[%c0_36, %c768] : memref<1x2688xf32, #tpu.memory_space<vmem>>, vector<1x32xf32>
    %47 = vector.broadcast %46 : vector<1x32xf32> to vector<8x32xf32>
    %48 = arith.addf %45, %47 : vector<8x32xf32>
    %cst_37 = arith.constant 0.000000e+00 : f32
    %49 = vector.broadcast %cst_37 : f32 to vector<8x32xf32>
    %50 = arith.maximumf %48, %49 : vector<8x32xf32>
    %c0_38 = arith.constant 0 : index
    %c0_39 = arith.constant 0 : index
    %c0_40 = arith.constant 0 : index
    %51 = vector.load %arg3[%c0_38, %c0_39, %c0_40] : memref<8x8x3xf32, #tpu.memory_space<vmem>>, vector<8x8x3xf32>
    %52 = vector.shape_cast %51 : vector<8x8x3xf32> to vector<64x3xf32>
    %c0_41 = arith.constant 0 : index
    %c512_42 = arith.constant 512 : index
    %53 = vector.load %arg9[%c0_41, %c512_42] : memref<32x3200xf32, #tpu.memory_space<vmem>>, vector<3x16xf32>
    %cst_43 = arith.constant dense<0.000000e+00> : vector<64x16xf32>
    %54 = tpu.matmul %52, %53, %cst_43 {dimension_numbers = #tpu.dot_dimension_numbers<[1], [0], [0], [1], [0, 0, 1, 1], [], []>} : vector<64x3xf32>, vector<3x16xf32>, vector<64x16xf32> -> vector<64x16xf32>
    %c0_44 = arith.constant 0 : index
    %c896 = arith.constant 896 : index
    %55 = vector.load %arg10[%c0_44, %c896] : memref<1x2688xf32, #tpu.memory_space<vmem>>, vector<1x16xf32>
    %56 = vector.broadcast %55 : vector<1x16xf32> to vector<64x16xf32>
    %57 = arith.addf %54, %56 : vector<64x16xf32>
    %cst_45 = arith.constant 0.000000e+00 : f32
    %58 = vector.broadcast %cst_45 : f32 to vector<64x16xf32>
    %59 = arith.maximumf %57, %58 : vector<64x16xf32>
    %c0_46 = arith.constant 0 : index
    %c640_47 = arith.constant 640 : index
    %60 = vector.load %arg9[%c0_46, %c640_47] : memref<32x3200xf32, #tpu.memory_space<vmem>>, vector<16x32xf32>
    %cst_48 = arith.constant dense<0.000000e+00> : vector<64x32xf32>
    %61 = tpu.matmul %59, %60, %cst_48 {dimension_numbers = #tpu.dot_dimension_numbers<[1], [0], [0], [1], [0, 0, 1, 1], [], []>} : vector<64x16xf32>, vector<16x32xf32>, vector<64x32xf32> -> vector<64x32xf32>
    %c0_49 = arith.constant 0 : index
    %c1024 = arith.constant 1024 : index
    %62 = vector.load %arg10[%c0_49, %c1024] : memref<1x2688xf32, #tpu.memory_space<vmem>>, vector<1x32xf32>
    %63 = vector.broadcast %62 : vector<1x32xf32> to vector<64x32xf32>
    %64 = arith.addf %61, %63 : vector<64x32xf32>
    %cst_50 = arith.constant 0.000000e+00 : f32
    %65 = vector.broadcast %cst_50 : f32 to vector<64x32xf32>
    %66 = arith.maximumf %64, %65 : vector<64x32xf32>
    %c0_51 = arith.constant 0 : index
    %c0_52 = arith.constant 0 : index
    %c0_53 = arith.constant 0 : index
    %67 = vector.load %arg5[%c0_51, %c0_52, %c0_53] : memref<8x8x6xf32, #tpu.memory_space<vmem>>, vector<8x8x6xf32>
    %68 = vector.shape_cast %67 : vector<8x8x6xf32> to vector<64x6xf32>
    %c0_54 = arith.constant 0 : index
    %c1024_55 = arith.constant 1024 : index
    %69 = vector.load %arg9[%c0_54, %c1024_55] : memref<32x3200xf32, #tpu.memory_space<vmem>>, vector<6x8xf32>
    %cst_56 = arith.constant dense<0.000000e+00> : vector<64x8xf32>
    %70 = tpu.matmul %68, %69, %cst_56 {dimension_numbers = #tpu.dot_dimension_numbers<[1], [0], [0], [1], [0, 0, 1, 1], [], []>} : vector<64x6xf32>, vector<6x8xf32>, vector<64x8xf32> -> vector<64x8xf32>
    %c0_57 = arith.constant 0 : index
    %c1408 = arith.constant 1408 : index
    %71 = vector.load %arg10[%c0_57, %c1408] : memref<1x2688xf32, #tpu.memory_space<vmem>>, vector<1x8xf32>
    %72 = vector.broadcast %71 : vector<1x8xf32> to vector<64x8xf32>
    %73 = arith.addf %70, %72 : vector<64x8xf32>
    %cst_58 = arith.constant 0.000000e+00 : f32
    %74 = vector.broadcast %cst_58 : f32 to vector<64x8xf32>
    %75 = arith.maximumf %73, %74 : vector<64x8xf32>
    %c0_59 = arith.constant 0 : index
    %c1152 = arith.constant 1152 : index
    %76 = vector.load %arg9[%c0_59, %c1152] : memref<32x3200xf32, #tpu.memory_space<vmem>>, vector<8x32xf32>
    %cst_60 = arith.constant dense<0.000000e+00> : vector<64x32xf32>
    %77 = tpu.matmul %75, %76, %cst_60 {dimension_numbers = #tpu.dot_dimension_numbers<[1], [0], [0], [1], [0, 0, 1, 1], [], []>} : vector<64x8xf32>, vector<8x32xf32>, vector<64x32xf32> -> vector<64x32xf32>
    %c0_61 = arith.constant 0 : index
    %c1536 = arith.constant 1536 : index
    %78 = vector.load %arg10[%c0_61, %c1536] : memref<1x2688xf32, #tpu.memory_space<vmem>>, vector<1x32xf32>
    %79 = vector.broadcast %78 : vector<1x32xf32> to vector<64x32xf32>
    %80 = arith.addf %77, %79 : vector<64x32xf32>
    %cst_62 = arith.constant 0.000000e+00 : f32
    %81 = vector.broadcast %cst_62 : f32 to vector<64x32xf32>
    %82 = arith.maximumf %80, %81 : vector<64x32xf32>
    %c0_63 = arith.constant 0 : index
    %c1536_64 = arith.constant 1536 : index
    %83 = vector.load %arg9[%c0_63, %c1536_64] : memref<32x3200xf32, #tpu.memory_space<vmem>>, vector<32x128xf32>
    %cst_65 = arith.constant dense<0.000000e+00> : vector<64x128xf32>
    %84 = tpu.matmul %82, %83, %cst_65 {dimension_numbers = #tpu.dot_dimension_numbers<[1], [0], [0], [1], [0, 0, 1, 1], [], []>} : vector<64x32xf32>, vector<32x128xf32>, vector<64x128xf32> -> vector<64x128xf32>
    %c0_66 = arith.constant 0 : index
    %c1920 = arith.constant 1920 : index
    %85 = vector.load %arg10[%c0_66, %c1920] : memref<1x2688xf32, #tpu.memory_space<vmem>>, vector<1x128xf32>
    %86 = vector.broadcast %85 : vector<1x128xf32> to vector<64x128xf32>
    %87 = arith.addf %84, %86 : vector<64x128xf32>
    %88 = vector.extract_strided_slice %87 {offsets = [0, 0], sizes = [64, 32], strides = [1, 1]} : vector<64x128xf32> to vector<64x32xf32>
    %89 = vector.shape_cast %88 : vector<64x32xf32> to vector<8x8x32xf32>
    %90 = vector.extract_strided_slice %87 {offsets = [0, 32], sizes = [64, 32], strides = [1, 1]} : vector<64x128xf32> to vector<64x32xf32>
    %91 = vector.shape_cast %90 : vector<64x32xf32> to vector<8x8x32xf32>
    %92 = vector.extract_strided_slice %87 {offsets = [0, 64], sizes = [64, 32], strides = [1, 1]} : vector<64x128xf32> to vector<64x32xf32>
    %93 = vector.extract_strided_slice %87 {offsets = [0, 96], sizes = [64, 32], strides = [1, 1]} : vector<64x128xf32> to vector<64x32xf32>
    %c0_67 = arith.constant 0 : index
    %c0_68 = arith.constant 0 : index
    %94 = vector.load %arg7[%c0_67, %c0_68] : memref<8x4xf32, #tpu.memory_space<vmem>>, vector<8x4xf32>
    %c0_69 = arith.constant 0 : index
    %c0_70 = arith.constant 0 : index
    %95 = vector.load %arg8[%c0_69, %c0_70] : memref<8x8xf32, #tpu.memory_space<vmem>>, vector<8x8xf32>
    %c0_71 = arith.constant 0 : index
    %c1664 = arith.constant 1664 : index
    %96 = vector.load %arg9[%c0_71, %c1664] : memref<32x3200xf32, #tpu.memory_space<vmem>>, vector<32x32xf32>
    %c0_72 = arith.constant 0 : index
    %c0_73 = arith.constant 0 : index
    %c0_74 = arith.constant 0 : index
    %97 = vector.load %arg4[%c0_72, %c0_73, %c0_74] : memref<32x8x3xf32, #tpu.memory_space<vmem>>, vector<8x8x3xf32>
    %98 = vector.shape_cast %97 : vector<8x8x3xf32> to vector<64x3xf32>
    %c0_75 = arith.constant 0 : index
    %c768_76 = arith.constant 768 : index
    %99 = vector.load %arg9[%c0_75, %c768_76] : memref<32x3200xf32, #tpu.memory_space<vmem>>, vector<3x8xf32>
    %cst_77 = arith.constant dense<0.000000e+00> : vector<64x8xf32>
    %100 = tpu.matmul %98, %99, %cst_77 {dimension_numbers = #tpu.dot_dimension_numbers<[1], [0], [0], [1], [0, 0, 1, 1], [], []>} : vector<64x3xf32>, vector<3x8xf32>, vector<64x8xf32> -> vector<64x8xf32>
    %c0_78 = arith.constant 0 : index
    %c1152_79 = arith.constant 1152 : index
    %101 = vector.load %arg10[%c0_78, %c1152_79] : memref<1x2688xf32, #tpu.memory_space<vmem>>, vector<1x8xf32>
    %102 = vector.broadcast %101 : vector<1x8xf32> to vector<64x8xf32>
    %103 = arith.addf %100, %102 : vector<64x8xf32>
    %cst_80 = arith.constant 0.000000e+00 : f32
    %104 = vector.broadcast %cst_80 : f32 to vector<64x8xf32>
    %105 = arith.maximumf %103, %104 : vector<64x8xf32>
    %c0_81 = arith.constant 0 : index
    %c896_82 = arith.constant 896 : index
    %106 = vector.load %arg9[%c0_81, %c896_82] : memref<32x3200xf32, #tpu.memory_space<vmem>>, vector<8x32xf32>
    %cst_83 = arith.constant dense<0.000000e+00> : vector<64x32xf32>
    %107 = tpu.matmul %105, %106, %cst_83 {dimension_numbers = #tpu.dot_dimension_numbers<[1], [0], [0], [1], [0, 0, 1, 1], [], []>} : vector<64x8xf32>, vector<8x32xf32>, vector<64x32xf32> -> vector<64x32xf32>
    %c0_84 = arith.constant 0 : index
    %c1280 = arith.constant 1280 : index
    %108 = vector.load %arg10[%c0_84, %c1280] : memref<1x2688xf32, #tpu.memory_space<vmem>>, vector<1x32xf32>
    %109 = vector.broadcast %108 : vector<1x32xf32> to vector<64x32xf32>
    %110 = arith.addf %107, %109 : vector<64x32xf32>
    %cst_85 = arith.constant 0.000000e+00 : f32
    %111 = vector.broadcast %cst_85 : f32 to vector<64x32xf32>
    %112 = arith.maximumf %110, %111 : vector<64x32xf32>
    %cst_86 = arith.constant dense<0.000000e+00> : vector<64x32xf32>
    %113 = tpu.matmul %112, %96, %cst_86 {dimension_numbers = #tpu.dot_dimension_numbers<[1], [0], [0], [1], [0, 0, 1, 1], [], []>} : vector<64x32xf32>, vector<32x32xf32>, vector<64x32xf32> -> vector<64x32xf32>
    %114 = vector.shape_cast %113 : vector<64x32xf32> to vector<8x8x32xf32>
    %115 = arith.addf %89, %114 : vector<8x8x32xf32>
    %cst_87 = arith.constant 0.000000e+00 : f32
    %116 = vector.broadcast %cst_87 : f32 to vector<8x8x32xf32>
    %117 = arith.maximumf %115, %116 : vector<8x8x32xf32>
    %118 = vector.extract_strided_slice %94 {offsets = [0, 0], sizes = [8, 1], strides = [1, 1]} : vector<8x4xf32> to vector<8x1xf32>
    %119 = vector.shape_cast %118 : vector<8x1xf32> to vector<1x8x1xf32>
    %120 = vector.broadcast %119 : vector<1x8x1xf32> to vector<8x8x32xf32>
    %121 = arith.mulf %117, %120 : vector<8x8x32xf32>
    %c8 = arith.constant 8 : index
    %c0_88 = arith.constant 0 : index
    %c0_89 = arith.constant 0 : index
    %122 = vector.load %arg4[%c8, %c0_88, %c0_89] : memref<32x8x3xf32, #tpu.memory_space<vmem>>, vector<8x8x3xf32>
    %123 = vector.shape_cast %122 : vector<8x8x3xf32> to vector<64x3xf32>
    %c0_90 = arith.constant 0 : index
    %c768_91 = arith.constant 768 : index
    %124 = vector.load %arg9[%c0_90, %c768_91] : memref<32x3200xf32, #tpu.memory_space<vmem>>, vector<3x8xf32>
    %cst_92 = arith.constant dense<0.000000e+00> : vector<64x8xf32>
    %125 = tpu.matmul %123, %124, %cst_92 {dimension_numbers = #tpu.dot_dimension_numbers<[1], [0], [0], [1], [0, 0, 1, 1], [], []>} : vector<64x3xf32>, vector<3x8xf32>, vector<64x8xf32> -> vector<64x8xf32>
    %c0_93 = arith.constant 0 : index
    %c1152_94 = arith.constant 1152 : index
    %126 = vector.load %arg10[%c0_93, %c1152_94] : memref<1x2688xf32, #tpu.memory_space<vmem>>, vector<1x8xf32>
    %127 = vector.broadcast %126 : vector<1x8xf32> to vector<64x8xf32>
    %128 = arith.addf %125, %127 : vector<64x8xf32>
    %cst_95 = arith.constant 0.000000e+00 : f32
    %129 = vector.broadcast %cst_95 : f32 to vector<64x8xf32>
    %130 = arith.maximumf %128, %129 : vector<64x8xf32>
    %c0_96 = arith.constant 0 : index
    %c896_97 = arith.constant 896 : index
    %131 = vector.load %arg9[%c0_96, %c896_97] : memref<32x3200xf32, #tpu.memory_space<vmem>>, vector<8x32xf32>
    %cst_98 = arith.constant dense<0.000000e+00> : vector<64x32xf32>
    %132 = tpu.matmul %130, %131, %cst_98 {dimension_numbers = #tpu.dot_dimension_numbers<[1], [0], [0], [1], [0, 0, 1, 1], [], []>} : vector<64x8xf32>, vector<8x32xf32>, vector<64x32xf32> -> vector<64x32xf32>
    %c0_99 = arith.constant 0 : index
    %c1280_100 = arith.constant 1280 : index
    %133 = vector.load %arg10[%c0_99, %c1280_100] : memref<1x2688xf32, #tpu.memory_space<vmem>>, vector<1x32xf32>
    %134 = vector.broadcast %133 : vector<1x32xf32> to vector<64x32xf32>
    %135 = arith.addf %132, %134 : vector<64x32xf32>
    %cst_101 = arith.constant 0.000000e+00 : f32
    %136 = vector.broadcast %cst_101 : f32 to vector<64x32xf32>
    %137 = arith.maximumf %135, %136 : vector<64x32xf32>
    %cst_102 = arith.constant dense<0.000000e+00> : vector<64x32xf32>
    %138 = tpu.matmul %137, %96, %cst_102 {dimension_numbers = #tpu.dot_dimension_numbers<[1], [0], [0], [1], [0, 0, 1, 1], [], []>} : vector<64x32xf32>, vector<32x32xf32>, vector<64x32xf32> -> vector<64x32xf32>
    %139 = vector.shape_cast %138 : vector<64x32xf32> to vector<8x8x32xf32>
    %140 = arith.addf %89, %139 : vector<8x8x32xf32>
    %cst_103 = arith.constant 0.000000e+00 : f32
    %141 = vector.broadcast %cst_103 : f32 to vector<8x8x32xf32>
    %142 = arith.maximumf %140, %141 : vector<8x8x32xf32>
    %143 = vector.extract_strided_slice %94 {offsets = [0, 1], sizes = [8, 1], strides = [1, 1]} : vector<8x4xf32> to vector<8x1xf32>
    %144 = vector.shape_cast %143 : vector<8x1xf32> to vector<1x8x1xf32>
    %145 = vector.broadcast %144 : vector<1x8x1xf32> to vector<8x8x32xf32>
    %146 = arith.mulf %142, %145 : vector<8x8x32xf32>
    %147 = arith.maximumf %121, %146 : vector<8x8x32xf32>
    %c16 = arith.constant 16 : index
    %c0_104 = arith.constant 0 : index
    %c0_105 = arith.constant 0 : index
    %148 = vector.load %arg4[%c16, %c0_104, %c0_105] : memref<32x8x3xf32, #tpu.memory_space<vmem>>, vector<8x8x3xf32>
    %149 = vector.shape_cast %148 : vector<8x8x3xf32> to vector<64x3xf32>
    %c0_106 = arith.constant 0 : index
    %c768_107 = arith.constant 768 : index
    %150 = vector.load %arg9[%c0_106, %c768_107] : memref<32x3200xf32, #tpu.memory_space<vmem>>, vector<3x8xf32>
    %cst_108 = arith.constant dense<0.000000e+00> : vector<64x8xf32>
    %151 = tpu.matmul %149, %150, %cst_108 {dimension_numbers = #tpu.dot_dimension_numbers<[1], [0], [0], [1], [0, 0, 1, 1], [], []>} : vector<64x3xf32>, vector<3x8xf32>, vector<64x8xf32> -> vector<64x8xf32>
    %c0_109 = arith.constant 0 : index
    %c1152_110 = arith.constant 1152 : index
    %152 = vector.load %arg10[%c0_109, %c1152_110] : memref<1x2688xf32, #tpu.memory_space<vmem>>, vector<1x8xf32>
    %153 = vector.broadcast %152 : vector<1x8xf32> to vector<64x8xf32>
    %154 = arith.addf %151, %153 : vector<64x8xf32>
    %cst_111 = arith.constant 0.000000e+00 : f32
    %155 = vector.broadcast %cst_111 : f32 to vector<64x8xf32>
    %156 = arith.maximumf %154, %155 : vector<64x8xf32>
    %c0_112 = arith.constant 0 : index
    %c896_113 = arith.constant 896 : index
    %157 = vector.load %arg9[%c0_112, %c896_113] : memref<32x3200xf32, #tpu.memory_space<vmem>>, vector<8x32xf32>
    %cst_114 = arith.constant dense<0.000000e+00> : vector<64x32xf32>
    %158 = tpu.matmul %156, %157, %cst_114 {dimension_numbers = #tpu.dot_dimension_numbers<[1], [0], [0], [1], [0, 0, 1, 1], [], []>} : vector<64x8xf32>, vector<8x32xf32>, vector<64x32xf32> -> vector<64x32xf32>
    %c0_115 = arith.constant 0 : index
    %c1280_116 = arith.constant 1280 : index
    %159 = vector.load %arg10[%c0_115, %c1280_116] : memref<1x2688xf32, #tpu.memory_space<vmem>>, vector<1x32xf32>
    %160 = vector.broadcast %159 : vector<1x32xf32> to vector<64x32xf32>
    %161 = arith.addf %158, %160 : vector<64x32xf32>
    %cst_117 = arith.constant 0.000000e+00 : f32
    %162 = vector.broadcast %cst_117 : f32 to vector<64x32xf32>
    %163 = arith.maximumf %161, %162 : vector<64x32xf32>
    %cst_118 = arith.constant dense<0.000000e+00> : vector<64x32xf32>
    %164 = tpu.matmul %163, %96, %cst_118 {dimension_numbers = #tpu.dot_dimension_numbers<[1], [0], [0], [1], [0, 0, 1, 1], [], []>} : vector<64x32xf32>, vector<32x32xf32>, vector<64x32xf32> -> vector<64x32xf32>
    %165 = vector.shape_cast %164 : vector<64x32xf32> to vector<8x8x32xf32>
    %166 = arith.addf %89, %165 : vector<8x8x32xf32>
    %cst_119 = arith.constant 0.000000e+00 : f32
    %167 = vector.broadcast %cst_119 : f32 to vector<8x8x32xf32>
    %168 = arith.maximumf %166, %167 : vector<8x8x32xf32>
    %169 = vector.extract_strided_slice %94 {offsets = [0, 2], sizes = [8, 1], strides = [1, 1]} : vector<8x4xf32> to vector<8x1xf32>
    %170 = vector.shape_cast %169 : vector<8x1xf32> to vector<1x8x1xf32>
    %171 = vector.broadcast %170 : vector<1x8x1xf32> to vector<8x8x32xf32>
    %172 = arith.mulf %168, %171 : vector<8x8x32xf32>
    %173 = arith.maximumf %147, %172 : vector<8x8x32xf32>
    %c24 = arith.constant 24 : index
    %c0_120 = arith.constant 0 : index
    %c0_121 = arith.constant 0 : index
    %174 = vector.load %arg4[%c24, %c0_120, %c0_121] : memref<32x8x3xf32, #tpu.memory_space<vmem>>, vector<8x8x3xf32>
    %175 = vector.shape_cast %174 : vector<8x8x3xf32> to vector<64x3xf32>
    %c0_122 = arith.constant 0 : index
    %c768_123 = arith.constant 768 : index
    %176 = vector.load %arg9[%c0_122, %c768_123] : memref<32x3200xf32, #tpu.memory_space<vmem>>, vector<3x8xf32>
    %cst_124 = arith.constant dense<0.000000e+00> : vector<64x8xf32>
    %177 = tpu.matmul %175, %176, %cst_124 {dimension_numbers = #tpu.dot_dimension_numbers<[1], [0], [0], [1], [0, 0, 1, 1], [], []>} : vector<64x3xf32>, vector<3x8xf32>, vector<64x8xf32> -> vector<64x8xf32>
    %c0_125 = arith.constant 0 : index
    %c1152_126 = arith.constant 1152 : index
    %178 = vector.load %arg10[%c0_125, %c1152_126] : memref<1x2688xf32, #tpu.memory_space<vmem>>, vector<1x8xf32>
    %179 = vector.broadcast %178 : vector<1x8xf32> to vector<64x8xf32>
    %180 = arith.addf %177, %179 : vector<64x8xf32>
    %cst_127 = arith.constant 0.000000e+00 : f32
    %181 = vector.broadcast %cst_127 : f32 to vector<64x8xf32>
    %182 = arith.maximumf %180, %181 : vector<64x8xf32>
    %c0_128 = arith.constant 0 : index
    %c896_129 = arith.constant 896 : index
    %183 = vector.load %arg9[%c0_128, %c896_129] : memref<32x3200xf32, #tpu.memory_space<vmem>>, vector<8x32xf32>
    %cst_130 = arith.constant dense<0.000000e+00> : vector<64x32xf32>
    %184 = tpu.matmul %182, %183, %cst_130 {dimension_numbers = #tpu.dot_dimension_numbers<[1], [0], [0], [1], [0, 0, 1, 1], [], []>} : vector<64x8xf32>, vector<8x32xf32>, vector<64x32xf32> -> vector<64x32xf32>
    %c0_131 = arith.constant 0 : index
    %c1280_132 = arith.constant 1280 : index
    %185 = vector.load %arg10[%c0_131, %c1280_132] : memref<1x2688xf32, #tpu.memory_space<vmem>>, vector<1x32xf32>
    %186 = vector.broadcast %185 : vector<1x32xf32> to vector<64x32xf32>
    %187 = arith.addf %184, %186 : vector<64x32xf32>
    %cst_133 = arith.constant 0.000000e+00 : f32
    %188 = vector.broadcast %cst_133 : f32 to vector<64x32xf32>
    %189 = arith.maximumf %187, %188 : vector<64x32xf32>
    %cst_134 = arith.constant dense<0.000000e+00> : vector<64x32xf32>
    %190 = tpu.matmul %189, %96, %cst_134 {dimension_numbers = #tpu.dot_dimension_numbers<[1], [0], [0], [1], [0, 0, 1, 1], [], []>} : vector<64x32xf32>, vector<32x32xf32>, vector<64x32xf32> -> vector<64x32xf32>
    %191 = vector.shape_cast %190 : vector<64x32xf32> to vector<8x8x32xf32>
    %192 = arith.addf %89, %191 : vector<8x8x32xf32>
    %cst_135 = arith.constant 0.000000e+00 : f32
    %193 = vector.broadcast %cst_135 : f32 to vector<8x8x32xf32>
    %194 = arith.maximumf %192, %193 : vector<8x8x32xf32>
    %195 = vector.extract_strided_slice %94 {offsets = [0, 3], sizes = [8, 1], strides = [1, 1]} : vector<8x4xf32> to vector<8x1xf32>
    %196 = vector.shape_cast %195 : vector<8x1xf32> to vector<1x8x1xf32>
    %197 = vector.broadcast %196 : vector<1x8x1xf32> to vector<8x8x32xf32>
    %198 = arith.mulf %194, %197 : vector<8x8x32xf32>
    %199 = arith.maximumf %173, %198 : vector<8x8x32xf32>
    %c0_136 = arith.constant 0 : index
    %c1792 = arith.constant 1792 : index
    %200 = vector.load %arg9[%c0_136, %c1792] : memref<32x3200xf32, #tpu.memory_space<vmem>>, vector<32x32xf32>
    %c0_137 = arith.constant 0 : index
    %c0_138 = arith.constant 0 : index
    %c0_139 = arith.constant 0 : index
    %201 = vector.load %arg6[%c0_137, %c0_138, %c0_139] : memref<64x8x4xf32, #tpu.memory_space<vmem>>, vector<8x8x4xf32>
    %202 = vector.shape_cast %201 : vector<8x8x4xf32> to vector<64x4xf32>
    %c0_140 = arith.constant 0 : index
    %c1280_141 = arith.constant 1280 : index
    %203 = vector.load %arg9[%c0_140, %c1280_141] : memref<32x3200xf32, #tpu.memory_space<vmem>>, vector<4x8xf32>
    %cst_142 = arith.constant dense<0.000000e+00> : vector<64x8xf32>
    %204 = tpu.matmul %202, %203, %cst_142 {dimension_numbers = #tpu.dot_dimension_numbers<[1], [0], [0], [1], [0, 0, 1, 1], [], []>} : vector<64x4xf32>, vector<4x8xf32>, vector<64x8xf32> -> vector<64x8xf32>
    %c0_143 = arith.constant 0 : index
    %c1664_144 = arith.constant 1664 : index
    %205 = vector.load %arg10[%c0_143, %c1664_144] : memref<1x2688xf32, #tpu.memory_space<vmem>>, vector<1x8xf32>
    %206 = vector.broadcast %205 : vector<1x8xf32> to vector<64x8xf32>
    %207 = arith.addf %204, %206 : vector<64x8xf32>
    %cst_145 = arith.constant 0.000000e+00 : f32
    %208 = vector.broadcast %cst_145 : f32 to vector<64x8xf32>
    %209 = arith.maximumf %207, %208 : vector<64x8xf32>
    %c0_146 = arith.constant 0 : index
    %c1408_147 = arith.constant 1408 : index
    %210 = vector.load %arg9[%c0_146, %c1408_147] : memref<32x3200xf32, #tpu.memory_space<vmem>>, vector<8x32xf32>
    %cst_148 = arith.constant dense<0.000000e+00> : vector<64x32xf32>
    %211 = tpu.matmul %209, %210, %cst_148 {dimension_numbers = #tpu.dot_dimension_numbers<[1], [0], [0], [1], [0, 0, 1, 1], [], []>} : vector<64x8xf32>, vector<8x32xf32>, vector<64x32xf32> -> vector<64x32xf32>
    %c0_149 = arith.constant 0 : index
    %c1792_150 = arith.constant 1792 : index
    %212 = vector.load %arg10[%c0_149, %c1792_150] : memref<1x2688xf32, #tpu.memory_space<vmem>>, vector<1x32xf32>
    %213 = vector.broadcast %212 : vector<1x32xf32> to vector<64x32xf32>
    %214 = arith.addf %211, %213 : vector<64x32xf32>
    %cst_151 = arith.constant 0.000000e+00 : f32
    %215 = vector.broadcast %cst_151 : f32 to vector<64x32xf32>
    %216 = arith.maximumf %214, %215 : vector<64x32xf32>
    %217 = vector.extract_strided_slice %92 {offsets = [0, 0], sizes = [8, 32], strides = [1, 1]} : vector<64x32xf32> to vector<8x32xf32>
    %218 = vector.shape_cast %217 : vector<8x32xf32> to vector<1x8x32xf32>
    %219 = vector.broadcast %218 : vector<1x8x32xf32> to vector<8x8x32xf32>
    %220 = arith.addf %91, %219 : vector<8x8x32xf32>
    %cst_152 = arith.constant dense<0.000000e+00> : vector<64x32xf32>
    %221 = tpu.matmul %216, %200, %cst_152 {dimension_numbers = #tpu.dot_dimension_numbers<[1], [0], [0], [1], [0, 0, 1, 1], [], []>} : vector<64x32xf32>, vector<32x32xf32>, vector<64x32xf32> -> vector<64x32xf32>
    %222 = vector.shape_cast %221 : vector<64x32xf32> to vector<8x8x32xf32>
    %223 = arith.addf %220, %222 : vector<8x8x32xf32>
    %cst_153 = arith.constant 0.000000e+00 : f32
    %224 = vector.broadcast %cst_153 : f32 to vector<8x8x32xf32>
    %225 = arith.maximumf %223, %224 : vector<8x8x32xf32>
    %226 = vector.extract_strided_slice %95 {offsets = [0, 0], sizes = [8, 1], strides = [1, 1]} : vector<8x8xf32> to vector<8x1xf32>
    %227 = vector.shape_cast %226 : vector<8x1xf32> to vector<1x8x1xf32>
    %228 = vector.broadcast %227 : vector<1x8x1xf32> to vector<8x8x32xf32>
    %229 = arith.mulf %225, %228 : vector<8x8x32xf32>
    %c8_154 = arith.constant 8 : index
    %c0_155 = arith.constant 0 : index
    %c0_156 = arith.constant 0 : index
    %230 = vector.load %arg6[%c8_154, %c0_155, %c0_156] : memref<64x8x4xf32, #tpu.memory_space<vmem>>, vector<8x8x4xf32>
    %231 = vector.shape_cast %230 : vector<8x8x4xf32> to vector<64x4xf32>
    %c0_157 = arith.constant 0 : index
    %c1280_158 = arith.constant 1280 : index
    %232 = vector.load %arg9[%c0_157, %c1280_158] : memref<32x3200xf32, #tpu.memory_space<vmem>>, vector<4x8xf32>
    %cst_159 = arith.constant dense<0.000000e+00> : vector<64x8xf32>
    %233 = tpu.matmul %231, %232, %cst_159 {dimension_numbers = #tpu.dot_dimension_numbers<[1], [0], [0], [1], [0, 0, 1, 1], [], []>} : vector<64x4xf32>, vector<4x8xf32>, vector<64x8xf32> -> vector<64x8xf32>
    %c0_160 = arith.constant 0 : index
    %c1664_161 = arith.constant 1664 : index
    %234 = vector.load %arg10[%c0_160, %c1664_161] : memref<1x2688xf32, #tpu.memory_space<vmem>>, vector<1x8xf32>
    %235 = vector.broadcast %234 : vector<1x8xf32> to vector<64x8xf32>
    %236 = arith.addf %233, %235 : vector<64x8xf32>
    %cst_162 = arith.constant 0.000000e+00 : f32
    %237 = vector.broadcast %cst_162 : f32 to vector<64x8xf32>
    %238 = arith.maximumf %236, %237 : vector<64x8xf32>
    %c0_163 = arith.constant 0 : index
    %c1408_164 = arith.constant 1408 : index
    %239 = vector.load %arg9[%c0_163, %c1408_164] : memref<32x3200xf32, #tpu.memory_space<vmem>>, vector<8x32xf32>
    %cst_165 = arith.constant dense<0.000000e+00> : vector<64x32xf32>
    %240 = tpu.matmul %238, %239, %cst_165 {dimension_numbers = #tpu.dot_dimension_numbers<[1], [0], [0], [1], [0, 0, 1, 1], [], []>} : vector<64x8xf32>, vector<8x32xf32>, vector<64x32xf32> -> vector<64x32xf32>
    %c0_166 = arith.constant 0 : index
    %c1792_167 = arith.constant 1792 : index
    %241 = vector.load %arg10[%c0_166, %c1792_167] : memref<1x2688xf32, #tpu.memory_space<vmem>>, vector<1x32xf32>
    %242 = vector.broadcast %241 : vector<1x32xf32> to vector<64x32xf32>
    %243 = arith.addf %240, %242 : vector<64x32xf32>
    %cst_168 = arith.constant 0.000000e+00 : f32
    %244 = vector.broadcast %cst_168 : f32 to vector<64x32xf32>
    %245 = arith.maximumf %243, %244 : vector<64x32xf32>
    %246 = vector.extract_strided_slice %92 {offsets = [8, 0], sizes = [8, 32], strides = [1, 1]} : vector<64x32xf32> to vector<8x32xf32>
    %247 = vector.shape_cast %246 : vector<8x32xf32> to vector<1x8x32xf32>
    %248 = vector.broadcast %247 : vector<1x8x32xf32> to vector<8x8x32xf32>
    %249 = arith.addf %91, %248 : vector<8x8x32xf32>
    %cst_169 = arith.constant dense<0.000000e+00> : vector<64x32xf32>
    %250 = tpu.matmul %245, %200, %cst_169 {dimension_numbers = #tpu.dot_dimension_numbers<[1], [0], [0], [1], [0, 0, 1, 1], [], []>} : vector<64x32xf32>, vector<32x32xf32>, vector<64x32xf32> -> vector<64x32xf32>
    %251 = vector.shape_cast %250 : vector<64x32xf32> to vector<8x8x32xf32>
    %252 = arith.addf %249, %251 : vector<8x8x32xf32>
    %cst_170 = arith.constant 0.000000e+00 : f32
    %253 = vector.broadcast %cst_170 : f32 to vector<8x8x32xf32>
    %254 = arith.maximumf %252, %253 : vector<8x8x32xf32>
    %255 = vector.extract_strided_slice %95 {offsets = [0, 1], sizes = [8, 1], strides = [1, 1]} : vector<8x8xf32> to vector<8x1xf32>
    %256 = vector.shape_cast %255 : vector<8x1xf32> to vector<1x8x1xf32>
    %257 = vector.broadcast %256 : vector<1x8x1xf32> to vector<8x8x32xf32>
    %258 = arith.mulf %254, %257 : vector<8x8x32xf32>
    %259 = arith.maximumf %229, %258 : vector<8x8x32xf32>
    %c16_171 = arith.constant 16 : index
    %c0_172 = arith.constant 0 : index
    %c0_173 = arith.constant 0 : index
    %260 = vector.load %arg6[%c16_171, %c0_172, %c0_173] : memref<64x8x4xf32, #tpu.memory_space<vmem>>, vector<8x8x4xf32>
    %261 = vector.shape_cast %260 : vector<8x8x4xf32> to vector<64x4xf32>
    %c0_174 = arith.constant 0 : index
    %c1280_175 = arith.constant 1280 : index
    %262 = vector.load %arg9[%c0_174, %c1280_175] : memref<32x3200xf32, #tpu.memory_space<vmem>>, vector<4x8xf32>
    %cst_176 = arith.constant dense<0.000000e+00> : vector<64x8xf32>
    %263 = tpu.matmul %261, %262, %cst_176 {dimension_numbers = #tpu.dot_dimension_numbers<[1], [0], [0], [1], [0, 0, 1, 1], [], []>} : vector<64x4xf32>, vector<4x8xf32>, vector<64x8xf32> -> vector<64x8xf32>
    %c0_177 = arith.constant 0 : index
    %c1664_178 = arith.constant 1664 : index
    %264 = vector.load %arg10[%c0_177, %c1664_178] : memref<1x2688xf32, #tpu.memory_space<vmem>>, vector<1x8xf32>
    %265 = vector.broadcast %264 : vector<1x8xf32> to vector<64x8xf32>
    %266 = arith.addf %263, %265 : vector<64x8xf32>
    %cst_179 = arith.constant 0.000000e+00 : f32
    %267 = vector.broadcast %cst_179 : f32 to vector<64x8xf32>
    %268 = arith.maximumf %266, %267 : vector<64x8xf32>
    %c0_180 = arith.constant 0 : index
    %c1408_181 = arith.constant 1408 : index
    %269 = vector.load %arg9[%c0_180, %c1408_181] : memref<32x3200xf32, #tpu.memory_space<vmem>>, vector<8x32xf32>
    %cst_182 = arith.constant dense<0.000000e+00> : vector<64x32xf32>
    %270 = tpu.matmul %268, %269, %cst_182 {dimension_numbers = #tpu.dot_dimension_numbers<[1], [0], [0], [1], [0, 0, 1, 1], [], []>} : vector<64x8xf32>, vector<8x32xf32>, vector<64x32xf32> -> vector<64x32xf32>
    %c0_183 = arith.constant 0 : index
    %c1792_184 = arith.constant 1792 : index
    %271 = vector.load %arg10[%c0_183, %c1792_184] : memref<1x2688xf32, #tpu.memory_space<vmem>>, vector<1x32xf32>
    %272 = vector.broadcast %271 : vector<1x32xf32> to vector<64x32xf32>
    %273 = arith.addf %270, %272 : vector<64x32xf32>
    %cst_185 = arith.constant 0.000000e+00 : f32
    %274 = vector.broadcast %cst_185 : f32 to vector<64x32xf32>
    %275 = arith.maximumf %273, %274 : vector<64x32xf32>
    %276 = vector.extract_strided_slice %92 {offsets = [16, 0], sizes = [8, 32], strides = [1, 1]} : vector<64x32xf32> to vector<8x32xf32>
    %277 = vector.shape_cast %276 : vector<8x32xf32> to vector<1x8x32xf32>
    %278 = vector.broadcast %277 : vector<1x8x32xf32> to vector<8x8x32xf32>
    %279 = arith.addf %91, %278 : vector<8x8x32xf32>
    %cst_186 = arith.constant dense<0.000000e+00> : vector<64x32xf32>
    %280 = tpu.matmul %275, %200, %cst_186 {dimension_numbers = #tpu.dot_dimension_numbers<[1], [0], [0], [1], [0, 0, 1, 1], [], []>} : vector<64x32xf32>, vector<32x32xf32>, vector<64x32xf32> -> vector<64x32xf32>
    %281 = vector.shape_cast %280 : vector<64x32xf32> to vector<8x8x32xf32>
    %282 = arith.addf %279, %281 : vector<8x8x32xf32>
    %cst_187 = arith.constant 0.000000e+00 : f32
    %283 = vector.broadcast %cst_187 : f32 to vector<8x8x32xf32>
    %284 = arith.maximumf %282, %283 : vector<8x8x32xf32>
    %285 = vector.extract_strided_slice %95 {offsets = [0, 2], sizes = [8, 1], strides = [1, 1]} : vector<8x8xf32> to vector<8x1xf32>
    %286 = vector.shape_cast %285 : vector<8x1xf32> to vector<1x8x1xf32>
    %287 = vector.broadcast %286 : vector<1x8x1xf32> to vector<8x8x32xf32>
    %288 = arith.mulf %284, %287 : vector<8x8x32xf32>
    %289 = arith.maximumf %259, %288 : vector<8x8x32xf32>
    %c24_188 = arith.constant 24 : index
    %c0_189 = arith.constant 0 : index
    %c0_190 = arith.constant 0 : index
    %290 = vector.load %arg6[%c24_188, %c0_189, %c0_190] : memref<64x8x4xf32, #tpu.memory_space<vmem>>, vector<8x8x4xf32>
    %291 = vector.shape_cast %290 : vector<8x8x4xf32> to vector<64x4xf32>
    %c0_191 = arith.constant 0 : index
    %c1280_192 = arith.constant 1280 : index
    %292 = vector.load %arg9[%c0_191, %c1280_192] : memref<32x3200xf32, #tpu.memory_space<vmem>>, vector<4x8xf32>
    %cst_193 = arith.constant dense<0.000000e+00> : vector<64x8xf32>
    %293 = tpu.matmul %291, %292, %cst_193 {dimension_numbers = #tpu.dot_dimension_numbers<[1], [0], [0], [1], [0, 0, 1, 1], [], []>} : vector<64x4xf32>, vector<4x8xf32>, vector<64x8xf32> -> vector<64x8xf32>
    %c0_194 = arith.constant 0 : index
    %c1664_195 = arith.constant 1664 : index
    %294 = vector.load %arg10[%c0_194, %c1664_195] : memref<1x2688xf32, #tpu.memory_space<vmem>>, vector<1x8xf32>
    %295 = vector.broadcast %294 : vector<1x8xf32> to vector<64x8xf32>
    %296 = arith.addf %293, %295 : vector<64x8xf32>
    %cst_196 = arith.constant 0.000000e+00 : f32
    %297 = vector.broadcast %cst_196 : f32 to vector<64x8xf32>
    %298 = arith.maximumf %296, %297 : vector<64x8xf32>
    %c0_197 = arith.constant 0 : index
    %c1408_198 = arith.constant 1408 : index
    %299 = vector.load %arg9[%c0_197, %c1408_198] : memref<32x3200xf32, #tpu.memory_space<vmem>>, vector<8x32xf32>
    %cst_199 = arith.constant dense<0.000000e+00> : vector<64x32xf32>
    %300 = tpu.matmul %298, %299, %cst_199 {dimension_numbers = #tpu.dot_dimension_numbers<[1], [0], [0], [1], [0, 0, 1, 1], [], []>} : vector<64x8xf32>, vector<8x32xf32>, vector<64x32xf32> -> vector<64x32xf32>
    %c0_200 = arith.constant 0 : index
    %c1792_201 = arith.constant 1792 : index
    %301 = vector.load %arg10[%c0_200, %c1792_201] : memref<1x2688xf32, #tpu.memory_space<vmem>>, vector<1x32xf32>
    %302 = vector.broadcast %301 : vector<1x32xf32> to vector<64x32xf32>
    %303 = arith.addf %300, %302 : vector<64x32xf32>
    %cst_202 = arith.constant 0.000000e+00 : f32
    %304 = vector.broadcast %cst_202 : f32 to vector<64x32xf32>
    %305 = arith.maximumf %303, %304 : vector<64x32xf32>
    %306 = vector.extract_strided_slice %92 {offsets = [24, 0], sizes = [8, 32], strides = [1, 1]} : vector<64x32xf32> to vector<8x32xf32>
    %307 = vector.shape_cast %306 : vector<8x32xf32> to vector<1x8x32xf32>
    %308 = vector.broadcast %307 : vector<1x8x32xf32> to vector<8x8x32xf32>
    %309 = arith.addf %91, %308 : vector<8x8x32xf32>
    %cst_203 = arith.constant dense<0.000000e+00> : vector<64x32xf32>
    %310 = tpu.matmul %305, %200, %cst_203 {dimension_numbers = #tpu.dot_dimension_numbers<[1], [0], [0], [1], [0, 0, 1, 1], [], []>} : vector<64x32xf32>, vector<32x32xf32>, vector<64x32xf32> -> vector<64x32xf32>
    %311 = vector.shape_cast %310 : vector<64x32xf32> to vector<8x8x32xf32>
    %312 = arith.addf %309, %311 : vector<8x8x32xf32>
    %cst_204 = arith.constant 0.000000e+00 : f32
    %313 = vector.broadcast %cst_204 : f32 to vector<8x8x32xf32>
    %314 = arith.maximumf %312, %313 : vector<8x8x32xf32>
    %315 = vector.extract_strided_slice %95 {offsets = [0, 3], sizes = [8, 1], strides = [1, 1]} : vector<8x8xf32> to vector<8x1xf32>
    %316 = vector.shape_cast %315 : vector<8x1xf32> to vector<1x8x1xf32>
    %317 = vector.broadcast %316 : vector<1x8x1xf32> to vector<8x8x32xf32>
    %318 = arith.mulf %314, %317 : vector<8x8x32xf32>
    %319 = arith.maximumf %289, %318 : vector<8x8x32xf32>
    %c32 = arith.constant 32 : index
    %c0_205 = arith.constant 0 : index
    %c0_206 = arith.constant 0 : index
    %320 = vector.load %arg6[%c32, %c0_205, %c0_206] : memref<64x8x4xf32, #tpu.memory_space<vmem>>, vector<8x8x4xf32>
    %321 = vector.shape_cast %320 : vector<8x8x4xf32> to vector<64x4xf32>
    %c0_207 = arith.constant 0 : index
    %c1280_208 = arith.constant 1280 : index
    %322 = vector.load %arg9[%c0_207, %c1280_208] : memref<32x3200xf32, #tpu.memory_space<vmem>>, vector<4x8xf32>
    %cst_209 = arith.constant dense<0.000000e+00> : vector<64x8xf32>
    %323 = tpu.matmul %321, %322, %cst_209 {dimension_numbers = #tpu.dot_dimension_numbers<[1], [0], [0], [1], [0, 0, 1, 1], [], []>} : vector<64x4xf32>, vector<4x8xf32>, vector<64x8xf32> -> vector<64x8xf32>
    %c0_210 = arith.constant 0 : index
    %c1664_211 = arith.constant 1664 : index
    %324 = vector.load %arg10[%c0_210, %c1664_211] : memref<1x2688xf32, #tpu.memory_space<vmem>>, vector<1x8xf32>
    %325 = vector.broadcast %324 : vector<1x8xf32> to vector<64x8xf32>
    %326 = arith.addf %323, %325 : vector<64x8xf32>
    %cst_212 = arith.constant 0.000000e+00 : f32
    %327 = vector.broadcast %cst_212 : f32 to vector<64x8xf32>
    %328 = arith.maximumf %326, %327 : vector<64x8xf32>
    %c0_213 = arith.constant 0 : index
    %c1408_214 = arith.constant 1408 : index
    %329 = vector.load %arg9[%c0_213, %c1408_214] : memref<32x3200xf32, #tpu.memory_space<vmem>>, vector<8x32xf32>
    %cst_215 = arith.constant dense<0.000000e+00> : vector<64x32xf32>
    %330 = tpu.matmul %328, %329, %cst_215 {dimension_numbers = #tpu.dot_dimension_numbers<[1], [0], [0], [1], [0, 0, 1, 1], [], []>} : vector<64x8xf32>, vector<8x32xf32>, vector<64x32xf32> -> vector<64x32xf32>
    %c0_216 = arith.constant 0 : index
    %c1792_217 = arith.constant 1792 : index
    %331 = vector.load %arg10[%c0_216, %c1792_217] : memref<1x2688xf32, #tpu.memory_space<vmem>>, vector<1x32xf32>
    %332 = vector.broadcast %331 : vector<1x32xf32> to vector<64x32xf32>
    %333 = arith.addf %330, %332 : vector<64x32xf32>
    %cst_218 = arith.constant 0.000000e+00 : f32
    %334 = vector.broadcast %cst_218 : f32 to vector<64x32xf32>
    %335 = arith.maximumf %333, %334 : vector<64x32xf32>
    %336 = vector.extract_strided_slice %92 {offsets = [32, 0], sizes = [8, 32], strides = [1, 1]} : vector<64x32xf32> to vector<8x32xf32>
    %337 = vector.shape_cast %336 : vector<8x32xf32> to vector<1x8x32xf32>
    %338 = vector.broadcast %337 : vector<1x8x32xf32> to vector<8x8x32xf32>
    %339 = arith.addf %91, %338 : vector<8x8x32xf32>
    %cst_219 = arith.constant dense<0.000000e+00> : vector<64x32xf32>
    %340 = tpu.matmul %335, %200, %cst_219 {dimension_numbers = #tpu.dot_dimension_numbers<[1], [0], [0], [1], [0, 0, 1, 1], [], []>} : vector<64x32xf32>, vector<32x32xf32>, vector<64x32xf32> -> vector<64x32xf32>
    %341 = vector.shape_cast %340 : vector<64x32xf32> to vector<8x8x32xf32>
    %342 = arith.addf %339, %341 : vector<8x8x32xf32>
    %cst_220 = arith.constant 0.000000e+00 : f32
    %343 = vector.broadcast %cst_220 : f32 to vector<8x8x32xf32>
    %344 = arith.maximumf %342, %343 : vector<8x8x32xf32>
    %345 = vector.extract_strided_slice %95 {offsets = [0, 4], sizes = [8, 1], strides = [1, 1]} : vector<8x8xf32> to vector<8x1xf32>
    %346 = vector.shape_cast %345 : vector<8x1xf32> to vector<1x8x1xf32>
    %347 = vector.broadcast %346 : vector<1x8x1xf32> to vector<8x8x32xf32>
    %348 = arith.mulf %344, %347 : vector<8x8x32xf32>
    %349 = arith.maximumf %319, %348 : vector<8x8x32xf32>
    %c40 = arith.constant 40 : index
    %c0_221 = arith.constant 0 : index
    %c0_222 = arith.constant 0 : index
    %350 = vector.load %arg6[%c40, %c0_221, %c0_222] : memref<64x8x4xf32, #tpu.memory_space<vmem>>, vector<8x8x4xf32>
    %351 = vector.shape_cast %350 : vector<8x8x4xf32> to vector<64x4xf32>
    %c0_223 = arith.constant 0 : index
    %c1280_224 = arith.constant 1280 : index
    %352 = vector.load %arg9[%c0_223, %c1280_224] : memref<32x3200xf32, #tpu.memory_space<vmem>>, vector<4x8xf32>
    %cst_225 = arith.constant dense<0.000000e+00> : vector<64x8xf32>
    %353 = tpu.matmul %351, %352, %cst_225 {dimension_numbers = #tpu.dot_dimension_numbers<[1], [0], [0], [1], [0, 0, 1, 1], [], []>} : vector<64x4xf32>, vector<4x8xf32>, vector<64x8xf32> -> vector<64x8xf32>
    %c0_226 = arith.constant 0 : index
    %c1664_227 = arith.constant 1664 : index
    %354 = vector.load %arg10[%c0_226, %c1664_227] : memref<1x2688xf32, #tpu.memory_space<vmem>>, vector<1x8xf32>
    %355 = vector.broadcast %354 : vector<1x8xf32> to vector<64x8xf32>
    %356 = arith.addf %353, %355 : vector<64x8xf32>
    %cst_228 = arith.constant 0.000000e+00 : f32
    %357 = vector.broadcast %cst_228 : f32 to vector<64x8xf32>
    %358 = arith.maximumf %356, %357 : vector<64x8xf32>
    %c0_229 = arith.constant 0 : index
    %c1408_230 = arith.constant 1408 : index
    %359 = vector.load %arg9[%c0_229, %c1408_230] : memref<32x3200xf32, #tpu.memory_space<vmem>>, vector<8x32xf32>
    %cst_231 = arith.constant dense<0.000000e+00> : vector<64x32xf32>
    %360 = tpu.matmul %358, %359, %cst_231 {dimension_numbers = #tpu.dot_dimension_numbers<[1], [0], [0], [1], [0, 0, 1, 1], [], []>} : vector<64x8xf32>, vector<8x32xf32>, vector<64x32xf32> -> vector<64x32xf32>
    %c0_232 = arith.constant 0 : index
    %c1792_233 = arith.constant 1792 : index
    %361 = vector.load %arg10[%c0_232, %c1792_233] : memref<1x2688xf32, #tpu.memory_space<vmem>>, vector<1x32xf32>
    %362 = vector.broadcast %361 : vector<1x32xf32> to vector<64x32xf32>
    %363 = arith.addf %360, %362 : vector<64x32xf32>
    %cst_234 = arith.constant 0.000000e+00 : f32
    %364 = vector.broadcast %cst_234 : f32 to vector<64x32xf32>
    %365 = arith.maximumf %363, %364 : vector<64x32xf32>
    %366 = vector.extract_strided_slice %92 {offsets = [40, 0], sizes = [8, 32], strides = [1, 1]} : vector<64x32xf32> to vector<8x32xf32>
    %367 = vector.shape_cast %366 : vector<8x32xf32> to vector<1x8x32xf32>
    %368 = vector.broadcast %367 : vector<1x8x32xf32> to vector<8x8x32xf32>
    %369 = arith.addf %91, %368 : vector<8x8x32xf32>
    %cst_235 = arith.constant dense<0.000000e+00> : vector<64x32xf32>
    %370 = tpu.matmul %365, %200, %cst_235 {dimension_numbers = #tpu.dot_dimension_numbers<[1], [0], [0], [1], [0, 0, 1, 1], [], []>} : vector<64x32xf32>, vector<32x32xf32>, vector<64x32xf32> -> vector<64x32xf32>
    %371 = vector.shape_cast %370 : vector<64x32xf32> to vector<8x8x32xf32>
    %372 = arith.addf %369, %371 : vector<8x8x32xf32>
    %cst_236 = arith.constant 0.000000e+00 : f32
    %373 = vector.broadcast %cst_236 : f32 to vector<8x8x32xf32>
    %374 = arith.maximumf %372, %373 : vector<8x8x32xf32>
    %375 = vector.extract_strided_slice %95 {offsets = [0, 5], sizes = [8, 1], strides = [1, 1]} : vector<8x8xf32> to vector<8x1xf32>
    %376 = vector.shape_cast %375 : vector<8x1xf32> to vector<1x8x1xf32>
    %377 = vector.broadcast %376 : vector<1x8x1xf32> to vector<8x8x32xf32>
    %378 = arith.mulf %374, %377 : vector<8x8x32xf32>
    %379 = arith.maximumf %349, %378 : vector<8x8x32xf32>
    %c48 = arith.constant 48 : index
    %c0_237 = arith.constant 0 : index
    %c0_238 = arith.constant 0 : index
    %380 = vector.load %arg6[%c48, %c0_237, %c0_238] : memref<64x8x4xf32, #tpu.memory_space<vmem>>, vector<8x8x4xf32>
    %381 = vector.shape_cast %380 : vector<8x8x4xf32> to vector<64x4xf32>
    %c0_239 = arith.constant 0 : index
    %c1280_240 = arith.constant 1280 : index
    %382 = vector.load %arg9[%c0_239, %c1280_240] : memref<32x3200xf32, #tpu.memory_space<vmem>>, vector<4x8xf32>
    %cst_241 = arith.constant dense<0.000000e+00> : vector<64x8xf32>
    %383 = tpu.matmul %381, %382, %cst_241 {dimension_numbers = #tpu.dot_dimension_numbers<[1], [0], [0], [1], [0, 0, 1, 1], [], []>} : vector<64x4xf32>, vector<4x8xf32>, vector<64x8xf32> -> vector<64x8xf32>
    %c0_242 = arith.constant 0 : index
    %c1664_243 = arith.constant 1664 : index
    %384 = vector.load %arg10[%c0_242, %c1664_243] : memref<1x2688xf32, #tpu.memory_space<vmem>>, vector<1x8xf32>
    %385 = vector.broadcast %384 : vector<1x8xf32> to vector<64x8xf32>
    %386 = arith.addf %383, %385 : vector<64x8xf32>
    %cst_244 = arith.constant 0.000000e+00 : f32
    %387 = vector.broadcast %cst_244 : f32 to vector<64x8xf32>
    %388 = arith.maximumf %386, %387 : vector<64x8xf32>
    %c0_245 = arith.constant 0 : index
    %c1408_246 = arith.constant 1408 : index
    %389 = vector.load %arg9[%c0_245, %c1408_246] : memref<32x3200xf32, #tpu.memory_space<vmem>>, vector<8x32xf32>
    %cst_247 = arith.constant dense<0.000000e+00> : vector<64x32xf32>
    %390 = tpu.matmul %388, %389, %cst_247 {dimension_numbers = #tpu.dot_dimension_numbers<[1], [0], [0], [1], [0, 0, 1, 1], [], []>} : vector<64x8xf32>, vector<8x32xf32>, vector<64x32xf32> -> vector<64x32xf32>
    %c0_248 = arith.constant 0 : index
    %c1792_249 = arith.constant 1792 : index
    %391 = vector.load %arg10[%c0_248, %c1792_249] : memref<1x2688xf32, #tpu.memory_space<vmem>>, vector<1x32xf32>
    %392 = vector.broadcast %391 : vector<1x32xf32> to vector<64x32xf32>
    %393 = arith.addf %390, %392 : vector<64x32xf32>
    %cst_250 = arith.constant 0.000000e+00 : f32
    %394 = vector.broadcast %cst_250 : f32 to vector<64x32xf32>
    %395 = arith.maximumf %393, %394 : vector<64x32xf32>
    %396 = vector.extract_strided_slice %92 {offsets = [48, 0], sizes = [8, 32], strides = [1, 1]} : vector<64x32xf32> to vector<8x32xf32>
    %397 = vector.shape_cast %396 : vector<8x32xf32> to vector<1x8x32xf32>
    %398 = vector.broadcast %397 : vector<1x8x32xf32> to vector<8x8x32xf32>
    %399 = arith.addf %91, %398 : vector<8x8x32xf32>
    %cst_251 = arith.constant dense<0.000000e+00> : vector<64x32xf32>
    %400 = tpu.matmul %395, %200, %cst_251 {dimension_numbers = #tpu.dot_dimension_numbers<[1], [0], [0], [1], [0, 0, 1, 1], [], []>} : vector<64x32xf32>, vector<32x32xf32>, vector<64x32xf32> -> vector<64x32xf32>
    %401 = vector.shape_cast %400 : vector<64x32xf32> to vector<8x8x32xf32>
    %402 = arith.addf %399, %401 : vector<8x8x32xf32>
    %cst_252 = arith.constant 0.000000e+00 : f32
    %403 = vector.broadcast %cst_252 : f32 to vector<8x8x32xf32>
    %404 = arith.maximumf %402, %403 : vector<8x8x32xf32>
    %405 = vector.extract_strided_slice %95 {offsets = [0, 6], sizes = [8, 1], strides = [1, 1]} : vector<8x8xf32> to vector<8x1xf32>
    %406 = vector.shape_cast %405 : vector<8x1xf32> to vector<1x8x1xf32>
    %407 = vector.broadcast %406 : vector<1x8x1xf32> to vector<8x8x32xf32>
    %408 = arith.mulf %404, %407 : vector<8x8x32xf32>
    %409 = arith.maximumf %379, %408 : vector<8x8x32xf32>
    %c56 = arith.constant 56 : index
    %c0_253 = arith.constant 0 : index
    %c0_254 = arith.constant 0 : index
    %410 = vector.load %arg6[%c56, %c0_253, %c0_254] : memref<64x8x4xf32, #tpu.memory_space<vmem>>, vector<8x8x4xf32>
    %411 = vector.shape_cast %410 : vector<8x8x4xf32> to vector<64x4xf32>
    %c0_255 = arith.constant 0 : index
    %c1280_256 = arith.constant 1280 : index
    %412 = vector.load %arg9[%c0_255, %c1280_256] : memref<32x3200xf32, #tpu.memory_space<vmem>>, vector<4x8xf32>
    %cst_257 = arith.constant dense<0.000000e+00> : vector<64x8xf32>
    %413 = tpu.matmul %411, %412, %cst_257 {dimension_numbers = #tpu.dot_dimension_numbers<[1], [0], [0], [1], [0, 0, 1, 1], [], []>} : vector<64x4xf32>, vector<4x8xf32>, vector<64x8xf32> -> vector<64x8xf32>
    %c0_258 = arith.constant 0 : index
    %c1664_259 = arith.constant 1664 : index
    %414 = vector.load %arg10[%c0_258, %c1664_259] : memref<1x2688xf32, #tpu.memory_space<vmem>>, vector<1x8xf32>
    %415 = vector.broadcast %414 : vector<1x8xf32> to vector<64x8xf32>
    %416 = arith.addf %413, %415 : vector<64x8xf32>
    %cst_260 = arith.constant 0.000000e+00 : f32
    %417 = vector.broadcast %cst_260 : f32 to vector<64x8xf32>
    %418 = arith.maximumf %416, %417 : vector<64x8xf32>
    %c0_261 = arith.constant 0 : index
    %c1408_262 = arith.constant 1408 : index
    %419 = vector.load %arg9[%c0_261, %c1408_262] : memref<32x3200xf32, #tpu.memory_space<vmem>>, vector<8x32xf32>
    %cst_263 = arith.constant dense<0.000000e+00> : vector<64x32xf32>
    %420 = tpu.matmul %418, %419, %cst_263 {dimension_numbers = #tpu.dot_dimension_numbers<[1], [0], [0], [1], [0, 0, 1, 1], [], []>} : vector<64x8xf32>, vector<8x32xf32>, vector<64x32xf32> -> vector<64x32xf32>
    %c0_264 = arith.constant 0 : index
    %c1792_265 = arith.constant 1792 : index
    %421 = vector.load %arg10[%c0_264, %c1792_265] : memref<1x2688xf32, #tpu.memory_space<vmem>>, vector<1x32xf32>
    %422 = vector.broadcast %421 : vector<1x32xf32> to vector<64x32xf32>
    %423 = arith.addf %420, %422 : vector<64x32xf32>
    %cst_266 = arith.constant 0.000000e+00 : f32
    %424 = vector.broadcast %cst_266 : f32 to vector<64x32xf32>
    %425 = arith.maximumf %423, %424 : vector<64x32xf32>
    %426 = vector.extract_strided_slice %92 {offsets = [56, 0], sizes = [8, 32], strides = [1, 1]} : vector<64x32xf32> to vector<8x32xf32>
    %427 = vector.shape_cast %426 : vector<8x32xf32> to vector<1x8x32xf32>
    %428 = vector.broadcast %427 : vector<1x8x32xf32> to vector<8x8x32xf32>
    %429 = arith.addf %91, %428 : vector<8x8x32xf32>
    %cst_267 = arith.constant dense<0.000000e+00> : vector<64x32xf32>
    %430 = tpu.matmul %425, %200, %cst_267 {dimension_numbers = #tpu.dot_dimension_numbers<[1], [0], [0], [1], [0, 0, 1, 1], [], []>} : vector<64x32xf32>, vector<32x32xf32>, vector<64x32xf32> -> vector<64x32xf32>
    %431 = vector.shape_cast %430 : vector<64x32xf32> to vector<8x8x32xf32>
    %432 = arith.addf %429, %431 : vector<8x8x32xf32>
    %cst_268 = arith.constant 0.000000e+00 : f32
    %433 = vector.broadcast %cst_268 : f32 to vector<8x8x32xf32>
    %434 = arith.maximumf %432, %433 : vector<8x8x32xf32>
    %435 = vector.extract_strided_slice %95 {offsets = [0, 7], sizes = [8, 1], strides = [1, 1]} : vector<8x8xf32> to vector<8x1xf32>
    %436 = vector.shape_cast %435 : vector<8x1xf32> to vector<1x8x1xf32>
    %437 = vector.broadcast %436 : vector<1x8x1xf32> to vector<8x8x32xf32>
    %438 = arith.mulf %434, %437 : vector<8x8x32xf32>
    %439 = arith.maximumf %409, %438 : vector<8x8x32xf32>
    %c0_269 = arith.constant 0 : index
    %c1920_270 = arith.constant 1920 : index
    %440 = vector.load %arg9[%c0_269, %c1920_270] : memref<32x3200xf32, #tpu.memory_space<vmem>>, vector<32x32xf32>
    %cst_271 = arith.constant dense<0.000000e+00> : vector<64x32xf32>
    %441 = tpu.matmul %66, %440, %cst_271 {dimension_numbers = #tpu.dot_dimension_numbers<[1], [0], [0], [1], [0, 0, 1, 1], [], []>} : vector<64x32xf32>, vector<32x32xf32>, vector<64x32xf32> -> vector<64x32xf32>
    %442 = arith.addf %93, %441 : vector<64x32xf32>
    %443 = vector.shape_cast %199 : vector<8x8x32xf32> to vector<64x32xf32>
    %c0_272 = arith.constant 0 : index
    %c2048 = arith.constant 2048 : index
    %444 = vector.load %arg9[%c0_272, %c2048] : memref<32x3200xf32, #tpu.memory_space<vmem>>, vector<32x32xf32>
    %cst_273 = arith.constant dense<0.000000e+00> : vector<64x32xf32>
    %445 = tpu.matmul %443, %444, %cst_273 {dimension_numbers = #tpu.dot_dimension_numbers<[1], [0], [0], [1], [0, 0, 1, 1], [], []>} : vector<64x32xf32>, vector<32x32xf32>, vector<64x32xf32> -> vector<64x32xf32>
    %446 = arith.addf %442, %445 : vector<64x32xf32>
    %447 = vector.shape_cast %439 : vector<8x8x32xf32> to vector<64x32xf32>
    %c0_274 = arith.constant 0 : index
    %c2176 = arith.constant 2176 : index
    %448 = vector.load %arg9[%c0_274, %c2176] : memref<32x3200xf32, #tpu.memory_space<vmem>>, vector<32x32xf32>
    %cst_275 = arith.constant dense<0.000000e+00> : vector<64x32xf32>
    %449 = tpu.matmul %447, %448, %cst_275 {dimension_numbers = #tpu.dot_dimension_numbers<[1], [0], [0], [1], [0, 0, 1, 1], [], []>} : vector<64x32xf32>, vector<32x32xf32>, vector<64x32xf32> -> vector<64x32xf32>
    %450 = arith.addf %446, %449 : vector<64x32xf32>
    %cst_276 = arith.constant 0.000000e+00 : f32
    %451 = vector.broadcast %cst_276 : f32 to vector<64x32xf32>
    %452 = arith.maximumf %450, %451 : vector<64x32xf32>
    %453 = arith.addf %82, %452 : vector<64x32xf32>
    %454 = vector.shape_cast %453 : vector<64x32xf32> to vector<8x8x32xf32>
    %455 = vector.extract_strided_slice %454 {offsets = [0, 0, 0], sizes = [1, 8, 32], strides = [1, 1, 1]} : vector<8x8x32xf32> to vector<1x8x32xf32>
    %456 = vector.shape_cast %455 : vector<1x8x32xf32> to vector<8x32xf32>
    %457 = vector.extract_strided_slice %95 {offsets = [0, 0], sizes = [8, 1], strides = [1, 1]} : vector<8x8xf32> to vector<8x1xf32>
    %458 = vector.broadcast %457 : vector<8x1xf32> to vector<8x32xf32>
    %459 = arith.mulf %456, %458 : vector<8x32xf32>
    %460 = vector.extract_strided_slice %454 {offsets = [1, 0, 0], sizes = [1, 8, 32], strides = [1, 1, 1]} : vector<8x8x32xf32> to vector<1x8x32xf32>
    %461 = vector.shape_cast %460 : vector<1x8x32xf32> to vector<8x32xf32>
    %462 = vector.extract_strided_slice %95 {offsets = [0, 1], sizes = [8, 1], strides = [1, 1]} : vector<8x8xf32> to vector<8x1xf32>
    %463 = vector.broadcast %462 : vector<8x1xf32> to vector<8x32xf32>
    %464 = arith.mulf %461, %463 : vector<8x32xf32>
    %465 = arith.maximumf %459, %464 : vector<8x32xf32>
    %466 = vector.extract_strided_slice %454 {offsets = [2, 0, 0], sizes = [1, 8, 32], strides = [1, 1, 1]} : vector<8x8x32xf32> to vector<1x8x32xf32>
    %467 = vector.shape_cast %466 : vector<1x8x32xf32> to vector<8x32xf32>
    %468 = vector.extract_strided_slice %95 {offsets = [0, 2], sizes = [8, 1], strides = [1, 1]} : vector<8x8xf32> to vector<8x1xf32>
    %469 = vector.broadcast %468 : vector<8x1xf32> to vector<8x32xf32>
    %470 = arith.mulf %467, %469 : vector<8x32xf32>
    %471 = arith.maximumf %465, %470 : vector<8x32xf32>
    %472 = vector.extract_strided_slice %454 {offsets = [3, 0, 0], sizes = [1, 8, 32], strides = [1, 1, 1]} : vector<8x8x32xf32> to vector<1x8x32xf32>
    %473 = vector.shape_cast %472 : vector<1x8x32xf32> to vector<8x32xf32>
    %474 = vector.extract_strided_slice %95 {offsets = [0, 3], sizes = [8, 1], strides = [1, 1]} : vector<8x8xf32> to vector<8x1xf32>
    %475 = vector.broadcast %474 : vector<8x1xf32> to vector<8x32xf32>
    %476 = arith.mulf %473, %475 : vector<8x32xf32>
    %477 = arith.maximumf %471, %476 : vector<8x32xf32>
    %478 = vector.extract_strided_slice %454 {offsets = [4, 0, 0], sizes = [1, 8, 32], strides = [1, 1, 1]} : vector<8x8x32xf32> to vector<1x8x32xf32>
    %479 = vector.shape_cast %478 : vector<1x8x32xf32> to vector<8x32xf32>
    %480 = vector.extract_strided_slice %95 {offsets = [0, 4], sizes = [8, 1], strides = [1, 1]} : vector<8x8xf32> to vector<8x1xf32>
    %481 = vector.broadcast %480 : vector<8x1xf32> to vector<8x32xf32>
    %482 = arith.mulf %479, %481 : vector<8x32xf32>
    %483 = arith.maximumf %477, %482 : vector<8x32xf32>
    %484 = vector.extract_strided_slice %454 {offsets = [5, 0, 0], sizes = [1, 8, 32], strides = [1, 1, 1]} : vector<8x8x32xf32> to vector<1x8x32xf32>
    %485 = vector.shape_cast %484 : vector<1x8x32xf32> to vector<8x32xf32>
    %486 = vector.extract_strided_slice %95 {offsets = [0, 5], sizes = [8, 1], strides = [1, 1]} : vector<8x8xf32> to vector<8x1xf32>
    %487 = vector.broadcast %486 : vector<8x1xf32> to vector<8x32xf32>
    %488 = arith.mulf %485, %487 : vector<8x32xf32>
    %489 = arith.maximumf %483, %488 : vector<8x32xf32>
    %490 = vector.extract_strided_slice %454 {offsets = [6, 0, 0], sizes = [1, 8, 32], strides = [1, 1, 1]} : vector<8x8x32xf32> to vector<1x8x32xf32>
    %491 = vector.shape_cast %490 : vector<1x8x32xf32> to vector<8x32xf32>
    %492 = vector.extract_strided_slice %95 {offsets = [0, 6], sizes = [8, 1], strides = [1, 1]} : vector<8x8xf32> to vector<8x1xf32>
    %493 = vector.broadcast %492 : vector<8x1xf32> to vector<8x32xf32>
    %494 = arith.mulf %491, %493 : vector<8x32xf32>
    %495 = arith.maximumf %489, %494 : vector<8x32xf32>
    %496 = vector.extract_strided_slice %454 {offsets = [7, 0, 0], sizes = [1, 8, 32], strides = [1, 1, 1]} : vector<8x8x32xf32> to vector<1x8x32xf32>
    %497 = vector.shape_cast %496 : vector<1x8x32xf32> to vector<8x32xf32>
    %498 = vector.extract_strided_slice %95 {offsets = [0, 7], sizes = [8, 1], strides = [1, 1]} : vector<8x8xf32> to vector<8x1xf32>
    %499 = vector.broadcast %498 : vector<8x1xf32> to vector<8x32xf32>
    %500 = arith.mulf %497, %499 : vector<8x32xf32>
    %501 = arith.maximumf %495, %500 : vector<8x32xf32>
    %c0_277 = arith.constant 0 : index
    %c2304 = arith.constant 2304 : index
    %502 = vector.load %arg9[%c0_277, %c2304] : memref<32x3200xf32, #tpu.memory_space<vmem>>, vector<32x32xf32>
    %cst_278 = arith.constant dense<0.000000e+00> : vector<8x32xf32>
    %503 = tpu.matmul %14, %502, %cst_278 {dimension_numbers = #tpu.dot_dimension_numbers<[1], [0], [0], [1], [0, 0, 1, 1], [], []>} : vector<8x32xf32>, vector<32x32xf32>, vector<8x32xf32> -> vector<8x32xf32>
    %c0_279 = arith.constant 0 : index
    %c2432 = arith.constant 2432 : index
    %504 = vector.load %arg9[%c0_279, %c2432] : memref<32x3200xf32, #tpu.memory_space<vmem>>, vector<32x32xf32>
    %cst_280 = arith.constant dense<0.000000e+00> : vector<8x32xf32>
    %505 = tpu.matmul %50, %504, %cst_280 {dimension_numbers = #tpu.dot_dimension_numbers<[1], [0], [0], [1], [0, 0, 1, 1], [], []>} : vector<8x32xf32>, vector<32x32xf32>, vector<8x32xf32> -> vector<8x32xf32>
    %506 = arith.addf %503, %505 : vector<8x32xf32>
    %c0_281 = arith.constant 0 : index
    %c2560 = arith.constant 2560 : index
    %507 = vector.load %arg9[%c0_281, %c2560] : memref<32x3200xf32, #tpu.memory_space<vmem>>, vector<32x32xf32>
    %cst_282 = arith.constant dense<0.000000e+00> : vector<8x32xf32>
    %508 = tpu.matmul %501, %507, %cst_282 {dimension_numbers = #tpu.dot_dimension_numbers<[1], [0], [0], [1], [0, 0, 1, 1], [], []>} : vector<8x32xf32>, vector<32x32xf32>, vector<8x32xf32> -> vector<8x32xf32>
    %509 = arith.addf %506, %508 : vector<8x32xf32>
    %c0_283 = arith.constant 0 : index
    %c2048_284 = arith.constant 2048 : index
    %510 = vector.load %arg10[%c0_283, %c2048_284] : memref<1x2688xf32, #tpu.memory_space<vmem>>, vector<1x32xf32>
    %511 = vector.broadcast %510 : vector<1x32xf32> to vector<8x32xf32>
    %512 = arith.addf %509, %511 : vector<8x32xf32>
    %cst_285 = arith.constant 0.000000e+00 : f32
    %513 = vector.broadcast %cst_285 : f32 to vector<8x32xf32>
    %514 = arith.maximumf %512, %513 : vector<8x32xf32>
    %c0_286 = arith.constant 0 : index
    %c2688 = arith.constant 2688 : index
    %515 = vector.load %arg9[%c0_286, %c2688] : memref<32x3200xf32, #tpu.memory_space<vmem>>, vector<32x32xf32>
    %cst_287 = arith.constant dense<0.000000e+00> : vector<8x32xf32>
    %516 = tpu.matmul %514, %515, %cst_287 {dimension_numbers = #tpu.dot_dimension_numbers<[1], [0], [0], [1], [0, 0, 1, 1], [], []>} : vector<8x32xf32>, vector<32x32xf32>, vector<8x32xf32> -> vector<8x32xf32>
    %c0_288 = arith.constant 0 : index
    %c2176_289 = arith.constant 2176 : index
    %517 = vector.load %arg10[%c0_288, %c2176_289] : memref<1x2688xf32, #tpu.memory_space<vmem>>, vector<1x32xf32>
    %518 = vector.broadcast %517 : vector<1x32xf32> to vector<8x32xf32>
    %519 = arith.addf %516, %518 : vector<8x32xf32>
    %cst_290 = arith.constant 0.000000e+00 : f32
    %520 = vector.broadcast %cst_290 : f32 to vector<8x32xf32>
    %521 = arith.maximumf %519, %520 : vector<8x32xf32>
    %c0_291 = arith.constant 0 : index
    %c2816 = arith.constant 2816 : index
    %522 = vector.load %arg9[%c0_291, %c2816] : memref<32x3200xf32, #tpu.memory_space<vmem>>, vector<32x32xf32>
    %cst_292 = arith.constant dense<0.000000e+00> : vector<8x32xf32>
    %523 = tpu.matmul %521, %522, %cst_292 {dimension_numbers = #tpu.dot_dimension_numbers<[1], [0], [0], [1], [0, 0, 1, 1], [], []>} : vector<8x32xf32>, vector<32x32xf32>, vector<8x32xf32> -> vector<8x32xf32>
    %c0_293 = arith.constant 0 : index
    %c2304_294 = arith.constant 2304 : index
    %524 = vector.load %arg10[%c0_293, %c2304_294] : memref<1x2688xf32, #tpu.memory_space<vmem>>, vector<1x32xf32>
    %525 = vector.broadcast %524 : vector<1x32xf32> to vector<8x32xf32>
    %526 = arith.addf %523, %525 : vector<8x32xf32>
    %cst_295 = arith.constant 0.000000e+00 : f32
    %527 = vector.broadcast %cst_295 : f32 to vector<8x32xf32>
    %528 = arith.maximumf %526, %527 : vector<8x32xf32>
    %c0_296 = arith.constant 0 : index
    %c2944 = arith.constant 2944 : index
    %529 = vector.load %arg9[%c0_296, %c2944] : memref<32x3200xf32, #tpu.memory_space<vmem>>, vector<32x32xf32>
    %cst_297 = arith.constant dense<0.000000e+00> : vector<8x32xf32>
    %530 = tpu.matmul %528, %529, %cst_297 {dimension_numbers = #tpu.dot_dimension_numbers<[1], [0], [0], [1], [0, 0, 1, 1], [], []>} : vector<8x32xf32>, vector<32x32xf32>, vector<8x32xf32> -> vector<8x32xf32>
    %c0_298 = arith.constant 0 : index
    %c2432_299 = arith.constant 2432 : index
    %531 = vector.load %arg10[%c0_298, %c2432_299] : memref<1x2688xf32, #tpu.memory_space<vmem>>, vector<1x32xf32>
    %532 = vector.broadcast %531 : vector<1x32xf32> to vector<8x32xf32>
    %533 = arith.addf %530, %532 : vector<8x32xf32>
    %cst_300 = arith.constant 0.000000e+00 : f32
    %534 = vector.broadcast %cst_300 : f32 to vector<8x32xf32>
    %535 = arith.maximumf %533, %534 : vector<8x32xf32>
    %c0_301 = arith.constant 0 : index
    %c3072 = arith.constant 3072 : index
    %536 = vector.load %arg9[%c0_301, %c3072] : memref<32x3200xf32, #tpu.memory_space<vmem>>, vector<32x128xf32>
    %cst_302 = arith.constant dense<0.000000e+00> : vector<8x128xf32>
    %537 = tpu.matmul %535, %536, %cst_302 {dimension_numbers = #tpu.dot_dimension_numbers<[1], [0], [0], [1], [0, 0, 1, 1], [], []>} : vector<8x32xf32>, vector<32x128xf32>, vector<8x128xf32> -> vector<8x128xf32>
    %c0_303 = arith.constant 0 : index
    %c2560_304 = arith.constant 2560 : index
    %538 = vector.load %arg10[%c0_303, %c2560_304] : memref<1x2688xf32, #tpu.memory_space<vmem>>, vector<1x128xf32>
    %539 = vector.broadcast %538 : vector<1x128xf32> to vector<8x128xf32>
    %540 = arith.addf %537, %539 : vector<8x128xf32>
    %c0_305 = arith.constant 0 : index
    %c0_306 = arith.constant 0 : index
    %541 = vector.load %arg14[%c0_305, %c0_306] : memref<8x128xf32, #tpu.memory_space<vmem>>, vector<8x128xf32>
    tpu.vector_store %arg14[%c0_305, %c0_306], %540 {strides = array<i32>} : memref<8x128xf32, #tpu.memory_space<vmem>>, vector<8x128xf32>,
    return
  }
  func.func @transform_0(%arg0: i32) -> (i32, i32) {
    %c0_i32 = arith.constant 0 : i32
    %c0_i32_0 = arith.constant 0 : i32
    return %arg0, %c0_i32 : i32, i32
  }
  func.func @transform_1(%arg0: i32) -> (i32, i32) {
    %c0_i32 = arith.constant 0 : i32
    %c0_i32_0 = arith.constant 0 : i32
    return %arg0, %c0_i32 : i32, i32
  }
  func.func @transform_2(%arg0: i32) -> (i32, i32, i32) {
    %c0_i32 = arith.constant 0 : i32
    %c0_i32_0 = arith.constant 0 : i32
    %c0_i32_1 = arith.constant 0 : i32
    return %c0_i32, %arg0, %c0_i32_0 : i32, i32, i32
  }
  func.func @transform_3(%arg0: i32) -> (i32, i32, i32) {
    %c0_i32 = arith.constant 0 : i32
    %c0_i32_0 = arith.constant 0 : i32
    %c0_i32_1 = arith.constant 0 : i32
    return %c0_i32, %arg0, %c0_i32_0 : i32, i32, i32
  }
  func.func @transform_4(%arg0: i32) -> (i32, i32, i32) {
    %c0_i32 = arith.constant 0 : i32
    %c0_i32_0 = arith.constant 0 : i32
    %c0_i32_1 = arith.constant 0 : i32
    return %c0_i32, %arg0, %c0_i32_0 : i32, i32, i32
  }
  func.func @transform_5(%arg0: i32) -> (i32, i32, i32) {
    %c0_i32 = arith.constant 0 : i32
    %c0_i32_0 = arith.constant 0 : i32
    %c0_i32_1 = arith.constant 0 : i32
    return %c0_i32, %arg0, %c0_i32_0 : i32, i32, i32
  }
  func.func @transform_6(%arg0: i32) -> (i32, i32) {
    %c0_i32 = arith.constant 0 : i32
    %c0_i32_0 = arith.constant 0 : i32
    return %arg0, %c0_i32 : i32, i32
  }
  func.func @transform_7(%arg0: i32) -> (i32, i32) {
    %c0_i32 = arith.constant 0 : i32
    %c0_i32_0 = arith.constant 0 : i32
    return %arg0, %c0_i32 : i32, i32
  }
  func.func @transform_8(%arg0: i32) -> (i32, i32) {
    %c0_i32 = arith.constant 0 : i32
    %c0_i32_0 = arith.constant 0 : i32
    %c0_i32_1 = arith.constant 0 : i32
    return %c0_i32, %c0_i32_0 : i32, i32
  }
  func.func @transform_9(%arg0: i32) -> (i32, i32) {
    %c0_i32 = arith.constant 0 : i32
    %c0_i32_0 = arith.constant 0 : i32
    %c0_i32_1 = arith.constant 0 : i32
    return %c0_i32, %c0_i32_0 : i32, i32
  }
  func.func @transform_10(%arg0: i32) -> (i32, i32) {
    %c0_i32 = arith.constant 0 : i32
    %c0_i32_0 = arith.constant 0 : i32
    %c0_i32_1 = arith.constant 0 : i32
    return %c0_i32, %c0_i32_0 : i32, i32
  }
  func.func @transform_11(%arg0: i32) -> (i32, i32) {
    %c0_i32 = arith.constant 0 : i32
    %c0_i32_0 = arith.constant 0 : i32
    %c0_i32_1 = arith.constant 0 : i32
    return %c0_i32, %c0_i32_0 : i32, i32
  }
  func.func @transform_12(%arg0: i32) -> (i32, i32) {
    %c0_i32 = arith.constant 0 : i32
    %c0_i32_0 = arith.constant 0 : i32
    %c0_i32_1 = arith.constant 0 : i32
    return %c0_i32, %c0_i32_0 : i32, i32
  }
  func.func @transform_13(%arg0: i32) -> (i32, i32) {
    %c0_i32 = arith.constant 0 : i32
    %c0_i32_0 = arith.constant 0 : i32
    return %arg0, %c0_i32 : i32, i32
  }
}

</mosaic_0001>

<llo_original>
// kernel: forward.1
$region0: #{forward.1}
  #allocation0 [shape = 'u32[]', space=smem, size = 0x4, offset = 0x4, fixed_abs, tag = 'smem constant byte address 0x4 - core index']
  #allocation1 [shape = 'u32[144,128]{1,0:T(1,128)}', space=vmem, size = 0x12000, scoped, tag = 'internal scratch']
  %s0 = inlined_call_operand.vmem [shape: f32[8,5], index: 0, kind: input, shape index: {}]
  %s1 = inlined_call_operand.vmem [shape: f32[8,512], index: 1, kind: input, shape index: {}]
  %s2 = inlined_call_operand.vmem [shape: f32[8,8,3], index: 2, kind: input, shape index: {}]
  %s3 = inlined_call_operand.vmem [shape: f32[32,8,3], index: 3, kind: input, shape index: {}]
  %s4 = inlined_call_operand.vmem [shape: f32[8,8,6], index: 4, kind: input, shape index: {}]
  %s5 = inlined_call_operand.vmem [shape: f32[64,8,4], index: 5, kind: input, shape index: {}]
  %s6 = inlined_call_operand.vmem [shape: f32[8,4], index: 6, kind: input, shape index: {}]
  %s7 = inlined_call_operand.vmem [shape: f32[8,8], index: 7, kind: input, shape index: {}]
  %s8 = inlined_call_operand.vmem [shape: f32[32,3200], index: 8, kind: input, shape index: {}]
  %s9 = inlined_call_operand.vmem [shape: f32[1,2688], index: 9, kind: input, shape index: {}]
  %s10 = inlined_call_operand.vmem [shape: f32[512,128], index: 10, kind: input, shape index: {}]
  %s11 = inlined_call_operand.vmem [shape: f32[128,64], index: 11, kind: input, shape index: {}]
  %s12 = inlined_call_operand.vmem [shape: f32[64,16], index: 12, kind: input, shape index: {}]
  %s13 = inlined_call_operand.hbm [shape: f32[8,128], index: 13, kind: output, shape index: {}]
  %s14 = sld [smem:[#allocation0]]
  $region62: #{forward.1} parent=0
    _
  %s16 = ssub.s32 1, %s14
  %s17 = scalar_select 0, %s16, %s14
  $region1: #{forward.1} parent=0
    #allocation2 [shape = 'u8[4096]{0}', space=vmem, size = 0x1000, scoped, tag = 'output window, operand 0, single buffered']
    #allocation3 [shape = 's32[1]{0}', space=sflag, size = 0x4, scoped, tag = 'scoped memory for forward.1']
    %18 = vsyncpa [#allocation3], 0
    // Predicated region
    $region2: #{forward.1} parent=1 // pred_check
      _
    $region3: #{forward.1} parent=1 // pred_check_branch
      %20 = sbr.rel (0) target = $region5
    $region4: #{forward.1} parent=1 // pred_region
      _
    $region5: #{forward.1} parent=1 // pred_fallthru
      _
    // Predicated region
    $region6: #{forward.1} parent=1 // pred_check
      _
    $region7: #{forward.1} parent=1 // pred_check_branch
      %22 = sbr.rel (0) target = $region9
    $region8: #{forward.1} parent=1 // pred_region
      _
    $region9: #{forward.1} parent=1 // pred_fallthru
      _
    // Predicated region
    $region10: #{forward.1} parent=1 // pred_check
      _
    $region11: #{forward.1} parent=1 // pred_check_branch
      %24 = sbr.rel (0) target = $region13
    $region12: #{forward.1} parent=1 // pred_region
      _
    $region13: #{forward.1} parent=1 // pred_fallthru
      _
    // Predicated region
    $region14: #{forward.1} parent=1 // pred_check
      _
    $region15: #{forward.1} parent=1 // pred_check_branch
      %26 = sbr.rel (0) target = $region17
    $region16: #{forward.1} parent=1 // pred_region
      _
    $region17: #{forward.1} parent=1 // pred_fallthru
      _
    // Predicated region
    $region18: #{forward.1} parent=1 // pred_check
      _
    $region19: #{forward.1} parent=1 // pred_check_branch
      %28 = sbr.rel (0) target = $region21
    $region20: #{forward.1} parent=1 // pred_region
      _
    $region21: #{forward.1} parent=1 // pred_fallthru
      _
    // Predicated region
    $region22: #{forward.1} parent=1 // pred_check
      _
    $region23: #{forward.1} parent=1 // pred_check_branch
      %30 = sbr.rel (0) target = $region25
    $region24: #{forward.1} parent=1 // pred_region
      _
    $region25: #{forward.1} parent=1 // pred_fallthru
      _
    // Predicated region
    $region26: #{forward.1} parent=1 // pred_check
      _
    $region27: #{forward.1} parent=1 // pred_check_branch
      %32 = sbr.rel (0) target = $region29
    $region28: #{forward.1} parent=1 // pred_region
      _
    $region29: #{forward.1} parent=1 // pred_fallthru
      _
    // Predicated region
    $region30: #{forward.1} parent=1 // pred_check
      _
    $region31: #{forward.1} parent=1 // pred_check_branch
      %34 = sbr.rel (0) target = $region33
    $region32: #{forward.1} parent=1 // pred_region
      _
    $region33: #{forward.1} parent=1 // pred_fallthru
      _
    // Predicated region
    $region34: #{forward.1} parent=1 // pred_check
      _
    $region35: #{forward.1} parent=1 // pred_check_branch
      %36 = sbr.rel (0) target = $region37
    $region36: #{forward.1} parent=1 // pred_region
      _
    $region37: #{forward.1} parent=1 // pred_fallthru
      _
    // Predicated region
    $region38: #{forward.1} parent=1 // pred_check
      _
    $region39: #{forward.1} parent=1 // pred_check_branch
      %38 = sbr.rel (0) target = $region41
    $region40: #{forward.1} parent=1 // pred_region
      _
    $region41: #{forward.1} parent=1 // pred_fallthru
      _
    // Predicated region
    $region42: #{forward.1} parent=1 // pred_check
      _
    $region43: #{forward.1} parent=1 // pred_check_branch
      %40 = sbr.rel (0) target = $region45
    $region44: #{forward.1} parent=1 // pred_region
      _
    $region45: #{forward.1} parent=1 // pred_fallthru
      _
    // Predicated region
    $region46: #{forward.1} parent=1 // pred_check
      _
    $region47: #{forward.1} parent=1 // pred_check_branch
      %42 = sbr.rel (0) target = $region49
    $region48: #{forward.1} parent=1 // pred_region
      _
    $region49: #{forward.1} parent=1 // pred_fallthru
      _
    // Predicated region
    $region50: #{forward.1} parent=1 // pred_check
      _
    $region51: #{forward.1} parent=1 // pred_check_branch
      %44 = sbr.rel (0) target = $region53
    $region52: #{forward.1} parent=1 // pred_region
      _
    $region53: #{forward.1} parent=1 // pred_fallthru
      _
    %v45 = vld [vmem:[%s0] sm:$0xff]
    %v46 = vld [vmem:[%s8] sm:$0x1f]
    %v47 = vld [vmem:[%s9] sm:$0x1]
    %v49 = vlaneseq
    %v50 = vshrl.u32 %v49, 7
    %v51 = vsub.s32 0, %v50
    %v52 = vrot.slane %v47, %v51
    %vm54 = vcmask 39936
    %v56 = vsel %vm54, %v45, 0
    %vm58 = vcmask 1044480
    %v60 = vsel %vm58, %v46, 0
    %62 = vmatprep.subr.mxu0 0.0
    %63 = vmatpush1.msra.mxu0 0.0
    %64 = vmatprep.subr.mxu0 0.0
    %65 = vmatpush1.msra.mxu0 0.0
    %66 = vmatprep.subr.mxu0 0.0
    %67 = vmatpush1.msra.mxu0 0.0
    %68 = vmatprep.subr.mxu0 0.0
    %69 = vmatpush1.msra.mxu0 0.0
    %70 = vmatprep.subr.mxu0 0.0
    %71 = vmatpush1.msra.mxu0 0.0
    %72 = vmatprep.subr.mxu0 0.0
    %73 = vmatpush1.msra.mxu0 0.0
    %74 = vmatprep.subr.mxu0 0.0
    %75 = vmatpush1.msra.mxu0 0.0
    %76 = vmatprep.subr.mxu0 0.0
    %77 = vmatpush1.msra.mxu0 0.0
    %78 = vmatprep.subr.mxu0 0.0
    %79 = vmatpush1.msra.mxu0 0.0
    %80 = vmatprep.subr.mxu0 0.0
    %81 = vmatpush1.msra.mxu0 0.0
    %82 = vmatprep.subr.mxu0 0.0
    %83 = vmatpush1.msra.mxu0 0.0
    %84 = vmatprep.subr.mxu0 0.0
    %85 = vmatpush1.msra.mxu0 0.0
    %86 = vmatprep.subr.mxu0 0.0
    %87 = vmatpush1.msra.mxu0 0.0
    %88 = vmatprep.subr.mxu0 0.0
    %89 = vmatpush1.msra.mxu0 0.0
    %90 = vmatprep.subr.mxu0 0.0
    %91 = vmatpush1.msra.mxu0 0.0
    %92 = vmatprep.subr.mxu0 0.0
    %93 = vmatpush1.msra.mxu0 %v60
    %94 = vmatprep.subr.mxu0 0.0
    %95 = vmatpush2.msra.mxu0 0.0
    %96 = vmatprep.subr.mxu0 0.0
    %97 = vmatpush2.msra.mxu0 0.0
    %98 = vmatprep.subr.mxu0 0.0
    %99 = vmatpush2.msra.mxu0 0.0
    %100 = vmatprep.subr.mxu0 0.0
    %101 = vmatpush2.msra.mxu0 0.0
    %102 = vmatprep.subr.mxu0 0.0
    %103 = vmatpush2.msra.mxu0 0.0
    %104 = vmatprep.subr.mxu0 0.0
    %105 = vmatpush2.msra.mxu0 0.0
    %106 = vmatprep.subr.mxu0 0.0
    %107 = vmatpush2.msra.mxu0 0.0
    %108 = vmatprep.subr.mxu0 0.0
    %109 = vmatpush2.msra.mxu0 0.0
    %110 = vmatprep.subr.mxu0 0.0
    %111 = vmatpush2.msra.mxu0 0.0
    %112 = vmatprep.subr.mxu0 0.0
    %113 = vmatpush2.msra.mxu0 0.0
    %114 = vmatprep.subr.mxu0 0.0
    %115 = vmatpush2.msra.mxu0 0.0
    %116 = vmatprep.subr.mxu0 0.0
    %117 = vmatpush2.msra.mxu0 0.0
    %118 = vmatprep.subr.mxu0 0.0
    %119 = vmatpush2.msra.mxu0 0.0
    %120 = vmatprep.subr.mxu0 0.0
    %121 = vmatpush2.msra.mxu0 0.0
    %122 = vmatprep.subr.mxu0 0.0
    %123 = vmatpush2.msra.mxu0 0.0
    %124 = vmatprep.subr.mxu0 0.0
    %125 = vmatpush2.msra.mxu0 0.0
    %126 = vmatprep.mubr.f32.mxu0 0.0
    %127 = vmatmul.mubr.f32.gmra.mxu0 %v56
    %v128 = vpop.f32.mrf.mxu0
    %v129 = vadd.f32 %v52, %v128
    %v130 = vpop.f32.mrf.mxu0
    %131 = vdwg.mxu0
    %v132 = vmax.f32 %v129, 0.0
    %v133 = vld [vmem:[%s8 + $0x8] sm:$0xff]
    %v134 = vld [vmem:[%s9 + $0x1] sm:$0x1]
    %v136 = vlaneseq
    %v137 = vshrl.u32 %v136, 7
    %v138 = vsub.s32 0, %v137
    %v139 = vrot.slane %v134, %v138
    %vm141 = vcmask 64512
    %v143 = vsel %vm141, %v132, 0
    %145 = vmatprep.subr.mxu0 0.0
    %146 = vmatpush1.msra.mxu0 0.0
    %147 = vmatprep.subr.mxu0 0.0
    %148 = vmatpush1.msra.mxu0 0.0
    %149 = vmatprep.subr.mxu0 0.0
    %150 = vmatpush1.msra.mxu0 0.0
    %151 = vmatprep.subr.mxu0 0.0
    %152 = vmatpush1.msra.mxu0 0.0
    %153 = vmatprep.subr.mxu0 0.0
    %154 = vmatpush1.msra.mxu0 0.0
    %155 = vmatprep.subr.mxu0 0.0
    %156 = vmatpush1.msra.mxu0 0.0
    %157 = vmatprep.subr.mxu0 0.0
    %158 = vmatpush1.msra.mxu0 0.0
    %159 = vmatprep.subr.mxu0 0.0
    %160 = vmatpush1.msra.mxu0 0.0
    %161 = vmatprep.subr.mxu0 0.0
    %162 = vmatpush1.msra.mxu0 0.0
    %163 = vmatprep.subr.mxu0 0.0
    %164 = vmatpush1.msra.mxu0 0.0
    %165 = vmatprep.subr.mxu0 0.0
    %166 = vmatpush1.msra.mxu0 0.0
    %167 = vmatprep.subr.mxu0 0.0
    %168 = vmatpush1.msra.mxu0 0.0
    %169 = vmatprep.subr.mxu0 0.0
    %170 = vmatpush1.msra.mxu0 0.0
    %171 = vmatprep.subr.mxu0 0.0
    %172 = vmatpush1.msra.mxu0 0.0
    %173 = vmatprep.subr.mxu0 0.0
    %174 = vmatpush1.msra.mxu0 0.0
    %175 = vmatprep.subr.mxu0 0.0
    %176 = vmatpush1.msra.mxu0 %v133
    %177 = vmatprep.subr.mxu0 0.0
    %178 = vmatpush2.msra.mxu0 0.0
    %179 = vmatprep.subr.mxu0 0.0
    %180 = vmatpush2.msra.mxu0 0.0
    %181 = vmatprep.subr.mxu0 0.0
    %182 = vmatpush2.msra.mxu0 0.0
    %183 = vmatprep.subr.mxu0 0.0
    %184 = vmatpush2.msra.mxu0 0.0
    %185 = vmatprep.subr.mxu0 0.0
    %186 = vmatpush2.msra.mxu0 0.0
    %187 = vmatprep.subr.mxu0 0.0
    %188 = vmatpush2.msra.mxu0 0.0
    %189 = vmatprep.subr.mxu0 0.0
    %190 = vmatpush2.msra.mxu0 0.0
    %191 = vmatprep.subr.mxu0 0.0
    %192 = vmatpush2.msra.mxu0 0.0
    %193 = vmatprep.subr.mxu0 0.0
    %194 = vmatpush2.msra.mxu0 0.0
    %195 = vmatprep.subr.mxu0 0.0
    %196 = vmatpush2.msra.mxu0 0.0
    %197 = vmatprep.subr.mxu0 0.0
    %198 = vmatpush2.msra.mxu0 0.0
    %199 = vmatprep.subr.mxu0 0.0
    %200 = vmatpush2.msra.mxu0 0.0
    %201 = vmatprep.subr.mxu0 0.0
    %202 = vmatpush2.msra.mxu0 0.0
    %203 = vmatprep.subr.mxu0 0.0
    %204 = vmatpush2.msra.mxu0 0.0
    %205 = vmatprep.subr.mxu0 0.0
    %206 = vmatpush2.msra.mxu0 0.0
    %207 = vmatprep.subr.mxu0 0.0
    %208 = vmatpush2.msra.mxu0 0.0
    %209 = vmatprep.mubr.f32.mxu0 0.0
    %210 = vmatmul.mubr.f32.gmra.mxu0 %v143
    %v211 = vpop.f32.mrf.mxu0
    %v212 = vadd.f32 %v139, %v211
    %v213 = vpop.f32.mrf.mxu0
    %214 = vdwg.mxu0
    %v215 = vmax.f32 %v212, 0.0
    %v216 = vld [vmem:[%s1] sm:$0xff]
    %v217 = vld [vmem:[%s1 + $0x8] sm:$0xff]
    %v218 = vld [vmem:[%s1 + $0x10] sm:$0xff]
    %v219 = vld [vmem:[%s1 + $0x18] sm:$0xff]
    %v220 = vld [vmem:[%s10] sm:$0xff]
    %v221 = vld [vmem:[%s10 + $0x8] sm:$0xff]
    %v222 = vld [vmem:[%s10 + $0x10] sm:$0xff]
    %v223 = vld [vmem:[%s10 + $0x18] sm:$0xff]
    %v224 = vld [vmem:[%s10 + $0x20] sm:$0xff]
    %v225 = vld [vmem:[%s10 + $0x28] sm:$0xff]
    %v226 = vld [vmem:[%s10 + $0x30] sm:$0xff]
    %v227 = vld [vmem:[%s10 + $0x38] sm:$0xff]
    %v228 = vld [vmem:[%s10 + $0x40] sm:$0xff]
    %v229 = vld [vmem:[%s10 + $0x48] sm:$0xff]
    %v230 = vld [vmem:[%s10 + $0x50] sm:$0xff]
    %v231 = vld [vmem:[%s10 + $0x58] sm:$0xff]
    %v232 = vld [vmem:[%s10 + $0x60] sm:$0xff]
    %v233 = vld [vmem:[%s10 + $0x68] sm:$0xff]
    %v234 = vld [vmem:[%s10 + $0x70] sm:$0xff]
    %v235 = vld [vmem:[%s10 + $0x78] sm:$0xff]
    %v236 = vld [vmem:[%s10 + $0x80] sm:$0xff]
    %v237 = vld [vmem:[%s10 + $0x88] sm:$0xff]
    %v238 = vld [vmem:[%s10 + $0x90] sm:$0xff]
    %v239 = vld [vmem:[%s10 + $0x98] sm:$0xff]
    %v240 = vld [vmem:[%s10 + $0xa0] sm:$0xff]
    %v241 = vld [vmem:[%s10 + $0xa8] sm:$0xff]
    %v242 = vld [vmem:[%s10 + $0xb0] sm:$0xff]
    %v243 = vld [vmem:[%s10 + $0xb8] sm:$0xff]
    %v244 = vld [vmem:[%s10 + $0xc0] sm:$0xff]
    %v245 = vld [vmem:[%s10 + $0xc8] sm:$0xff]
    %v246 = vld [vmem:[%s10 + $0xd0] sm:$0xff]
    %v247 = vld [vmem:[%s10 + $0xd8] sm:$0xff]
    %v248 = vld [vmem:[%s10 + $0xe0] sm:$0xff]
    %v249 = vld [vmem:[%s10 + $0xe8] sm:$0xff]
    %v250 = vld [vmem:[%s10 + $0xf0] sm:$0xff]
    %v251 = vld [vmem:[%s10 + $0xf8] sm:$0xff]
    %v252 = vld [vmem:[%s10 + $0x100] sm:$0xff]
    %v253 = vld [vmem:[%s10 + $0x108] sm:$0xff]
    %v254 = vld [vmem:[%s10 + $0x110] sm:$0xff]
    %v255 = vld [vmem:[%s10 + $0x118] sm:$0xff]
    %v256 = vld [vmem:[%s10 + $0x120] sm:$0xff]
    %v257 = vld [vmem:[%s10 + $0x128] sm:$0xff]
    %v258 = vld [vmem:[%s10 + $0x130] sm:$0xff]
    %v259 = vld [vmem:[%s10 + $0x138] sm:$0xff]
    %v260 = vld [vmem:[%s10 + $0x140] sm:$0xff]
    %v261 = vld [vmem:[%s10 + $0x148] sm:$0xff]
    %v262 = vld [vmem:[%s10 + $0x150] sm:$0xff]
    %v263 = vld [vmem:[%s10 + $0x158] sm:$0xff]
    %v264 = vld [vmem:[%s10 + $0x160] sm:$0xff]
    %v265 = vld [vmem:[%s10 + $0x168] sm:$0xff]
    %v266 = vld [vmem:[%s10 + $0x170] sm:$0xff]
    %v267 = vld [vmem:[%s10 + $0x178] sm:$0xff]
    %v268 = vld [vmem:[%s10 + $0x180] sm:$0xff]
    %v269 = vld [vmem:[%s10 + $0x188] sm:$0xff]
    %v270 = vld [vmem:[%s10 + $0x190] sm:$0xff]
    %v271 = vld [vmem:[%s10 + $0x198] sm:$0xff]
    %v272 = vld [vmem:[%s10 + $0x1a0] sm:$0xff]
    %v273 = vld [vmem:[%s10 + $0x1a8] sm:$0xff]
    %v274 = vld [vmem:[%s10 + $0x1b0] sm:$0xff]
    %v275 = vld [vmem:[%s10 + $0x1b8] sm:$0xff]
    %v276 = vld [vmem:[%s10 + $0x1c0] sm:$0xff]
    %v277 = vld [vmem:[%s10 + $0x1c8] sm:$0xff]
    %v278 = vld [vmem:[%s10 + $0x1d0] sm:$0xff]
    %v279 = vld [vmem:[%s10 + $0x1d8] sm:$0xff]
    %v280 = vld [vmem:[%s10 + $0x1e0] sm:$0xff]
    %v281 = vld [vmem:[%s10 + $0x1e8] sm:$0xff]
    %v282 = vld [vmem:[%s10 + $0x1f0] sm:$0xff]
    %v283 = vld [vmem:[%s10 + $0x1f8] sm:$0xff]
    %v284 = vld [vmem:[%s9 + $0x2] sm:$0x1]
    %v286 = vlaneseq
    %v287 = vshrl.u32 %v286, 7
    %v288 = vsub.s32 0, %v287
    %v289 = vrot.slane %v284, %v288
    %291 = vmatprep.subr.mxu0 0.0
    %292 = vmatpush1.msra.mxu0 %v235
    %293 = vmatprep.subr.mxu0 0.0
    %294 = vmatpush1.msra.mxu0 %v234
    %295 = vmatprep.subr.mxu0 0.0
    %296 = vmatpush1.msra.mxu0 %v233
    %297 = vmatprep.subr.mxu0 0.0
    %298 = vmatpush1.msra.mxu0 %v232
    %299 = vmatprep.subr.mxu0 0.0
    %300 = vmatpush1.msra.mxu0 %v231
    %301 = vmatprep.subr.mxu0 0.0
    %302 = vmatpush1.msra.mxu0 %v230
    %303 = vmatprep.subr.mxu0 0.0
    %304 = vmatpush1.msra.mxu0 %v229
    %305 = vmatprep.subr.mxu0 0.0
    %306 = vmatpush1.msra.mxu0 %v228
    %307 = vmatprep.subr.mxu0 0.0
    %308 = vmatpush1.msra.mxu0 %v227
    %309 = vmatprep.subr.mxu0 0.0
    %310 = vmatpush1.msra.mxu0 %v226
    %311 = vmatprep.subr.mxu0 0.0
    %312 = vmatpush1.msra.mxu0 %v225
    %313 = vmatprep.subr.mxu0 0.0
    %314 = vmatpush1.msra.mxu0 %v224
    %315 = vmatprep.subr.mxu0 0.0
    %316 = vmatpush1.msra.mxu0 %v223
    %317 = vmatprep.subr.mxu0 0.0
    %318 = vmatpush1.msra.mxu0 %v222
    %319 = vmatprep.subr.mxu0 0.0
    %320 = vmatpush1.msra.mxu0 %v221
    %321 = vmatprep.subr.mxu0 0.0
    %322 = vmatpush1.msra.mxu0 %v220
    %323 = vmatprep.subr.mxu0 0.0
    %324 = vmatpush2.msra.mxu0 %v251
    %325 = vmatprep.subr.mxu0 0.0
    %326 = vmatpush2.msra.mxu0 %v250
    %327 = vmatprep.subr.mxu0 0.0
    %328 = vmatpush2.msra.mxu0 %v249
    %329 = vmatprep.subr.mxu0 0.0
    %330 = vmatpush2.msra.mxu0 %v248
    %331 = vmatprep.subr.mxu0 0.0
    %332 = vmatpush2.msra.mxu0 %v247
    %333 = vmatprep.subr.mxu0 0.0
    %334 = vmatpush2.msra.mxu0 %v246
    %335 = vmatprep.subr.mxu0 0.0
    %336 = vmatpush2.msra.mxu0 %v245
    %337 = vmatprep.subr.mxu0 0.0
    %338 = vmatpush2.msra.mxu0 %v244
    %339 = vmatprep.subr.mxu0 0.0
    %340 = vmatpush2.msra.mxu0 %v243
    %341 = vmatprep.subr.mxu0 0.0
    %342 = vmatpush2.msra.mxu0 %v242
    %343 = vmatprep.subr.mxu0 0.0
    %344 = vmatpush2.msra.mxu0 %v241
    %345 = vmatprep.subr.mxu0 0.0
    %346 = vmatpush2.msra.mxu0 %v240
    %347 = vmatprep.subr.mxu0 0.0
    %348 = vmatpush2.msra.mxu0 %v239
    %349 = vmatprep.subr.mxu0 0.0
    %350 = vmatpush2.msra.mxu0 %v238
    %351 = vmatprep.subr.mxu0 0.0
    %352 = vmatpush2.msra.mxu0 %v237
    %353 = vmatprep.subr.mxu0 0.0
    %354 = vmatpush2.msra.mxu0 %v236
    %355 = vmatprep.mubr.f32.mxu0 %v217
    %356 = vmatmul.mubr.f32.gmra.mxu0 %v216
    %v357 = vpop.f32.mrf.mxu0
    %v358 = vadd.f32 %v289, %v357
    %v359 = vpop.f32.mrf.mxu0
    %360 = vdwg.mxu0
    %361 = vmatprep.subr.mxu0 0.0
    %362 = vmatpush1.msra.mxu0 %v267
    %363 = vmatprep.subr.mxu0 0.0
    %364 = vmatpush1.msra.mxu0 %v266
    %365 = vmatprep.subr.mxu0 0.0
    %366 = vmatpush1.msra.mxu0 %v265
    %367 = vmatprep.subr.mxu0 0.0
    %368 = vmatpush1.msra.mxu0 %v264
    %369 = vmatprep.subr.mxu0 0.0
    %370 = vmatpush1.msra.mxu0 %v263
    %371 = vmatprep.subr.mxu0 0.0
    %372 = vmatpush1.msra.mxu0 %v262
    %373 = vmatprep.subr.mxu0 0.0
    %374 = vmatpush1.msra.mxu0 %v261
    %375 = vmatprep.subr.mxu0 0.0
    %376 = vmatpush1.msra.mxu0 %v260
    %377 = vmatprep.subr.mxu0 0.0
    %378 = vmatpush1.msra.mxu0 %v259
    %379 = vmatprep.subr.mxu0 0.0
    %380 = vmatpush1.msra.mxu0 %v258
    %381 = vmatprep.subr.mxu0 0.0
    %382 = vmatpush1.msra.mxu0 %v257
    %383 = vmatprep.subr.mxu0 0.0
    %384 = vmatpush1.msra.mxu0 %v256
    %385 = vmatprep.subr.mxu0 0.0
    %386 = vmatpush1.msra.mxu0 %v255
    %387 = vmatprep.subr.mxu0 0.0
    %388 = vmatpush1.msra.mxu0 %v254
    %389 = vmatprep.subr.mxu0 0.0
    %390 = vmatpush1.msra.mxu0 %v253
    %391 = vmatprep.subr.mxu0 0.0
    %392 = vmatpush1.msra.mxu0 %v252
    %393 = vmatprep.subr.mxu0 0.0
    %394 = vmatpush2.msra.mxu0 %v283
    %395 = vmatprep.subr.mxu0 0.0
    %396 = vmatpush2.msra.mxu0 %v282
    %397 = vmatprep.subr.mxu0 0.0
    %398 = vmatpush2.msra.mxu0 %v281
    %399 = vmatprep.subr.mxu0 0.0
    %400 = vmatpush2.msra.mxu0 %v280
    %401 = vmatprep.subr.mxu0 0.0
    %402 = vmatpush2.msra.mxu0 %v279
    %403 = vmatprep.subr.mxu0 0.0
    %404 = vmatpush2.msra.mxu0 %v278
    %405 = vmatprep.subr.mxu0 0.0
    %406 = vmatpush2.msra.mxu0 %v277
    %407 = vmatprep.subr.mxu0 0.0
    %408 = vmatpush2.msra.mxu0 %v276
    %409 = vmatprep.subr.mxu0 0.0
    %410 = vmatpush2.msra.mxu0 %v275
    %411 = vmatprep.subr.mxu0 0.0
    %412 = vmatpush2.msra.mxu0 %v274
    %413 = vmatprep.subr.mxu0 0.0
    %414 = vmatpush2.msra.mxu0 %v273
    %415 = vmatprep.subr.mxu0 0.0
    %416 = vmatpush2.msra.mxu0 %v272
    %417 = vmatprep.subr.mxu0 0.0
    %418 = vmatpush2.msra.mxu0 %v271
    %419 = vmatprep.subr.mxu0 0.0
    %420 = vmatpush2.msra.mxu0 %v270
    %421 = vmatprep.subr.mxu0 0.0
    %422 = vmatpush2.msra.mxu0 %v269
    %423 = vmatprep.subr.mxu0 0.0
    %424 = vmatpush2.msra.mxu0 %v268
    %425 = vmatprep.mubr.f32.mxu0 %v219
    %426 = vmatmul.mubr.f32.gmra.mxu0 %v218
    %v427 = vpop.f32.mrf.mxu0
    %v428 = vadd.f32 %v358, %v427
    %v429 = vpop.f32.mrf.mxu0
    %430 = vdwg.mxu0
    %v431 = vmax.f32 %v428, 0.0
    %v432 = vld [vmem:[%s11] sm:$0xff]
    %v433 = vld [vmem:[%s11 + $0x8] sm:$0xff]
    %v434 = vld [vmem:[%s11 + $0x10] sm:$0xff]
    %v435 = vld [vmem:[%s11 + $0x18] sm:$0xff]
    %v436 = vld [vmem:[%s11 + $0x20] sm:$0xff]
    %v437 = vld [vmem:[%s11 + $0x28] sm:$0xff]
    %v438 = vld [vmem:[%s11 + $0x30] sm:$0xff]
    %v439 = vld [vmem:[%s11 + $0x38] sm:$0xff]
    %v440 = vld [vmem:[%s11 + $0x40] sm:$0xff]
    %v441 = vld [vmem:[%s11 + $0x48] sm:$0xff]
    %v442 = vld [vmem:[%s11 + $0x50] sm:$0xff]
    %v443 = vld [vmem:[%s11 + $0x58] sm:$0xff]
    %v444 = vld [vmem:[%s11 + $0x60] sm:$0xff]
    %v445 = vld [vmem:[%s11 + $0x68] sm:$0xff]
    %v446 = vld [vmem:[%s11 + $0x70] sm:$0xff]
    %v447 = vld [vmem:[%s11 + $0x78] sm:$0xff]
    %v448 = vld [vmem:[%s9 + $0x3] sm:$0x1]
    %v450 = vlaneseq
    %v451 = vshrl.u32 %v450, 7
    %v452 = vsub.s32 0, %v451
    %v453 = vrot.slane %v448, %v452
    %455 = vmatprep.subr.mxu0 0.0
    %456 = vmatpush1.msra.mxu0 %v447
    %457 = vmatprep.subr.mxu0 0.0
    %458 = vmatpush1.msra.mxu0 %v446
    %459 = vmatprep.subr.mxu0 0.0
    %460 = vmatpush1.msra.mxu0 %v445
    %461 = vmatprep.subr.mxu0 0.0
    %462 = vmatpush1.msra.mxu0 %v444
    %463 = vmatprep.subr.mxu0 0.0
    %464 = vmatpush1.msra.mxu0 %v443
    %465 = vmatprep.subr.mxu0 0.0
    %466 = vmatpush1.msra.mxu0 %v442
    %467 = vmatprep.subr.mxu0 0.0
    %468 = vmatpush1.msra.mxu0 %v441
    %469 = vmatprep.subr.mxu0 0.0
    %470 = vmatpush1.msra.mxu0 %v440
    %471 = vmatprep.subr.mxu0 0.0
    %472 = vmatpush1.msra.mxu0 %v439
    %473 = vmatprep.subr.mxu0 0.0
    %474 = vmatpush1.msra.mxu0 %v438
    %475 = vmatprep.subr.mxu0 0.0
    %476 = vmatpush1.msra.mxu0 %v437
    %477 = vmatprep.subr.mxu0 0.0
    %478 = vmatpush1.msra.mxu0 %v436
    %479 = vmatprep.subr.mxu0 0.0
    %480 = vmatpush1.msra.mxu0 %v435
    %481 = vmatprep.subr.mxu0 0.0
    %482 = vmatpush1.msra.mxu0 %v434
    %483 = vmatprep.subr.mxu0 0.0
    %484 = vmatpush1.msra.mxu0 %v433
    %485 = vmatprep.subr.mxu0 0.0
    %486 = vmatpush1.msra.mxu0 %v432
    %487 = vmatprep.subr.mxu0 0.0
    %488 = vmatpush2.msra.mxu0 0.0
    %489 = vmatprep.subr.mxu0 0.0
    %490 = vmatpush2.msra.mxu0 0.0
    %491 = vmatprep.subr.mxu0 0.0
    %492 = vmatpush2.msra.mxu0 0.0
    %493 = vmatprep.subr.mxu0 0.0
    %494 = vmatpush2.msra.mxu0 0.0
    %495 = vmatprep.subr.mxu0 0.0
    %496 = vmatpush2.msra.mxu0 0.0
    %497 = vmatprep.subr.mxu0 0.0
    %498 = vmatpush2.msra.mxu0 0.0
    %499 = vmatprep.subr.mxu0 0.0
    %500 = vmatpush2.msra.mxu0 0.0
    %501 = vmatprep.subr.mxu0 0.0
    %502 = vmatpush2.msra.mxu0 0.0
    %503 = vmatprep.subr.mxu0 0.0
    %504 = vmatpush2.msra.mxu0 0.0
    %505 = vmatprep.subr.mxu0 0.0
    %506 = vmatpush2.msra.mxu0 0.0
    %507 = vmatprep.subr.mxu0 0.0
    %508 = vmatpush2.msra.mxu0 0.0
    %509 = vmatprep.subr.mxu0 0.0
    %510 = vmatpush2.msra.mxu0 0.0
    %511 = vmatprep.subr.mxu0 0.0
    %512 = vmatpush2.msra.mxu0 0.0
    %513 = vmatprep.subr.mxu0 0.0
    %514 = vmatpush2.msra.mxu0 0.0
    %515 = vmatprep.subr.mxu0 0.0
    %516 = vmatpush2.msra.mxu0 0.0
    %517 = vmatprep.subr.mxu0 0.0
    %518 = vmatpush2.msra.mxu0 0.0
    %519 = vmatprep.mubr.f32.mxu0 0.0
    %520 = vmatmul.mubr.f32.gmra.mxu0 %v431
    %v521 = vpop.f32.mrf.mxu0
    %v522 = vadd.f32 %v453, %v521
    %v523 = vpop.f32.mrf.mxu0
    %524 = vdwg.mxu0
    %v525 = vmax.f32 %v522, 0.0
    %v526 = vld [vmem:[%s12] sm:$0xff]
    %v527 = vld [vmem:[%s12 + $0x8] sm:$0xff]
    %v528 = vld [vmem:[%s12 + $0x10] sm:$0xff]
    %v529 = vld [vmem:[%s12 + $0x18] sm:$0xff]
    %v530 = vld [vmem:[%s12 + $0x20] sm:$0xff]
    %v531 = vld [vmem:[%s12 + $0x28] sm:$0xff]
    %v532 = vld [vmem:[%s12 + $0x30] sm:$0xff]
    %v533 = vld [vmem:[%s12 + $0x38] sm:$0xff]
    %v534 = vld [vmem:[%s9 + $0x4] sm:$0x1]
    %v536 = vlaneseq
    %v537 = vshrl.u32 %v536, 7
    %v538 = vsub.s32 0, %v537
    %v539 = vrot.slane %v534, %v538
    %vm541 = vcmask 523264
    %v543 = vsel %vm541, %v525, 0
    %545 = vmatprep.subr.mxu0 0.0
    %546 = vmatpush1.msra.mxu0 0.0
    %547 = vmatprep.subr.mxu0 0.0
    %548 = vmatpush1.msra.mxu0 0.0
    %549 = vmatprep.subr.mxu0 0.0
    %550 = vmatpush1.msra.mxu0 0.0
    %551 = vmatprep.subr.mxu0 0.0
    %552 = vmatpush1.msra.mxu0 0.0
    %553 = vmatprep.subr.mxu0 0.0
    %554 = vmatpush1.msra.mxu0 0.0
    %555 = vmatprep.subr.mxu0 0.0
    %556 = vmatpush1.msra.mxu0 0.0
    %557 = vmatprep.subr.mxu0 0.0
    %558 = vmatpush1.msra.mxu0 0.0
    %559 = vmatprep.subr.mxu0 0.0
    %560 = vmatpush1.msra.mxu0 0.0
    %561 = vmatprep.subr.mxu0 0.0
    %562 = vmatpush1.msra.mxu0 %v533
    %563 = vmatprep.subr.mxu0 0.0
    %564 = vmatpush1.msra.mxu0 %v532
    %565 = vmatprep.subr.mxu0 0.0
    %566 = vmatpush1.msra.mxu0 %v531
    %567 = vmatprep.subr.mxu0 0.0
    %568 = vmatpush1.msra.mxu0 %v530
    %569 = vmatprep.subr.mxu0 0.0
    %570 = vmatpush1.msra.mxu0 %v529
    %571 = vmatprep.subr.mxu0 0.0
    %572 = vmatpush1.msra.mxu0 %v528
    %573 = vmatprep.subr.mxu0 0.0
    %574 = vmatpush1.msra.mxu0 %v527
    %575 = vmatprep.subr.mxu0 0.0
    %576 = vmatpush1.msra.mxu0 %v526
    %577 = vmatprep.subr.mxu0 0.0
    %578 = vmatpush2.msra.mxu0 0.0
    %579 = vmatprep.subr.mxu0 0.0
    %580 = vmatpush2.msra.mxu0 0.0
    %581 = vmatprep.subr.mxu0 0.0
    %582 = vmatpush2.msra.mxu0 0.0
    %583 = vmatprep.subr.mxu0 0.0
    %584 = vmatpush2.msra.mxu0 0.0
    %585 = vmatprep.subr.mxu0 0.0
    %586 = vmatpush2.msra.mxu0 0.0
    %587 = vmatprep.subr.mxu0 0.0
    %588 = vmatpush2.msra.mxu0 0.0
    %589 = vmatprep.subr.mxu0 0.0
    %590 = vmatpush2.msra.mxu0 0.0
    %591 = vmatprep.subr.mxu0 0.0
    %592 = vmatpush2.msra.mxu0 0.0
    %593 = vmatprep.subr.mxu0 0.0
    %594 = vmatpush2.msra.mxu0 0.0
    %595 = vmatprep.subr.mxu0 0.0
    %596 = vmatpush2.msra.mxu0 0.0
    %597 = vmatprep.subr.mxu0 0.0
    %598 = vmatpush2.msra.mxu0 0.0
    %599 = vmatprep.subr.mxu0 0.0
    %600 = vmatpush2.msra.mxu0 0.0
    %601 = vmatprep.subr.mxu0 0.0
    %602 = vmatpush2.msra.mxu0 0.0
    %603 = vmatprep.subr.mxu0 0.0
    %604 = vmatpush2.msra.mxu0 0.0
    %605 = vmatprep.subr.mxu0 0.0
    %606 = vmatpush2.msra.mxu0 0.0
    %607 = vmatprep.subr.mxu0 0.0
    %608 = vmatpush2.msra.mxu0 0.0
    %609 = vmatprep.mubr.f32.mxu0 0.0
    %610 = vmatmul.mubr.f32.gmra.mxu0 %v543
    %v611 = vpop.f32.mrf.mxu0
    %v612 = vadd.f32 %v539, %v611
    %v613 = vpop.f32.mrf.mxu0
    %614 = vdwg.mxu0
    %v615 = vmax.f32 %v612, 0.0
    %v616 = vld [vmem:[%s8 + $0x10] sm:$0xff]
    %v617 = vld [vmem:[%s8 + $0xd8] sm:$0xff]
    %v618 = vld [vmem:[%s9 + $0x5] sm:$0x1]
    %v620 = vlaneseq
    %v621 = vshrl.u32 %v620, 7
    %v622 = vsub.s32 0, %v621
    %v623 = vrot.slane %v618, %v622
    %vm625 = vcmask 130048
    %v627 = vsel %vm625, %v615, 0
    %629 = vmatprep.subr.mxu0 0.0
    %630 = vmatpush1.msra.mxu0 0.0
    %631 = vmatprep.subr.mxu0 0.0
    %632 = vmatpush1.msra.mxu0 0.0
    %633 = vmatprep.subr.mxu0 0.0
    %634 = vmatpush1.msra.mxu0 0.0
    %635 = vmatprep.subr.mxu0 0.0
    %636 = vmatpush1.msra.mxu0 0.0
    %637 = vmatprep.subr.mxu0 0.0
    %638 = vmatpush1.msra.mxu0 0.0
    %639 = vmatprep.subr.mxu0 0.0
    %640 = vmatpush1.msra.mxu0 0.0
    %641 = vmatprep.subr.mxu0 0.0
    %642 = vmatpush1.msra.mxu0 0.0
    %643 = vmatprep.subr.mxu0 0.0
    %644 = vmatpush1.msra.mxu0 0.0
    %645 = vmatprep.subr.mxu0 0.0
    %646 = vmatpush1.msra.mxu0 0.0
    %647 = vmatprep.subr.mxu0 0.0
    %648 = vmatpush1.msra.mxu0 0.0
    %649 = vmatprep.subr.mxu0 0.0
    %650 = vmatpush1.msra.mxu0 0.0
    %651 = vmatprep.subr.mxu0 0.0
    %652 = vmatpush1.msra.mxu0 0.0
    %653 = vmatprep.subr.mxu0 0.0
    %654 = vmatpush1.msra.mxu0 0.0
    %655 = vmatprep.subr.mxu0 0.0
    %656 = vmatpush1.msra.mxu0 0.0
    %657 = vmatprep.subr.mxu0 0.0
    %658 = vmatpush1.msra.mxu0 %v617
    %659 = vmatprep.subr.mxu0 0.0
    %660 = vmatpush1.msra.mxu0 %v616
    %661 = vmatprep.subr.mxu0 0.0
    %662 = vmatpush2.msra.mxu0 0.0
    %663 = vmatprep.subr.mxu0 0.0
    %664 = vmatpush2.msra.mxu0 0.0
    %665 = vmatprep.subr.mxu0 0.0
    %666 = vmatpush2.msra.mxu0 0.0
    %667 = vmatprep.subr.mxu0 0.0
    %668 = vmatpush2.msra.mxu0 0.0
    %669 = vmatprep.subr.mxu0 0.0
    %670 = vmatpush2.msra.mxu0 0.0
    %671 = vmatprep.subr.mxu0 0.0
    %672 = vmatpush2.msra.mxu0 0.0
    %673 = vmatprep.subr.mxu0 0.0
    %674 = vmatpush2.msra.mxu0 0.0
    %675 = vmatprep.subr.mxu0 0.0
    %676 = vmatpush2.msra.mxu0 0.0
    %677 = vmatprep.subr.mxu0 0.0
    %678 = vmatpush2.msra.mxu0 0.0
    %679 = vmatprep.subr.mxu0 0.0
    %680 = vmatpush2.msra.mxu0 0.0
    %681 = vmatprep.subr.mxu0 0.0
    %682 = vmatpush2.msra.mxu0 0.0
    %683 = vmatprep.subr.mxu0 0.0
    %684 = vmatpush2.msra.mxu0 0.0
    %685 = vmatprep.subr.mxu0 0.0
    %686 = vmatpush2.msra.mxu0 0.0
    %687 = vmatprep.subr.mxu0 0.0
    %688 = vmatpush2.msra.mxu0 0.0
    %689 = vmatprep.subr.mxu0 0.0
    %690 = vmatpush2.msra.mxu0 0.0
    %691 = vmatprep.subr.mxu0 0.0
    %692 = vmatpush2.msra.mxu0 0.0
    %693 = vmatprep.mubr.f32.mxu0 0.0
    %694 = vmatmul.mubr.f32.gmra.mxu0 %v627
    %v695 = vpop.f32.mrf.mxu0
    %v696 = vadd.f32 %v623, %v695
    %v697 = vpop.f32.mrf.mxu0
    %698 = vdwg.mxu0
    %v699 = vmax.f32 %v696, 0.0
    %v700 = vld [vmem:[%s8 + $0x18] sm:$0xff]
    %v701 = vld [vmem:[%s8 + $0xe0] sm:$0xff]
    %v702 = vld [vmem:[%s8 + $0x1a8] sm:$0xff]
    %v703 = vld [vmem:[%s8 + $0x270] sm:$0xff]
    %v704 = vld [vmem:[%s9 + $0x6] sm:$0x1]
    %v706 = vlaneseq
    %v707 = vshrl.u32 %v706, 7
    %v708 = vsub.s32 0, %v707
    %v709 = vrot.slane %v704, %v708
    %vm711 = vcmask 261120
    %v713 = vsel %vm711, %v699, 0
    %715 = vmatprep.subr.mxu0 0.0
    %716 = vmatpush1.msra.mxu0 0.0
    %717 = vmatprep.subr.mxu0 0.0
    %718 = vmatpush1.msra.mxu0 0.0
    %719 = vmatprep.subr.mxu0 0.0
    %720 = vmatpush1.msra.mxu0 0.0
    %721 = vmatprep.subr.mxu0 0.0
    %722 = vmatpush1.msra.mxu0 0.0
    %723 = vmatprep.subr.mxu0 0.0
    %724 = vmatpush1.msra.mxu0 0.0
    %725 = vmatprep.subr.mxu0 0.0
    %726 = vmatpush1.msra.mxu0 0.0
    %727 = vmatprep.subr.mxu0 0.0
    %728 = vmatpush1.msra.mxu0 0.0
    %729 = vmatprep.subr.mxu0 0.0
    %730 = vmatpush1.msra.mxu0 0.0
    %731 = vmatprep.subr.mxu0 0.0
    %732 = vmatpush1.msra.mxu0 0.0
    %733 = vmatprep.subr.mxu0 0.0
    %734 = vmatpush1.msra.mxu0 0.0
    %735 = vmatprep.subr.mxu0 0.0
    %736 = vmatpush1.msra.mxu0 0.0
    %737 = vmatprep.subr.mxu0 0.0
    %738 = vmatpush1.msra.mxu0 0.0
    %739 = vmatprep.subr.mxu0 0.0
    %740 = vmatpush1.msra.mxu0 %v703
    %741 = vmatprep.subr.mxu0 0.0
    %742 = vmatpush1.msra.mxu0 %v702
    %743 = vmatprep.subr.mxu0 0.0
    %744 = vmatpush1.msra.mxu0 %v701
    %745 = vmatprep.subr.mxu0 0.0
    %746 = vmatpush1.msra.mxu0 %v700
    %747 = vmatprep.subr.mxu0 0.0
    %748 = vmatpush2.msra.mxu0 0.0
    %749 = vmatprep.subr.mxu0 0.0
    %750 = vmatpush2.msra.mxu0 0.0
    %751 = vmatprep.subr.mxu0 0.0
    %752 = vmatpush2.msra.mxu0 0.0
    %753 = vmatprep.subr.mxu0 0.0
    %754 = vmatpush2.msra.mxu0 0.0
    %755 = vmatprep.subr.mxu0 0.0
    %756 = vmatpush2.msra.mxu0 0.0
    %757 = vmatprep.subr.mxu0 0.0
    %758 = vmatpush2.msra.mxu0 0.0
    %759 = vmatprep.subr.mxu0 0.0
    %760 = vmatpush2.msra.mxu0 0.0
    %761 = vmatprep.subr.mxu0 0.0
    %762 = vmatpush2.msra.mxu0 0.0
    %763 = vmatprep.subr.mxu0 0.0
    %764 = vmatpush2.msra.mxu0 0.0
    %765 = vmatprep.subr.mxu0 0.0
    %766 = vmatpush2.msra.mxu0 0.0
    %767 = vmatprep.subr.mxu0 0.0
    %768 = vmatpush2.msra.mxu0 0.0
    %769 = vmatprep.subr.mxu0 0.0
    %770 = vmatpush2.msra.mxu0 0.0
    %771 = vmatprep.subr.mxu0 0.0
    %772 = vmatpush2.msra.mxu0 0.0
    %773 = vmatprep.subr.mxu0 0.0
    %774 = vmatpush2.msra.mxu0 0.0
    %775 = vmatprep.subr.mxu0 0.0
    %776 = vmatpush2.msra.mxu0 0.0
    %777 = vmatprep.subr.mxu0 0.0
    %778 = vmatpush2.msra.mxu0 0.0
    %779 = vmatprep.mubr.f32.mxu0 0.0
    %780 = vmatmul.mubr.f32.gmra.mxu0 %v713
    %v781 = vpop.f32.mrf.mxu0
    %v782 = vadd.f32 %v709, %v781
    %v783 = vpop.f32.mrf.mxu0
    %784 = vdwg.mxu0
    %v785 = vmax.f32 %v782, 0.0
    %v786 = vld [vmem:[%s2] sm:$0xff]
    %v787 = vld [vmem:[%s2 + $0x8] sm:$0xff]
    %v788 = vld [vmem:[%s2 + $0x10] sm:$0xff]
    %v789 = vld [vmem:[%s2 + $0x18] sm:$0xff]
    %v790 = vld [vmem:[%s2 + $0x20] sm:$0xff]
    %v791 = vld [vmem:[%s2 + $0x28] sm:$0xff]
    %v792 = vld [vmem:[%s2 + $0x30] sm:$0xff]
    %v793 = vld [vmem:[%s2 + $0x38] sm:$0xff]
    %v794 = vld [vmem:[%s8 + $0x20] sm:$0x7]
    %v795 = vld [vmem:[%s9 + $0x7] sm:$0x1]
    %v797 = vlaneseq
    %v798 = vshrl.u32 %v797, 7
    %v799 = vsub.s32 0, %v798
    %v800 = vrot.slane %v795, %v799
    %vm802 = vcmask 23552
    %v804 = vsel %vm802, %v786, 0
    %v807 = vsel %vm802, %v787, 0
    %v810 = vsel %vm802, %v788, 0
    %v813 = vsel %vm802, %v789, 0
    %v816 = vsel %vm802, %v790, 0
    %v819 = vsel %vm802, %v791, 0
    %v822 = vsel %vm802, %v792, 0
    %v825 = vsel %vm802, %v793, 0
    %vm827 = vcmask 1042432
    %v829 = vsel %vm827, %v794, 0
    %831 = vmatprep.subr.mxu0 0.0
    %832 = vmatpush1.msra.mxu0 0.0
    %833 = vmatprep.subr.mxu0 0.0
    %834 = vmatpush1.msra.mxu0 0.0
    %835 = vmatprep.subr.mxu0 0.0
    %836 = vmatpush1.msra.mxu0 0.0
    %837 = vmatprep.subr.mxu0 0.0
    %838 = vmatpush1.msra.mxu0 0.0
    %839 = vmatprep.subr.mxu0 0.0
    %840 = vmatpush1.msra.mxu0 0.0
    %841 = vmatprep.subr.mxu0 0.0
    %842 = vmatpush1.msra.mxu0 0.0
    %843 = vmatprep.subr.mxu0 0.0
    %844 = vmatpush1.msra.mxu0 0.0
    %845 = vmatprep.subr.mxu0 0.0
    %846 = vmatpush1.msra.mxu0 0.0
    %847 = vmatprep.subr.mxu0 0.0
    %848 = vmatpush1.msra.mxu0 0.0
    %849 = vmatprep.subr.mxu0 0.0
    %850 = vmatpush1.msra.mxu0 0.0
    %851 = vmatprep.subr.mxu0 0.0
    %852 = vmatpush1.msra.mxu0 0.0
    %853 = vmatprep.subr.mxu0 0.0
    %854 = vmatpush1.msra.mxu0 0.0
    %855 = vmatprep.subr.mxu0 0.0
    %856 = vmatpush1.msra.mxu0 0.0
    %857 = vmatprep.subr.mxu0 0.0
    %858 = vmatpush1.msra.mxu0 0.0
    %859 = vmatprep.subr.mxu0 0.0
    %860 = vmatpush1.msra.mxu0 0.0
    %861 = vmatprep.subr.mxu0 0.0
    %862 = vmatpush1.msra.mxu0 %v829
    %863 = vmatprep.subr.mxu0 0.0
    %864 = vmatpush2.msra.mxu0 0.0
    %865 = vmatprep.subr.mxu0 0.0
    %866 = vmatpush2.msra.mxu0 0.0
    %867 = vmatprep.subr.mxu0 0.0
    %868 = vmatpush2.msra.mxu0 0.0
    %869 = vmatprep.subr.mxu0 0.0
    %870 = vmatpush2.msra.mxu0 0.0
    %871 = vmatprep.subr.mxu0 0.0
    %872 = vmatpush2.msra.mxu0 0.0
    %873 = vmatprep.subr.mxu0 0.0
    %874 = vmatpush2.msra.mxu0 0.0
    %875 = vmatprep.subr.mxu0 0.0
    %876 = vmatpush2.msra.mxu0 0.0
    %877 = vmatprep.subr.mxu0 0.0
    %878 = vmatpush2.msra.mxu0 0.0
    %879 = vmatprep.subr.mxu0 0.0
    %880 = vmatpush2.msra.mxu0 0.0
    %881 = vmatprep.subr.mxu0 0.0
    %882 = vmatpush2.msra.mxu0 0.0
    %883 = vmatprep.subr.mxu0 0.0
    %884 = vmatpush2.msra.mxu0 0.0
    %885 = vmatprep.subr.mxu0 0.0
    %886 = vmatpush2.msra.mxu0 0.0
    %887 = vmatprep.subr.mxu0 0.0
    %888 = vmatpush2.msra.mxu0 0.0
    %889 = vmatprep.subr.mxu0 0.0
    %890 = vmatpush2.msra.mxu0 0.0
    %891 = vmatprep.subr.mxu0 0.0
    %892 = vmatpush2.msra.mxu0 0.0
    %893 = vmatprep.subr.mxu0 0.0
    %894 = vmatpush2.msra.mxu0 0.0
    %895 = vmatprep.mubr.f32.mxu0 0.0
    %896 = vmatmul.mubr.f32.gmra.mxu0 %v804
    %v897 = vpop.f32.mrf.mxu0
    %v898 = vadd.f32 %v800, %v897
    %v899 = vpop.f32.mrf.mxu0
    %900 = vmatprep.mubr.f32.mxu0 0.0
    %901 = vmatmul.mubr.f32.gmra.mxu0 %v807
    %v902 = vpop.f32.mrf.mxu0
    %v903 = vadd.f32 %v800, %v902
    %v904 = vpop.f32.mrf.mxu0
    %905 = vmatprep.mubr.f32.mxu0 0.0
    %906 = vmatmul.mubr.f32.gmra.mxu0 %v810
    %v907 = vpop.f32.mrf.mxu0
    %v908 = vadd.f32 %v800, %v907
    %v909 = vpop.f32.mrf.mxu0
    %910 = vmatprep.mubr.f32.mxu0 0.0
    %911 = vmatmul.mubr.f32.gmra.mxu0 %v813
    %v912 = vpop.f32.mrf.mxu0
    %v913 = vadd.f32 %v800, %v912
    %v914 = vpop.f32.mrf.mxu0
    %915 = vmatprep.mubr.f32.mxu0 0.0
    %916 = vmatmul.mubr.f32.gmra.mxu0 %v816
    %v917 = vpop.f32.mrf.mxu0
    %v918 = vadd.f32 %v800, %v917
    %v919 = vpop.f32.mrf.mxu0
    %920 = vmatprep.mubr.f32.mxu0 0.0
    %921 = vmatmul.mubr.f32.gmra.mxu0 %v819
    %v922 = vpop.f32.mrf.mxu0
    %v923 = vadd.f32 %v800, %v922
    %v924 = vpop.f32.mrf.mxu0
    %925 = vmatprep.mubr.f32.mxu0 0.0
    %926 = vmatmul.mubr.f32.gmra.mxu0 %v822
    %v927 = vpop.f32.mrf.mxu0
    %v928 = vadd.f32 %v800, %v927
    %v929 = vpop.f32.mrf.mxu0
    %930 = vmatprep.mubr.f32.mxu0 0.0
    %931 = vmatmul.mubr.f32.gmra.mxu0 %v825
    %v932 = vpop.f32.mrf.mxu0
    %v933 = vadd.f32 %v800, %v932
    %v934 = vpop.f32.mrf.mxu0
    %935 = vdwg.mxu0
    %v936 = vmax.f32 %v898, 0.0
    %v937 = vmax.f32 %v903, 0.0
    %v938 = vmax.f32 %v908, 0.0
    %v939 = vmax.f32 %v913, 0.0
    %v940 = vmax.f32 %v918, 0.0
    %v941 = vmax.f32 %v923, 0.0
    %v942 = vmax.f32 %v928, 0.0
    %v943 = vmax.f32 %v933, 0.0
    %v944 = vld [vmem:[%s8 + $0x28] sm:$0xff]
    %v945 = vld [vmem:[%s8 + $0xf0] sm:$0xff]
    %v946 = vld [vmem:[%s9 + $0x8] sm:$0x1]
    %v948 = vlaneseq
    %v949 = vshrl.u32 %v948, 7
    %v950 = vsub.s32 0, %v949
    %v951 = vrot.slane %v946, %v950
    %v954 = vsel %vm625, %v936, 0
    %v957 = vsel %vm625, %v937, 0
    %v960 = vsel %vm625, %v938, 0
    %v963 = vsel %vm625, %v939, 0
    %v966 = vsel %vm625, %v940, 0
    %v969 = vsel %vm625, %v941, 0
    %v972 = vsel %vm625, %v942, 0
    %v975 = vsel %vm625, %v943, 0
    %977 = vmatprep.subr.mxu0 0.0
    %978 = vmatpush1.msra.mxu0 0.0
    %979 = vmatprep.subr.mxu0 0.0
    %980 = vmatpush1.msra.mxu0 0.0
    %981 = vmatprep.subr.mxu0 0.0
    %982 = vmatpush1.msra.mxu0 0.0
    %983 = vmatprep.subr.mxu0 0.0
    %984 = vmatpush1.msra.mxu0 0.0
    %985 = vmatprep.subr.mxu0 0.0
    %986 = vmatpush1.msra.mxu0 0.0
    %987 = vmatprep.subr.mxu0 0.0
    %988 = vmatpush1.msra.mxu0 0.0
    %989 = vmatprep.subr.mxu0 0.0
    %990 = vmatpush1.msra.mxu0 0.0
    %991 = vmatprep.subr.mxu0 0.0
    %992 = vmatpush1.msra.mxu0 0.0
    %993 = vmatprep.subr.mxu0 0.0
    %994 = vmatpush1.msra.mxu0 0.0
    %995 = vmatprep.subr.mxu0 0.0
    %996 = vmatpush1.msra.mxu0 0.0
    %997 = vmatprep.subr.mxu0 0.0
    %998 = vmatpush1.msra.mxu0 0.0
    %999 = vmatprep.subr.mxu0 0.0
    %1000 = vmatpush1.msra.mxu0 0.0
    %1001 = vmatprep.subr.mxu0 0.0
    %1002 = vmatpush1.msra.mxu0 0.0
    %1003 = vmatprep.subr.mxu0 0.0
    %1004 = vmatpush1.msra.mxu0 0.0
    %1005 = vmatprep.subr.mxu0 0.0
    %1006 = vmatpush1.msra.mxu0 %v945
    %1007 = vmatprep.subr.mxu0 0.0
    %1008 = vmatpush1.msra.mxu0 %v944
    %1009 = vmatprep.subr.mxu0 0.0
    %1010 = vmatpush2.msra.mxu0 0.0
    %1011 = vmatprep.subr.mxu0 0.0
    %1012 = vmatpush2.msra.mxu0 0.0
    %1013 = vmatprep.subr.mxu0 0.0
    %1014 = vmatpush2.msra.mxu0 0.0
    %1015 = vmatprep.subr.mxu0 0.0
    %1016 = vmatpush2.msra.mxu0 0.0
    %1017 = vmatprep.subr.mxu0 0.0
    %1018 = vmatpush2.msra.mxu0 0.0
    %1019 = vmatprep.subr.mxu0 0.0
    %1020 = vmatpush2.msra.mxu0 0.0
    %1021 = vmatprep.subr.mxu0 0.0
    %1022 = vmatpush2.msra.mxu0 0.0
    %1023 = vmatprep.subr.mxu0 0.0
    %1024 = vmatpush2.msra.mxu0 0.0
    %1025 = vmatprep.subr.mxu0 0.0
    %1026 = vmatpush2.msra.mxu0 0.0
    %1027 = vmatprep.subr.mxu0 0.0
    %1028 = vmatpush2.msra.mxu0 0.0
    %1029 = vmatprep.subr.mxu0 0.0
    %1030 = vmatpush2.msra.mxu0 0.0
    %1031 = vmatprep.subr.mxu0 0.0
    %1032 = vmatpush2.msra.mxu0 0.0
    %1033 = vmatprep.subr.mxu0 0.0
    %1034 = vmatpush2.msra.mxu0 0.0
    %1035 = vmatprep.subr.mxu0 0.0
    %1036 = vmatpush2.msra.mxu0 0.0
    %1037 = vmatprep.subr.mxu0 0.0
    %1038 = vmatpush2.msra.mxu0 0.0
    %1039 = vmatprep.subr.mxu0 0.0
    %1040 = vmatpush2.msra.mxu0 0.0
    %1041 = vmatprep.mubr.f32.mxu0 0.0
    %1042 = vmatmul.mubr.f32.gmra.mxu0 %v954
    %v1043 = vpop.f32.mrf.mxu0
    %v1044 = vadd.f32 %v951, %v1043
    %v1045 = vpop.f32.mrf.mxu0
    %1046 = vmatprep.mubr.f32.mxu0 0.0
    %1047 = vmatmul.mubr.f32.gmra.mxu0 %v957
    %v1048 = vpop.f32.mrf.mxu0
    %v1049 = vadd.f32 %v951, %v1048
    %v1050 = vpop.f32.mrf.mxu0
    %1051 = vmatprep.mubr.f32.mxu0 0.0
    %1052 = vmatmul.mubr.f32.gmra.mxu0 %v960
    %v1053 = vpop.f32.mrf.mxu0
    %v1054 = vadd.f32 %v951, %v1053
    %v1055 = vpop.f32.mrf.mxu0
    %1056 = vmatprep.mubr.f32.mxu0 0.0
    %1057 = vmatmul.mubr.f32.gmra.mxu0 %v963
    %v1058 = vpop.f32.mrf.mxu0
    %v1059 = vadd.f32 %v951, %v1058
    %v1060 = vpop.f32.mrf.mxu0
    %1061 = vmatprep.mubr.f32.mxu0 0.0
    %1062 = vmatmul.mubr.f32.gmra.mxu0 %v966
    %v1063 = vpop.f32.mrf.mxu0
    %v1064 = vadd.f32 %v951, %v1063
    %v1065 = vpop.f32.mrf.mxu0
    %1066 = vmatprep.mubr.f32.mxu0 0.0
    %1067 = vmatmul.mubr.f32.gmra.mxu0 %v969
    %v1068 = vpop.f32.mrf.mxu0
    %v1069 = vadd.f32 %v951, %v1068
    %v1070 = vpop.f32.mrf.mxu0
    %1071 = vmatprep.mubr.f32.mxu0 0.0
    %1072 = vmatmul.mubr.f32.gmra.mxu0 %v972
    %v1073 = vpop.f32.mrf.mxu0
    %v1074 = vadd.f32 %v951, %v1073
    %v1075 = vpop.f32.mrf.mxu0
    %1076 = vmatprep.mubr.f32.mxu0 0.0
    %1077 = vmatmul.mubr.f32.gmra.mxu0 %v975
    %v1078 = vpop.f32.mrf.mxu0
    %v1079 = vadd.f32 %v951, %v1078
    %v1080 = vpop.f32.mrf.mxu0
    %1081 = vdwg.mxu0
    %v1082 = vmax.f32 %v1044, 0.0
    %v1083 = vmax.f32 %v1049, 0.0
    %v1084 = vmax.f32 %v1054, 0.0
    %v1085 = vmax.f32 %v1059, 0.0
    %v1086 = vmax.f32 %v1064, 0.0
    %v1087 = vmax.f32 %v1069, 0.0
    %v1088 = vmax.f32 %v1074, 0.0
    %v1089 = vmax.f32 %v1079, 0.0
    %v1090 = vld [vmem:[%s4] sm:$0xff]
    %v1091 = vld [vmem:[%s4 + $0x8] sm:$0xff]
    %v1092 = vld [vmem:[%s4 + $0x10] sm:$0xff]
    %v1093 = vld [vmem:[%s4 + $0x18] sm:$0xff]
    %v1094 = vld [vmem:[%s4 + $0x20] sm:$0xff]
    %v1095 = vld [vmem:[%s4 + $0x28] sm:$0xff]
    %v1096 = vld [vmem:[%s4 + $0x30] sm:$0xff]
    %v1097 = vld [vmem:[%s4 + $0x38] sm:$0xff]
    %v1098 = vld [vmem:[%s8 + $0x40] sm:$0x3f]
    %v1099 = vld [vmem:[%s9 + $0xb] sm:$0x1]
    %v1101 = vlaneseq
    %v1102 = vshrl.u32 %v1101, 7
    %v1103 = vsub.s32 0, %v1102
    %v1104 = vrot.slane %v1099, %v1103
    %vm1106 = vcmask 48128
    %v1108 = vsel %vm1106, %v1090, 0
    %v1111 = vsel %vm1106, %v1091, 0
    %v1114 = vsel %vm1106, %v1092, 0
    %v1117 = vsel %vm1106, %v1093, 0
    %v1120 = vsel %vm1106, %v1094, 0
    %v1123 = vsel %vm1106, %v1095, 0
    %v1126 = vsel %vm1106, %v1096, 0
    %v1129 = vsel %vm1106, %v1097, 0
    %vm1131 = vcmask 1045504
    %v1133 = vsel %vm1131, %v1098, 0
    %1135 = vmatprep.subr.mxu0 0.0
    %1136 = vmatpush1.msra.mxu0 0.0
    %1137 = vmatprep.subr.mxu0 0.0
    %1138 = vmatpush1.msra.mxu0 0.0
    %1139 = vmatprep.subr.mxu0 0.0
    %1140 = vmatpush1.msra.mxu0 0.0
    %1141 = vmatprep.subr.mxu0 0.0
    %1142 = vmatpush1.msra.mxu0 0.0
    %1143 = vmatprep.subr.mxu0 0.0
    %1144 = vmatpush1.msra.mxu0 0.0
    %1145 = vmatprep.subr.mxu0 0.0
    %1146 = vmatpush1.msra.mxu0 0.0
    %1147 = vmatprep.subr.mxu0 0.0
    %1148 = vmatpush1.msra.mxu0 0.0
    %1149 = vmatprep.subr.mxu0 0.0
    %1150 = vmatpush1.msra.mxu0 0.0
    %1151 = vmatprep.subr.mxu0 0.0
    %1152 = vmatpush1.msra.mxu0 0.0
    %1153 = vmatprep.subr.mxu0 0.0
    %1154 = vmatpush1.msra.mxu0 0.0
    %1155 = vmatprep.subr.mxu0 0.0
    %1156 = vmatpush1.msra.mxu0 0.0
    %1157 = vmatprep.subr.mxu0 0.0
    %1158 = vmatpush1.msra.mxu0 0.0
    %1159 = vmatprep.subr.mxu0 0.0
    %1160 = vmatpush1.msra.mxu0 0.0
    %1161 = vmatprep.subr.mxu0 0.0
    %1162 = vmatpush1.msra.mxu0 0.0
    %1163 = vmatprep.subr.mxu0 0.0
    %1164 = vmatpush1.msra.mxu0 0.0
    %1165 = vmatprep.subr.mxu0 0.0
    %1166 = vmatpush1.msra.mxu0 %v1133
    %1167 = vmatprep.subr.mxu0 0.0
    %1168 = vmatpush2.msra.mxu0 0.0
    %1169 = vmatprep.subr.mxu0 0.0
    %1170 = vmatpush2.msra.mxu0 0.0
    %1171 = vmatprep.subr.mxu0 0.0
    %1172 = vmatpush2.msra.mxu0 0.0
    %1173 = vmatprep.subr.mxu0 0.0
    %1174 = vmatpush2.msra.mxu0 0.0
    %1175 = vmatprep.subr.mxu0 0.0
    %1176 = vmatpush2.msra.mxu0 0.0
    %1177 = vmatprep.subr.mxu0 0.0
    %1178 = vmatpush2.msra.mxu0 0.0
    %1179 = vmatprep.subr.mxu0 0.0
    %1180 = vmatpush2.msra.mxu0 0.0
    %1181 = vmatprep.subr.mxu0 0.0
    %1182 = vmatpush2.msra.mxu0 0.0
    %1183 = vmatprep.subr.mxu0 0.0
    %1184 = vmatpush2.msra.mxu0 0.0
    %1185 = vmatprep.subr.mxu0 0.0
    %1186 = vmatpush2.msra.mxu0 0.0
    %1187 = vmatprep.subr.mxu0 0.0
    %1188 = vmatpush2.msra.mxu0 0.0
    %1189 = vmatprep.subr.mxu0 0.0
    %1190 = vmatpush2.msra.mxu0 0.0
    %1191 = vmatprep.subr.mxu0 0.0
    %1192 = vmatpush2.msra.mxu0 0.0
    %1193 = vmatprep.subr.mxu0 0.0
    %1194 = vmatpush2.msra.mxu0 0.0
    %1195 = vmatprep.subr.mxu0 0.0
    %1196 = vmatpush2.msra.mxu0 0.0
    %1197 = vmatprep.subr.mxu0 0.0
    %1198 = vmatpush2.msra.mxu0 0.0
    %1199 = vmatprep.mubr.f32.mxu0 0.0
    %1200 = vmatmul.mubr.f32.gmra.mxu0 %v1108
    %v1201 = vpop.f32.mrf.mxu0
    %v1202 = vadd.f32 %v1104, %v1201
    %v1203 = vpop.f32.mrf.mxu0
    %1204 = vmatprep.mubr.f32.mxu0 0.0
    %1205 = vmatmul.mubr.f32.gmra.mxu0 %v1111
    %v1206 = vpop.f32.mrf.mxu0
    %v1207 = vadd.f32 %v1104, %v1206
    %v1208 = vpop.f32.mrf.mxu0
    %1209 = vmatprep.mubr.f32.mxu0 0.0
    %1210 = vmatmul.mubr.f32.gmra.mxu0 %v1114
    %v1211 = vpop.f32.mrf.mxu0
    %v1212 = vadd.f32 %v1104, %v1211
    %v1213 = vpop.f32.mrf.mxu0
    %1214 = vmatprep.mubr.f32.mxu0 0.0
    %1215 = vmatmul.mubr.f32.gmra.mxu0 %v1117
    %v1216 = vpop.f32.mrf.mxu0
    %v1217 = vadd.f32 %v1104, %v1216
    %v1218 = vpop.f32.mrf.mxu0
    %1219 = vmatprep.mubr.f32.mxu0 0.0
    %1220 = vmatmul.mubr.f32.gmra.mxu0 %v1120
    %v1221 = vpop.f32.mrf.mxu0
    %v1222 = vadd.f32 %v1104, %v1221
    %v1223 = vpop.f32.mrf.mxu0
    %1224 = vmatprep.mubr.f32.mxu0 0.0
    %1225 = vmatmul.mubr.f32.gmra.mxu0 %v1123
    %v1226 = vpop.f32.mrf.mxu0
    %v1227 = vadd.f32 %v1104, %v1226
    %v1228 = vpop.f32.mrf.mxu0
    %1229 = vmatprep.mubr.f32.mxu0 0.0
    %1230 = vmatmul.mubr.f32.gmra.mxu0 %v1126
    %v1231 = vpop.f32.mrf.mxu0
    %v1232 = vadd.f32 %v1104, %v1231
    %v1233 = vpop.f32.mrf.mxu0
    %1234 = vmatprep.mubr.f32.mxu0 0.0
    %1235 = vmatmul.mubr.f32.gmra.mxu0 %v1129
    %v1236 = vpop.f32.mrf.mxu0
    %v1237 = vadd.f32 %v1104, %v1236
    %v1238 = vpop.f32.mrf.mxu0
    %1239 = vdwg.mxu0
    %v1240 = vmax.f32 %v1202, 0.0
    %v1241 = vmax.f32 %v1207, 0.0
    %v1242 = vmax.f32 %v1212, 0.0
    %v1243 = vmax.f32 %v1217, 0.0
    %v1244 = vmax.f32 %v1222, 0.0
    %v1245 = vmax.f32 %v1227, 0.0
    %v1246 = vmax.f32 %v1232, 0.0
    %v1247 = vmax.f32 %v1237, 0.0
    %v1248 = vld [vmem:[%s8 + $0x48] sm:$0xff]
    %v1249 = vld [vmem:[%s9 + $0xc] sm:$0x1]
    %v1251 = vlaneseq
    %v1252 = vshrl.u32 %v1251, 7
    %v1253 = vsub.s32 0, %v1252
    %v1254 = vrot.slane %v1249, %v1253
    %v1257 = vsel %vm141, %v1240, 0
    %v1260 = vsel %vm141, %v1241, 0
    %v1263 = vsel %vm141, %v1242, 0
    %v1266 = vsel %vm141, %v1243, 0
    %v1269 = vsel %vm141, %v1244, 0
    %v1272 = vsel %vm141, %v1245, 0
    %v1275 = vsel %vm141, %v1246, 0
    %v1278 = vsel %vm141, %v1247, 0
    %1280 = vmatprep.subr.mxu0 0.0
    %1281 = vmatpush1.msra.mxu0 0.0
    %1282 = vmatprep.subr.mxu0 0.0
    %1283 = vmatpush1.msra.mxu0 0.0
    %1284 = vmatprep.subr.mxu0 0.0
    %1285 = vmatpush1.msra.mxu0 0.0
    %1286 = vmatprep.subr.mxu0 0.0
    %1287 = vmatpush1.msra.mxu0 0.0
    %1288 = vmatprep.subr.mxu0 0.0
    %1289 = vmatpush1.msra.mxu0 0.0
    %1290 = vmatprep.subr.mxu0 0.0
    %1291 = vmatpush1.msra.mxu0 0.0
    %1292 = vmatprep.subr.mxu0 0.0
    %1293 = vmatpush1.msra.mxu0 0.0
    %1294 = vmatprep.subr.mxu0 0.0
    %1295 = vmatpush1.msra.mxu0 0.0
    %1296 = vmatprep.subr.mxu0 0.0
    %1297 = vmatpush1.msra.mxu0 0.0
    %1298 = vmatprep.subr.mxu0 0.0
    %1299 = vmatpush1.msra.mxu0 0.0
    %1300 = vmatprep.subr.mxu0 0.0
    %1301 = vmatpush1.msra.mxu0 0.0
    %1302 = vmatprep.subr.mxu0 0.0
    %1303 = vmatpush1.msra.mxu0 0.0
    %1304 = vmatprep.subr.mxu0 0.0
    %1305 = vmatpush1.msra.mxu0 0.0
    %1306 = vmatprep.subr.mxu0 0.0
    %1307 = vmatpush1.msra.mxu0 0.0
    %1308 = vmatprep.subr.mxu0 0.0
    %1309 = vmatpush1.msra.mxu0 0.0
    %1310 = vmatprep.subr.mxu0 0.0
    %1311 = vmatpush1.msra.mxu0 %v1248
    %1312 = vmatprep.subr.mxu0 0.0
    %1313 = vmatpush2.msra.mxu0 0.0
    %1314 = vmatprep.subr.mxu0 0.0
    %1315 = vmatpush2.msra.mxu0 0.0
    %1316 = vmatprep.subr.mxu0 0.0
    %1317 = vmatpush2.msra.mxu0 0.0
    %1318 = vmatprep.subr.mxu0 0.0
    %1319 = vmatpush2.msra.mxu0 0.0
    %1320 = vmatprep.subr.mxu0 0.0
    %1321 = vmatpush2.msra.mxu0 0.0
    %1322 = vmatprep.subr.mxu0 0.0
    %1323 = vmatpush2.msra.mxu0 0.0
    %1324 = vmatprep.subr.mxu0 0.0
    %1325 = vmatpush2.msra.mxu0 0.0
    %1326 = vmatprep.subr.mxu0 0.0
    %1327 = vmatpush2.msra.mxu0 0.0
    %1328 = vmatprep.subr.mxu0 0.0
    %1329 = vmatpush2.msra.mxu0 0.0
    %1330 = vmatprep.subr.mxu0 0.0
    %1331 = vmatpush2.msra.mxu0 0.0
    %1332 = vmatprep.subr.mxu0 0.0
    %1333 = vmatpush2.msra.mxu0 0.0
    %1334 = vmatprep.subr.mxu0 0.0
    %1335 = vmatpush2.msra.mxu0 0.0
    %1336 = vmatprep.subr.mxu0 0.0
    %1337 = vmatpush2.msra.mxu0 0.0
    %1338 = vmatprep.subr.mxu0 0.0
    %1339 = vmatpush2.msra.mxu0 0.0
    %1340 = vmatprep.subr.mxu0 0.0
    %1341 = vmatpush2.msra.mxu0 0.0
    %1342 = vmatprep.subr.mxu0 0.0
    %1343 = vmatpush2.msra.mxu0 0.0
    %1344 = vmatprep.mubr.f32.mxu0 0.0
    %1345 = vmatmul.mubr.f32.gmra.mxu0 %v1257
    %v1346 = vpop.f32.mrf.mxu0
    %v1347 = vadd.f32 %v1254, %v1346
    %v1348 = vpop.f32.mrf.mxu0
    %1349 = vmatprep.mubr.f32.mxu0 0.0
    %1350 = vmatmul.mubr.f32.gmra.mxu0 %v1260
    %v1351 = vpop.f32.mrf.mxu0
    %v1352 = vadd.f32 %v1254, %v1351
    %v1353 = vpop.f32.mrf.mxu0
    %1354 = vmatprep.mubr.f32.mxu0 0.0
    %1355 = vmatmul.mubr.f32.gmra.mxu0 %v1263
    %v1356 = vpop.f32.mrf.mxu0
    %v1357 = vadd.f32 %v1254, %v1356
    %v1358 = vpop.f32.mrf.mxu0
    %1359 = vmatprep.mubr.f32.mxu0 0.0
    %1360 = vmatmul.mubr.f32.gmra.mxu0 %v1266
    %v1361 = vpop.f32.mrf.mxu0
    %v1362 = vadd.f32 %v1254, %v1361
    %v1363 = vpop.f32.mrf.mxu0
    %1364 = vmatprep.mubr.f32.mxu0 0.0
    %1365 = vmatmul.mubr.f32.gmra.mxu0 %v1269
    %v1366 = vpop.f32.mrf.mxu0
    %v1367 = vadd.f32 %v1254, %v1366
    %v1368 = vpop.f32.mrf.mxu0
    %1369 = vmatprep.mubr.f32.mxu0 0.0
    %1370 = vmatmul.mubr.f32.gmra.mxu0 %v1272
    %v1371 = vpop.f32.mrf.mxu0
    %v1372 = vadd.f32 %v1254, %v1371
    %v1373 = vpop.f32.mrf.mxu0
    %1374 = vmatprep.mubr.f32.mxu0 0.0
    %1375 = vmatmul.mubr.f32.gmra.mxu0 %v1275
    %v1376 = vpop.f32.mrf.mxu0
    %v1377 = vadd.f32 %v1254, %v1376
    %v1378 = vpop.f32.mrf.mxu0
    %1379 = vmatprep.mubr.f32.mxu0 0.0
    %1380 = vmatmul.mubr.f32.gmra.mxu0 %v1278
    %v1381 = vpop.f32.mrf.mxu0
    %v1382 = vadd.f32 %v1254, %v1381
    %v1383 = vpop.f32.mrf.mxu0
    %1384 = vdwg.mxu0
    %v1385 = vmax.f32 %v1347, 0.0
    %v1386 = vmax.f32 %v1352, 0.0
    %v1387 = vmax.f32 %v1357, 0.0
    %v1388 = vmax.f32 %v1362, 0.0
    %v1389 = vmax.f32 %v1367, 0.0
    %v1390 = vmax.f32 %v1372, 0.0
    %v1391 = vmax.f32 %v1377, 0.0
    %v1392 = vmax.f32 %v1382, 0.0
    %v1393 = vld [vmem:[%s8 + $0x60] sm:$0xff]
    %v1394 = vld [vmem:[%s8 + $0x128] sm:$0xff]
    %v1395 = vld [vmem:[%s8 + $0x1f0] sm:$0xff]
    %v1396 = vld [vmem:[%s8 + $0x2b8] sm:$0xff]
    %v1397 = vld [vmem:[%s9 + $0xf] sm:$0x1]
    %v1399 = vlaneseq
    %v1400 = vshrl.u32 %v1399, 7
    %v1401 = vsub.s32 0, %v1400
    %v1402 = vrot.slane %v1397, %v1401
    %v1405 = vsel %vm711, %v1385, 0
    %v1408 = vsel %vm711, %v1386, 0
    %v1411 = vsel %vm711, %v1387, 0
    %v1414 = vsel %vm711, %v1388, 0
    %v1417 = vsel %vm711, %v1389, 0
    %v1420 = vsel %vm711, %v1390, 0
    %v1423 = vsel %vm711, %v1391, 0
    %v1426 = vsel %vm711, %v1392, 0
    %1428 = vmatprep.subr.mxu0 0.0
    %1429 = vmatpush1.msra.mxu0 0.0
    %1430 = vmatprep.subr.mxu0 0.0
    %1431 = vmatpush1.msra.mxu0 0.0
    %1432 = vmatprep.subr.mxu0 0.0
    %1433 = vmatpush1.msra.mxu0 0.0
    %1434 = vmatprep.subr.mxu0 0.0
    %1435 = vmatpush1.msra.mxu0 0.0
    %1436 = vmatprep.subr.mxu0 0.0
    %1437 = vmatpush1.msra.mxu0 0.0
    %1438 = vmatprep.subr.mxu0 0.0
    %1439 = vmatpush1.msra.mxu0 0.0
    %1440 = vmatprep.subr.mxu0 0.0
    %1441 = vmatpush1.msra.mxu0 0.0
    %1442 = vmatprep.subr.mxu0 0.0
    %1443 = vmatpush1.msra.mxu0 0.0
    %1444 = vmatprep.subr.mxu0 0.0
    %1445 = vmatpush1.msra.mxu0 0.0
    %1446 = vmatprep.subr.mxu0 0.0
    %1447 = vmatpush1.msra.mxu0 0.0
    %1448 = vmatprep.subr.mxu0 0.0
    %1449 = vmatpush1.msra.mxu0 0.0
    %1450 = vmatprep.subr.mxu0 0.0
    %1451 = vmatpush1.msra.mxu0 0.0
    %1452 = vmatprep.subr.mxu0 0.0
    %1453 = vmatpush1.msra.mxu0 %v1396
    %1454 = vmatprep.subr.mxu0 0.0
    %1455 = vmatpush1.msra.mxu0 %v1395
    %1456 = vmatprep.subr.mxu0 0.0
    %1457 = vmatpush1.msra.mxu0 %v1394
    %1458 = vmatprep.subr.mxu0 0.0
    %1459 = vmatpush1.msra.mxu0 %v1393
    %1460 = vmatprep.subr.mxu0 0.0
    %1461 = vmatpush2.msra.mxu0 0.0
    %1462 = vmatprep.subr.mxu0 0.0
    %1463 = vmatpush2.msra.mxu0 0.0
    %1464 = vmatprep.subr.mxu0 0.0
    %1465 = vmatpush2.msra.mxu0 0.0
    %1466 = vmatprep.subr.mxu0 0.0
    %1467 = vmatpush2.msra.mxu0 0.0
    %1468 = vmatprep.subr.mxu0 0.0
    %1469 = vmatpush2.msra.mxu0 0.0
    %1470 = vmatprep.subr.mxu0 0.0
    %1471 = vmatpush2.msra.mxu0 0.0
    %1472 = vmatprep.subr.mxu0 0.0
    %1473 = vmatpush2.msra.mxu0 0.0
    %1474 = vmatprep.subr.mxu0 0.0
    %1475 = vmatpush2.msra.mxu0 0.0
    %1476 = vmatprep.subr.mxu0 0.0
    %1477 = vmatpush2.msra.mxu0 0.0
    %1478 = vmatprep.subr.mxu0 0.0
    %1479 = vmatpush2.msra.mxu0 0.0
    %1480 = vmatprep.subr.mxu0 0.0
    %1481 = vmatpush2.msra.mxu0 0.0
    %1482 = vmatprep.subr.mxu0 0.0
    %1483 = vmatpush2.msra.mxu0 0.0
    %1484 = vmatprep.subr.mxu0 0.0
    %1485 = vmatpush2.msra.mxu0 0.0
    %1486 = vmatprep.subr.mxu0 0.0
    %1487 = vmatpush2.msra.mxu0 0.0
    %1488 = vmatprep.subr.mxu0 0.0
    %1489 = vmatpush2.msra.mxu0 0.0
    %1490 = vmatprep.subr.mxu0 0.0
    %1491 = vmatpush2.msra.mxu0 0.0
    %1492 = vmatprep.mubr.f32.mxu0 0.0
    %1493 = vmatmul.mubr.f32.gmra.mxu0 %v1405
    %v1494 = vpop.f32.mrf.mxu0
    %v1495 = vadd.f32 %v1402, %v1494
    %v1496 = vpop.f32.mrf.mxu0
    %1497 = vmatprep.mubr.f32.mxu0 0.0
    %1498 = vmatmul.mubr.f32.gmra.mxu0 %v1408
    %v1499 = vpop.f32.mrf.mxu0
    %v1500 = vadd.f32 %v1402, %v1499
    %v1501 = vpop.f32.mrf.mxu0
    %1502 = vmatprep.mubr.f32.mxu0 0.0
    %1503 = vmatmul.mubr.f32.gmra.mxu0 %v1411
    %v1504 = vpop.f32.mrf.mxu0
    %v1505 = vadd.f32 %v1402, %v1504
    %v1506 = vpop.f32.mrf.mxu0
    %1507 = vmatprep.mubr.f32.mxu0 0.0
    %1508 = vmatmul.mubr.f32.gmra.mxu0 %v1414
    %v1509 = vpop.f32.mrf.mxu0
    %v1510 = vadd.f32 %v1402, %v1509
    %v1511 = vpop.f32.mrf.mxu0
    %1512 = vmatprep.mubr.f32.mxu0 0.0
    %1513 = vmatmul.mubr.f32.gmra.mxu0 %v1417
    %v1514 = vpop.f32.mrf.mxu0
    %v1515 = vadd.f32 %v1402, %v1514
    %v1516 = vpop.f32.mrf.mxu0
    %1517 = vmatprep.mubr.f32.mxu0 0.0
    %1518 = vmatmul.mubr.f32.gmra.mxu0 %v1420
    %v1519 = vpop.f32.mrf.mxu0
    %v1520 = vadd.f32 %v1402, %v1519
    %v1521 = vpop.f32.mrf.mxu0
    %1522 = vmatprep.mubr.f32.mxu0 0.0
    %1523 = vmatmul.mubr.f32.gmra.mxu0 %v1423
    %v1524 = vpop.f32.mrf.mxu0
    %v1525 = vadd.f32 %v1402, %v1524
    %v1526 = vpop.f32.mrf.mxu0
    %1527 = vmatprep.mubr.f32.mxu0 0.0
    %1528 = vmatmul.mubr.f32.gmra.mxu0 %v1426
    %v1529 = vpop.f32.mrf.mxu0
    %v1530 = vadd.f32 %v1402, %v1529
    %v1531 = vpop.f32.mrf.mxu0
    %1532 = vdwg.mxu0
    %v1533 = vld [vmem:[%s6] sm:$0xff]
    %v1534 = vld [vmem:[%s7] sm:$0xff]
    %v1535 = vld [vmem:[%s8 + $0x68] sm:$0xff]
    %v1536 = vld [vmem:[%s8 + $0x130] sm:$0xff]
    %v1537 = vld [vmem:[%s8 + $0x1f8] sm:$0xff]
    %v1538 = vld [vmem:[%s8 + $0x2c0] sm:$0xff]
    %v1539 = vld [vmem:[%s3] sm:$0xff]
    %v1540 = vld [vmem:[%s3 + $0x8] sm:$0xff]
    %v1541 = vld [vmem:[%s3 + $0x10] sm:$0xff]
    %v1542 = vld [vmem:[%s3 + $0x18] sm:$0xff]
    %v1543 = vld [vmem:[%s3 + $0x20] sm:$0xff]
    %v1544 = vld [vmem:[%s3 + $0x28] sm:$0xff]
    %v1545 = vld [vmem:[%s3 + $0x30] sm:$0xff]
    %v1546 = vld [vmem:[%s3 + $0x38] sm:$0xff]
    %v1547 = vld [vmem:[%s8 + $0x30] sm:$0x7]
    %v1548 = vld [vmem:[%s9 + $0x9] sm:$0x1]
    %v1550 = vlaneseq
    %v1551 = vshrl.u32 %v1550, 7
    %v1552 = vsub.s32 0, %v1551
    %v1553 = vrot.slane %v1548, %v1552
    %v1556 = vsel %vm802, %v1539, 0
    %v1559 = vsel %vm802, %v1540, 0
    %v1562 = vsel %vm802, %v1541, 0
    %v1565 = vsel %vm802, %v1542, 0
    %v1568 = vsel %vm802, %v1543, 0
    %v1571 = vsel %vm802, %v1544, 0
    %v1574 = vsel %vm802, %v1545, 0
    %v1577 = vsel %vm802, %v1546, 0
    %v1580 = vsel %vm827, %v1547, 0
    %1582 = vmatprep.subr.mxu0 0.0
    %1583 = vmatpush1.msra.mxu0 0.0
    %1584 = vmatprep.subr.mxu0 0.0
    %1585 = vmatpush1.msra.mxu0 0.0
    %1586 = vmatprep.subr.mxu0 0.0
    %1587 = vmatpush1.msra.mxu0 0.0
    %1588 = vmatprep.subr.mxu0 0.0
    %1589 = vmatpush1.msra.mxu0 0.0
    %1590 = vmatprep.subr.mxu0 0.0
    %1591 = vmatpush1.msra.mxu0 0.0
    %1592 = vmatprep.subr.mxu0 0.0
    %1593 = vmatpush1.msra.mxu0 0.0
    %1594 = vmatprep.subr.mxu0 0.0
    %1595 = vmatpush1.msra.mxu0 0.0
    %1596 = vmatprep.subr.mxu0 0.0
    %1597 = vmatpush1.msra.mxu0 0.0
    %1598 = vmatprep.subr.mxu0 0.0
    %1599 = vmatpush1.msra.mxu0 0.0
    %1600 = vmatprep.subr.mxu0 0.0
    %1601 = vmatpush1.msra.mxu0 0.0
    %1602 = vmatprep.subr.mxu0 0.0
    %1603 = vmatpush1.msra.mxu0 0.0
    %1604 = vmatprep.subr.mxu0 0.0
    %1605 = vmatpush1.msra.mxu0 0.0
    %1606 = vmatprep.subr.mxu0 0.0
    %1607 = vmatpush1.msra.mxu0 0.0
    %1608 = vmatprep.subr.mxu0 0.0
    %1609 = vmatpush1.msra.mxu0 0.0
    %1610 = vmatprep.subr.mxu0 0.0
    %1611 = vmatpush1.msra.mxu0 0.0
    %1612 = vmatprep.subr.mxu0 0.0
    %1613 = vmatpush1.msra.mxu0 %v1580
    %1614 = vmatprep.subr.mxu0 0.0
    %1615 = vmatpush2.msra.mxu0 0.0
    %1616 = vmatprep.subr.mxu0 0.0
    %1617 = vmatpush2.msra.mxu0 0.0
    %1618 = vmatprep.subr.mxu0 0.0
    %1619 = vmatpush2.msra.mxu0 0.0
    %1620 = vmatprep.subr.mxu0 0.0
    %1621 = vmatpush2.msra.mxu0 0.0
    %1622 = vmatprep.subr.mxu0 0.0
    %1623 = vmatpush2.msra.mxu0 0.0
    %1624 = vmatprep.subr.mxu0 0.0
    %1625 = vmatpush2.msra.mxu0 0.0
    %1626 = vmatprep.subr.mxu0 0.0
    %1627 = vmatpush2.msra.mxu0 0.0
    %1628 = vmatprep.subr.mxu0 0.0
    %1629 = vmatpush2.msra.mxu0 0.0
    %1630 = vmatprep.subr.mxu0 0.0
    %1631 = vmatpush2.msra.mxu0 0.0
    %1632 = vmatprep.subr.mxu0 0.0
    %1633 = vmatpush2.msra.mxu0 0.0
    %1634 = vmatprep.subr.mxu0 0.0
    %1635 = vmatpush2.msra.mxu0 0.0
    %1636 = vmatprep.subr.mxu0 0.0
    %1637 = vmatpush2.msra.mxu0 0.0
    %1638 = vmatprep.subr.mxu0 0.0
    %1639 = vmatpush2.msra.mxu0 0.0
    %1640 = vmatprep.subr.mxu0 0.0
    %1641 = vmatpush2.msra.mxu0 0.0
    %1642 = vmatprep.subr.mxu0 0.0
    %1643 = vmatpush2.msra.mxu0 0.0
    %1644 = vmatprep.subr.mxu0 0.0
    %1645 = vmatpush2.msra.mxu0 0.0
    %1646 = vmatprep.mubr.f32.mxu0 0.0
    %1647 = vmatmul.mubr.f32.gmra.mxu0 %v1556
    %v1648 = vpop.f32.mrf.mxu0
    %v1649 = vadd.f32 %v1553, %v1648
    %v1650 = vpop.f32.mrf.mxu0
    %1651 = vmatprep.mubr.f32.mxu0 0.0
    %1652 = vmatmul.mubr.f32.gmra.mxu0 %v1559
    %v1653 = vpop.f32.mrf.mxu0
    %v1654 = vadd.f32 %v1553, %v1653
    %v1655 = vpop.f32.mrf.mxu0
    %1656 = vmatprep.mubr.f32.mxu0 0.0
    %1657 = vmatmul.mubr.f32.gmra.mxu0 %v1562
    %v1658 = vpop.f32.mrf.mxu0
    %v1659 = vadd.f32 %v1553, %v1658
    %v1660 = vpop.f32.mrf.mxu0
    %1661 = vmatprep.mubr.f32.mxu0 0.0
    %1662 = vmatmul.mubr.f32.gmra.mxu0 %v1565
    %v1663 = vpop.f32.mrf.mxu0
    %v1664 = vadd.f32 %v1553, %v1663
    %v1665 = vpop.f32.mrf.mxu0
    %1666 = vmatprep.mubr.f32.mxu0 0.0
    %1667 = vmatmul.mubr.f32.gmra.mxu0 %v1568
    %v1668 = vpop.f32.mrf.mxu0
    %v1669 = vadd.f32 %v1553, %v1668
    %v1670 = vpop.f32.mrf.mxu0
    %1671 = vmatprep.mubr.f32.mxu0 0.0
    %1672 = vmatmul.mubr.f32.gmra.mxu0 %v1571
    %v1673 = vpop.f32.mrf.mxu0
    %v1674 = vadd.f32 %v1553, %v1673
    %v1675 = vpop.f32.mrf.mxu0
    %1676 = vmatprep.mubr.f32.mxu0 0.0
    %1677 = vmatmul.mubr.f32.gmra.mxu0 %v1574
    %v1678 = vpop.f32.mrf.mxu0
    %v1679 = vadd.f32 %v1553, %v1678
    %v1680 = vpop.f32.mrf.mxu0
    %1681 = vmatprep.mubr.f32.mxu0 0.0
    %1682 = vmatmul.mubr.f32.gmra.mxu0 %v1577
    %v1683 = vpop.f32.mrf.mxu0
    %v1684 = vadd.f32 %v1553, %v1683
    %v1685 = vpop.f32.mrf.mxu0
    %1686 = vdwg.mxu0
    %v1687 = vmax.f32 %v1649, 0.0
    %v1688 = vmax.f32 %v1654, 0.0
    %v1689 = vmax.f32 %v1659, 0.0
    %v1690 = vmax.f32 %v1664, 0.0
    %v1691 = vmax.f32 %v1669, 0.0
    %v1692 = vmax.f32 %v1674, 0.0
    %v1693 = vmax.f32 %v1679, 0.0
    %v1694 = vmax.f32 %v1684, 0.0
    %v1695 = vld [vmem:[%s8 + $0x38] sm:$0xff]
    %v1696 = vld [vmem:[%s9 + $0xa] sm:$0x1]
    %v1698 = vlaneseq
    %v1699 = vshrl.u32 %v1698, 7
    %v1700 = vsub.s32 0, %v1699
    %v1701 = vrot.slane %v1696, %v1700
    %v1704 = vsel %vm141, %v1687, 0
    %v1707 = vsel %vm141, %v1688, 0
    %v1710 = vsel %vm141, %v1689, 0
    %v1713 = vsel %vm141, %v1690, 0
    %v1716 = vsel %vm141, %v1691, 0
    %v1719 = vsel %vm141, %v1692, 0
    %v1722 = vsel %vm141, %v1693, 0
    %v1725 = vsel %vm141, %v1694, 0
    %1727 = vmatprep.subr.mxu0 0.0
    %1728 = vmatpush1.msra.mxu0 0.0
    %1729 = vmatprep.subr.mxu0 0.0
    %1730 = vmatpush1.msra.mxu0 0.0
    %1731 = vmatprep.subr.mxu0 0.0
    %1732 = vmatpush1.msra.mxu0 0.0
    %1733 = vmatprep.subr.mxu0 0.0
    %1734 = vmatpush1.msra.mxu0 0.0
    %1735 = vmatprep.subr.mxu0 0.0
    %1736 = vmatpush1.msra.mxu0 0.0
    %1737 = vmatprep.subr.mxu0 0.0
    %1738 = vmatpush1.msra.mxu0 0.0
    %1739 = vmatprep.subr.mxu0 0.0
    %1740 = vmatpush1.msra.mxu0 0.0
    %1741 = vmatprep.subr.mxu0 0.0
    %1742 = vmatpush1.msra.mxu0 0.0
    %1743 = vmatprep.subr.mxu0 0.0
    %1744 = vmatpush1.msra.mxu0 0.0
    %1745 = vmatprep.subr.mxu0 0.0
    %1746 = vmatpush1.msra.mxu0 0.0
    %1747 = vmatprep.subr.mxu0 0.0
    %1748 = vmatpush1.msra.mxu0 0.0
    %1749 = vmatprep.subr.mxu0 0.0
    %1750 = vmatpush1.msra.mxu0 0.0
    %1751 = vmatprep.subr.mxu0 0.0
    %1752 = vmatpush1.msra.mxu0 0.0
    %1753 = vmatprep.subr.mxu0 0.0
    %1754 = vmatpush1.msra.mxu0 0.0
    %1755 = vmatprep.subr.mxu0 0.0
    %1756 = vmatpush1.msra.mxu0 0.0
    %1757 = vmatprep.subr.mxu0 0.0
    %1758 = vmatpush1.msra.mxu0 %v1695
    %1759 = vmatprep.subr.mxu0 0.0
    %1760 = vmatpush2.msra.mxu0 0.0
    %1761 = vmatprep.subr.mxu0 0.0
    %1762 = vmatpush2.msra.mxu0 0.0
    %1763 = vmatprep.subr.mxu0 0.0
    %1764 = vmatpush2.msra.mxu0 0.0
    %1765 = vmatprep.subr.mxu0 0.0
    %1766 = vmatpush2.msra.mxu0 0.0
    %1767 = vmatprep.subr.mxu0 0.0
    %1768 = vmatpush2.msra.mxu0 0.0
    %1769 = vmatprep.subr.mxu0 0.0
    %1770 = vmatpush2.msra.mxu0 0.0
    %1771 = vmatprep.subr.mxu0 0.0
    %1772 = vmatpush2.msra.mxu0 0.0
    %1773 = vmatprep.subr.mxu0 0.0
    %1774 = vmatpush2.msra.mxu0 0.0
    %1775 = vmatprep.subr.mxu0 0.0
    %1776 = vmatpush2.msra.mxu0 0.0
    %1777 = vmatprep.subr.mxu0 0.0
    %1778 = vmatpush2.msra.mxu0 0.0
    %1779 = vmatprep.subr.mxu0 0.0
    %1780 = vmatpush2.msra.mxu0 0.0
    %1781 = vmatprep.subr.mxu0 0.0
    %1782 = vmatpush2.msra.mxu0 0.0
    %1783 = vmatprep.subr.mxu0 0.0
    %1784 = vmatpush2.msra.mxu0 0.0
    %1785 = vmatprep.subr.mxu0 0.0
    %1786 = vmatpush2.msra.mxu0 0.0
    %1787 = vmatprep.subr.mxu0 0.0
    %1788 = vmatpush2.msra.mxu0 0.0
    %1789 = vmatprep.subr.mxu0 0.0
    %1790 = vmatpush2.msra.mxu0 0.0
    %1791 = vmatprep.mubr.f32.mxu0 0.0
    %1792 = vmatmul.mubr.f32.gmra.mxu0 %v1704
    %v1793 = vpop.f32.mrf.mxu0
    %v1794 = vadd.f32 %v1701, %v1793
    %v1795 = vpop.f32.mrf.mxu0
    %1796 = vmatprep.mubr.f32.mxu0 0.0
    %1797 = vmatmul.mubr.f32.gmra.mxu0 %v1707
    %v1798 = vpop.f32.mrf.mxu0
    %v1799 = vadd.f32 %v1701, %v1798
    %v1800 = vpop.f32.mrf.mxu0
    %1801 = vmatprep.mubr.f32.mxu0 0.0
    %1802 = vmatmul.mubr.f32.gmra.mxu0 %v1710
    %v1803 = vpop.f32.mrf.mxu0
    %v1804 = vadd.f32 %v1701, %v1803
    %v1805 = vpop.f32.mrf.mxu0
    %1806 = vmatprep.mubr.f32.mxu0 0.0
    %1807 = vmatmul.mubr.f32.gmra.mxu0 %v1713
    %v1808 = vpop.f32.mrf.mxu0
    %v1809 = vadd.f32 %v1701, %v1808
    %v1810 = vpop.f32.mrf.mxu0
    %1811 = vmatprep.mubr.f32.mxu0 0.0
    %1812 = vmatmul.mubr.f32.gmra.mxu0 %v1716
    %v1813 = vpop.f32.mrf.mxu0
    %v1814 = vadd.f32 %v1701, %v1813
    %v1815 = vpop.f32.mrf.mxu0
    %1816 = vmatprep.mubr.f32.mxu0 0.0
    %1817 = vmatmul.mubr.f32.gmra.mxu0 %v1719
    %v1818 = vpop.f32.mrf.mxu0
    %v1819 = vadd.f32 %v1701, %v1818
    %v1820 = vpop.f32.mrf.mxu0
    %1821 = vmatprep.mubr.f32.mxu0 0.0
    %1822 = vmatmul.mubr.f32.gmra.mxu0 %v1722
    %v1823 = vpop.f32.mrf.mxu0
    %v1824 = vadd.f32 %v1701, %v1823
    %v1825 = vpop.f32.mrf.mxu0
    %1826 = vmatprep.mubr.f32.mxu0 0.0
    %1827 = vmatmul.mubr.f32.gmra.mxu0 %v1725
    %v1828 = vpop.f32.mrf.mxu0
    %v1829 = vadd.f32 %v1701, %v1828
    %v1830 = vpop.f32.mrf.mxu0
    %1831 = vdwg.mxu0
    %v1832 = vmax.f32 %v1794, 0.0
    %v1833 = vmax.f32 %v1799, 0.0
    %v1834 = vmax.f32 %v1804, 0.0
    %v1835 = vmax.f32 %v1809, 0.0
    %v1836 = vmax.f32 %v1814, 0.0
    %v1837 = vmax.f32 %v1819, 0.0
    %v1838 = vmax.f32 %v1824, 0.0
    %v1839 = vmax.f32 %v1829, 0.0
    %v1841 = vsel %vm711, %v1832, 0
    %v1844 = vsel %vm711, %v1833, 0
    %v1847 = vsel %vm711, %v1834, 0
    %v1850 = vsel %vm711, %v1835, 0
    %v1853 = vsel %vm711, %v1836, 0
    %v1856 = vsel %vm711, %v1837, 0
    %v1859 = vsel %vm711, %v1838, 0
    %v1862 = vsel %vm711, %v1839, 0
    %1864 = vmatprep.subr.mxu0 0.0
    %1865 = vmatpush1.msra.mxu0 0.0
    %1866 = vmatprep.subr.mxu0 0.0
    %1867 = vmatpush1.msra.mxu0 0.0
    %1868 = vmatprep.subr.mxu0 0.0
    %1869 = vmatpush1.msra.mxu0 0.0
    %1870 = vmatprep.subr.mxu0 0.0
    %1871 = vmatpush1.msra.mxu0 0.0
    %1872 = vmatprep.subr.mxu0 0.0
    %1873 = vmatpush1.msra.mxu0 0.0
    %1874 = vmatprep.subr.mxu0 0.0
    %1875 = vmatpush1.msra.mxu0 0.0
    %1876 = vmatprep.subr.mxu0 0.0
    %1877 = vmatpush1.msra.mxu0 0.0
    %1878 = vmatprep.subr.mxu0 0.0
    %1879 = vmatpush1.msra.mxu0 0.0
    %1880 = vmatprep.subr.mxu0 0.0
    %1881 = vmatpush1.msra.mxu0 0.0
    %1882 = vmatprep.subr.mxu0 0.0
    %1883 = vmatpush1.msra.mxu0 0.0
    %1884 = vmatprep.subr.mxu0 0.0
    %1885 = vmatpush1.msra.mxu0 0.0
    %1886 = vmatprep.subr.mxu0 0.0
    %1887 = vmatpush1.msra.mxu0 0.0
    %1888 = vmatprep.subr.mxu0 0.0
    %1889 = vmatpush1.msra.mxu0 %v1538
    %1890 = vmatprep.subr.mxu0 0.0
    %1891 = vmatpush1.msra.mxu0 %v1537
    %1892 = vmatprep.subr.mxu0 0.0
    %1893 = vmatpush1.msra.mxu0 %v1536
    %1894 = vmatprep.subr.mxu0 0.0
    %1895 = vmatpush1.msra.mxu0 %v1535
    %1896 = vmatprep.subr.mxu0 0.0
    %1897 = vmatpush2.msra.mxu0 0.0
    %1898 = vmatprep.subr.mxu0 0.0
    %1899 = vmatpush2.msra.mxu0 0.0
    %1900 = vmatprep.subr.mxu0 0.0
    %1901 = vmatpush2.msra.mxu0 0.0
    %1902 = vmatprep.subr.mxu0 0.0
    %1903 = vmatpush2.msra.mxu0 0.0
    %1904 = vmatprep.subr.mxu0 0.0
    %1905 = vmatpush2.msra.mxu0 0.0
    %1906 = vmatprep.subr.mxu0 0.0
    %1907 = vmatpush2.msra.mxu0 0.0
    %1908 = vmatprep.subr.mxu0 0.0
    %1909 = vmatpush2.msra.mxu0 0.0
    %1910 = vmatprep.subr.mxu0 0.0
    %1911 = vmatpush2.msra.mxu0 0.0
    %1912 = vmatprep.subr.mxu0 0.0
    %1913 = vmatpush2.msra.mxu0 0.0
    %1914 = vmatprep.subr.mxu0 0.0
    %1915 = vmatpush2.msra.mxu0 0.0
    %1916 = vmatprep.subr.mxu0 0.0
    %1917 = vmatpush2.msra.mxu0 0.0
    %1918 = vmatprep.subr.mxu0 0.0
    %1919 = vmatpush2.msra.mxu0 0.0
    %1920 = vmatprep.subr.mxu0 0.0
    %1921 = vmatpush2.msra.mxu0 0.0
    %1922 = vmatprep.subr.mxu0 0.0
    %1923 = vmatpush2.msra.mxu0 0.0
    %1924 = vmatprep.subr.mxu0 0.0
    %1925 = vmatpush2.msra.mxu0 0.0
    %1926 = vmatprep.subr.mxu0 0.0
    %1927 = vmatpush2.msra.mxu0 0.0
    %1928 = vmatprep.mubr.f32.mxu0 0.0
    %1929 = vmatmul.mubr.f32.gmra.mxu0 %v1841
    %v1930 = vpop.f32.mrf.mxu0
    %v1931 = vadd.f32 0.0, %v1930
    %v1932 = vpop.f32.mrf.mxu0
    %1933 = vmatprep.mubr.f32.mxu0 0.0
    %1934 = vmatmul.mubr.f32.gmra.mxu0 %v1844
    %v1935 = vpop.f32.mrf.mxu0
    %v1936 = vadd.f32 0.0, %v1935
    %v1937 = vpop.f32.mrf.mxu0
    %1938 = vmatprep.mubr.f32.mxu0 0.0
    %1939 = vmatmul.mubr.f32.gmra.mxu0 %v1847
    %v1940 = vpop.f32.mrf.mxu0
    %v1941 = vadd.f32 0.0, %v1940
    %v1942 = vpop.f32.mrf.mxu0
    %1943 = vmatprep.mubr.f32.mxu0 0.0
    %1944 = vmatmul.mubr.f32.gmra.mxu0 %v1850
    %v1945 = vpop.f32.mrf.mxu0
    %v1946 = vadd.f32 0.0, %v1945
    %v1947 = vpop.f32.mrf.mxu0
    %1948 = vmatprep.mubr.f32.mxu0 0.0
    %1949 = vmatmul.mubr.f32.gmra.mxu0 %v1853
    %v1950 = vpop.f32.mrf.mxu0
    %v1951 = vadd.f32 0.0, %v1950
    %v1952 = vpop.f32.mrf.mxu0
    %1953 = vmatprep.mubr.f32.mxu0 0.0
    %1954 = vmatmul.mubr.f32.gmra.mxu0 %v1856
    %v1955 = vpop.f32.mrf.mxu0
    %v1956 = vadd.f32 0.0, %v1955
    %v1957 = vpop.f32.mrf.mxu0
    %1958 = vmatprep.mubr.f32.mxu0 0.0
    %1959 = vmatmul.mubr.f32.gmra.mxu0 %v1859
    %v1960 = vpop.f32.mrf.mxu0
    %v1961 = vadd.f32 0.0, %v1960
    %v1962 = vpop.f32.mrf.mxu0
    %1963 = vmatprep.mubr.f32.mxu0 0.0
    %1964 = vmatmul.mubr.f32.gmra.mxu0 %v1862
    %v1965 = vpop.f32.mrf.mxu0
    %v1966 = vadd.f32 0.0, %v1965
    %v1967 = vpop.f32.mrf.mxu0
    %1968 = vdwg.mxu0
    %v1969 = vadd.f32 %v1495, %v1931
    %v1970 = vadd.f32 %v1500, %v1936
    %v1971 = vadd.f32 %v1505, %v1941
    %v1972 = vadd.f32 %v1510, %v1946
    %v1973 = vadd.f32 %v1515, %v1951
    %v1974 = vadd.f32 %v1520, %v1956
    %v1975 = vadd.f32 %v1525, %v1961
    %v1976 = vadd.f32 %v1530, %v1966
    %v1977 = vmax.f32 %v1969, 0.0
    %v1978 = vmax.f32 %v1970, 0.0
    %v1979 = vmax.f32 %v1971, 0.0
    %v1980 = vmax.f32 %v1972, 0.0
    %v1981 = vmax.f32 %v1973, 0.0
    %v1982 = vmax.f32 %v1974, 0.0
    %v1983 = vmax.f32 %v1975, 0.0
    %v1984 = vmax.f32 %v1976, 0.0
    %1986 = vset.pattern.permute.xlu0 0
    %1987 = vperm.xlu0 %1986, %v1533
    %v1988 = vpop.permute.xlu0 %1987
    %v1990 = vmul.f32 %v1977, %v1988
    %v1991 = vmul.f32 %v1978, %v1988
    %v1992 = vmul.f32 %v1979, %v1988
    %v1993 = vmul.f32 %v1980, %v1988
    %v1994 = vmul.f32 %v1981, %v1988
    %v1995 = vmul.f32 %v1982, %v1988
    %v1996 = vmul.f32 %v1983, %v1988
    %v1997 = vmul.f32 %v1984, %v1988
    %s1998 = scalar_lea.vmem %s3, 64
    %v1999 = vld [vmem:[%s1998] sm:$0xff]
    %v2000 = vld [vmem:[%s1998 + $0x8] sm:$0xff]
    %v2001 = vld [vmem:[%s1998 + $0x10] sm:$0xff]
    %v2002 = vld [vmem:[%s1998 + $0x18] sm:$0xff]
    %v2003 = vld [vmem:[%s1998 + $0x20] sm:$0xff]
    %v2004 = vld [vmem:[%s1998 + $0x28] sm:$0xff]
    %v2005 = vld [vmem:[%s1998 + $0x30] sm:$0xff]
    %v2006 = vld [vmem:[%s1998 + $0x38] sm:$0xff]
    %v2008 = vsel %vm802, %v1999, 0
    %v2011 = vsel %vm802, %v2000, 0
    %v2014 = vsel %vm802, %v2001, 0
    %v2017 = vsel %vm802, %v2002, 0
    %v2020 = vsel %vm802, %v2003, 0
    %v2023 = vsel %vm802, %v2004, 0
    %v2026 = vsel %vm802, %v2005, 0
    %v2029 = vsel %vm802, %v2006, 0
    %2031 = vmatprep.subr.mxu0 0.0
    %2032 = vmatpush1.msra.mxu0 0.0
    %2033 = vmatprep.subr.mxu0 0.0
    %2034 = vmatpush1.msra.mxu0 0.0
    %2035 = vmatprep.subr.mxu0 0.0
    %2036 = vmatpush1.msra.mxu0 0.0
    %2037 = vmatprep.subr.mxu0 0.0
    %2038 = vmatpush1.msra.mxu0 0.0
    %2039 = vmatprep.subr.mxu0 0.0
    %2040 = vmatpush1.msra.mxu0 0.0
    %2041 = vmatprep.subr.mxu0 0.0
    %2042 = vmatpush1.msra.mxu0 0.0
    %2043 = vmatprep.subr.mxu0 0.0
    %2044 = vmatpush1.msra.mxu0 0.0
    %2045 = vmatprep.subr.mxu0 0.0
    %2046 = vmatpush1.msra.mxu0 0.0
    %2047 = vmatprep.subr.mxu0 0.0
    %2048 = vmatpush1.msra.mxu0 0.0
    %2049 = vmatprep.subr.mxu0 0.0
    %2050 = vmatpush1.msra.mxu0 0.0
    %2051 = vmatprep.subr.mxu0 0.0
    %2052 = vmatpush1.msra.mxu0 0.0
    %2053 = vmatprep.subr.mxu0 0.0
    %2054 = vmatpush1.msra.mxu0 0.0
    %2055 = vmatprep.subr.mxu0 0.0
    %2056 = vmatpush1.msra.mxu0 0.0
    %2057 = vmatprep.subr.mxu0 0.0
    %2058 = vmatpush1.msra.mxu0 0.0
    %2059 = vmatprep.subr.mxu0 0.0
    %2060 = vmatpush1.msra.mxu0 0.0
    %2061 = vmatprep.subr.mxu0 0.0
    %2062 = vmatpush1.msra.mxu0 %v1580
    %2063 = vmatprep.subr.mxu0 0.0
    %2064 = vmatpush2.msra.mxu0 0.0
    %2065 = vmatprep.subr.mxu0 0.0
    %2066 = vmatpush2.msra.mxu0 0.0
    %2067 = vmatprep.subr.mxu0 0.0
    %2068 = vmatpush2.msra.mxu0 0.0
    %2069 = vmatprep.subr.mxu0 0.0
    %2070 = vmatpush2.msra.mxu0 0.0
    %2071 = vmatprep.subr.mxu0 0.0
    %2072 = vmatpush2.msra.mxu0 0.0
    %2073 = vmatprep.subr.mxu0 0.0
    %2074 = vmatpush2.msra.mxu0 0.0
    %2075 = vmatprep.subr.mxu0 0.0
    %2076 = vmatpush2.msra.mxu0 0.0
    %2077 = vmatprep.subr.mxu0 0.0
    %2078 = vmatpush2.msra.mxu0 0.0
    %2079 = vmatprep.subr.mxu0 0.0
    %2080 = vmatpush2.msra.mxu0 0.0
    %2081 = vmatprep.subr.mxu0 0.0
    %2082 = vmatpush2.msra.mxu0 0.0
    %2083 = vmatprep.subr.mxu0 0.0
    %2084 = vmatpush2.msra.mxu0 0.0
    %2085 = vmatprep.subr.mxu0 0.0
    %2086 = vmatpush2.msra.mxu0 0.0
    %2087 = vmatprep.subr.mxu0 0.0
    %2088 = vmatpush2.msra.mxu0 0.0
    %2089 = vmatprep.subr.mxu0 0.0
    %2090 = vmatpush2.msra.mxu0 0.0
    %2091 = vmatprep.subr.mxu0 0.0
    %2092 = vmatpush2.msra.mxu0 0.0
    %2093 = vmatprep.subr.mxu0 0.0
    %2094 = vmatpush2.msra.mxu0 0.0
    %2095 = vmatprep.mubr.f32.mxu0 0.0
    %2096 = vmatmul.mubr.f32.gmra.mxu0 %v2008
    %v2097 = vpop.f32.mrf.mxu0
    %v2098 = vadd.f32 %v1553, %v2097
    %v2099 = vpop.f32.mrf.mxu0
    %2100 = vmatprep.mubr.f32.mxu0 0.0
    %2101 = vmatmul.mubr.f32.gmra.mxu0 %v2011
    %v2102 = vpop.f32.mrf.mxu0
    %v2103 = vadd.f32 %v1553, %v2102
    %v2104 = vpop.f32.mrf.mxu0
    %2105 = vmatprep.mubr.f32.mxu0 0.0
    %2106 = vmatmul.mubr.f32.gmra.mxu0 %v2014
    %v2107 = vpop.f32.mrf.mxu0
    %v2108 = vadd.f32 %v1553, %v2107
    %v2109 = vpop.f32.mrf.mxu0
    %2110 = vmatprep.mubr.f32.mxu0 0.0
    %2111 = vmatmul.mubr.f32.gmra.mxu0 %v2017
    %v2112 = vpop.f32.mrf.mxu0
    %v2113 = vadd.f32 %v1553, %v2112
    %v2114 = vpop.f32.mrf.mxu0
    %2115 = vmatprep.mubr.f32.mxu0 0.0
    %2116 = vmatmul.mubr.f32.gmra.mxu0 %v2020
    %v2117 = vpop.f32.mrf.mxu0
    %v2118 = vadd.f32 %v1553, %v2117
    %v2119 = vpop.f32.mrf.mxu0
    %2120 = vmatprep.mubr.f32.mxu0 0.0
    %2121 = vmatmul.mubr.f32.gmra.mxu0 %v2023
    %v2122 = vpop.f32.mrf.mxu0
    %v2123 = vadd.f32 %v1553, %v2122
    %v2124 = vpop.f32.mrf.mxu0
    %2125 = vmatprep.mubr.f32.mxu0 0.0
    %2126 = vmatmul.mubr.f32.gmra.mxu0 %v2026
    %v2127 = vpop.f32.mrf.mxu0
    %v2128 = vadd.f32 %v1553, %v2127
    %v2129 = vpop.f32.mrf.mxu0
    %2130 = vmatprep.mubr.f32.mxu0 0.0
    %2131 = vmatmul.mubr.f32.gmra.mxu0 %v2029
    %v2132 = vpop.f32.mrf.mxu0
    %v2133 = vadd.f32 %v1553, %v2132
    %v2134 = vpop.f32.mrf.mxu0
    %2135 = vdwg.mxu0
    %v2136 = vmax.f32 %v2098, 0.0
    %v2137 = vmax.f32 %v2103, 0.0
    %v2138 = vmax.f32 %v2108, 0.0
    %v2139 = vmax.f32 %v2113, 0.0
    %v2140 = vmax.f32 %v2118, 0.0
    %v2141 = vmax.f32 %v2123, 0.0
    %v2142 = vmax.f32 %v2128, 0.0
    %v2143 = vmax.f32 %v2133, 0.0
    %v2145 = vsel %vm141, %v2136, 0
    %v2148 = vsel %vm141, %v2137, 0
    %v2151 = vsel %vm141, %v2138, 0
    %v2154 = vsel %vm141, %v2139, 0
    %v2157 = vsel %vm141, %v2140, 0
    %v2160 = vsel %vm141, %v2141, 0
    %v2163 = vsel %vm141, %v2142, 0
    %v2166 = vsel %vm141, %v2143, 0
    %2168 = vmatprep.subr.mxu0 0.0
    %2169 = vmatpush1.msra.mxu0 0.0
    %2170 = vmatprep.subr.mxu0 0.0
    %2171 = vmatpush1.msra.mxu0 0.0
    %2172 = vmatprep.subr.mxu0 0.0
    %2173 = vmatpush1.msra.mxu0 0.0
    %2174 = vmatprep.subr.mxu0 0.0
    %2175 = vmatpush1.msra.mxu0 0.0
    %2176 = vmatprep.subr.mxu0 0.0
    %2177 = vmatpush1.msra.mxu0 0.0
    %2178 = vmatprep.subr.mxu0 0.0
    %2179 = vmatpush1.msra.mxu0 0.0
    %2180 = vmatprep.subr.mxu0 0.0
    %2181 = vmatpush1.msra.mxu0 0.0
    %2182 = vmatprep.subr.mxu0 0.0
    %2183 = vmatpush1.msra.mxu0 0.0
    %2184 = vmatprep.subr.mxu0 0.0
    %2185 = vmatpush1.msra.mxu0 0.0
    %2186 = vmatprep.subr.mxu0 0.0
    %2187 = vmatpush1.msra.mxu0 0.0
    %2188 = vmatprep.subr.mxu0 0.0
    %2189 = vmatpush1.msra.mxu0 0.0
    %2190 = vmatprep.subr.mxu0 0.0
    %2191 = vmatpush1.msra.mxu0 0.0
    %2192 = vmatprep.subr.mxu0 0.0
    %2193 = vmatpush1.msra.mxu0 0.0
    %2194 = vmatprep.subr.mxu0 0.0
    %2195 = vmatpush1.msra.mxu0 0.0
    %2196 = vmatprep.subr.mxu0 0.0
    %2197 = vmatpush1.msra.mxu0 0.0
    %2198 = vmatprep.subr.mxu0 0.0
    %2199 = vmatpush1.msra.mxu0 %v1695
    %2200 = vmatprep.subr.mxu0 0.0
    %2201 = vmatpush2.msra.mxu0 0.0
    %2202 = vmatprep.subr.mxu0 0.0
    %2203 = vmatpush2.msra.mxu0 0.0
    %2204 = vmatprep.subr.mxu0 0.0
    %2205 = vmatpush2.msra.mxu0 0.0
    %2206 = vmatprep.subr.mxu0 0.0
    %2207 = vmatpush2.msra.mxu0 0.0
    %2208 = vmatprep.subr.mxu0 0.0
    %2209 = vmatpush2.msra.mxu0 0.0
    %2210 = vmatprep.subr.mxu0 0.0
    %2211 = vmatpush2.msra.mxu0 0.0
    %2212 = vmatprep.subr.mxu0 0.0
    %2213 = vmatpush2.msra.mxu0 0.0
    %2214 = vmatprep.subr.mxu0 0.0
    %2215 = vmatpush2.msra.mxu0 0.0
    %2216 = vmatprep.subr.mxu0 0.0
    %2217 = vmatpush2.msra.mxu0 0.0
    %2218 = vmatprep.subr.mxu0 0.0
    %2219 = vmatpush2.msra.mxu0 0.0
    %2220 = vmatprep.subr.mxu0 0.0
    %2221 = vmatpush2.msra.mxu0 0.0
    %2222 = vmatprep.subr.mxu0 0.0
    %2223 = vmatpush2.msra.mxu0 0.0
    %2224 = vmatprep.subr.mxu0 0.0
    %2225 = vmatpush2.msra.mxu0 0.0
    %2226 = vmatprep.subr.mxu0 0.0
    %2227 = vmatpush2.msra.mxu0 0.0
    %2228 = vmatprep.subr.mxu0 0.0
    %2229 = vmatpush2.msra.mxu0 0.0
    %2230 = vmatprep.subr.mxu0 0.0
    %2231 = vmatpush2.msra.mxu0 0.0
    %2232 = vmatprep.mubr.f32.mxu0 0.0
    %2233 = vmatmul.mubr.f32.gmra.mxu0 %v2145
    %v2234 = vpop.f32.mrf.mxu0
    %v2235 = vadd.f32 %v1701, %v2234
    %v2236 = vpop.f32.mrf.mxu0
    %2237 = vmatprep.mubr.f32.mxu0 0.0
    %2238 = vmatmul.mubr.f32.gmra.mxu0 %v2148
    %v2239 = vpop.f32.mrf.mxu0
    %v2240 = vadd.f32 %v1701, %v2239
    %v2241 = vpop.f32.mrf.mxu0
    %2242 = vmatprep.mubr.f32.mxu0 0.0
    %2243 = vmatmul.mubr.f32.gmra.mxu0 %v2151
    %v2244 = vpop.f32.mrf.mxu0
    %v2245 = vadd.f32 %v1701, %v2244
    %v2246 = vpop.f32.mrf.mxu0
    %2247 = vmatprep.mubr.f32.mxu0 0.0
    %2248 = vmatmul.mubr.f32.gmra.mxu0 %v2154
    %v2249 = vpop.f32.mrf.mxu0
    %v2250 = vadd.f32 %v1701, %v2249
    %v2251 = vpop.f32.mrf.mxu0
    %2252 = vmatprep.mubr.f32.mxu0 0.0
    %2253 = vmatmul.mubr.f32.gmra.mxu0 %v2157
    %v2254 = vpop.f32.mrf.mxu0
    %v2255 = vadd.f32 %v1701, %v2254
    %v2256 = vpop.f32.mrf.mxu0
    %2257 = vmatprep.mubr.f32.mxu0 0.0
    %2258 = vmatmul.mubr.f32.gmra.mxu0 %v2160
    %v2259 = vpop.f32.mrf.mxu0
    %v2260 = vadd.f32 %v1701, %v2259
    %v2261 = vpop.f32.mrf.mxu0
    %2262 = vmatprep.mubr.f32.mxu0 0.0
    %2263 = vmatmul.mubr.f32.gmra.mxu0 %v2163
    %v2264 = vpop.f32.mrf.mxu0
    %v2265 = vadd.f32 %v1701, %v2264
    %v2266 = vpop.f32.mrf.mxu0
    %2267 = vmatprep.mubr.f32.mxu0 0.0
    %2268 = vmatmul.mubr.f32.gmra.mxu0 %v2166
    %v2269 = vpop.f32.mrf.mxu0
    %v2270 = vadd.f32 %v1701, %v2269
    %v2271 = vpop.f32.mrf.mxu0
    %2272 = vdwg.mxu0
    %v2273 = vmax.f32 %v2235, 0.0
    %v2274 = vmax.f32 %v2240, 0.0
    %v2275 = vmax.f32 %v2245, 0.0
    %v2276 = vmax.f32 %v2250, 0.0
    %v2277 = vmax.f32 %v2255, 0.0
    %v2278 = vmax.f32 %v2260, 0.0
    %v2279 = vmax.f32 %v2265, 0.0
    %v2280 = vmax.f32 %v2270, 0.0
    %v2282 = vsel %vm711, %v2273, 0
    %v2285 = vsel %vm711, %v2274, 0
    %v2288 = vsel %vm711, %v2275, 0
    %v2291 = vsel %vm711, %v2276, 0
    %v2294 = vsel %vm711, %v2277, 0
    %v2297 = vsel %vm711, %v2278, 0
    %v2300 = vsel %vm711, %v2279, 0
    %v2303 = vsel %vm711, %v2280, 0
    %2305 = vmatprep.subr.mxu0 0.0
    %2306 = vmatpush1.msra.mxu0 0.0
    %2307 = vmatprep.subr.mxu0 0.0
    %2308 = vmatpush1.msra.mxu0 0.0
    %2309 = vmatprep.subr.mxu0 0.0
    %2310 = vmatpush1.msra.mxu0 0.0
    %2311 = vmatprep.subr.mxu0 0.0
    %2312 = vmatpush1.msra.mxu0 0.0
    %2313 = vmatprep.subr.mxu0 0.0
    %2314 = vmatpush1.msra.mxu0 0.0
    %2315 = vmatprep.subr.mxu0 0.0
    %2316 = vmatpush1.msra.mxu0 0.0
    %2317 = vmatprep.subr.mxu0 0.0
    %2318 = vmatpush1.msra.mxu0 0.0
    %2319 = vmatprep.subr.mxu0 0.0
    %2320 = vmatpush1.msra.mxu0 0.0
    %2321 = vmatprep.subr.mxu0 0.0
    %2322 = vmatpush1.msra.mxu0 0.0
    %2323 = vmatprep.subr.mxu0 0.0
    %2324 = vmatpush1.msra.mxu0 0.0
    %2325 = vmatprep.subr.mxu0 0.0
    %2326 = vmatpush1.msra.mxu0 0.0
    %2327 = vmatprep.subr.mxu0 0.0
    %2328 = vmatpush1.msra.mxu0 0.0
    %2329 = vmatprep.subr.mxu0 0.0
    %2330 = vmatpush1.msra.mxu0 %v1538
    %2331 = vmatprep.subr.mxu0 0.0
    %2332 = vmatpush1.msra.mxu0 %v1537
    %2333 = vmatprep.subr.mxu0 0.0
    %2334 = vmatpush1.msra.mxu0 %v1536
    %2335 = vmatprep.subr.mxu0 0.0
    %2336 = vmatpush1.msra.mxu0 %v1535
    %2337 = vmatprep.subr.mxu0 0.0
    %2338 = vmatpush2.msra.mxu0 0.0
    %2339 = vmatprep.subr.mxu0 0.0
    %2340 = vmatpush2.msra.mxu0 0.0
    %2341 = vmatprep.subr.mxu0 0.0
    %2342 = vmatpush2.msra.mxu0 0.0
    %2343 = vmatprep.subr.mxu0 0.0
    %2344 = vmatpush2.msra.mxu0 0.0
    %2345 = vmatprep.subr.mxu0 0.0
    %2346 = vmatpush2.msra.mxu0 0.0
    %2347 = vmatprep.subr.mxu0 0.0
    %2348 = vmatpush2.msra.mxu0 0.0
    %2349 = vmatprep.subr.mxu0 0.0
    %2350 = vmatpush2.msra.mxu0 0.0
    %2351 = vmatprep.subr.mxu0 0.0
    %2352 = vmatpush2.msra.mxu0 0.0
    %2353 = vmatprep.subr.mxu0 0.0
    %2354 = vmatpush2.msra.mxu0 0.0
    %2355 = vmatprep.subr.mxu0 0.0
    %2356 = vmatpush2.msra.mxu0 0.0
    %2357 = vmatprep.subr.mxu0 0.0
    %2358 = vmatpush2.msra.mxu0 0.0
    %2359 = vmatprep.subr.mxu0 0.0
    %2360 = vmatpush2.msra.mxu0 0.0
    %2361 = vmatprep.subr.mxu0 0.0
    %2362 = vmatpush2.msra.mxu0 0.0
    %2363 = vmatprep.subr.mxu0 0.0
    %2364 = vmatpush2.msra.mxu0 0.0
    %2365 = vmatprep.subr.mxu0 0.0
    %2366 = vmatpush2.msra.mxu0 0.0
    %2367 = vmatprep.subr.mxu0 0.0
    %2368 = vmatpush2.msra.mxu0 0.0
    %2369 = vmatprep.mubr.f32.mxu0 0.0
    %2370 = vmatmul.mubr.f32.gmra.mxu0 %v2282
    %v2371 = vpop.f32.mrf.mxu0
    %v2372 = vadd.f32 0.0, %v2371
    %v2373 = vpop.f32.mrf.mxu0
    %2374 = vmatprep.mubr.f32.mxu0 0.0
    %2375 = vmatmul.mubr.f32.gmra.mxu0 %v2285
    %v2376 = vpop.f32.mrf.mxu0
    %v2377 = vadd.f32 0.0, %v2376
    %v2378 = vpop.f32.mrf.mxu0
    %2379 = vmatprep.mubr.f32.mxu0 0.0
    %2380 = vmatmul.mubr.f32.gmra.mxu0 %v2288
    %v2381 = vpop.f32.mrf.mxu0
    %v2382 = vadd.f32 0.0, %v2381
    %v2383 = vpop.f32.mrf.mxu0
    %2384 = vmatprep.mubr.f32.mxu0 0.0
    %2385 = vmatmul.mubr.f32.gmra.mxu0 %v2291
    %v2386 = vpop.f32.mrf.mxu0
    %v2387 = vadd.f32 0.0, %v2386
    %v2388 = vpop.f32.mrf.mxu0
    %2389 = vmatprep.mubr.f32.mxu0 0.0
    %2390 = vmatmul.mubr.f32.gmra.mxu0 %v2294
    %v2391 = vpop.f32.mrf.mxu0
    %v2392 = vadd.f32 0.0, %v2391
    %v2393 = vpop.f32.mrf.mxu0
    %2394 = vmatprep.mubr.f32.mxu0 0.0
    %2395 = vmatmul.mubr.f32.gmra.mxu0 %v2297
    %v2396 = vpop.f32.mrf.mxu0
    %v2397 = vadd.f32 0.0, %v2396
    %v2398 = vpop.f32.mrf.mxu0
    %2399 = vmatprep.mubr.f32.mxu0 0.0
    %2400 = vmatmul.mubr.f32.gmra.mxu0 %v2300
    %v2401 = vpop.f32.mrf.mxu0
    %v2402 = vadd.f32 0.0, %v2401
    %v2403 = vpop.f32.mrf.mxu0
    %2404 = vmatprep.mubr.f32.mxu0 0.0
    %2405 = vmatmul.mubr.f32.gmra.mxu0 %v2303
    %v2406 = vpop.f32.mrf.mxu0
    %v2407 = vadd.f32 0.0, %v2406
    %v2408 = vpop.f32.mrf.mxu0
    %2409 = vdwg.mxu0
    %v2410 = vadd.f32 %v1495, %v2372
    %v2411 = vadd.f32 %v1500, %v2377
    %v2412 = vadd.f32 %v1505, %v2382
    %v2413 = vadd.f32 %v1510, %v2387
    %v2414 = vadd.f32 %v1515, %v2392
    %v2415 = vadd.f32 %v1520, %v2397
    %v2416 = vadd.f32 %v1525, %v2402
    %v2417 = vadd.f32 %v1530, %v2407
    %v2418 = vmax.f32 %v2410, 0.0
    %v2419 = vmax.f32 %v2411, 0.0
    %v2420 = vmax.f32 %v2412, 0.0
    %v2421 = vmax.f32 %v2413, 0.0
    %v2422 = vmax.f32 %v2414, 0.0
    %v2423 = vmax.f32 %v2415, 0.0
    %v2424 = vmax.f32 %v2416, 0.0
    %v2425 = vmax.f32 %v2417, 0.0
    %2426 = vset.pattern.permute.xlu0 1
    %2427 = vperm.xlu0 %2426, %v1533
    %v2428 = vpop.permute.xlu0 %2427
    %v2430 = vmul.f32 %v2418, %v2428
    %v2431 = vmul.f32 %v2419, %v2428
    %v2432 = vmul.f32 %v2420, %v2428
    %v2433 = vmul.f32 %v2421, %v2428
    %v2434 = vmul.f32 %v2422, %v2428
    %v2435 = vmul.f32 %v2423, %v2428
    %v2436 = vmul.f32 %v2424, %v2428
    %v2437 = vmul.f32 %v2425, %v2428
    %v2438 = vmax.f32 %v1990, %v2430
    %v2439 = vmax.f32 %v1991, %v2431
    %v2440 = vmax.f32 %v1992, %v2432
    %v2441 = vmax.f32 %v1993, %v2433
    %v2442 = vmax.f32 %v1994, %v2434
    %v2443 = vmax.f32 %v1995, %v2435
    %v2444 = vmax.f32 %v1996, %v2436
    %v2445 = vmax.f32 %v1997, %v2437
    %s2446 = scalar_lea.vmem %s3, 128
    %v2447 = vld [vmem:[%s2446] sm:$0xff]
    %v2448 = vld [vmem:[%s2446 + $0x8] sm:$0xff]
    %v2449 = vld [vmem:[%s2446 + $0x10] sm:$0xff]
    %v2450 = vld [vmem:[%s2446 + $0x18] sm:$0xff]
    %v2451 = vld [vmem:[%s2446 + $0x20] sm:$0xff]
    %v2452 = vld [vmem:[%s2446 + $0x28] sm:$0xff]
    %v2453 = vld [vmem:[%s2446 + $0x30] sm:$0xff]
    %v2454 = vld [vmem:[%s2446 + $0x38] sm:$0xff]
    %v2456 = vsel %vm802, %v2447, 0
    %v2459 = vsel %vm802, %v2448, 0
    %v2462 = vsel %vm802, %v2449, 0
    %v2465 = vsel %vm802, %v2450, 0
    %v2468 = vsel %vm802, %v2451, 0
    %v2471 = vsel %vm802, %v2452, 0
    %v2474 = vsel %vm802, %v2453, 0
    %v2477 = vsel %vm802, %v2454, 0
    %2479 = vmatprep.subr.mxu0 0.0
    %2480 = vmatpush1.msra.mxu0 0.0
    %2481 = vmatprep.subr.mxu0 0.0
    %2482 = vmatpush1.msra.mxu0 0.0
    %2483 = vmatprep.subr.mxu0 0.0
    %2484 = vmatpush1.msra.mxu0 0.0
    %2485 = vmatprep.subr.mxu0 0.0
    %2486 = vmatpush1.msra.mxu0 0.0
    %2487 = vmatprep.subr.mxu0 0.0
    %2488 = vmatpush1.msra.mxu0 0.0
    %2489 = vmatprep.subr.mxu0 0.0
    %2490 = vmatpush1.msra.mxu0 0.0
    %2491 = vmatprep.subr.mxu0 0.0
    %2492 = vmatpush1.msra.mxu0 0.0
    %2493 = vmatprep.subr.mxu0 0.0
    %2494 = vmatpush1.msra.mxu0 0.0
    %2495 = vmatprep.subr.mxu0 0.0
    %2496 = vmatpush1.msra.mxu0 0.0
    %2497 = vmatprep.subr.mxu0 0.0
    %2498 = vmatpush1.msra.mxu0 0.0
    %2499 = vmatprep.subr.mxu0 0.0
    %2500 = vmatpush1.msra.mxu0 0.0
    %2501 = vmatprep.subr.mxu0 0.0
    %2502 = vmatpush1.msra.mxu0 0.0
    %2503 = vmatprep.subr.mxu0 0.0
    %2504 = vmatpush1.msra.mxu0 0.0
    %2505 = vmatprep.subr.mxu0 0.0
    %2506 = vmatpush1.msra.mxu0 0.0
    %2507 = vmatprep.subr.mxu0 0.0
    %2508 = vmatpush1.msra.mxu0 0.0
    %2509 = vmatprep.subr.mxu0 0.0
    %2510 = vmatpush1.msra.mxu0 %v1580
    %2511 = vmatprep.subr.mxu0 0.0
    %2512 = vmatpush2.msra.mxu0 0.0
    %2513 = vmatprep.subr.mxu0 0.0
    %2514 = vmatpush2.msra.mxu0 0.0
    %2515 = vmatprep.subr.mxu0 0.0
    %2516 = vmatpush2.msra.mxu0 0.0
    %2517 = vmatprep.subr.mxu0 0.0
    %2518 = vmatpush2.msra.mxu0 0.0
    %2519 = vmatprep.subr.mxu0 0.0
    %2520 = vmatpush2.msra.mxu0 0.0
    %2521 = vmatprep.subr.mxu0 0.0
    %2522 = vmatpush2.msra.mxu0 0.0
    %2523 = vmatprep.subr.mxu0 0.0
    %2524 = vmatpush2.msra.mxu0 0.0
    %2525 = vmatprep.subr.mxu0 0.0
    %2526 = vmatpush2.msra.mxu0 0.0
    %2527 = vmatprep.subr.mxu0 0.0
    %2528 = vmatpush2.msra.mxu0 0.0
    %2529 = vmatprep.subr.mxu0 0.0
    %2530 = vmatpush2.msra.mxu0 0.0
    %2531 = vmatprep.subr.mxu0 0.0
    %2532 = vmatpush2.msra.mxu0 0.0
    %2533 = vmatprep.subr.mxu0 0.0
    %2534 = vmatpush2.msra.mxu0 0.0
    %2535 = vmatprep.subr.mxu0 0.0
    %2536 = vmatpush2.msra.mxu0 0.0
    %2537 = vmatprep.subr.mxu0 0.0
    %2538 = vmatpush2.msra.mxu0 0.0
    %2539 = vmatprep.subr.mxu0 0.0
    %2540 = vmatpush2.msra.mxu0 0.0
    %2541 = vmatprep.subr.mxu0 0.0
    %2542 = vmatpush2.msra.mxu0 0.0
    %2543 = vmatprep.mubr.f32.mxu0 0.0
    %2544 = vmatmul.mubr.f32.gmra.mxu0 %v2456
    %v2545 = vpop.f32.mrf.mxu0
    %v2546 = vadd.f32 %v1553, %v2545
    %v2547 = vpop.f32.mrf.mxu0
    %2548 = vmatprep.mubr.f32.mxu0 0.0
    %2549 = vmatmul.mubr.f32.gmra.mxu0 %v2459
    %v2550 = vpop.f32.mrf.mxu0
    %v2551 = vadd.f32 %v1553, %v2550
    %v2552 = vpop.f32.mrf.mxu0
    %2553 = vmatprep.mubr.f32.mxu0 0.0
    %2554 = vmatmul.mubr.f32.gmra.mxu0 %v2462
    %v2555 = vpop.f32.mrf.mxu0
    %v2556 = vadd.f32 %v1553, %v2555
    %v2557 = vpop.f32.mrf.mxu0
    %2558 = vmatprep.mubr.f32.mxu0 0.0
    %2559 = vmatmul.mubr.f32.gmra.mxu0 %v2465
    %v2560 = vpop.f32.mrf.mxu0
    %v2561 = vadd.f32 %v1553, %v2560
    %v2562 = vpop.f32.mrf.mxu0
    %2563 = vmatprep.mubr.f32.mxu0 0.0
    %2564 = vmatmul.mubr.f32.gmra.mxu0 %v2468
    %v2565 = vpop.f32.mrf.mxu0
    %v2566 = vadd.f32 %v1553, %v2565
    %v2567 = vpop.f32.mrf.mxu0
    %2568 = vmatprep.mubr.f32.mxu0 0.0
    %2569 = vmatmul.mubr.f32.gmra.mxu0 %v2471
    %v2570 = vpop.f32.mrf.mxu0
    %v2571 = vadd.f32 %v1553, %v2570
    %v2572 = vpop.f32.mrf.mxu0
    %2573 = vmatprep.mubr.f32.mxu0 0.0
    %2574 = vmatmul.mubr.f32.gmra.mxu0 %v2474
    %v2575 = vpop.f32.mrf.mxu0
    %v2576 = vadd.f32 %v1553, %v2575
    %v2577 = vpop.f32.mrf.mxu0
    %2578 = vmatprep.mubr.f32.mxu0 0.0
    %2579 = vmatmul.mubr.f32.gmra.mxu0 %v2477
    %v2580 = vpop.f32.mrf.mxu0
    %v2581 = vadd.f32 %v1553, %v2580
    %v2582 = vpop.f32.mrf.mxu0
    %2583 = vdwg.mxu0
    %v2584 = vmax.f32 %v2546, 0.0
    %v2585 = vmax.f32 %v2551, 0.0
    %v2586 = vmax.f32 %v2556, 0.0
    %v2587 = vmax.f32 %v2561, 0.0
    %v2588 = vmax.f32 %v2566, 0.0
    %v2589 = vmax.f32 %v2571, 0.0
    %v2590 = vmax.f32 %v2576, 0.0
    %v2591 = vmax.f32 %v2581, 0.0
    %v2593 = vsel %vm141, %v2584, 0
    %v2596 = vsel %vm141, %v2585, 0
    %v2599 = vsel %vm141, %v2586, 0
    %v2602 = vsel %vm141, %v2587, 0
    %v2605 = vsel %vm141, %v2588, 0
    %v2608 = vsel %vm141, %v2589, 0
    %v2611 = vsel %vm141, %v2590, 0
    %v2614 = vsel %vm141, %v2591, 0
    %2616 = vmatprep.subr.mxu0 0.0
    %2617 = vmatpush1.msra.mxu0 0.0
    %2618 = vmatprep.subr.mxu0 0.0
    %2619 = vmatpush1.msra.mxu0 0.0
    %2620 = vmatprep.subr.mxu0 0.0
    %2621 = vmatpush1.msra.mxu0 0.0
    %2622 = vmatprep.subr.mxu0 0.0
    %2623 = vmatpush1.msra.mxu0 0.0
    %2624 = vmatprep.subr.mxu0 0.0
    %2625 = vmatpush1.msra.mxu0 0.0
    %2626 = vmatprep.subr.mxu0 0.0
    %2627 = vmatpush1.msra.mxu0 0.0
    %2628 = vmatprep.subr.mxu0 0.0
    %2629 = vmatpush1.msra.mxu0 0.0
    %2630 = vmatprep.subr.mxu0 0.0
    %2631 = vmatpush1.msra.mxu0 0.0
    %2632 = vmatprep.subr.mxu0 0.0
    %2633 = vmatpush1.msra.mxu0 0.0
    %2634 = vmatprep.subr.mxu0 0.0
    %2635 = vmatpush1.msra.mxu0 0.0
    %2636 = vmatprep.subr.mxu0 0.0
    %2637 = vmatpush1.msra.mxu0 0.0
    %2638 = vmatprep.subr.mxu0 0.0
    %2639 = vmatpush1.msra.mxu0 0.0
    %2640 = vmatprep.subr.mxu0 0.0
    %2641 = vmatpush1.msra.mxu0 0.0
    %2642 = vmatprep.subr.mxu0 0.0
    %2643 = vmatpush1.msra.mxu0 0.0
    %2644 = vmatprep.subr.mxu0 0.0
    %2645 = vmatpush1.msra.mxu0 0.0
    %2646 = vmatprep.subr.mxu0 0.0
    %2647 = vmatpush1.msra.mxu0 %v1695
    %2648 = vmatprep.subr.mxu0 0.0
    %2649 = vmatpush2.msra.mxu0 0.0
    %2650 = vmatprep.subr.mxu0 0.0
    %2651 = vmatpush2.msra.mxu0 0.0
    %2652 = vmatprep.subr.mxu0 0.0
    %2653 = vmatpush2.msra.mxu0 0.0
    %2654 = vmatprep.subr.mxu0 0.0
    %2655 = vmatpush2.msra.mxu0 0.0
    %2656 = vmatprep.subr.mxu0 0.0
    %2657 = vmatpush2.msra.mxu0 0.0
    %2658 = vmatprep.subr.mxu0 0.0
    %2659 = vmatpush2.msra.mxu0 0.0
    %2660 = vmatprep.subr.mxu0 0.0
    %2661 = vmatpush2.msra.mxu0 0.0
    %2662 = vmatprep.subr.mxu0 0.0
    %2663 = vmatpush2.msra.mxu0 0.0
    %2664 = vmatprep.subr.mxu0 0.0
    %2665 = vmatpush2.msra.mxu0 0.0
    %2666 = vmatprep.subr.mxu0 0.0
    %2667 = vmatpush2.msra.mxu0 0.0
    %2668 = vmatprep.subr.mxu0 0.0
    %2669 = vmatpush2.msra.mxu0 0.0
    %2670 = vmatprep.subr.mxu0 0.0
    %2671 = vmatpush2.msra.mxu0 0.0
    %2672 = vmatprep.subr.mxu0 0.0
    %2673 = vmatpush2.msra.mxu0 0.0
    %2674 = vmatprep.subr.mxu0 0.0
    %2675 = vmatpush2.msra.mxu0 0.0
    %2676 = vmatprep.subr.mxu0 0.0
    %2677 = vmatpush2.msra.mxu0 0.0
    %2678 = vmatprep.subr.mxu0 0.0
    %2679 = vmatpush2.msra.mxu0 0.0
    %2680 = vmatprep.mubr.f32.mxu0 0.0
    %2681 = vmatmul.mubr.f32.gmra.mxu0 %v2593
    %v2682 = vpop.f32.mrf.mxu0
    %v2683 = vadd.f32 %v1701, %v2682
    %v2684 = vpop.f32.mrf.mxu0
    %2685 = vmatprep.mubr.f32.mxu0 0.0
    %2686 = vmatmul.mubr.f32.gmra.mxu0 %v2596
    %v2687 = vpop.f32.mrf.mxu0
    %v2688 = vadd.f32 %v1701, %v2687
    %v2689 = vpop.f32.mrf.mxu0
    %2690 = vmatprep.mubr.f32.mxu0 0.0
    %2691 = vmatmul.mubr.f32.gmra.mxu0 %v2599
    %v2692 = vpop.f32.mrf.mxu0
    %v2693 = vadd.f32 %v1701, %v2692
    %v2694 = vpop.f32.mrf.mxu0
    %2695 = vmatprep.mubr.f32.mxu0 0.0
    %2696 = vmatmul.mubr.f32.gmra.mxu0 %v2602
    %v2697 = vpop.f32.mrf.mxu0
    %v2698 = vadd.f32 %v1701, %v2697
    %v2699 = vpop.f32.mrf.mxu0
    %2700 = vmatprep.mubr.f32.mxu0 0.0
    %2701 = vmatmul.mubr.f32.gmra.mxu0 %v2605
    %v2702 = vpop.f32.mrf.mxu0
    %v2703 = vadd.f32 %v1701, %v2702
    %v2704 = vpop.f32.mrf.mxu0
    %2705 = vmatprep.mubr.f32.mxu0 0.0
    %2706 = vmatmul.mubr.f32.gmra.mxu0 %v2608
    %v2707 = vpop.f32.mrf.mxu0
    %v2708 = vadd.f32 %v1701, %v2707
    %v2709 = vpop.f32.mrf.mxu0
    %2710 = vmatprep.mubr.f32.mxu0 0.0
    %2711 = vmatmul.mubr.f32.gmra.mxu0 %v2611
    %v2712 = vpop.f32.mrf.mxu0
    %v2713 = vadd.f32 %v1701, %v2712
    %v2714 = vpop.f32.mrf.mxu0
    %2715 = vmatprep.mubr.f32.mxu0 0.0
    %2716 = vmatmul.mubr.f32.gmra.mxu0 %v2614
    %v2717 = vpop.f32.mrf.mxu0
    %v2718 = vadd.f32 %v1701, %v2717
    %v2719 = vpop.f32.mrf.mxu0
    %2720 = vdwg.mxu0
    %v2721 = vmax.f32 %v2683, 0.0
    %v2722 = vmax.f32 %v2688, 0.0
    %v2723 = vmax.f32 %v2693, 0.0
    %v2724 = vmax.f32 %v2698, 0.0
    %v2725 = vmax.f32 %v2703, 0.0
    %v2726 = vmax.f32 %v2708, 0.0
    %v2727 = vmax.f32 %v2713, 0.0
    %v2728 = vmax.f32 %v2718, 0.0
    %v2730 = vsel %vm711, %v2721, 0
    %v2733 = vsel %vm711, %v2722, 0
    %v2736 = vsel %vm711, %v2723, 0
    %v2739 = vsel %vm711, %v2724, 0
    %v2742 = vsel %vm711, %v2725, 0
    %v2745 = vsel %vm711, %v2726, 0
    %v2748 = vsel %vm711, %v2727, 0
    %v2751 = vsel %vm711, %v2728, 0
    %2753 = vmatprep.subr.mxu0 0.0
    %2754 = vmatpush1.msra.mxu0 0.0
    %2755 = vmatprep.subr.mxu0 0.0
    %2756 = vmatpush1.msra.mxu0 0.0
    %2757 = vmatprep.subr.mxu0 0.0
    %2758 = vmatpush1.msra.mxu0 0.0
    %2759 = vmatprep.subr.mxu0 0.0
    %2760 = vmatpush1.msra.mxu0 0.0
    %2761 = vmatprep.subr.mxu0 0.0
    %2762 = vmatpush1.msra.mxu0 0.0
    %2763 = vmatprep.subr.mxu0 0.0
    %2764 = vmatpush1.msra.mxu0 0.0
    %2765 = vmatprep.subr.mxu0 0.0
    %2766 = vmatpush1.msra.mxu0 0.0
    %2767 = vmatprep.subr.mxu0 0.0
    %2768 = vmatpush1.msra.mxu0 0.0
    %2769 = vmatprep.subr.mxu0 0.0
    %2770 = vmatpush1.msra.mxu0 0.0
    %2771 = vmatprep.subr.mxu0 0.0
    %2772 = vmatpush1.msra.mxu0 0.0
    %2773 = vmatprep.subr.mxu0 0.0
    %2774 = vmatpush1.msra.mxu0 0.0
    %2775 = vmatprep.subr.mxu0 0.0
    %2776 = vmatpush1.msra.mxu0 0.0
    %2777 = vmatprep.subr.mxu0 0.0
    %2778 = vmatpush1.msra.mxu0 %v1538
    %2779 = vmatprep.subr.mxu0 0.0
    %2780 = vmatpush1.msra.mxu0 %v1537
    %2781 = vmatprep.subr.mxu0 0.0
    %2782 = vmatpush1.msra.mxu0 %v1536
    %2783 = vmatprep.subr.mxu0 0.0
    %2784 = vmatpush1.msra.mxu0 %v1535
    %2785 = vmatprep.subr.mxu0 0.0
    %2786 = vmatpush2.msra.mxu0 0.0
    %2787 = vmatprep.subr.mxu0 0.0
    %2788 = vmatpush2.msra.mxu0 0.0
    %2789 = vmatprep.subr.mxu0 0.0
    %2790 = vmatpush2.msra.mxu0 0.0
    %2791 = vmatprep.subr.mxu0 0.0
    %2792 = vmatpush2.msra.mxu0 0.0
    %2793 = vmatprep.subr.mxu0 0.0
    %2794 = vmatpush2.msra.mxu0 0.0
    %2795 = vmatprep.subr.mxu0 0.0
    %2796 = vmatpush2.msra.mxu0 0.0
    %2797 = vmatprep.subr.mxu0 0.0
    %2798 = vmatpush2.msra.mxu0 0.0
    %2799 = vmatprep.subr.mxu0 0.0
    %2800 = vmatpush2.msra.mxu0 0.0
    %2801 = vmatprep.subr.mxu0 0.0
    %2802 = vmatpush2.msra.mxu0 0.0
    %2803 = vmatprep.subr.mxu0 0.0
    %2804 = vmatpush2.msra.mxu0 0.0
    %2805 = vmatprep.subr.mxu0 0.0
    %2806 = vmatpush2.msra.mxu0 0.0
    %2807 = vmatprep.subr.mxu0 0.0
    %2808 = vmatpush2.msra.mxu0 0.0
    %2809 = vmatprep.subr.mxu0 0.0
    %2810 = vmatpush2.msra.mxu0 0.0
    %2811 = vmatprep.subr.mxu0 0.0
    %2812 = vmatpush2.msra.mxu0 0.0
    %2813 = vmatprep.subr.mxu0 0.0
    %2814 = vmatpush2.msra.mxu0 0.0
    %2815 = vmatprep.subr.mxu0 0.0
    %2816 = vmatpush2.msra.mxu0 0.0
    %2817 = vmatprep.mubr.f32.mxu0 0.0
    %2818 = vmatmul.mubr.f32.gmra.mxu0 %v2730
    %v2819 = vpop.f32.mrf.mxu0
    %v2820 = vadd.f32 0.0, %v2819
    %v2821 = vpop.f32.mrf.mxu0
    %2822 = vmatprep.mubr.f32.mxu0 0.0
    %2823 = vmatmul.mubr.f32.gmra.mxu0 %v2733
    %v2824 = vpop.f32.mrf.mxu0
    %v2825 = vadd.f32 0.0, %v2824
    %v2826 = vpop.f32.mrf.mxu0
    %2827 = vmatprep.mubr.f32.mxu0 0.0
    %2828 = vmatmul.mubr.f32.gmra.mxu0 %v2736
    %v2829 = vpop.f32.mrf.mxu0
    %v2830 = vadd.f32 0.0, %v2829
    %v2831 = vpop.f32.mrf.mxu0
    %2832 = vmatprep.mubr.f32.mxu0 0.0
    %2833 = vmatmul.mubr.f32.gmra.mxu0 %v2739
    %v2834 = vpop.f32.mrf.mxu0
    %v2835 = vadd.f32 0.0, %v2834
    %v2836 = vpop.f32.mrf.mxu0
    %2837 = vmatprep.mubr.f32.mxu0 0.0
    %2838 = vmatmul.mubr.f32.gmra.mxu0 %v2742
    %v2839 = vpop.f32.mrf.mxu0
    %v2840 = vadd.f32 0.0, %v2839
    %v2841 = vpop.f32.mrf.mxu0
    %2842 = vmatprep.mubr.f32.mxu0 0.0
    %2843 = vmatmul.mubr.f32.gmra.mxu0 %v2745
    %v2844 = vpop.f32.mrf.mxu0
    %v2845 = vadd.f32 0.0, %v2844
    %v2846 = vpop.f32.mrf.mxu0
    %2847 = vmatprep.mubr.f32.mxu0 0.0
    %2848 = vmatmul.mubr.f32.gmra.mxu0 %v2748
    %v2849 = vpop.f32.mrf.mxu0
    %v2850 = vadd.f32 0.0, %v2849
    %v2851 = vpop.f32.mrf.mxu0
    %2852 = vmatprep.mubr.f32.mxu0 0.0
    %2853 = vmatmul.mubr.f32.gmra.mxu0 %v2751
    %v2854 = vpop.f32.mrf.mxu0
    %v2855 = vadd.f32 0.0, %v2854
    %v2856 = vpop.f32.mrf.mxu0
    %2857 = vdwg.mxu0
    %v2858 = vadd.f32 %v1495, %v2820
    %v2859 = vadd.f32 %v1500, %v2825
    %v2860 = vadd.f32 %v1505, %v2830
    %v2861 = vadd.f32 %v1510, %v2835
    %v2862 = vadd.f32 %v1515, %v2840
    %v2863 = vadd.f32 %v1520, %v2845
    %v2864 = vadd.f32 %v1525, %v2850
    %v2865 = vadd.f32 %v1530, %v2855
    %v2866 = vmax.f32 %v2858, 0.0
    %v2867 = vmax.f32 %v2859, 0.0
    %v2868 = vmax.f32 %v2860, 0.0
    %v2869 = vmax.f32 %v2861, 0.0
    %v2870 = vmax.f32 %v2862, 0.0
    %v2871 = vmax.f32 %v2863, 0.0
    %v2872 = vmax.f32 %v2864, 0.0
    %v2873 = vmax.f32 %v2865, 0.0
    %2874 = vset.pattern.permute.xlu0 2
    %2875 = vperm.xlu0 %2874, %v1533
    %v2876 = vpop.permute.xlu0 %2875
    %v2878 = vmul.f32 %v2866, %v2876
    %v2879 = vmul.f32 %v2867, %v2876
    %v2880 = vmul.f32 %v2868, %v2876
    %v2881 = vmul.f32 %v2869, %v2876
    %v2882 = vmul.f32 %v2870, %v2876
    %v2883 = vmul.f32 %v2871, %v2876
    %v2884 = vmul.f32 %v2872, %v2876
    %v2885 = vmul.f32 %v2873, %v2876
    %v2886 = vmax.f32 %v2438, %v2878
    %v2887 = vmax.f32 %v2439, %v2879
    %v2888 = vmax.f32 %v2440, %v2880
    %v2889 = vmax.f32 %v2441, %v2881
    %v2890 = vmax.f32 %v2442, %v2882
    %v2891 = vmax.f32 %v2443, %v2883
    %v2892 = vmax.f32 %v2444, %v2884
    %v2893 = vmax.f32 %v2445, %v2885
    %s2894 = scalar_lea.vmem %s3, 192
    %v2895 = vld [vmem:[%s2894] sm:$0xff]
    %v2896 = vld [vmem:[%s2894 + $0x8] sm:$0xff]
    %v2897 = vld [vmem:[%s2894 + $0x10] sm:$0xff]
    %v2898 = vld [vmem:[%s2894 + $0x18] sm:$0xff]
    %v2899 = vld [vmem:[%s2894 + $0x20] sm:$0xff]
    %v2900 = vld [vmem:[%s2894 + $0x28] sm:$0xff]
    %v2901 = vld [vmem:[%s2894 + $0x30] sm:$0xff]
    %v2902 = vld [vmem:[%s2894 + $0x38] sm:$0xff]
    %v2904 = vsel %vm802, %v2895, 0
    %v2907 = vsel %vm802, %v2896, 0
    %v2910 = vsel %vm802, %v2897, 0
    %v2913 = vsel %vm802, %v2898, 0
    %v2916 = vsel %vm802, %v2899, 0
    %v2919 = vsel %vm802, %v2900, 0
    %v2922 = vsel %vm802, %v2901, 0
    %v2925 = vsel %vm802, %v2902, 0
    %2927 = vmatprep.subr.mxu0 0.0
    %2928 = vmatpush1.msra.mxu0 0.0
    %2929 = vmatprep.subr.mxu0 0.0
    %2930 = vmatpush1.msra.mxu0 0.0
    %2931 = vmatprep.subr.mxu0 0.0
    %2932 = vmatpush1.msra.mxu0 0.0
    %2933 = vmatprep.subr.mxu0 0.0
    %2934 = vmatpush1.msra.mxu0 0.0
    %2935 = vmatprep.subr.mxu0 0.0
    %2936 = vmatpush1.msra.mxu0 0.0
    %2937 = vmatprep.subr.mxu0 0.0
    %2938 = vmatpush1.msra.mxu0 0.0
    %2939 = vmatprep.subr.mxu0 0.0
    %2940 = vmatpush1.msra.mxu0 0.0
    %2941 = vmatprep.subr.mxu0 0.0
    %2942 = vmatpush1.msra.mxu0 0.0
    %2943 = vmatprep.subr.mxu0 0.0
    %2944 = vmatpush1.msra.mxu0 0.0
    %2945 = vmatprep.subr.mxu0 0.0
    %2946 = vmatpush1.msra.mxu0 0.0
    %2947 = vmatprep.subr.mxu0 0.0
    %2948 = vmatpush1.msra.mxu0 0.0
    %2949 = vmatprep.subr.mxu0 0.0
    %2950 = vmatpush1.msra.mxu0 0.0
    %2951 = vmatprep.subr.mxu0 0.0
    %2952 = vmatpush1.msra.mxu0 0.0
    %2953 = vmatprep.subr.mxu0 0.0
    %2954 = vmatpush1.msra.mxu0 0.0
    %2955 = vmatprep.subr.mxu0 0.0
    %2956 = vmatpush1.msra.mxu0 0.0
    %2957 = vmatprep.subr.mxu0 0.0
    %2958 = vmatpush1.msra.mxu0 %v1580
    %2959 = vmatprep.subr.mxu0 0.0
    %2960 = vmatpush2.msra.mxu0 0.0
    %2961 = vmatprep.subr.mxu0 0.0
    %2962 = vmatpush2.msra.mxu0 0.0
    %2963 = vmatprep.subr.mxu0 0.0
    %2964 = vmatpush2.msra.mxu0 0.0
    %2965 = vmatprep.subr.mxu0 0.0
    %2966 = vmatpush2.msra.mxu0 0.0
    %2967 = vmatprep.subr.mxu0 0.0
    %2968 = vmatpush2.msra.mxu0 0.0
    %2969 = vmatprep.subr.mxu0 0.0
    %2970 = vmatpush2.msra.mxu0 0.0
    %2971 = vmatprep.subr.mxu0 0.0
    %2972 = vmatpush2.msra.mxu0 0.0
    %2973 = vmatprep.subr.mxu0 0.0
    %2974 = vmatpush2.msra.mxu0 0.0
    %2975 = vmatprep.subr.mxu0 0.0
    %2976 = vmatpush2.msra.mxu0 0.0
    %2977 = vmatprep.subr.mxu0 0.0
    %2978 = vmatpush2.msra.mxu0 0.0
    %2979 = vmatprep.subr.mxu0 0.0
    %2980 = vmatpush2.msra.mxu0 0.0
    %2981 = vmatprep.subr.mxu0 0.0
    %2982 = vmatpush2.msra.mxu0 0.0
    %2983 = vmatprep.subr.mxu0 0.0
    %2984 = vmatpush2.msra.mxu0 0.0
    %2985 = vmatprep.subr.mxu0 0.0
    %2986 = vmatpush2.msra.mxu0 0.0
    %2987 = vmatprep.subr.mxu0 0.0
    %2988 = vmatpush2.msra.mxu0 0.0
    %2989 = vmatprep.subr.mxu0 0.0
    %2990 = vmatpush2.msra.mxu0 0.0
    %2991 = vmatprep.mubr.f32.mxu0 0.0
    %2992 = vmatmul.mubr.f32.gmra.mxu0 %v2904
    %v2993 = vpop.f32.mrf.mxu0
    %v2994 = vadd.f32 %v1553, %v2993
    %v2995 = vpop.f32.mrf.mxu0
    %2996 = vmatprep.mubr.f32.mxu0 0.0
    %2997 = vmatmul.mubr.f32.gmra.mxu0 %v2907
    %v2998 = vpop.f32.mrf.mxu0
    %v2999 = vadd.f32 %v1553, %v2998
    %v3000 = vpop.f32.mrf.mxu0
    %3001 = vmatprep.mubr.f32.mxu0 0.0
    %3002 = vmatmul.mubr.f32.gmra.mxu0 %v2910
    %v3003 = vpop.f32.mrf.mxu0
    %v3004 = vadd.f32 %v1553, %v3003
    %v3005 = vpop.f32.mrf.mxu0
    %3006 = vmatprep.mubr.f32.mxu0 0.0
    %3007 = vmatmul.mubr.f32.gmra.mxu0 %v2913
    %v3008 = vpop.f32.mrf.mxu0
    %v3009 = vadd.f32 %v1553, %v3008
    %v3010 = vpop.f32.mrf.mxu0
    %3011 = vmatprep.mubr.f32.mxu0 0.0
    %3012 = vmatmul.mubr.f32.gmra.mxu0 %v2916
    %v3013 = vpop.f32.mrf.mxu0
    %v3014 = vadd.f32 %v1553, %v3013
    %v3015 = vpop.f32.mrf.mxu0
    %3016 = vmatprep.mubr.f32.mxu0 0.0
    %3017 = vmatmul.mubr.f32.gmra.mxu0 %v2919
    %v3018 = vpop.f32.mrf.mxu0
    %v3019 = vadd.f32 %v1553, %v3018
    %v3020 = vpop.f32.mrf.mxu0
    %3021 = vmatprep.mubr.f32.mxu0 0.0
    %3022 = vmatmul.mubr.f32.gmra.mxu0 %v2922
    %v3023 = vpop.f32.mrf.mxu0
    %v3024 = vadd.f32 %v1553, %v3023
    %v3025 = vpop.f32.mrf.mxu0
    %3026 = vmatprep.mubr.f32.mxu0 0.0
    %3027 = vmatmul.mubr.f32.gmra.mxu0 %v2925
    %v3028 = vpop.f32.mrf.mxu0
    %v3029 = vadd.f32 %v1553, %v3028
    %v3030 = vpop.f32.mrf.mxu0
    %3031 = vdwg.mxu0
    %v3032 = vmax.f32 %v2994, 0.0
    %v3033 = vmax.f32 %v2999, 0.0
    %v3034 = vmax.f32 %v3004, 0.0
    %v3035 = vmax.f32 %v3009, 0.0
    %v3036 = vmax.f32 %v3014, 0.0
    %v3037 = vmax.f32 %v3019, 0.0
    %v3038 = vmax.f32 %v3024, 0.0
    %v3039 = vmax.f32 %v3029, 0.0
    %v3041 = vsel %vm141, %v3032, 0
    %v3044 = vsel %vm141, %v3033, 0
    %v3047 = vsel %vm141, %v3034, 0
    %v3050 = vsel %vm141, %v3035, 0
    %v3053 = vsel %vm141, %v3036, 0
    %v3056 = vsel %vm141, %v3037, 0
    %v3059 = vsel %vm141, %v3038, 0
    %v3062 = vsel %vm141, %v3039, 0
    %3064 = vmatprep.subr.mxu0 0.0
    %3065 = vmatpush1.msra.mxu0 0.0
    %3066 = vmatprep.subr.mxu0 0.0
    %3067 = vmatpush1.msra.mxu0 0.0
    %3068 = vmatprep.subr.mxu0 0.0
    %3069 = vmatpush1.msra.mxu0 0.0
    %3070 = vmatprep.subr.mxu0 0.0
    %3071 = vmatpush1.msra.mxu0 0.0
    %3072 = vmatprep.subr.mxu0 0.0
    %3073 = vmatpush1.msra.mxu0 0.0
    %3074 = vmatprep.subr.mxu0 0.0
    %3075 = vmatpush1.msra.mxu0 0.0
    %3076 = vmatprep.subr.mxu0 0.0
    %3077 = vmatpush1.msra.mxu0 0.0
    %3078 = vmatprep.subr.mxu0 0.0
    %3079 = vmatpush1.msra.mxu0 0.0
    %3080 = vmatprep.subr.mxu0 0.0
    %3081 = vmatpush1.msra.mxu0 0.0
    %3082 = vmatprep.subr.mxu0 0.0
    %3083 = vmatpush1.msra.mxu0 0.0
    %3084 = vmatprep.subr.mxu0 0.0
    %3085 = vmatpush1.msra.mxu0 0.0
    %3086 = vmatprep.subr.mxu0 0.0
    %3087 = vmatpush1.msra.mxu0 0.0
    %3088 = vmatprep.subr.mxu0 0.0
    %3089 = vmatpush1.msra.mxu0 0.0
    %3090 = vmatprep.subr.mxu0 0.0
    %3091 = vmatpush1.msra.mxu0 0.0
    %3092 = vmatprep.subr.mxu0 0.0
    %3093 = vmatpush1.msra.mxu0 0.0
    %3094 = vmatprep.subr.mxu0 0.0
    %3095 = vmatpush1.msra.mxu0 %v1695
    %3096 = vmatprep.subr.mxu0 0.0
    %3097 = vmatpush2.msra.mxu0 0.0
    %3098 = vmatprep.subr.mxu0 0.0
    %3099 = vmatpush2.msra.mxu0 0.0
    %3100 = vmatprep.subr.mxu0 0.0
    %3101 = vmatpush2.msra.mxu0 0.0
    %3102 = vmatprep.subr.mxu0 0.0
    %3103 = vmatpush2.msra.mxu0 0.0
    %3104 = vmatprep.subr.mxu0 0.0
    %3105 = vmatpush2.msra.mxu0 0.0
    %3106 = vmatprep.subr.mxu0 0.0
    %3107 = vmatpush2.msra.mxu0 0.0
    %3108 = vmatprep.subr.mxu0 0.0
    %3109 = vmatpush2.msra.mxu0 0.0
    %3110 = vmatprep.subr.mxu0 0.0
    %3111 = vmatpush2.msra.mxu0 0.0
    %3112 = vmatprep.subr.mxu0 0.0
    %3113 = vmatpush2.msra.mxu0 0.0
    %3114 = vmatprep.subr.mxu0 0.0
    %3115 = vmatpush2.msra.mxu0 0.0
    %3116 = vmatprep.subr.mxu0 0.0
    %3117 = vmatpush2.msra.mxu0 0.0
    %3118 = vmatprep.subr.mxu0 0.0
    %3119 = vmatpush2.msra.mxu0 0.0
    %3120 = vmatprep.subr.mxu0 0.0
    %3121 = vmatpush2.msra.mxu0 0.0
    %3122 = vmatprep.subr.mxu0 0.0
    %3123 = vmatpush2.msra.mxu0 0.0
    %3124 = vmatprep.subr.mxu0 0.0
    %3125 = vmatpush2.msra.mxu0 0.0
    %3126 = vmatprep.subr.mxu0 0.0
    %3127 = vmatpush2.msra.mxu0 0.0
    %3128 = vmatprep.mubr.f32.mxu0 0.0
    %3129 = vmatmul.mubr.f32.gmra.mxu0 %v3041
    %v3130 = vpop.f32.mrf.mxu0
    %v3131 = vadd.f32 %v1701, %v3130
    %v3132 = vpop.f32.mrf.mxu0
    %3133 = vmatprep.mubr.f32.mxu0 0.0
    %3134 = vmatmul.mubr.f32.gmra.mxu0 %v3044
    %v3135 = vpop.f32.mrf.mxu0
    %v3136 = vadd.f32 %v1701, %v3135
    %v3137 = vpop.f32.mrf.mxu0
    %3138 = vmatprep.mubr.f32.mxu0 0.0
    %3139 = vmatmul.mubr.f32.gmra.mxu0 %v3047
    %v3140 = vpop.f32.mrf.mxu0
    %v3141 = vadd.f32 %v1701, %v3140
    %v3142 = vpop.f32.mrf.mxu0
    %3143 = vmatprep.mubr.f32.mxu0 0.0
    %3144 = vmatmul.mubr.f32.gmra.mxu0 %v3050
    %v3145 = vpop.f32.mrf.mxu0
    %v3146 = vadd.f32 %v1701, %v3145
    %v3147 = vpop.f32.mrf.mxu0
    %3148 = vmatprep.mubr.f32.mxu0 0.0
    %3149 = vmatmul.mubr.f32.gmra.mxu0 %v3053
    %v3150 = vpop.f32.mrf.mxu0
    %v3151 = vadd.f32 %v1701, %v3150
    %v3152 = vpop.f32.mrf.mxu0
    %3153 = vmatprep.mubr.f32.mxu0 0.0
    %3154 = vmatmul.mubr.f32.gmra.mxu0 %v3056
    %v3155 = vpop.f32.mrf.mxu0
    %v3156 = vadd.f32 %v1701, %v3155
    %v3157 = vpop.f32.mrf.mxu0
    %3158 = vmatprep.mubr.f32.mxu0 0.0
    %3159 = vmatmul.mubr.f32.gmra.mxu0 %v3059
    %v3160 = vpop.f32.mrf.mxu0
    %v3161 = vadd.f32 %v1701, %v3160
    %v3162 = vpop.f32.mrf.mxu0
    %3163 = vmatprep.mubr.f32.mxu0 0.0
    %3164 = vmatmul.mubr.f32.gmra.mxu0 %v3062
    %v3165 = vpop.f32.mrf.mxu0
    %v3166 = vadd.f32 %v1701, %v3165
    %v3167 = vpop.f32.mrf.mxu0
    %3168 = vdwg.mxu0
    %v3169 = vmax.f32 %v3131, 0.0
    %v3170 = vmax.f32 %v3136, 0.0
    %v3171 = vmax.f32 %v3141, 0.0
    %v3172 = vmax.f32 %v3146, 0.0
    %v3173 = vmax.f32 %v3151, 0.0
    %v3174 = vmax.f32 %v3156, 0.0
    %v3175 = vmax.f32 %v3161, 0.0
    %v3176 = vmax.f32 %v3166, 0.0
    %v3178 = vsel %vm711, %v3169, 0
    %v3181 = vsel %vm711, %v3170, 0
    %v3184 = vsel %vm711, %v3171, 0
    %v3187 = vsel %vm711, %v3172, 0
    %v3190 = vsel %vm711, %v3173, 0
    %v3193 = vsel %vm711, %v3174, 0
    %v3196 = vsel %vm711, %v3175, 0
    %v3199 = vsel %vm711, %v3176, 0
    %3201 = vmatprep.subr.mxu0 0.0
    %3202 = vmatpush1.msra.mxu0 0.0
    %3203 = vmatprep.subr.mxu0 0.0
    %3204 = vmatpush1.msra.mxu0 0.0
    %3205 = vmatprep.subr.mxu0 0.0
    %3206 = vmatpush1.msra.mxu0 0.0
    %3207 = vmatprep.subr.mxu0 0.0
    %3208 = vmatpush1.msra.mxu0 0.0
    %3209 = vmatprep.subr.mxu0 0.0
    %3210 = vmatpush1.msra.mxu0 0.0
    %3211 = vmatprep.subr.mxu0 0.0
    %3212 = vmatpush1.msra.mxu0 0.0
    %3213 = vmatprep.subr.mxu0 0.0
    %3214 = vmatpush1.msra.mxu0 0.0
    %3215 = vmatprep.subr.mxu0 0.0
    %3216 = vmatpush1.msra.mxu0 0.0
    %3217 = vmatprep.subr.mxu0 0.0
    %3218 = vmatpush1.msra.mxu0 0.0
    %3219 = vmatprep.subr.mxu0 0.0
    %3220 = vmatpush1.msra.mxu0 0.0
    %3221 = vmatprep.subr.mxu0 0.0
    %3222 = vmatpush1.msra.mxu0 0.0
    %3223 = vmatprep.subr.mxu0 0.0
    %3224 = vmatpush1.msra.mxu0 0.0
    %3225 = vmatprep.subr.mxu0 0.0
    %3226 = vmatpush1.msra.mxu0 %v1538
    %3227 = vmatprep.subr.mxu0 0.0
    %3228 = vmatpush1.msra.mxu0 %v1537
    %3229 = vmatprep.subr.mxu0 0.0
    %3230 = vmatpush1.msra.mxu0 %v1536
    %3231 = vmatprep.subr.mxu0 0.0
    %3232 = vmatpush1.msra.mxu0 %v1535
    %3233 = vmatprep.subr.mxu0 0.0
    %3234 = vmatpush2.msra.mxu0 0.0
    %3235 = vmatprep.subr.mxu0 0.0
    %3236 = vmatpush2.msra.mxu0 0.0
    %3237 = vmatprep.subr.mxu0 0.0
    %3238 = vmatpush2.msra.mxu0 0.0
    %3239 = vmatprep.subr.mxu0 0.0
    %3240 = vmatpush2.msra.mxu0 0.0
    %3241 = vmatprep.subr.mxu0 0.0
    %3242 = vmatpush2.msra.mxu0 0.0
    %3243 = vmatprep.subr.mxu0 0.0
    %3244 = vmatpush2.msra.mxu0 0.0
    %3245 = vmatprep.subr.mxu0 0.0
    %3246 = vmatpush2.msra.mxu0 0.0
    %3247 = vmatprep.subr.mxu0 0.0
    %3248 = vmatpush2.msra.mxu0 0.0
    %3249 = vmatprep.subr.mxu0 0.0
    %3250 = vmatpush2.msra.mxu0 0.0
    %3251 = vmatprep.subr.mxu0 0.0
    %3252 = vmatpush2.msra.mxu0 0.0
    %3253 = vmatprep.subr.mxu0 0.0
    %3254 = vmatpush2.msra.mxu0 0.0
    %3255 = vmatprep.subr.mxu0 0.0
    %3256 = vmatpush2.msra.mxu0 0.0
    %3257 = vmatprep.subr.mxu0 0.0
    %3258 = vmatpush2.msra.mxu0 0.0
    %3259 = vmatprep.subr.mxu0 0.0
    %3260 = vmatpush2.msra.mxu0 0.0
    %3261 = vmatprep.subr.mxu0 0.0
    %3262 = vmatpush2.msra.mxu0 0.0
    %3263 = vmatprep.subr.mxu0 0.0
    %3264 = vmatpush2.msra.mxu0 0.0
    %3265 = vmatprep.mubr.f32.mxu0 0.0
    %3266 = vmatmul.mubr.f32.gmra.mxu0 %v3178
    %v3267 = vpop.f32.mrf.mxu0
    %v3268 = vadd.f32 0.0, %v3267
    %v3269 = vpop.f32.mrf.mxu0
    %3270 = vmatprep.mubr.f32.mxu0 0.0
    %3271 = vmatmul.mubr.f32.gmra.mxu0 %v3181
    %v3272 = vpop.f32.mrf.mxu0
    %v3273 = vadd.f32 0.0, %v3272
    %v3274 = vpop.f32.mrf.mxu0
    %3275 = vmatprep.mubr.f32.mxu0 0.0
    %3276 = vmatmul.mubr.f32.gmra.mxu0 %v3184
    %v3277 = vpop.f32.mrf.mxu0
    %v3278 = vadd.f32 0.0, %v3277
    %v3279 = vpop.f32.mrf.mxu0
    %3280 = vmatprep.mubr.f32.mxu0 0.0
    %3281 = vmatmul.mubr.f32.gmra.mxu0 %v3187
    %v3282 = vpop.f32.mrf.mxu0
    %v3283 = vadd.f32 0.0, %v3282
    %v3284 = vpop.f32.mrf.mxu0
    %3285 = vmatprep.mubr.f32.mxu0 0.0
    %3286 = vmatmul.mubr.f32.gmra.mxu0 %v3190
    %v3287 = vpop.f32.mrf.mxu0
    %v3288 = vadd.f32 0.0, %v3287
    %v3289 = vpop.f32.mrf.mxu0
    %3290 = vmatprep.mubr.f32.mxu0 0.0
    %3291 = vmatmul.mubr.f32.gmra.mxu0 %v3193
    %v3292 = vpop.f32.mrf.mxu0
    %v3293 = vadd.f32 0.0, %v3292
    %v3294 = vpop.f32.mrf.mxu0
    %3295 = vmatprep.mubr.f32.mxu0 0.0
    %3296 = vmatmul.mubr.f32.gmra.mxu0 %v3196
    %v3297 = vpop.f32.mrf.mxu0
    %v3298 = vadd.f32 0.0, %v3297
    %v3299 = vpop.f32.mrf.mxu0
    %3300 = vmatprep.mubr.f32.mxu0 0.0
    %3301 = vmatmul.mubr.f32.gmra.mxu0 %v3199
    %v3302 = vpop.f32.mrf.mxu0
    %v3303 = vadd.f32 0.0, %v3302
    %v3304 = vpop.f32.mrf.mxu0
    %3305 = vdwg.mxu0
    %v3306 = vadd.f32 %v1495, %v3268
    %v3307 = vadd.f32 %v1500, %v3273
    %v3308 = vadd.f32 %v1505, %v3278
    %v3309 = vadd.f32 %v1510, %v3283
    %v3310 = vadd.f32 %v1515, %v3288
    %v3311 = vadd.f32 %v1520, %v3293
    %v3312 = vadd.f32 %v1525, %v3298
    %v3313 = vadd.f32 %v1530, %v3303
    %v3314 = vmax.f32 %v3306, 0.0
    %v3315 = vmax.f32 %v3307, 0.0
    %v3316 = vmax.f32 %v3308, 0.0
    %v3317 = vmax.f32 %v3309, 0.0
    %v3318 = vmax.f32 %v3310, 0.0
    %v3319 = vmax.f32 %v3311, 0.0
    %v3320 = vmax.f32 %v3312, 0.0
    %v3321 = vmax.f32 %v3313, 0.0
    %3322 = vset.pattern.permute.xlu0 3
    %3323 = vperm.xlu0 %3322, %v1533
    %v3324 = vpop.permute.xlu0 %3323
    %v3326 = vmul.f32 %v3314, %v3324
    %v3327 = vmul.f32 %v3315, %v3324
    %v3328 = vmul.f32 %v3316, %v3324
    %v3329 = vmul.f32 %v3317, %v3324
    %v3330 = vmul.f32 %v3318, %v3324
    %v3331 = vmul.f32 %v3319, %v3324
    %v3332 = vmul.f32 %v3320, %v3324
    %v3333 = vmul.f32 %v3321, %v3324
    %v3334 = vmax.f32 %v2886, %v3326
    %v3335 = vmax.f32 %v2887, %v3327
    %v3336 = vmax.f32 %v2888, %v3328
    %v3337 = vmax.f32 %v2889, %v3329
    %v3338 = vmax.f32 %v2890, %v3330
    %v3339 = vmax.f32 %v2891, %v3331
    %v3340 = vmax.f32 %v2892, %v3332
    %v3341 = vmax.f32 %v2893, %v3333
    %v3342 = vld [vmem:[%s8 + $0x70] sm:$0xff]
    %v3343 = vld [vmem:[%s8 + $0x138] sm:$0xff]
    %v3344 = vld [vmem:[%s8 + $0x200] sm:$0xff]
    %v3345 = vld [vmem:[%s8 + $0x2c8] sm:$0xff]
    %v3346 = vld [vmem:[%s5] sm:$0xff]
    %v3347 = vld [vmem:[%s5 + $0x8] sm:$0xff]
    %v3348 = vld [vmem:[%s5 + $0x10] sm:$0xff]
    %v3349 = vld [vmem:[%s5 + $0x18] sm:$0xff]
    %v3350 = vld [vmem:[%s5 + $0x20] sm:$0xff]
    %v3351 = vld [vmem:[%s5 + $0x28] sm:$0xff]
    %v3352 = vld [vmem:[%s5 + $0x30] sm:$0xff]
    %v3353 = vld [vmem:[%s5 + $0x38] sm:$0xff]
    %v3354 = vld [vmem:[%s8 + $0x50] sm:$0xf]
    %v3355 = vld [vmem:[%s9 + $0xd] sm:$0x1]
    %v3357 = vlaneseq
    %v3358 = vshrl.u32 %v3357, 7
    %v3359 = vsub.s32 0, %v3358
    %v3360 = vrot.slane %v3355, %v3359
    %vm3362 = vcmask 31744
    %v3364 = vsel %vm3362, %v3346, 0
    %v3367 = vsel %vm3362, %v3347, 0
    %v3370 = vsel %vm3362, %v3348, 0
    %v3373 = vsel %vm3362, %v3349, 0
    %v3376 = vsel %vm3362, %v3350, 0
    %v3379 = vsel %vm3362, %v3351, 0
    %v3382 = vsel %vm3362, %v3352, 0
    %v3385 = vsel %vm3362, %v3353, 0
    %vm3387 = vcmask 1043456
    %v3389 = vsel %vm3387, %v3354, 0
    %3391 = vmatprep.subr.mxu0 0.0
    %3392 = vmatpush1.msra.mxu0 0.0
    %3393 = vmatprep.subr.mxu0 0.0
    %3394 = vmatpush1.msra.mxu0 0.0
    %3395 = vmatprep.subr.mxu0 0.0
    %3396 = vmatpush1.msra.mxu0 0.0
    %3397 = vmatprep.subr.mxu0 0.0
    %3398 = vmatpush1.msra.mxu0 0.0
    %3399 = vmatprep.subr.mxu0 0.0
    %3400 = vmatpush1.msra.mxu0 0.0
    %3401 = vmatprep.subr.mxu0 0.0
    %3402 = vmatpush1.msra.mxu0 0.0
    %3403 = vmatprep.subr.mxu0 0.0
    %3404 = vmatpush1.msra.mxu0 0.0
    %3405 = vmatprep.subr.mxu0 0.0
    %3406 = vmatpush1.msra.mxu0 0.0
    %3407 = vmatprep.subr.mxu0 0.0
    %3408 = vmatpush1.msra.mxu0 0.0
    %3409 = vmatprep.subr.mxu0 0.0
    %3410 = vmatpush1.msra.mxu0 0.0
    %3411 = vmatprep.subr.mxu0 0.0
    %3412 = vmatpush1.msra.mxu0 0.0
    %3413 = vmatprep.subr.mxu0 0.0
    %3414 = vmatpush1.msra.mxu0 0.0
    %3415 = vmatprep.subr.mxu0 0.0
    %3416 = vmatpush1.msra.mxu0 0.0
    %3417 = vmatprep.subr.mxu0 0.0
    %3418 = vmatpush1.msra.mxu0 0.0
    %3419 = vmatprep.subr.mxu0 0.0
    %3420 = vmatpush1.msra.mxu0 0.0
    %3421 = vmatprep.subr.mxu0 0.0
    %3422 = vmatpush1.msra.mxu0 %v3389
    %3423 = vmatprep.subr.mxu0 0.0
    %3424 = vmatpush2.msra.mxu0 0.0
    %3425 = vmatprep.subr.mxu0 0.0
    %3426 = vmatpush2.msra.mxu0 0.0
    %3427 = vmatprep.subr.mxu0 0.0
    %3428 = vmatpush2.msra.mxu0 0.0
    %3429 = vmatprep.subr.mxu0 0.0
    %3430 = vmatpush2.msra.mxu0 0.0
    %3431 = vmatprep.subr.mxu0 0.0
    %3432 = vmatpush2.msra.mxu0 0.0
    %3433 = vmatprep.subr.mxu0 0.0
    %3434 = vmatpush2.msra.mxu0 0.0
    %3435 = vmatprep.subr.mxu0 0.0
    %3436 = vmatpush2.msra.mxu0 0.0
    %3437 = vmatprep.subr.mxu0 0.0
    %3438 = vmatpush2.msra.mxu0 0.0
    %3439 = vmatprep.subr.mxu0 0.0
    %3440 = vmatpush2.msra.mxu0 0.0
    %3441 = vmatprep.subr.mxu0 0.0
    %3442 = vmatpush2.msra.mxu0 0.0
    %3443 = vmatprep.subr.mxu0 0.0
    %3444 = vmatpush2.msra.mxu0 0.0
    %3445 = vmatprep.subr.mxu0 0.0
    %3446 = vmatpush2.msra.mxu0 0.0
    %3447 = vmatprep.subr.mxu0 0.0
    %3448 = vmatpush2.msra.mxu0 0.0
    %3449 = vmatprep.subr.mxu0 0.0
    %3450 = vmatpush2.msra.mxu0 0.0
    %3451 = vmatprep.subr.mxu0 0.0
    %3452 = vmatpush2.msra.mxu0 0.0
    %3453 = vmatprep.subr.mxu0 0.0
    %3454 = vmatpush2.msra.mxu0 0.0
    %3455 = vmatprep.mubr.f32.mxu0 0.0
    %3456 = vmatmul.mubr.f32.gmra.mxu0 %v3364
    %v3457 = vpop.f32.mrf.mxu0
    %v3458 = vadd.f32 %v3360, %v3457
    %v3459 = vpop.f32.mrf.mxu0
    %3460 = vmatprep.mubr.f32.mxu0 0.0
    %3461 = vmatmul.mubr.f32.gmra.mxu0 %v3367
    %v3462 = vpop.f32.mrf.mxu0
    %v3463 = vadd.f32 %v3360, %v3462
    %v3464 = vpop.f32.mrf.mxu0
    %3465 = vmatprep.mubr.f32.mxu0 0.0
    %3466 = vmatmul.mubr.f32.gmra.mxu0 %v3370
    %v3467 = vpop.f32.mrf.mxu0
    %v3468 = vadd.f32 %v3360, %v3467
    %v3469 = vpop.f32.mrf.mxu0
    %3470 = vmatprep.mubr.f32.mxu0 0.0
    %3471 = vmatmul.mubr.f32.gmra.mxu0 %v3373
    %v3472 = vpop.f32.mrf.mxu0
    %v3473 = vadd.f32 %v3360, %v3472
    %v3474 = vpop.f32.mrf.mxu0
    %3475 = vmatprep.mubr.f32.mxu0 0.0
    %3476 = vmatmul.mubr.f32.gmra.mxu0 %v3376
    %v3477 = vpop.f32.mrf.mxu0
    %v3478 = vadd.f32 %v3360, %v3477
    %v3479 = vpop.f32.mrf.mxu0
    %3480 = vmatprep.mubr.f32.mxu0 0.0
    %3481 = vmatmul.mubr.f32.gmra.mxu0 %v3379
    %v3482 = vpop.f32.mrf.mxu0
    %v3483 = vadd.f32 %v3360, %v3482
    %v3484 = vpop.f32.mrf.mxu0
    %3485 = vmatprep.mubr.f32.mxu0 0.0
    %3486 = vmatmul.mubr.f32.gmra.mxu0 %v3382
    %v3487 = vpop.f32.mrf.mxu0
    %v3488 = vadd.f32 %v3360, %v3487
    %v3489 = vpop.f32.mrf.mxu0
    %3490 = vmatprep.mubr.f32.mxu0 0.0
    %3491 = vmatmul.mubr.f32.gmra.mxu0 %v3385
    %v3492 = vpop.f32.mrf.mxu0
    %v3493 = vadd.f32 %v3360, %v3492
    %v3494 = vpop.f32.mrf.mxu0
    %3495 = vdwg.mxu0
    %v3496 = vmax.f32 %v3458, 0.0
    %v3497 = vmax.f32 %v3463, 0.0
    %v3498 = vmax.f32 %v3468, 0.0
    %v3499 = vmax.f32 %v3473, 0.0
    %v3500 = vmax.f32 %v3478, 0.0
    %v3501 = vmax.f32 %v3483, 0.0
    %v3502 = vmax.f32 %v3488, 0.0
    %v3503 = vmax.f32 %v3493, 0.0
    %v3504 = vld [vmem:[%s8 + $0x58] sm:$0xff]
    %v3505 = vld [vmem:[%s9 + $0xe] sm:$0x1]
    %v3507 = vlaneseq
    %v3508 = vshrl.u32 %v3507, 7
    %v3509 = vsub.s32 0, %v3508
    %v3510 = vrot.slane %v3505, %v3509
    %v3513 = vsel %vm141, %v3496, 0
    %v3516 = vsel %vm141, %v3497, 0
    %v3519 = vsel %vm141, %v3498, 0
    %v3522 = vsel %vm141, %v3499, 0
    %v3525 = vsel %vm141, %v3500, 0
    %v3528 = vsel %vm141, %v3501, 0
    %v3531 = vsel %vm141, %v3502, 0
    %v3534 = vsel %vm141, %v3503, 0
    %3536 = vmatprep.subr.mxu0 0.0
    %3537 = vmatpush1.msra.mxu0 0.0
    %3538 = vmatprep.subr.mxu0 0.0
    %3539 = vmatpush1.msra.mxu0 0.0
    %3540 = vmatprep.subr.mxu0 0.0
    %3541 = vmatpush1.msra.mxu0 0.0
    %3542 = vmatprep.subr.mxu0 0.0
    %3543 = vmatpush1.msra.mxu0 0.0
    %3544 = vmatprep.subr.mxu0 0.0
    %3545 = vmatpush1.msra.mxu0 0.0
    %3546 = vmatprep.subr.mxu0 0.0
    %3547 = vmatpush1.msra.mxu0 0.0
    %3548 = vmatprep.subr.mxu0 0.0
    %3549 = vmatpush1.msra.mxu0 0.0
    %3550 = vmatprep.subr.mxu0 0.0
    %3551 = vmatpush1.msra.mxu0 0.0
    %3552 = vmatprep.subr.mxu0 0.0
    %3553 = vmatpush1.msra.mxu0 0.0
    %3554 = vmatprep.subr.mxu0 0.0
    %3555 = vmatpush1.msra.mxu0 0.0
    %3556 = vmatprep.subr.mxu0 0.0
    %3557 = vmatpush1.msra.mxu0 0.0
    %3558 = vmatprep.subr.mxu0 0.0
    %3559 = vmatpush1.msra.mxu0 0.0
    %3560 = vmatprep.subr.mxu0 0.0
    %3561 = vmatpush1.msra.mxu0 0.0
    %3562 = vmatprep.subr.mxu0 0.0
    %3563 = vmatpush1.msra.mxu0 0.0
    %3564 = vmatprep.subr.mxu0 0.0
    %3565 = vmatpush1.msra.mxu0 0.0
    %3566 = vmatprep.subr.mxu0 0.0
    %3567 = vmatpush1.msra.mxu0 %v3504
    %3568 = vmatprep.subr.mxu0 0.0
    %3569 = vmatpush2.msra.mxu0 0.0
    %3570 = vmatprep.subr.mxu0 0.0
    %3571 = vmatpush2.msra.mxu0 0.0
    %3572 = vmatprep.subr.mxu0 0.0
    %3573 = vmatpush2.msra.mxu0 0.0
    %3574 = vmatprep.subr.mxu0 0.0
    %3575 = vmatpush2.msra.mxu0 0.0
    %3576 = vmatprep.subr.mxu0 0.0
    %3577 = vmatpush2.msra.mxu0 0.0
    %3578 = vmatprep.subr.mxu0 0.0
    %3579 = vmatpush2.msra.mxu0 0.0
    %3580 = vmatprep.subr.mxu0 0.0
    %3581 = vmatpush2.msra.mxu0 0.0
    %3582 = vmatprep.subr.mxu0 0.0
    %3583 = vmatpush2.msra.mxu0 0.0
    %3584 = vmatprep.subr.mxu0 0.0
    %3585 = vmatpush2.msra.mxu0 0.0
    %3586 = vmatprep.subr.mxu0 0.0
    %3587 = vmatpush2.msra.mxu0 0.0
    %3588 = vmatprep.subr.mxu0 0.0
    %3589 = vmatpush2.msra.mxu0 0.0
    %3590 = vmatprep.subr.mxu0 0.0
    %3591 = vmatpush2.msra.mxu0 0.0
    %3592 = vmatprep.subr.mxu0 0.0
    %3593 = vmatpush2.msra.mxu0 0.0
    %3594 = vmatprep.subr.mxu0 0.0
    %3595 = vmatpush2.msra.mxu0 0.0
    %3596 = vmatprep.subr.mxu0 0.0
    %3597 = vmatpush2.msra.mxu0 0.0
    %3598 = vmatprep.subr.mxu0 0.0
    %3599 = vmatpush2.msra.mxu0 0.0
    %3600 = vmatprep.mubr.f32.mxu0 0.0
    %3601 = vmatmul.mubr.f32.gmra.mxu0 %v3513
    %v3602 = vpop.f32.mrf.mxu0
    %v3603 = vadd.f32 %v3510, %v3602
    %v3604 = vpop.f32.mrf.mxu0
    %3605 = vmatprep.mubr.f32.mxu0 0.0
    %3606 = vmatmul.mubr.f32.gmra.mxu0 %v3516
    %v3607 = vpop.f32.mrf.mxu0
    %v3608 = vadd.f32 %v3510, %v3607
    %v3609 = vpop.f32.mrf.mxu0
    %3610 = vmatprep.mubr.f32.mxu0 0.0
    %3611 = vmatmul.mubr.f32.gmra.mxu0 %v3519
    %v3612 = vpop.f32.mrf.mxu0
    %v3613 = vadd.f32 %v3510, %v3612
    %v3614 = vpop.f32.mrf.mxu0
    %3615 = vmatprep.mubr.f32.mxu0 0.0
    %3616 = vmatmul.mubr.f32.gmra.mxu0 %v3522
    %v3617 = vpop.f32.mrf.mxu0
    %v3618 = vadd.f32 %v3510, %v3617
    %v3619 = vpop.f32.mrf.mxu0
    %3620 = vmatprep.mubr.f32.mxu0 0.0
    %3621 = vmatmul.mubr.f32.gmra.mxu0 %v3525
    %v3622 = vpop.f32.mrf.mxu0
    %v3623 = vadd.f32 %v3510, %v3622
    %v3624 = vpop.f32.mrf.mxu0
    %3625 = vmatprep.mubr.f32.mxu0 0.0
    %3626 = vmatmul.mubr.f32.gmra.mxu0 %v3528
    %v3627 = vpop.f32.mrf.mxu0
    %v3628 = vadd.f32 %v3510, %v3627
    %v3629 = vpop.f32.mrf.mxu0
    %3630 = vmatprep.mubr.f32.mxu0 0.0
    %3631 = vmatmul.mubr.f32.gmra.mxu0 %v3531
    %v3632 = vpop.f32.mrf.mxu0
    %v3633 = vadd.f32 %v3510, %v3632
    %v3634 = vpop.f32.mrf.mxu0
    %3635 = vmatprep.mubr.f32.mxu0 0.0
    %3636 = vmatmul.mubr.f32.gmra.mxu0 %v3534
    %v3637 = vpop.f32.mrf.mxu0
    %v3638 = vadd.f32 %v3510, %v3637
    %v3639 = vpop.f32.mrf.mxu0
    %3640 = vdwg.mxu0
    %v3641 = vmax.f32 %v3603, 0.0
    %v3642 = vmax.f32 %v3608, 0.0
    %v3643 = vmax.f32 %v3613, 0.0
    %v3644 = vmax.f32 %v3618, 0.0
    %v3645 = vmax.f32 %v3623, 0.0
    %v3646 = vmax.f32 %v3628, 0.0
    %v3647 = vmax.f32 %v3633, 0.0
    %v3648 = vmax.f32 %v3638, 0.0
    %3650 = vrot.lane.b32.xlu0 %v1495, 96
    %v3651 = vpop.permute.xlu0 %3650
    %v3653 = vadd.f32 %v1495, %v3651
    %v3654 = vadd.f32 %v1500, %v3651
    %v3655 = vadd.f32 %v1505, %v3651
    %v3656 = vadd.f32 %v1510, %v3651
    %v3657 = vadd.f32 %v1515, %v3651
    %v3658 = vadd.f32 %v1520, %v3651
    %v3659 = vadd.f32 %v1525, %v3651
    %v3660 = vadd.f32 %v1530, %v3651
    %v3662 = vsel %vm711, %v3641, 0
    %v3665 = vsel %vm711, %v3642, 0
    %v3668 = vsel %vm711, %v3643, 0
    %v3671 = vsel %vm711, %v3644, 0
    %v3674 = vsel %vm711, %v3645, 0
    %v3677 = vsel %vm711, %v3646, 0
    %v3680 = vsel %vm711, %v3647, 0
    %v3683 = vsel %vm711, %v3648, 0
    %3685 = vmatprep.subr.mxu0 0.0
    %3686 = vmatpush1.msra.mxu0 0.0
    %3687 = vmatprep.subr.mxu0 0.0
    %3688 = vmatpush1.msra.mxu0 0.0
    %3689 = vmatprep.subr.mxu0 0.0
    %3690 = vmatpush1.msra.mxu0 0.0
    %3691 = vmatprep.subr.mxu0 0.0
    %3692 = vmatpush1.msra.mxu0 0.0
    %3693 = vmatprep.subr.mxu0 0.0
    %3694 = vmatpush1.msra.mxu0 0.0
    %3695 = vmatprep.subr.mxu0 0.0
    %3696 = vmatpush1.msra.mxu0 0.0
    %3697 = vmatprep.subr.mxu0 0.0
    %3698 = vmatpush1.msra.mxu0 0.0
    %3699 = vmatprep.subr.mxu0 0.0
    %3700 = vmatpush1.msra.mxu0 0.0
    %3701 = vmatprep.subr.mxu0 0.0
    %3702 = vmatpush1.msra.mxu0 0.0
    %3703 = vmatprep.subr.mxu0 0.0
    %3704 = vmatpush1.msra.mxu0 0.0
    %3705 = vmatprep.subr.mxu0 0.0
    %3706 = vmatpush1.msra.mxu0 0.0
    %3707 = vmatprep.subr.mxu0 0.0
    %3708 = vmatpush1.msra.mxu0 0.0
    %3709 = vmatprep.subr.mxu0 0.0
    %3710 = vmatpush1.msra.mxu0 %v3345
    %3711 = vmatprep.subr.mxu0 0.0
    %3712 = vmatpush1.msra.mxu0 %v3344
    %3713 = vmatprep.subr.mxu0 0.0
    %3714 = vmatpush1.msra.mxu0 %v3343
    %3715 = vmatprep.subr.mxu0 0.0
    %3716 = vmatpush1.msra.mxu0 %v3342
    %3717 = vmatprep.subr.mxu0 0.0
    %3718 = vmatpush2.msra.mxu0 0.0
    %3719 = vmatprep.subr.mxu0 0.0
    %3720 = vmatpush2.msra.mxu0 0.0
    %3721 = vmatprep.subr.mxu0 0.0
    %3722 = vmatpush2.msra.mxu0 0.0
    %3723 = vmatprep.subr.mxu0 0.0
    %3724 = vmatpush2.msra.mxu0 0.0
    %3725 = vmatprep.subr.mxu0 0.0
    %3726 = vmatpush2.msra.mxu0 0.0
    %3727 = vmatprep.subr.mxu0 0.0
    %3728 = vmatpush2.msra.mxu0 0.0
    %3729 = vmatprep.subr.mxu0 0.0
    %3730 = vmatpush2.msra.mxu0 0.0
    %3731 = vmatprep.subr.mxu0 0.0
    %3732 = vmatpush2.msra.mxu0 0.0
    %3733 = vmatprep.subr.mxu0 0.0
    %3734 = vmatpush2.msra.mxu0 0.0
    %3735 = vmatprep.subr.mxu0 0.0
    %3736 = vmatpush2.msra.mxu0 0.0
    %3737 = vmatprep.subr.mxu0 0.0
    %3738 = vmatpush2.msra.mxu0 0.0
    %3739 = vmatprep.subr.mxu0 0.0
    %3740 = vmatpush2.msra.mxu0 0.0
    %3741 = vmatprep.subr.mxu0 0.0
    %3742 = vmatpush2.msra.mxu0 0.0
    %3743 = vmatprep.subr.mxu0 0.0
    %3744 = vmatpush2.msra.mxu0 0.0
    %3745 = vmatprep.subr.mxu0 0.0
    %3746 = vmatpush2.msra.mxu0 0.0
    %3747 = vmatprep.subr.mxu0 0.0
    %3748 = vmatpush2.msra.mxu0 0.0
    %3749 = vmatprep.mubr.f32.mxu0 0.0
    %3750 = vmatmul.mubr.f32.gmra.mxu0 %v3662
    %v3751 = vpop.f32.mrf.mxu0
    %v3752 = vadd.f32 0.0, %v3751
    %v3753 = vpop.f32.mrf.mxu0
    %3754 = vmatprep.mubr.f32.mxu0 0.0
    %3755 = vmatmul.mubr.f32.gmra.mxu0 %v3665
    %v3756 = vpop.f32.mrf.mxu0
    %v3757 = vadd.f32 0.0, %v3756
    %v3758 = vpop.f32.mrf.mxu0
    %3759 = vmatprep.mubr.f32.mxu0 0.0
    %3760 = vmatmul.mubr.f32.gmra.mxu0 %v3668
    %v3761 = vpop.f32.mrf.mxu0
    %v3762 = vadd.f32 0.0, %v3761
    %v3763 = vpop.f32.mrf.mxu0
    %3764 = vmatprep.mubr.f32.mxu0 0.0
    %3765 = vmatmul.mubr.f32.gmra.mxu0 %v3671
    %v3766 = vpop.f32.mrf.mxu0
    %v3767 = vadd.f32 0.0, %v3766
    %v3768 = vpop.f32.mrf.mxu0
    %3769 = vmatprep.mubr.f32.mxu0 0.0
    %3770 = vmatmul.mubr.f32.gmra.mxu0 %v3674
    %v3771 = vpop.f32.mrf.mxu0
    %v3772 = vadd.f32 0.0, %v3771
    %v3773 = vpop.f32.mrf.mxu0
    %3774 = vmatprep.mubr.f32.mxu0 0.0
    %3775 = vmatmul.mubr.f32.gmra.mxu0 %v3677
    %v3776 = vpop.f32.mrf.mxu0
    %v3777 = vadd.f32 0.0, %v3776
    %v3778 = vpop.f32.mrf.mxu0
    %3779 = vmatprep.mubr.f32.mxu0 0.0
    %3780 = vmatmul.mubr.f32.gmra.mxu0 %v3680
    %v3781 = vpop.f32.mrf.mxu0
    %v3782 = vadd.f32 0.0, %v3781
    %v3783 = vpop.f32.mrf.mxu0
    %3784 = vmatprep.mubr.f32.mxu0 0.0
    %3785 = vmatmul.mubr.f32.gmra.mxu0 %v3683
    %v3786 = vpop.f32.mrf.mxu0
    %v3787 = vadd.f32 0.0, %v3786
    %v3788 = vpop.f32.mrf.mxu0
    %3789 = vdwg.mxu0
    %3798 = vrot.lane.b32.xlu0 %v3752, 32
    %v3799 = vpop.permute.xlu0 %3798
    %3800 = vrot.lane.b32.xlu0 %v3757, 32
    %v3801 = vpop.permute.xlu0 %3800
    %3802 = vrot.lane.b32.xlu0 %v3762, 32
    %v3803 = vpop.permute.xlu0 %3802
    %3804 = vrot.lane.b32.xlu0 %v3767, 32
    %v3805 = vpop.permute.xlu0 %3804
    %3806 = vrot.lane.b32.xlu0 %v3772, 32
    %v3807 = vpop.permute.xlu0 %3806
    %3808 = vrot.lane.b32.xlu0 %v3777, 32
    %v3809 = vpop.permute.xlu0 %3808
    %3810 = vrot.lane.b32.xlu0 %v3782, 32
    %v3811 = vpop.permute.xlu0 %3810
    %3812 = vrot.lane.b32.xlu0 %v3787, 32
    %v3813 = vpop.permute.xlu0 %3812
    %v3822 = vadd.f32 %v3653, %v3799
    %v3823 = vadd.f32 %v3654, %v3801
    %v3824 = vadd.f32 %v3655, %v3803
    %v3825 = vadd.f32 %v3656, %v3805
    %v3826 = vadd.f32 %v3657, %v3807
    %v3827 = vadd.f32 %v3658, %v3809
    %v3828 = vadd.f32 %v3659, %v3811
    %v3829 = vadd.f32 %v3660, %v3813
    %v3830 = vmax.f32 %v3822, 0.0
    %v3831 = vmax.f32 %v3823, 0.0
    %v3832 = vmax.f32 %v3824, 0.0
    %v3833 = vmax.f32 %v3825, 0.0
    %v3834 = vmax.f32 %v3826, 0.0
    %v3835 = vmax.f32 %v3827, 0.0
    %v3836 = vmax.f32 %v3828, 0.0
    %v3837 = vmax.f32 %v3829, 0.0
    %3839 = vset.pattern.permute.xlu0 0
    %3840 = vperm.xlu0 %3839, %v1534
    %v3841 = vpop.permute.xlu0 %3840
    %v3843 = vmul.f32 %v3830, %v3841
    %v3844 = vmul.f32 %v3831, %v3841
    %v3845 = vmul.f32 %v3832, %v3841
    %v3846 = vmul.f32 %v3833, %v3841
    %v3847 = vmul.f32 %v3834, %v3841
    %v3848 = vmul.f32 %v3835, %v3841
    %v3849 = vmul.f32 %v3836, %v3841
    %v3850 = vmul.f32 %v3837, %v3841
    %s3851 = scalar_lea.vmem %s5, 64
    %v3852 = vld [vmem:[%s3851] sm:$0xff]
    %v3853 = vld [vmem:[%s3851 + $0x8] sm:$0xff]
    %v3854 = vld [vmem:[%s3851 + $0x10] sm:$0xff]
    %v3855 = vld [vmem:[%s3851 + $0x18] sm:$0xff]
    %v3856 = vld [vmem:[%s3851 + $0x20] sm:$0xff]
    %v3857 = vld [vmem:[%s3851 + $0x28] sm:$0xff]
    %v3858 = vld [vmem:[%s3851 + $0x30] sm:$0xff]
    %v3859 = vld [vmem:[%s3851 + $0x38] sm:$0xff]
    %v3861 = vsel %vm3362, %v3852, 0
    %v3864 = vsel %vm3362, %v3853, 0
    %v3867 = vsel %vm3362, %v3854, 0
    %v3870 = vsel %vm3362, %v3855, 0
    %v3873 = vsel %vm3362, %v3856, 0
    %v3876 = vsel %vm3362, %v3857, 0
    %v3879 = vsel %vm3362, %v3858, 0
    %v3882 = vsel %vm3362, %v3859, 0
    %3884 = vmatprep.subr.mxu0 0.0
    %3885 = vmatpush1.msra.mxu0 0.0
    %3886 = vmatprep.subr.mxu0 0.0
    %3887 = vmatpush1.msra.mxu0 0.0
    %3888 = vmatprep.subr.mxu0 0.0
    %3889 = vmatpush1.msra.mxu0 0.0
    %3890 = vmatprep.subr.mxu0 0.0
    %3891 = vmatpush1.msra.mxu0 0.0
    %3892 = vmatprep.subr.mxu0 0.0
    %3893 = vmatpush1.msra.mxu0 0.0
    %3894 = vmatprep.subr.mxu0 0.0
    %3895 = vmatpush1.msra.mxu0 0.0
    %3896 = vmatprep.subr.mxu0 0.0
    %3897 = vmatpush1.msra.mxu0 0.0
    %3898 = vmatprep.subr.mxu0 0.0
    %3899 = vmatpush1.msra.mxu0 0.0
    %3900 = vmatprep.subr.mxu0 0.0
    %3901 = vmatpush1.msra.mxu0 0.0
    %3902 = vmatprep.subr.mxu0 0.0
    %3903 = vmatpush1.msra.mxu0 0.0
    %3904 = vmatprep.subr.mxu0 0.0
    %3905 = vmatpush1.msra.mxu0 0.0
    %3906 = vmatprep.subr.mxu0 0.0
    %3907 = vmatpush1.msra.mxu0 0.0
    %3908 = vmatprep.subr.mxu0 0.0
    %3909 = vmatpush1.msra.mxu0 0.0
    %3910 = vmatprep.subr.mxu0 0.0
    %3911 = vmatpush1.msra.mxu0 0.0
    %3912 = vmatprep.subr.mxu0 0.0
    %3913 = vmatpush1.msra.mxu0 0.0
    %3914 = vmatprep.subr.mxu0 0.0
    %3915 = vmatpush1.msra.mxu0 %v3389
    %3916 = vmatprep.subr.mxu0 0.0
    %3917 = vmatpush2.msra.mxu0 0.0
    %3918 = vmatprep.subr.mxu0 0.0
    %3919 = vmatpush2.msra.mxu0 0.0
    %3920 = vmatprep.subr.mxu0 0.0
    %3921 = vmatpush2.msra.mxu0 0.0
    %3922 = vmatprep.subr.mxu0 0.0
    %3923 = vmatpush2.msra.mxu0 0.0
    %3924 = vmatprep.subr.mxu0 0.0
    %3925 = vmatpush2.msra.mxu0 0.0
    %3926 = vmatprep.subr.mxu0 0.0
    %3927 = vmatpush2.msra.mxu0 0.0
    %3928 = vmatprep.subr.mxu0 0.0
    %3929 = vmatpush2.msra.mxu0 0.0
    %3930 = vmatprep.subr.mxu0 0.0
    %3931 = vmatpush2.msra.mxu0 0.0
    %3932 = vmatprep.subr.mxu0 0.0
    %3933 = vmatpush2.msra.mxu0 0.0
    %3934 = vmatprep.subr.mxu0 0.0
    %3935 = vmatpush2.msra.mxu0 0.0
    %3936 = vmatprep.subr.mxu0 0.0
    %3937 = vmatpush2.msra.mxu0 0.0
    %3938 = vmatprep.subr.mxu0 0.0
    %3939 = vmatpush2.msra.mxu0 0.0
    %3940 = vmatprep.subr.mxu0 0.0
    %3941 = vmatpush2.msra.mxu0 0.0
    %3942 = vmatprep.subr.mxu0 0.0
    %3943 = vmatpush2.msra.mxu0 0.0
    %3944 = vmatprep.subr.mxu0 0.0
    %3945 = vmatpush2.msra.mxu0 0.0
    %3946 = vmatprep.subr.mxu0 0.0
    %3947 = vmatpush2.msra.mxu0 0.0
    %3948 = vmatprep.mubr.f32.mxu0 0.0
    %3949 = vmatmul.mubr.f32.gmra.mxu0 %v3861
    %v3950 = vpop.f32.mrf.mxu0
    %v3951 = vadd.f32 %v3360, %v3950
    %v3952 = vpop.f32.mrf.mxu0
    %3953 = vmatprep.mubr.f32.mxu0 0.0
    %3954 = vmatmul.mubr.f32.gmra.mxu0 %v3864
    %v3955 = vpop.f32.mrf.mxu0
    %v3956 = vadd.f32 %v3360, %v3955
    %v3957 = vpop.f32.mrf.mxu0
    %3958 = vmatprep.mubr.f32.mxu0 0.0
    %3959 = vmatmul.mubr.f32.gmra.mxu0 %v3867
    %v3960 = vpop.f32.mrf.mxu0
    %v3961 = vadd.f32 %v3360, %v3960
    %v3962 = vpop.f32.mrf.mxu0
    %3963 = vmatprep.mubr.f32.mxu0 0.0
    %3964 = vmatmul.mubr.f32.gmra.mxu0 %v3870
    %v3965 = vpop.f32.mrf.mxu0
    %v3966 = vadd.f32 %v3360, %v3965
    %v3967 = vpop.f32.mrf.mxu0
    %3968 = vmatprep.mubr.f32.mxu0 0.0
    %3969 = vmatmul.mubr.f32.gmra.mxu0 %v3873
    %v3970 = vpop.f32.mrf.mxu0
    %v3971 = vadd.f32 %v3360, %v3970
    %v3972 = vpop.f32.mrf.mxu0
    %3973 = vmatprep.mubr.f32.mxu0 0.0
    %3974 = vmatmul.mubr.f32.gmra.mxu0 %v3876
    %v3975 = vpop.f32.mrf.mxu0
    %v3976 = vadd.f32 %v3360, %v3975
    %v3977 = vpop.f32.mrf.mxu0
    %3978 = vmatprep.mubr.f32.mxu0 0.0
    %3979 = vmatmul.mubr.f32.gmra.mxu0 %v3879
    %v3980 = vpop.f32.mrf.mxu0
    %v3981 = vadd.f32 %v3360, %v3980
    %v3982 = vpop.f32.mrf.mxu0
    %3983 = vmatprep.mubr.f32.mxu0 0.0
    %3984 = vmatmul.mubr.f32.gmra.mxu0 %v3882
    %v3985 = vpop.f32.mrf.mxu0
    %v3986 = vadd.f32 %v3360, %v3985
    %v3987 = vpop.f32.mrf.mxu0
    %3988 = vdwg.mxu0
    %v3989 = vmax.f32 %v3951, 0.0
    %v3990 = vmax.f32 %v3956, 0.0
    %v3991 = vmax.f32 %v3961, 0.0
    %v3992 = vmax.f32 %v3966, 0.0
    %v3993 = vmax.f32 %v3971, 0.0
    %v3994 = vmax.f32 %v3976, 0.0
    %v3995 = vmax.f32 %v3981, 0.0
    %v3996 = vmax.f32 %v3986, 0.0
    %v3998 = vsel %vm141, %v3989, 0
    %v4001 = vsel %vm141, %v3990, 0
    %v4004 = vsel %vm141, %v3991, 0
    %v4007 = vsel %vm141, %v3992, 0
    %v4010 = vsel %vm141, %v3993, 0
    %v4013 = vsel %vm141, %v3994, 0
    %v4016 = vsel %vm141, %v3995, 0
    %v4019 = vsel %vm141, %v3996, 0
    %4021 = vmatprep.subr.mxu0 0.0
    %4022 = vmatpush1.msra.mxu0 0.0
    %4023 = vmatprep.subr.mxu0 0.0
    %4024 = vmatpush1.msra.mxu0 0.0
    %4025 = vmatprep.subr.mxu0 0.0
    %4026 = vmatpush1.msra.mxu0 0.0
    %4027 = vmatprep.subr.mxu0 0.0
    %4028 = vmatpush1.msra.mxu0 0.0
    %4029 = vmatprep.subr.mxu0 0.0
    %4030 = vmatpush1.msra.mxu0 0.0
    %4031 = vmatprep.subr.mxu0 0.0
    %4032 = vmatpush1.msra.mxu0 0.0
    %4033 = vmatprep.subr.mxu0 0.0
    %4034 = vmatpush1.msra.mxu0 0.0
    %4035 = vmatprep.subr.mxu0 0.0
    %4036 = vmatpush1.msra.mxu0 0.0
    %4037 = vmatprep.subr.mxu0 0.0
    %4038 = vmatpush1.msra.mxu0 0.0
    %4039 = vmatprep.subr.mxu0 0.0
    %4040 = vmatpush1.msra.mxu0 0.0
    %4041 = vmatprep.subr.mxu0 0.0
    %4042 = vmatpush1.msra.mxu0 0.0
    %4043 = vmatprep.subr.mxu0 0.0
    %4044 = vmatpush1.msra.mxu0 0.0
    %4045 = vmatprep.subr.mxu0 0.0
    %4046 = vmatpush1.msra.mxu0 0.0
    %4047 = vmatprep.subr.mxu0 0.0
    %4048 = vmatpush1.msra.mxu0 0.0
    %4049 = vmatprep.subr.mxu0 0.0
    %4050 = vmatpush1.msra.mxu0 0.0
    %4051 = vmatprep.subr.mxu0 0.0
    %4052 = vmatpush1.msra.mxu0 %v3504
    %4053 = vmatprep.subr.mxu0 0.0
    %4054 = vmatpush2.msra.mxu0 0.0
    %4055 = vmatprep.subr.mxu0 0.0
    %4056 = vmatpush2.msra.mxu0 0.0
    %4057 = vmatprep.subr.mxu0 0.0
    %4058 = vmatpush2.msra.mxu0 0.0
    %4059 = vmatprep.subr.mxu0 0.0
    %4060 = vmatpush2.msra.mxu0 0.0
    %4061 = vmatprep.subr.mxu0 0.0
    %4062 = vmatpush2.msra.mxu0 0.0
    %4063 = vmatprep.subr.mxu0 0.0
    %4064 = vmatpush2.msra.mxu0 0.0
    %4065 = vmatprep.subr.mxu0 0.0
    %4066 = vmatpush2.msra.mxu0 0.0
    %4067 = vmatprep.subr.mxu0 0.0
    %4068 = vmatpush2.msra.mxu0 0.0
    %4069 = vmatprep.subr.mxu0 0.0
    %4070 = vmatpush2.msra.mxu0 0.0
    %4071 = vmatprep.subr.mxu0 0.0
    %4072 = vmatpush2.msra.mxu0 0.0
    %4073 = vmatprep.subr.mxu0 0.0
    %4074 = vmatpush2.msra.mxu0 0.0
    %4075 = vmatprep.subr.mxu0 0.0
    %4076 = vmatpush2.msra.mxu0 0.0
    %4077 = vmatprep.subr.mxu0 0.0
    %4078 = vmatpush2.msra.mxu0 0.0
    %4079 = vmatprep.subr.mxu0 0.0
    %4080 = vmatpush2.msra.mxu0 0.0
    %4081 = vmatprep.subr.mxu0 0.0
    %4082 = vmatpush2.msra.mxu0 0.0
    %4083 = vmatprep.subr.mxu0 0.0
    %4084 = vmatpush2.msra.mxu0 0.0
    %4085 = vmatprep.mubr.f32.mxu0 0.0
    %4086 = vmatmul.mubr.f32.gmra.mxu0 %v3998
    %v4087 = vpop.f32.mrf.mxu0
    %v4088 = vadd.f32 %v3510, %v4087
    %v4089 = vpop.f32.mrf.mxu0
    %4090 = vmatprep.mubr.f32.mxu0 0.0
    %4091 = vmatmul.mubr.f32.gmra.mxu0 %v4001
    %v4092 = vpop.f32.mrf.mxu0
    %v4093 = vadd.f32 %v3510, %v4092
    %v4094 = vpop.f32.mrf.mxu0
    %4095 = vmatprep.mubr.f32.mxu0 0.0
    %4096 = vmatmul.mubr.f32.gmra.mxu0 %v4004
    %v4097 = vpop.f32.mrf.mxu0
    %v4098 = vadd.f32 %v3510, %v4097
    %v4099 = vpop.f32.mrf.mxu0
    %4100 = vmatprep.mubr.f32.mxu0 0.0
    %4101 = vmatmul.mubr.f32.gmra.mxu0 %v4007
    %v4102 = vpop.f32.mrf.mxu0
    %v4103 = vadd.f32 %v3510, %v4102
    %v4104 = vpop.f32.mrf.mxu0
    %4105 = vmatprep.mubr.f32.mxu0 0.0
    %4106 = vmatmul.mubr.f32.gmra.mxu0 %v4010
    %v4107 = vpop.f32.mrf.mxu0
    %v4108 = vadd.f32 %v3510, %v4107
    %v4109 = vpop.f32.mrf.mxu0
    %4110 = vmatprep.mubr.f32.mxu0 0.0
    %4111 = vmatmul.mubr.f32.gmra.mxu0 %v4013
    %v4112 = vpop.f32.mrf.mxu0
    %v4113 = vadd.f32 %v3510, %v4112
    %v4114 = vpop.f32.mrf.mxu0
    %4115 = vmatprep.mubr.f32.mxu0 0.0
    %4116 = vmatmul.mubr.f32.gmra.mxu0 %v4016
    %v4117 = vpop.f32.mrf.mxu0
    %v4118 = vadd.f32 %v3510, %v4117
    %v4119 = vpop.f32.mrf.mxu0
    %4120 = vmatprep.mubr.f32.mxu0 0.0
    %4121 = vmatmul.mubr.f32.gmra.mxu0 %v4019
    %v4122 = vpop.f32.mrf.mxu0
    %v4123 = vadd.f32 %v3510, %v4122
    %v4124 = vpop.f32.mrf.mxu0
    %4125 = vdwg.mxu0
    %v4126 = vmax.f32 %v4088, 0.0
    %v4127 = vmax.f32 %v4093, 0.0
    %v4128 = vmax.f32 %v4098, 0.0
    %v4129 = vmax.f32 %v4103, 0.0
    %v4130 = vmax.f32 %v4108, 0.0
    %v4131 = vmax.f32 %v4113, 0.0
    %v4132 = vmax.f32 %v4118, 0.0
    %v4133 = vmax.f32 %v4123, 0.0
    %4135 = vrot.lane.b32.xlu0 %v1500, 96
    %v4136 = vpop.permute.xlu0 %4135
    %v4138 = vadd.f32 %v1495, %v4136
    %v4139 = vadd.f32 %v1500, %v4136
    %v4140 = vadd.f32 %v1505, %v4136
    %v4141 = vadd.f32 %v1510, %v4136
    %v4142 = vadd.f32 %v1515, %v4136
    %v4143 = vadd.f32 %v1520, %v4136
    %v4144 = vadd.f32 %v1525, %v4136
    %v4145 = vadd.f32 %v1530, %v4136
    %v4147 = vsel %vm711, %v4126, 0
    %v4150 = vsel %vm711, %v4127, 0
    %v4153 = vsel %vm711, %v4128, 0
    %v4156 = vsel %vm711, %v4129, 0
    %v4159 = vsel %vm711, %v4130, 0
    %v4162 = vsel %vm711, %v4131, 0
    %v4165 = vsel %vm711, %v4132, 0
    %v4168 = vsel %vm711, %v4133, 0
    %4170 = vmatprep.subr.mxu0 0.0
    %4171 = vmatpush1.msra.mxu0 0.0
    %4172 = vmatprep.subr.mxu0 0.0
    %4173 = vmatpush1.msra.mxu0 0.0
    %4174 = vmatprep.subr.mxu0 0.0
    %4175 = vmatpush1.msra.mxu0 0.0
    %4176 = vmatprep.subr.mxu0 0.0
    %4177 = vmatpush1.msra.mxu0 0.0
    %4178 = vmatprep.subr.mxu0 0.0
    %4179 = vmatpush1.msra.mxu0 0.0
    %4180 = vmatprep.subr.mxu0 0.0
    %4181 = vmatpush1.msra.mxu0 0.0
    %4182 = vmatprep.subr.mxu0 0.0
    %4183 = vmatpush1.msra.mxu0 0.0
    %4184 = vmatprep.subr.mxu0 0.0
    %4185 = vmatpush1.msra.mxu0 0.0
    %4186 = vmatprep.subr.mxu0 0.0
    %4187 = vmatpush1.msra.mxu0 0.0
    %4188 = vmatprep.subr.mxu0 0.0
    %4189 = vmatpush1.msra.mxu0 0.0
    %4190 = vmatprep.subr.mxu0 0.0
    %4191 = vmatpush1.msra.mxu0 0.0
    %4192 = vmatprep.subr.mxu0 0.0
    %4193 = vmatpush1.msra.mxu0 0.0
    %4194 = vmatprep.subr.mxu0 0.0
    %4195 = vmatpush1.msra.mxu0 %v3345
    %4196 = vmatprep.subr.mxu0 0.0
    %4197 = vmatpush1.msra.mxu0 %v3344
    %4198 = vmatprep.subr.mxu0 0.0
    %4199 = vmatpush1.msra.mxu0 %v3343
    %4200 = vmatprep.subr.mxu0 0.0
    %4201 = vmatpush1.msra.mxu0 %v3342
    %4202 = vmatprep.subr.mxu0 0.0
    %4203 = vmatpush2.msra.mxu0 0.0
    %4204 = vmatprep.subr.mxu0 0.0
    %4205 = vmatpush2.msra.mxu0 0.0
    %4206 = vmatprep.subr.mxu0 0.0
    %4207 = vmatpush2.msra.mxu0 0.0
    %4208 = vmatprep.subr.mxu0 0.0
    %4209 = vmatpush2.msra.mxu0 0.0
    %4210 = vmatprep.subr.mxu0 0.0
    %4211 = vmatpush2.msra.mxu0 0.0
    %4212 = vmatprep.subr.mxu0 0.0
    %4213 = vmatpush2.msra.mxu0 0.0
    %4214 = vmatprep.subr.mxu0 0.0
    %4215 = vmatpush2.msra.mxu0 0.0
    %4216 = vmatprep.subr.mxu0 0.0
    %4217 = vmatpush2.msra.mxu0 0.0
    %4218 = vmatprep.subr.mxu0 0.0
    %4219 = vmatpush2.msra.mxu0 0.0
    %4220 = vmatprep.subr.mxu0 0.0
    %4221 = vmatpush2.msra.mxu0 0.0
    %4222 = vmatprep.subr.mxu0 0.0
    %4223 = vmatpush2.msra.mxu0 0.0
    %4224 = vmatprep.subr.mxu0 0.0
    %4225 = vmatpush2.msra.mxu0 0.0
    %4226 = vmatprep.subr.mxu0 0.0
    %4227 = vmatpush2.msra.mxu0 0.0
    %4228 = vmatprep.subr.mxu0 0.0
    %4229 = vmatpush2.msra.mxu0 0.0
    %4230 = vmatprep.subr.mxu0 0.0
    %4231 = vmatpush2.msra.mxu0 0.0
    %4232 = vmatprep.subr.mxu0 0.0
    %4233 = vmatpush2.msra.mxu0 0.0
    %4234 = vmatprep.mubr.f32.mxu0 0.0
    %4235 = vmatmul.mubr.f32.gmra.mxu0 %v4147
    %v4236 = vpop.f32.mrf.mxu0
    %v4237 = vadd.f32 0.0, %v4236
    %v4238 = vpop.f32.mrf.mxu0
    %4239 = vmatprep.mubr.f32.mxu0 0.0
    %4240 = vmatmul.mubr.f32.gmra.mxu0 %v4150
    %v4241 = vpop.f32.mrf.mxu0
    %v4242 = vadd.f32 0.0, %v4241
    %v4243 = vpop.f32.mrf.mxu0
    %4244 = vmatprep.mubr.f32.mxu0 0.0
    %4245 = vmatmul.mubr.f32.gmra.mxu0 %v4153
    %v4246 = vpop.f32.mrf.mxu0
    %v4247 = vadd.f32 0.0, %v4246
    %v4248 = vpop.f32.mrf.mxu0
    %4249 = vmatprep.mubr.f32.mxu0 0.0
    %4250 = vmatmul.mubr.f32.gmra.mxu0 %v4156
    %v4251 = vpop.f32.mrf.mxu0
    %v4252 = vadd.f32 0.0, %v4251
    %v4253 = vpop.f32.mrf.mxu0
    %4254 = vmatprep.mubr.f32.mxu0 0.0
    %4255 = vmatmul.mubr.f32.gmra.mxu0 %v4159
    %v4256 = vpop.f32.mrf.mxu0
    %v4257 = vadd.f32 0.0, %v4256
    %v4258 = vpop.f32.mrf.mxu0
    %4259 = vmatprep.mubr.f32.mxu0 0.0
    %4260 = vmatmul.mubr.f32.gmra.mxu0 %v4162
    %v4261 = vpop.f32.mrf.mxu0
    %v4262 = vadd.f32 0.0, %v4261
    %v4263 = vpop.f32.mrf.mxu0
    %4264 = vmatprep.mubr.f32.mxu0 0.0
    %4265 = vmatmul.mubr.f32.gmra.mxu0 %v4165
    %v4266 = vpop.f32.mrf.mxu0
    %v4267 = vadd.f32 0.0, %v4266
    %v4268 = vpop.f32.mrf.mxu0
    %4269 = vmatprep.mubr.f32.mxu0 0.0
    %4270 = vmatmul.mubr.f32.gmra.mxu0 %v4168
    %v4271 = vpop.f32.mrf.mxu0
    %v4272 = vadd.f32 0.0, %v4271
    %v4273 = vpop.f32.mrf.mxu0
    %4274 = vdwg.mxu0
    %4283 = vrot.lane.b32.xlu0 %v4237, 32
    %v4284 = vpop.permute.xlu0 %4283
    %4285 = vrot.lane.b32.xlu0 %v4242, 32
    %v4286 = vpop.permute.xlu0 %4285
    %4287 = vrot.lane.b32.xlu0 %v4247, 32
    %v4288 = vpop.permute.xlu0 %4287
    %4289 = vrot.lane.b32.xlu0 %v4252, 32
    %v4290 = vpop.permute.xlu0 %4289
    %4291 = vrot.lane.b32.xlu0 %v4257, 32
    %v4292 = vpop.permute.xlu0 %4291
    %4293 = vrot.lane.b32.xlu0 %v4262, 32
    %v4294 = vpop.permute.xlu0 %4293
    %4295 = vrot.lane.b32.xlu0 %v4267, 32
    %v4296 = vpop.permute.xlu0 %4295
    %4297 = vrot.lane.b32.xlu0 %v4272, 32
    %v4298 = vpop.permute.xlu0 %4297
    %v4307 = vadd.f32 %v4138, %v4284
    %v4308 = vadd.f32 %v4139, %v4286
    %v4309 = vadd.f32 %v4140, %v4288
    %v4310 = vadd.f32 %v4141, %v4290
    %v4311 = vadd.f32 %v4142, %v4292
    %v4312 = vadd.f32 %v4143, %v4294
    %v4313 = vadd.f32 %v4144, %v4296
    %v4314 = vadd.f32 %v4145, %v4298
    %v4315 = vmax.f32 %v4307, 0.0
    %v4316 = vmax.f32 %v4308, 0.0
    %v4317 = vmax.f32 %v4309, 0.0
    %v4318 = vmax.f32 %v4310, 0.0
    %v4319 = vmax.f32 %v4311, 0.0
    %v4320 = vmax.f32 %v4312, 0.0
    %v4321 = vmax.f32 %v4313, 0.0
    %v4322 = vmax.f32 %v4314, 0.0
    %4323 = vset.pattern.permute.xlu0 1
    %4324 = vperm.xlu0 %4323, %v1534
    %v4325 = vpop.permute.xlu0 %4324
    %v4327 = vmul.f32 %v4315, %v4325
    %v4328 = vmul.f32 %v4316, %v4325
    %v4329 = vmul.f32 %v4317, %v4325
    %v4330 = vmul.f32 %v4318, %v4325
    %v4331 = vmul.f32 %v4319, %v4325
    %v4332 = vmul.f32 %v4320, %v4325
    %v4333 = vmul.f32 %v4321, %v4325
    %v4334 = vmul.f32 %v4322, %v4325
    %v4335 = vmax.f32 %v3843, %v4327
    %v4336 = vmax.f32 %v3844, %v4328
    %v4337 = vmax.f32 %v3845, %v4329
    %v4338 = vmax.f32 %v3846, %v4330
    %v4339 = vmax.f32 %v3847, %v4331
    %v4340 = vmax.f32 %v3848, %v4332
    %v4341 = vmax.f32 %v3849, %v4333
    %v4342 = vmax.f32 %v3850, %v4334
    %s4343 = scalar_lea.vmem %s5, 128
    %v4344 = vld [vmem:[%s4343] sm:$0xff]
    %v4345 = vld [vmem:[%s4343 + $0x8] sm:$0xff]
    %v4346 = vld [vmem:[%s4343 + $0x10] sm:$0xff]
    %v4347 = vld [vmem:[%s4343 + $0x18] sm:$0xff]
    %v4348 = vld [vmem:[%s4343 + $0x20] sm:$0xff]
    %v4349 = vld [vmem:[%s4343 + $0x28] sm:$0xff]
    %v4350 = vld [vmem:[%s4343 + $0x30] sm:$0xff]
    %v4351 = vld [vmem:[%s4343 + $0x38] sm:$0xff]
    %v4353 = vsel %vm3362, %v4344, 0
    %v4356 = vsel %vm3362, %v4345, 0
    %v4359 = vsel %vm3362, %v4346, 0
    %v4362 = vsel %vm3362, %v4347, 0
    %v4365 = vsel %vm3362, %v4348, 0
    %v4368 = vsel %vm3362, %v4349, 0
    %v4371 = vsel %vm3362, %v4350, 0
    %v4374 = vsel %vm3362, %v4351, 0
    %4376 = vmatprep.subr.mxu0 0.0
    %4377 = vmatpush1.msra.mxu0 0.0
    %4378 = vmatprep.subr.mxu0 0.0
    %4379 = vmatpush1.msra.mxu0 0.0
    %4380 = vmatprep.subr.mxu0 0.0
    %4381 = vmatpush1.msra.mxu0 0.0
    %4382 = vmatprep.subr.mxu0 0.0
    %4383 = vmatpush1.msra.mxu0 0.0
    %4384 = vmatprep.subr.mxu0 0.0
    %4385 = vmatpush1.msra.mxu0 0.0
    %4386 = vmatprep.subr.mxu0 0.0
    %4387 = vmatpush1.msra.mxu0 0.0
    %4388 = vmatprep.subr.mxu0 0.0
    %4389 = vmatpush1.msra.mxu0 0.0
    %4390 = vmatprep.subr.mxu0 0.0
    %4391 = vmatpush1.msra.mxu0 0.0
    %4392 = vmatprep.subr.mxu0 0.0
    %4393 = vmatpush1.msra.mxu0 0.0
    %4394 = vmatprep.subr.mxu0 0.0
    %4395 = vmatpush1.msra.mxu0 0.0
    %4396 = vmatprep.subr.mxu0 0.0
    %4397 = vmatpush1.msra.mxu0 0.0
    %4398 = vmatprep.subr.mxu0 0.0
    %4399 = vmatpush1.msra.mxu0 0.0
    %4400 = vmatprep.subr.mxu0 0.0
    %4401 = vmatpush1.msra.mxu0 0.0
    %4402 = vmatprep.subr.mxu0 0.0
    %4403 = vmatpush1.msra.mxu0 0.0
    %4404 = vmatprep.subr.mxu0 0.0
    %4405 = vmatpush1.msra.mxu0 0.0
    %4406 = vmatprep.subr.mxu0 0.0
    %4407 = vmatpush1.msra.mxu0 %v3389
    %4408 = vmatprep.subr.mxu0 0.0
    %4409 = vmatpush2.msra.mxu0 0.0
    %4410 = vmatprep.subr.mxu0 0.0
    %4411 = vmatpush2.msra.mxu0 0.0
    %4412 = vmatprep.subr.mxu0 0.0
    %4413 = vmatpush2.msra.mxu0 0.0
    %4414 = vmatprep.subr.mxu0 0.0
    %4415 = vmatpush2.msra.mxu0 0.0
    %4416 = vmatprep.subr.mxu0 0.0
    %4417 = vmatpush2.msra.mxu0 0.0
    %4418 = vmatprep.subr.mxu0 0.0
    %4419 = vmatpush2.msra.mxu0 0.0
    %4420 = vmatprep.subr.mxu0 0.0
    %4421 = vmatpush2.msra.mxu0 0.0
    %4422 = vmatprep.subr.mxu0 0.0
    %4423 = vmatpush2.msra.mxu0 0.0
    %4424 = vmatprep.subr.mxu0 0.0
    %4425 = vmatpush2.msra.mxu0 0.0
    %4426 = vmatprep.subr.mxu0 0.0
    %4427 = vmatpush2.msra.mxu0 0.0
    %4428 = vmatprep.subr.mxu0 0.0
    %4429 = vmatpush2.msra.mxu0 0.0
    %4430 = vmatprep.subr.mxu0 0.0
    %4431 = vmatpush2.msra.mxu0 0.0
    %4432 = vmatprep.subr.mxu0 0.0
    %4433 = vmatpush2.msra.mxu0 0.0
    %4434 = vmatprep.subr.mxu0 0.0
    %4435 = vmatpush2.msra.mxu0 0.0
    %4436 = vmatprep.subr.mxu0 0.0
    %4437 = vmatpush2.msra.mxu0 0.0
    %4438 = vmatprep.subr.mxu0 0.0
    %4439 = vmatpush2.msra.mxu0 0.0
    %4440 = vmatprep.mubr.f32.mxu0 0.0
    %4441 = vmatmul.mubr.f32.gmra.mxu0 %v4353
    %v4442 = vpop.f32.mrf.mxu0
    %v4443 = vadd.f32 %v3360, %v4442
    %v4444 = vpop.f32.mrf.mxu0
    %4445 = vmatprep.mubr.f32.mxu0 0.0
    %4446 = vmatmul.mubr.f32.gmra.mxu0 %v4356
    %v4447 = vpop.f32.mrf.mxu0
    %v4448 = vadd.f32 %v3360, %v4447
    %v4449 = vpop.f32.mrf.mxu0
    %4450 = vmatprep.mubr.f32.mxu0 0.0
    %4451 = vmatmul.mubr.f32.gmra.mxu0 %v4359
    %v4452 = vpop.f32.mrf.mxu0
    %v4453 = vadd.f32 %v3360, %v4452
    %v4454 = vpop.f32.mrf.mxu0
    %4455 = vmatprep.mubr.f32.mxu0 0.0
    %4456 = vmatmul.mubr.f32.gmra.mxu0 %v4362
    %v4457 = vpop.f32.mrf.mxu0
    %v4458 = vadd.f32 %v3360, %v4457
    %v4459 = vpop.f32.mrf.mxu0
    %4460 = vmatprep.mubr.f32.mxu0 0.0
    %4461 = vmatmul.mubr.f32.gmra.mxu0 %v4365
    %v4462 = vpop.f32.mrf.mxu0
    %v4463 = vadd.f32 %v3360, %v4462
    %v4464 = vpop.f32.mrf.mxu0
    %4465 = vmatprep.mubr.f32.mxu0 0.0
    %4466 = vmatmul.mubr.f32.gmra.mxu0 %v4368
    %v4467 = vpop.f32.mrf.mxu0
    %v4468 = vadd.f32 %v3360, %v4467
    %v4469 = vpop.f32.mrf.mxu0
    %4470 = vmatprep.mubr.f32.mxu0 0.0
    %4471 = vmatmul.mubr.f32.gmra.mxu0 %v4371
    %v4472 = vpop.f32.mrf.mxu0
    %v4473 = vadd.f32 %v3360, %v4472
    %v4474 = vpop.f32.mrf.mxu0
    %4475 = vmatprep.mubr.f32.mxu0 0.0
    %4476 = vmatmul.mubr.f32.gmra.mxu0 %v4374
    %v4477 = vpop.f32.mrf.mxu0
    %v4478 = vadd.f32 %v3360, %v4477
    %v4479 = vpop.f32.mrf.mxu0
    %4480 = vdwg.mxu0
    %v4481 = vmax.f32 %v4443, 0.0
    %v4482 = vmax.f32 %v4448, 0.0
    %v4483 = vmax.f32 %v4453, 0.0
    %v4484 = vmax.f32 %v4458, 0.0
    %v4485 = vmax.f32 %v4463, 0.0
    %v4486 = vmax.f32 %v4468, 0.0
    %v4487 = vmax.f32 %v4473, 0.0
    %v4488 = vmax.f32 %v4478, 0.0
    %v4490 = vsel %vm141, %v4481, 0
    %v4493 = vsel %vm141, %v4482, 0
    %v4496 = vsel %vm141, %v4483, 0
    %v4499 = vsel %vm141, %v4484, 0
    %v4502 = vsel %vm141, %v4485, 0
    %v4505 = vsel %vm141, %v4486, 0
    %v4508 = vsel %vm141, %v4487, 0
    %v4511 = vsel %vm141, %v4488, 0
    %4513 = vmatprep.subr.mxu0 0.0
    %4514 = vmatpush1.msra.mxu0 0.0
    %4515 = vmatprep.subr.mxu0 0.0
    %4516 = vmatpush1.msra.mxu0 0.0
    %4517 = vmatprep.subr.mxu0 0.0
    %4518 = vmatpush1.msra.mxu0 0.0
    %4519 = vmatprep.subr.mxu0 0.0
    %4520 = vmatpush1.msra.mxu0 0.0
    %4521 = vmatprep.subr.mxu0 0.0
    %4522 = vmatpush1.msra.mxu0 0.0
    %4523 = vmatprep.subr.mxu0 0.0
    %4524 = vmatpush1.msra.mxu0 0.0
    %4525 = vmatprep.subr.mxu0 0.0
    %4526 = vmatpush1.msra.mxu0 0.0
    %4527 = vmatprep.subr.mxu0 0.0
    %4528 = vmatpush1.msra.mxu0 0.0
    %4529 = vmatprep.subr.mxu0 0.0
    %4530 = vmatpush1.msra.mxu0 0.0
    %4531 = vmatprep.subr.mxu0 0.0
    %4532 = vmatpush1.msra.mxu0 0.0
    %4533 = vmatprep.subr.mxu0 0.0
    %4534 = vmatpush1.msra.mxu0 0.0
    %4535 = vmatprep.subr.mxu0 0.0
    %4536 = vmatpush1.msra.mxu0 0.0
    %4537 = vmatprep.subr.mxu0 0.0
    %4538 = vmatpush1.msra.mxu0 0.0
    %4539 = vmatprep.subr.mxu0 0.0
    %4540 = vmatpush1.msra.mxu0 0.0
    %4541 = vmatprep.subr.mxu0 0.0
    %4542 = vmatpush1.msra.mxu0 0.0
    %4543 = vmatprep.subr.mxu0 0.0
    %4544 = vmatpush1.msra.mxu0 %v3504
    %4545 = vmatprep.subr.mxu0 0.0
    %4546 = vmatpush2.msra.mxu0 0.0
    %4547 = vmatprep.subr.mxu0 0.0
    %4548 = vmatpush2.msra.mxu0 0.0
    %4549 = vmatprep.subr.mxu0 0.0
    %4550 = vmatpush2.msra.mxu0 0.0
    %4551 = vmatprep.subr.mxu0 0.0
    %4552 = vmatpush2.msra.mxu0 0.0
    %4553 = vmatprep.subr.mxu0 0.0
    %4554 = vmatpush2.msra.mxu0 0.0
    %4555 = vmatprep.subr.mxu0 0.0
    %4556 = vmatpush2.msra.mxu0 0.0
    %4557 = vmatprep.subr.mxu0 0.0
    %4558 = vmatpush2.msra.mxu0 0.0
    %4559 = vmatprep.subr.mxu0 0.0
    %4560 = vmatpush2.msra.mxu0 0.0
    %4561 = vmatprep.subr.mxu0 0.0
    %4562 = vmatpush2.msra.mxu0 0.0
    %4563 = vmatprep.subr.mxu0 0.0
    %4564 = vmatpush2.msra.mxu0 0.0
    %4565 = vmatprep.subr.mxu0 0.0
    %4566 = vmatpush2.msra.mxu0 0.0
    %4567 = vmatprep.subr.mxu0 0.0
    %4568 = vmatpush2.msra.mxu0 0.0
    %4569 = vmatprep.subr.mxu0 0.0
    %4570 = vmatpush2.msra.mxu0 0.0
    %4571 = vmatprep.subr.mxu0 0.0
    %4572 = vmatpush2.msra.mxu0 0.0
    %4573 = vmatprep.subr.mxu0 0.0
    %4574 = vmatpush2.msra.mxu0 0.0
    %4575 = vmatprep.subr.mxu0 0.0
    %4576 = vmatpush2.msra.mxu0 0.0
    %4577 = vmatprep.mubr.f32.mxu0 0.0
    %4578 = vmatmul.mubr.f32.gmra.mxu0 %v4490
    %v4579 = vpop.f32.mrf.mxu0
    %v4580 = vadd.f32 %v3510, %v4579
    %v4581 = vpop.f32.mrf.mxu0
    %4582 = vmatprep.mubr.f32.mxu0 0.0
    %4583 = vmatmul.mubr.f32.gmra.mxu0 %v4493
    %v4584 = vpop.f32.mrf.mxu0
    %v4585 = vadd.f32 %v3510, %v4584
    %v4586 = vpop.f32.mrf.mxu0
    %4587 = vmatprep.mubr.f32.mxu0 0.0
    %4588 = vmatmul.mubr.f32.gmra.mxu0 %v4496
    %v4589 = vpop.f32.mrf.mxu0
    %v4590 = vadd.f32 %v3510, %v4589
    %v4591 = vpop.f32.mrf.mxu0
    %4592 = vmatprep.mubr.f32.mxu0 0.0
    %4593 = vmatmul.mubr.f32.gmra.mxu0 %v4499
    %v4594 = vpop.f32.mrf.mxu0
    %v4595 = vadd.f32 %v3510, %v4594
    %v4596 = vpop.f32.mrf.mxu0
    %4597 = vmatprep.mubr.f32.mxu0 0.0
    %4598 = vmatmul.mubr.f32.gmra.mxu0 %v4502
    %v4599 = vpop.f32.mrf.mxu0
    %v4600 = vadd.f32 %v3510, %v4599
    %v4601 = vpop.f32.mrf.mxu0
    %4602 = vmatprep.mubr.f32.mxu0 0.0
    %4603 = vmatmul.mubr.f32.gmra.mxu0 %v4505
    %v4604 = vpop.f32.mrf.mxu0
    %v4605 = vadd.f32 %v3510, %v4604
    %v4606 = vpop.f32.mrf.mxu0
    %4607 = vmatprep.mubr.f32.mxu0 0.0
    %4608 = vmatmul.mubr.f32.gmra.mxu0 %v4508
    %v4609 = vpop.f32.mrf.mxu0
    %v4610 = vadd.f32 %v3510, %v4609
    %v4611 = vpop.f32.mrf.mxu0
    %4612 = vmatprep.mubr.f32.mxu0 0.0
    %4613 = vmatmul.mubr.f32.gmra.mxu0 %v4511
    %v4614 = vpop.f32.mrf.mxu0
    %v4615 = vadd.f32 %v3510, %v4614
    %v4616 = vpop.f32.mrf.mxu0
    %4617 = vdwg.mxu0
    %v4618 = vmax.f32 %v4580, 0.0
    %v4619 = vmax.f32 %v4585, 0.0
    %v4620 = vmax.f32 %v4590, 0.0
    %v4621 = vmax.f32 %v4595, 0.0
    %v4622 = vmax.f32 %v4600, 0.0
    %v4623 = vmax.f32 %v4605, 0.0
    %v4624 = vmax.f32 %v4610, 0.0
    %v4625 = vmax.f32 %v4615, 0.0
    %4627 = vrot.lane.b32.xlu0 %v1505, 96
    %v4628 = vpop.permute.xlu0 %4627
    %v4630 = vadd.f32 %v1495, %v4628
    %v4631 = vadd.f32 %v1500, %v4628
    %v4632 = vadd.f32 %v1505, %v4628
    %v4633 = vadd.f32 %v1510, %v4628
    %v4634 = vadd.f32 %v1515, %v4628
    %v4635 = vadd.f32 %v1520, %v4628
    %v4636 = vadd.f32 %v1525, %v4628
    %v4637 = vadd.f32 %v1530, %v4628
    %v4639 = vsel %vm711, %v4618, 0
    %v4642 = vsel %vm711, %v4619, 0
    %v4645 = vsel %vm711, %v4620, 0
    %v4648 = vsel %vm711, %v4621, 0
    %v4651 = vsel %vm711, %v4622, 0
    %v4654 = vsel %vm711, %v4623, 0
    %v4657 = vsel %vm711, %v4624, 0
    %v4660 = vsel %vm711, %v4625, 0
    %4662 = vmatprep.subr.mxu0 0.0
    %4663 = vmatpush1.msra.mxu0 0.0
    %4664 = vmatprep.subr.mxu0 0.0
    %4665 = vmatpush1.msra.mxu0 0.0
    %4666 = vmatprep.subr.mxu0 0.0
    %4667 = vmatpush1.msra.mxu0 0.0
    %4668 = vmatprep.subr.mxu0 0.0
    %4669 = vmatpush1.msra.mxu0 0.0
    %4670 = vmatprep.subr.mxu0 0.0
    %4671 = vmatpush1.msra.mxu0 0.0
    %4672 = vmatprep.subr.mxu0 0.0
    %4673 = vmatpush1.msra.mxu0 0.0
    %4674 = vmatprep.subr.mxu0 0.0
    %4675 = vmatpush1.msra.mxu0 0.0
    %4676 = vmatprep.subr.mxu0 0.0
    %4677 = vmatpush1.msra.mxu0 0.0
    %4678 = vmatprep.subr.mxu0 0.0
    %4679 = vmatpush1.msra.mxu0 0.0
    %4680 = vmatprep.subr.mxu0 0.0
    %4681 = vmatpush1.msra.mxu0 0.0
    %4682 = vmatprep.subr.mxu0 0.0
    %4683 = vmatpush1.msra.mxu0 0.0
    %4684 = vmatprep.subr.mxu0 0.0
    %4685 = vmatpush1.msra.mxu0 0.0
    %4686 = vmatprep.subr.mxu0 0.0
    %4687 = vmatpush1.msra.mxu0 %v3345
    %4688 = vmatprep.subr.mxu0 0.0
    %4689 = vmatpush1.msra.mxu0 %v3344
    %4690 = vmatprep.subr.mxu0 0.0
    %4691 = vmatpush1.msra.mxu0 %v3343
    %4692 = vmatprep.subr.mxu0 0.0
    %4693 = vmatpush1.msra.mxu0 %v3342
    %4694 = vmatprep.subr.mxu0 0.0
    %4695 = vmatpush2.msra.mxu0 0.0
    %4696 = vmatprep.subr.mxu0 0.0
    %4697 = vmatpush2.msra.mxu0 0.0
    %4698 = vmatprep.subr.mxu0 0.0
    %4699 = vmatpush2.msra.mxu0 0.0
    %4700 = vmatprep.subr.mxu0 0.0
    %4701 = vmatpush2.msra.mxu0 0.0
    %4702 = vmatprep.subr.mxu0 0.0
    %4703 = vmatpush2.msra.mxu0 0.0
    %4704 = vmatprep.subr.mxu0 0.0
    %4705 = vmatpush2.msra.mxu0 0.0
    %4706 = vmatprep.subr.mxu0 0.0
    %4707 = vmatpush2.msra.mxu0 0.0
    %4708 = vmatprep.subr.mxu0 0.0
    %4709 = vmatpush2.msra.mxu0 0.0
    %4710 = vmatprep.subr.mxu0 0.0
    %4711 = vmatpush2.msra.mxu0 0.0
    %4712 = vmatprep.subr.mxu0 0.0
    %4713 = vmatpush2.msra.mxu0 0.0
    %4714 = vmatprep.subr.mxu0 0.0
    %4715 = vmatpush2.msra.mxu0 0.0
    %4716 = vmatprep.subr.mxu0 0.0
    %4717 = vmatpush2.msra.mxu0 0.0
    %4718 = vmatprep.subr.mxu0 0.0
    %4719 = vmatpush2.msra.mxu0 0.0
    %4720 = vmatprep.subr.mxu0 0.0
    %4721 = vmatpush2.msra.mxu0 0.0
    %4722 = vmatprep.subr.mxu0 0.0
    %4723 = vmatpush2.msra.mxu0 0.0
    %4724 = vmatprep.subr.mxu0 0.0
    %4725 = vmatpush2.msra.mxu0 0.0
    %4726 = vmatprep.mubr.f32.mxu0 0.0
    %4727 = vmatmul.mubr.f32.gmra.mxu0 %v4639
    %v4728 = vpop.f32.mrf.mxu0
    %v4729 = vadd.f32 0.0, %v4728
    %v4730 = vpop.f32.mrf.mxu0
    %4731 = vmatprep.mubr.f32.mxu0 0.0
    %4732 = vmatmul.mubr.f32.gmra.mxu0 %v4642
    %v4733 = vpop.f32.mrf.mxu0
    %v4734 = vadd.f32 0.0, %v4733
    %v4735 = vpop.f32.mrf.mxu0
    %4736 = vmatprep.mubr.f32.mxu0 0.0
    %4737 = vmatmul.mubr.f32.gmra.mxu0 %v4645
    %v4738 = vpop.f32.mrf.mxu0
    %v4739 = vadd.f32 0.0, %v4738
    %v4740 = vpop.f32.mrf.mxu0
    %4741 = vmatprep.mubr.f32.mxu0 0.0
    %4742 = vmatmul.mubr.f32.gmra.mxu0 %v4648
    %v4743 = vpop.f32.mrf.mxu0
    %v4744 = vadd.f32 0.0, %v4743
    %v4745 = vpop.f32.mrf.mxu0
    %4746 = vmatprep.mubr.f32.mxu0 0.0
    %4747 = vmatmul.mubr.f32.gmra.mxu0 %v4651
    %v4748 = vpop.f32.mrf.mxu0
    %v4749 = vadd.f32 0.0, %v4748
    %v4750 = vpop.f32.mrf.mxu0
    %4751 = vmatprep.mubr.f32.mxu0 0.0
    %4752 = vmatmul.mubr.f32.gmra.mxu0 %v4654
    %v4753 = vpop.f32.mrf.mxu0
    %v4754 = vadd.f32 0.0, %v4753
    %v4755 = vpop.f32.mrf.mxu0
    %4756 = vmatprep.mubr.f32.mxu0 0.0
    %4757 = vmatmul.mubr.f32.gmra.mxu0 %v4657
    %v4758 = vpop.f32.mrf.mxu0
    %v4759 = vadd.f32 0.0, %v4758
    %v4760 = vpop.f32.mrf.mxu0
    %4761 = vmatprep.mubr.f32.mxu0 0.0
    %4762 = vmatmul.mubr.f32.gmra.mxu0 %v4660
    %v4763 = vpop.f32.mrf.mxu0
    %v4764 = vadd.f32 0.0, %v4763
    %v4765 = vpop.f32.mrf.mxu0
    %4766 = vdwg.mxu0
    %4775 = vrot.lane.b32.xlu0 %v4729, 32
    %v4776 = vpop.permute.xlu0 %4775
    %4777 = vrot.lane.b32.xlu0 %v4734, 32
    %v4778 = vpop.permute.xlu0 %4777
    %4779 = vrot.lane.b32.xlu0 %v4739, 32
    %v4780 = vpop.permute.xlu0 %4779
    %4781 = vrot.lane.b32.xlu0 %v4744, 32
    %v4782 = vpop.permute.xlu0 %4781
    %4783 = vrot.lane.b32.xlu0 %v4749, 32
    %v4784 = vpop.permute.xlu0 %4783
    %4785 = vrot.lane.b32.xlu0 %v4754, 32
    %v4786 = vpop.permute.xlu0 %4785
    %4787 = vrot.lane.b32.xlu0 %v4759, 32
    %v4788 = vpop.permute.xlu0 %4787
    %4789 = vrot.lane.b32.xlu0 %v4764, 32
    %v4790 = vpop.permute.xlu0 %4789
    %v4799 = vadd.f32 %v4630, %v4776
    %v4800 = vadd.f32 %v4631, %v4778
    %v4801 = vadd.f32 %v4632, %v4780
    %v4802 = vadd.f32 %v4633, %v4782
    %v4803 = vadd.f32 %v4634, %v4784
    %v4804 = vadd.f32 %v4635, %v4786
    %v4805 = vadd.f32 %v4636, %v4788
    %v4806 = vadd.f32 %v4637, %v4790
    %v4807 = vmax.f32 %v4799, 0.0
    %v4808 = vmax.f32 %v4800, 0.0
    %v4809 = vmax.f32 %v4801, 0.0
    %v4810 = vmax.f32 %v4802, 0.0
    %v4811 = vmax.f32 %v4803, 0.0
    %v4812 = vmax.f32 %v4804, 0.0
    %v4813 = vmax.f32 %v4805, 0.0
    %v4814 = vmax.f32 %v4806, 0.0
    %4815 = vset.pattern.permute.xlu0 2
    %4816 = vperm.xlu0 %4815, %v1534
    %v4817 = vpop.permute.xlu0 %4816
    %v4819 = vmul.f32 %v4807, %v4817
    %v4820 = vmul.f32 %v4808, %v4817
    %v4821 = vmul.f32 %v4809, %v4817
    %v4822 = vmul.f32 %v4810, %v4817
    %v4823 = vmul.f32 %v4811, %v4817
    %v4824 = vmul.f32 %v4812, %v4817
    %v4825 = vmul.f32 %v4813, %v4817
    %v4826 = vmul.f32 %v4814, %v4817
    %v4827 = vmax.f32 %v4335, %v4819
    %v4828 = vmax.f32 %v4336, %v4820
    %v4829 = vmax.f32 %v4337, %v4821
    %v4830 = vmax.f32 %v4338, %v4822
    %v4831 = vmax.f32 %v4339, %v4823
    %v4832 = vmax.f32 %v4340, %v4824
    %v4833 = vmax.f32 %v4341, %v4825
    %v4834 = vmax.f32 %v4342, %v4826
    %s4835 = scalar_lea.vmem %s5, 192
    %v4836 = vld [vmem:[%s4835] sm:$0xff]
    %v4837 = vld [vmem:[%s4835 + $0x8] sm:$0xff]
    %v4838 = vld [vmem:[%s4835 + $0x10] sm:$0xff]
    %v4839 = vld [vmem:[%s4835 + $0x18] sm:$0xff]
    %v4840 = vld [vmem:[%s4835 + $0x20] sm:$0xff]
    %v4841 = vld [vmem:[%s4835 + $0x28] sm:$0xff]
    %v4842 = vld [vmem:[%s4835 + $0x30] sm:$0xff]
    %v4843 = vld [vmem:[%s4835 + $0x38] sm:$0xff]
    %v4845 = vsel %vm3362, %v4836, 0
    %v4848 = vsel %vm3362, %v4837, 0
    %v4851 = vsel %vm3362, %v4838, 0
    %v4854 = vsel %vm3362, %v4839, 0
    %v4857 = vsel %vm3362, %v4840, 0
    %v4860 = vsel %vm3362, %v4841, 0
    %v4863 = vsel %vm3362, %v4842, 0
    %v4866 = vsel %vm3362, %v4843, 0
    %4868 = vmatprep.subr.mxu0 0.0
    %4869 = vmatpush1.msra.mxu0 0.0
    %4870 = vmatprep.subr.mxu0 0.0
    %4871 = vmatpush1.msra.mxu0 0.0
    %4872 = vmatprep.subr.mxu0 0.0
    %4873 = vmatpush1.msra.mxu0 0.0
    %4874 = vmatprep.subr.mxu0 0.0
    %4875 = vmatpush1.msra.mxu0 0.0
    %4876 = vmatprep.subr.mxu0 0.0
    %4877 = vmatpush1.msra.mxu0 0.0
    %4878 = vmatprep.subr.mxu0 0.0
    %4879 = vmatpush1.msra.mxu0 0.0
    %4880 = vmatprep.subr.mxu0 0.0
    %4881 = vmatpush1.msra.mxu0 0.0
    %4882 = vmatprep.subr.mxu0 0.0
    %4883 = vmatpush1.msra.mxu0 0.0
    %4884 = vmatprep.subr.mxu0 0.0
    %4885 = vmatpush1.msra.mxu0 0.0
    %4886 = vmatprep.subr.mxu0 0.0
    %4887 = vmatpush1.msra.mxu0 0.0
    %4888 = vmatprep.subr.mxu0 0.0
    %4889 = vmatpush1.msra.mxu0 0.0
    %4890 = vmatprep.subr.mxu0 0.0
    %4891 = vmatpush1.msra.mxu0 0.0
    %4892 = vmatprep.subr.mxu0 0.0
    %4893 = vmatpush1.msra.mxu0 0.0
    %4894 = vmatprep.subr.mxu0 0.0
    %4895 = vmatpush1.msra.mxu0 0.0
    %4896 = vmatprep.subr.mxu0 0.0
    %4897 = vmatpush1.msra.mxu0 0.0
    %4898 = vmatprep.subr.mxu0 0.0
    %4899 = vmatpush1.msra.mxu0 %v3389
    %4900 = vmatprep.subr.mxu0 0.0
    %4901 = vmatpush2.msra.mxu0 0.0
    %4902 = vmatprep.subr.mxu0 0.0
    %4903 = vmatpush2.msra.mxu0 0.0
    %4904 = vmatprep.subr.mxu0 0.0
    %4905 = vmatpush2.msra.mxu0 0.0
    %4906 = vmatprep.subr.mxu0 0.0
    %4907 = vmatpush2.msra.mxu0 0.0
    %4908 = vmatprep.subr.mxu0 0.0
    %4909 = vmatpush2.msra.mxu0 0.0
    %4910 = vmatprep.subr.mxu0 0.0
    %4911 = vmatpush2.msra.mxu0 0.0
    %4912 = vmatprep.subr.mxu0 0.0
    %4913 = vmatpush2.msra.mxu0 0.0
    %4914 = vmatprep.subr.mxu0 0.0
    %4915 = vmatpush2.msra.mxu0 0.0
    %4916 = vmatprep.subr.mxu0 0.0
    %4917 = vmatpush2.msra.mxu0 0.0
    %4918 = vmatprep.subr.mxu0 0.0
    %4919 = vmatpush2.msra.mxu0 0.0
    %4920 = vmatprep.subr.mxu0 0.0
    %4921 = vmatpush2.msra.mxu0 0.0
    %4922 = vmatprep.subr.mxu0 0.0
    %4923 = vmatpush2.msra.mxu0 0.0
    %4924 = vmatprep.subr.mxu0 0.0
    %4925 = vmatpush2.msra.mxu0 0.0
    %4926 = vmatprep.subr.mxu0 0.0
    %4927 = vmatpush2.msra.mxu0 0.0
    %4928 = vmatprep.subr.mxu0 0.0
    %4929 = vmatpush2.msra.mxu0 0.0
    %4930 = vmatprep.subr.mxu0 0.0
    %4931 = vmatpush2.msra.mxu0 0.0
    %4932 = vmatprep.mubr.f32.mxu0 0.0
    %4933 = vmatmul.mubr.f32.gmra.mxu0 %v4845
    %v4934 = vpop.f32.mrf.mxu0
    %v4935 = vadd.f32 %v3360, %v4934
    %v4936 = vpop.f32.mrf.mxu0
    %4937 = vmatprep.mubr.f32.mxu0 0.0
    %4938 = vmatmul.mubr.f32.gmra.mxu0 %v4848
    %v4939 = vpop.f32.mrf.mxu0
    %v4940 = vadd.f32 %v3360, %v4939
    %v4941 = vpop.f32.mrf.mxu0
    %4942 = vmatprep.mubr.f32.mxu0 0.0
    %4943 = vmatmul.mubr.f32.gmra.mxu0 %v4851
    %v4944 = vpop.f32.mrf.mxu0
    %v4945 = vadd.f32 %v3360, %v4944
    %v4946 = vpop.f32.mrf.mxu0
    %4947 = vmatprep.mubr.f32.mxu0 0.0
    %4948 = vmatmul.mubr.f32.gmra.mxu0 %v4854
    %v4949 = vpop.f32.mrf.mxu0
    %v4950 = vadd.f32 %v3360, %v4949
    %v4951 = vpop.f32.mrf.mxu0
    %4952 = vmatprep.mubr.f32.mxu0 0.0
    %4953 = vmatmul.mubr.f32.gmra.mxu0 %v4857
    %v4954 = vpop.f32.mrf.mxu0
    %v4955 = vadd.f32 %v3360, %v4954
    %v4956 = vpop.f32.mrf.mxu0
    %4957 = vmatprep.mubr.f32.mxu0 0.0
    %4958 = vmatmul.mubr.f32.gmra.mxu0 %v4860
    %v4959 = vpop.f32.mrf.mxu0
    %v4960 = vadd.f32 %v3360, %v4959
    %v4961 = vpop.f32.mrf.mxu0
    %4962 = vmatprep.mubr.f32.mxu0 0.0
    %4963 = vmatmul.mubr.f32.gmra.mxu0 %v4863
    %v4964 = vpop.f32.mrf.mxu0
    %v4965 = vadd.f32 %v3360, %v4964
    %v4966 = vpop.f32.mrf.mxu0
    %4967 = vmatprep.mubr.f32.mxu0 0.0
    %4968 = vmatmul.mubr.f32.gmra.mxu0 %v4866
    %v4969 = vpop.f32.mrf.mxu0
    %v4970 = vadd.f32 %v3360, %v4969
    %v4971 = vpop.f32.mrf.mxu0
    %4972 = vdwg.mxu0
    %v4973 = vmax.f32 %v4935, 0.0
    %v4974 = vmax.f32 %v4940, 0.0
    %v4975 = vmax.f32 %v4945, 0.0
    %v4976 = vmax.f32 %v4950, 0.0
    %v4977 = vmax.f32 %v4955, 0.0
    %v4978 = vmax.f32 %v4960, 0.0
    %v4979 = vmax.f32 %v4965, 0.0
    %v4980 = vmax.f32 %v4970, 0.0
    %v4982 = vsel %vm141, %v4973, 0
    %v4985 = vsel %vm141, %v4974, 0
    %v4988 = vsel %vm141, %v4975, 0
    %v4991 = vsel %vm141, %v4976, 0
    %v4994 = vsel %vm141, %v4977, 0
    %v4997 = vsel %vm141, %v4978, 0
    %v5000 = vsel %vm141, %v4979, 0
    %v5003 = vsel %vm141, %v4980, 0
    %5005 = vmatprep.subr.mxu0 0.0
    %5006 = vmatpush1.msra.mxu0 0.0
    %5007 = vmatprep.subr.mxu0 0.0
    %5008 = vmatpush1.msra.mxu0 0.0
    %5009 = vmatprep.subr.mxu0 0.0
    %5010 = vmatpush1.msra.mxu0 0.0
    %5011 = vmatprep.subr.mxu0 0.0
    %5012 = vmatpush1.msra.mxu0 0.0
    %5013 = vmatprep.subr.mxu0 0.0
    %5014 = vmatpush1.msra.mxu0 0.0
    %5015 = vmatprep.subr.mxu0 0.0
    %5016 = vmatpush1.msra.mxu0 0.0
    %5017 = vmatprep.subr.mxu0 0.0
    %5018 = vmatpush1.msra.mxu0 0.0
    %5019 = vmatprep.subr.mxu0 0.0
    %5020 = vmatpush1.msra.mxu0 0.0
    %5021 = vmatprep.subr.mxu0 0.0
    %5022 = vmatpush1.msra.mxu0 0.0
    %5023 = vmatprep.subr.mxu0 0.0
    %5024 = vmatpush1.msra.mxu0 0.0
    %5025 = vmatprep.subr.mxu0 0.0
    %5026 = vmatpush1.msra.mxu0 0.0
    %5027 = vmatprep.subr.mxu0 0.0
    %5028 = vmatpush1.msra.mxu0 0.0
    %5029 = vmatprep.subr.mxu0 0.0
    %5030 = vmatpush1.msra.mxu0 0.0
    %5031 = vmatprep.subr.mxu0 0.0
    %5032 = vmatpush1.msra.mxu0 0.0
    %5033 = vmatprep.subr.mxu0 0.0
    %5034 = vmatpush1.msra.mxu0 0.0
    %5035 = vmatprep.subr.mxu0 0.0
    %5036 = vmatpush1.msra.mxu0 %v3504
    %5037 = vmatprep.subr.mxu0 0.0
    %5038 = vmatpush2.msra.mxu0 0.0
    %5039 = vmatprep.subr.mxu0 0.0
    %5040 = vmatpush2.msra.mxu0 0.0
    %5041 = vmatprep.subr.mxu0 0.0
    %5042 = vmatpush2.msra.mxu0 0.0
    %5043 = vmatprep.subr.mxu0 0.0
    %5044 = vmatpush2.msra.mxu0 0.0
    %5045 = vmatprep.subr.mxu0 0.0
    %5046 = vmatpush2.msra.mxu0 0.0
    %5047 = vmatprep.subr.mxu0 0.0
    %5048 = vmatpush2.msra.mxu0 0.0
    %5049 = vmatprep.subr.mxu0 0.0
    %5050 = vmatpush2.msra.mxu0 0.0
    %5051 = vmatprep.subr.mxu0 0.0
    %5052 = vmatpush2.msra.mxu0 0.0
    %5053 = vmatprep.subr.mxu0 0.0
    %5054 = vmatpush2.msra.mxu0 0.0
    %5055 = vmatprep.subr.mxu0 0.0
    %5056 = vmatpush2.msra.mxu0 0.0
    %5057 = vmatprep.subr.mxu0 0.0
    %5058 = vmatpush2.msra.mxu0 0.0
    %5059 = vmatprep.subr.mxu0 0.0
    %5060 = vmatpush2.msra.mxu0 0.0
    %5061 = vmatprep.subr.mxu0 0.0
    %5062 = vmatpush2.msra.mxu0 0.0
    %5063 = vmatprep.subr.mxu0 0.0
    %5064 = vmatpush2.msra.mxu0 0.0
    %5065 = vmatprep.subr.mxu0 0.0
    %5066 = vmatpush2.msra.mxu0 0.0
    %5067 = vmatprep.subr.mxu0 0.0
    %5068 = vmatpush2.msra.mxu0 0.0
    %5069 = vmatprep.mubr.f32.mxu0 0.0
    %5070 = vmatmul.mubr.f32.gmra.mxu0 %v4982
    %v5071 = vpop.f32.mrf.mxu0
    %v5072 = vadd.f32 %v3510, %v5071
    %v5073 = vpop.f32.mrf.mxu0
    %5074 = vmatprep.mubr.f32.mxu0 0.0
    %5075 = vmatmul.mubr.f32.gmra.mxu0 %v4985
    %v5076 = vpop.f32.mrf.mxu0
    %v5077 = vadd.f32 %v3510, %v5076
    %v5078 = vpop.f32.mrf.mxu0
    %5079 = vmatprep.mubr.f32.mxu0 0.0
    %5080 = vmatmul.mubr.f32.gmra.mxu0 %v4988
    %v5081 = vpop.f32.mrf.mxu0
    %v5082 = vadd.f32 %v3510, %v5081
    %v5083 = vpop.f32.mrf.mxu0
    %5084 = vmatprep.mubr.f32.mxu0 0.0
    %5085 = vmatmul.mubr.f32.gmra.mxu0 %v4991
    %v5086 = vpop.f32.mrf.mxu0
    %v5087 = vadd.f32 %v3510, %v5086
    %v5088 = vpop.f32.mrf.mxu0
    %5089 = vmatprep.mubr.f32.mxu0 0.0
    %5090 = vmatmul.mubr.f32.gmra.mxu0 %v4994
    %v5091 = vpop.f32.mrf.mxu0
    %v5092 = vadd.f32 %v3510, %v5091
    %v5093 = vpop.f32.mrf.mxu0
    %5094 = vmatprep.mubr.f32.mxu0 0.0
    %5095 = vmatmul.mubr.f32.gmra.mxu0 %v4997
    %v5096 = vpop.f32.mrf.mxu0
    %v5097 = vadd.f32 %v3510, %v5096
    %v5098 = vpop.f32.mrf.mxu0
    %5099 = vmatprep.mubr.f32.mxu0 0.0
    %5100 = vmatmul.mubr.f32.gmra.mxu0 %v5000
    %v5101 = vpop.f32.mrf.mxu0
    %v5102 = vadd.f32 %v3510, %v5101
    %v5103 = vpop.f32.mrf.mxu0
    %5104 = vmatprep.mubr.f32.mxu0 0.0
    %5105 = vmatmul.mubr.f32.gmra.mxu0 %v5003
    %v5106 = vpop.f32.mrf.mxu0
    %v5107 = vadd.f32 %v3510, %v5106
    %v5108 = vpop.f32.mrf.mxu0
    %5109 = vdwg.mxu0
    %v5110 = vmax.f32 %v5072, 0.0
    %v5111 = vmax.f32 %v5077, 0.0
    %v5112 = vmax.f32 %v5082, 0.0
    %v5113 = vmax.f32 %v5087, 0.0
    %v5114 = vmax.f32 %v5092, 0.0
    %v5115 = vmax.f32 %v5097, 0.0
    %v5116 = vmax.f32 %v5102, 0.0
    %v5117 = vmax.f32 %v5107, 0.0
    %5119 = vrot.lane.b32.xlu0 %v1510, 96
    %v5120 = vpop.permute.xlu0 %5119
    %v5122 = vadd.f32 %v1495, %v5120
    %v5123 = vadd.f32 %v1500, %v5120
    %v5124 = vadd.f32 %v1505, %v5120
    %v5125 = vadd.f32 %v1510, %v5120
    %v5126 = vadd.f32 %v1515, %v5120
    %v5127 = vadd.f32 %v1520, %v5120
    %v5128 = vadd.f32 %v1525, %v5120
    %v5129 = vadd.f32 %v1530, %v5120
    %v5131 = vsel %vm711, %v5110, 0
    %v5134 = vsel %vm711, %v5111, 0
    %v5137 = vsel %vm711, %v5112, 0
    %v5140 = vsel %vm711, %v5113, 0
    %v5143 = vsel %vm711, %v5114, 0
    %v5146 = vsel %vm711, %v5115, 0
    %v5149 = vsel %vm711, %v5116, 0
    %v5152 = vsel %vm711, %v5117, 0
    %5154 = vmatprep.subr.mxu0 0.0
    %5155 = vmatpush1.msra.mxu0 0.0
    %5156 = vmatprep.subr.mxu0 0.0
    %5157 = vmatpush1.msra.mxu0 0.0
    %5158 = vmatprep.subr.mxu0 0.0
    %5159 = vmatpush1.msra.mxu0 0.0
    %5160 = vmatprep.subr.mxu0 0.0
    %5161 = vmatpush1.msra.mxu0 0.0
    %5162 = vmatprep.subr.mxu0 0.0
    %5163 = vmatpush1.msra.mxu0 0.0
    %5164 = vmatprep.subr.mxu0 0.0
    %5165 = vmatpush1.msra.mxu0 0.0
    %5166 = vmatprep.subr.mxu0 0.0
    %5167 = vmatpush1.msra.mxu0 0.0
    %5168 = vmatprep.subr.mxu0 0.0
    %5169 = vmatpush1.msra.mxu0 0.0
    %5170 = vmatprep.subr.mxu0 0.0
    %5171 = vmatpush1.msra.mxu0 0.0
    %5172 = vmatprep.subr.mxu0 0.0
    %5173 = vmatpush1.msra.mxu0 0.0
    %5174 = vmatprep.subr.mxu0 0.0
    %5175 = vmatpush1.msra.mxu0 0.0
    %5176 = vmatprep.subr.mxu0 0.0
    %5177 = vmatpush1.msra.mxu0 0.0
    %5178 = vmatprep.subr.mxu0 0.0
    %5179 = vmatpush1.msra.mxu0 %v3345
    %5180 = vmatprep.subr.mxu0 0.0
    %5181 = vmatpush1.msra.mxu0 %v3344
    %5182 = vmatprep.subr.mxu0 0.0
    %5183 = vmatpush1.msra.mxu0 %v3343
    %5184 = vmatprep.subr.mxu0 0.0
    %5185 = vmatpush1.msra.mxu0 %v3342
    %5186 = vmatprep.subr.mxu0 0.0
    %5187 = vmatpush2.msra.mxu0 0.0
    %5188 = vmatprep.subr.mxu0 0.0
    %5189 = vmatpush2.msra.mxu0 0.0
    %5190 = vmatprep.subr.mxu0 0.0
    %5191 = vmatpush2.msra.mxu0 0.0
    %5192 = vmatprep.subr.mxu0 0.0
    %5193 = vmatpush2.msra.mxu0 0.0
    %5194 = vmatprep.subr.mxu0 0.0
    %5195 = vmatpush2.msra.mxu0 0.0
    %5196 = vmatprep.subr.mxu0 0.0
    %5197 = vmatpush2.msra.mxu0 0.0
    %5198 = vmatprep.subr.mxu0 0.0
    %5199 = vmatpush2.msra.mxu0 0.0
    %5200 = vmatprep.subr.mxu0 0.0
    %5201 = vmatpush2.msra.mxu0 0.0
    %5202 = vmatprep.subr.mxu0 0.0
    %5203 = vmatpush2.msra.mxu0 0.0
    %5204 = vmatprep.subr.mxu0 0.0
    %5205 = vmatpush2.msra.mxu0 0.0
    %5206 = vmatprep.subr.mxu0 0.0
    %5207 = vmatpush2.msra.mxu0 0.0
    %5208 = vmatprep.subr.mxu0 0.0
    %5209 = vmatpush2.msra.mxu0 0.0
    %5210 = vmatprep.subr.mxu0 0.0
    %5211 = vmatpush2.msra.mxu0 0.0
    %5212 = vmatprep.subr.mxu0 0.0
    %5213 = vmatpush2.msra.mxu0 0.0
    %5214 = vmatprep.subr.mxu0 0.0
    %5215 = vmatpush2.msra.mxu0 0.0
    %5216 = vmatprep.subr.mxu0 0.0
    %5217 = vmatpush2.msra.mxu0 0.0
    %5218 = vmatprep.mubr.f32.mxu0 0.0
    %5219 = vmatmul.mubr.f32.gmra.mxu0 %v5131
    %v5220 = vpop.f32.mrf.mxu0
    %v5221 = vadd.f32 0.0, %v5220
    %v5222 = vpop.f32.mrf.mxu0
    %5223 = vmatprep.mubr.f32.mxu0 0.0
    %5224 = vmatmul.mubr.f32.gmra.mxu0 %v5134
    %v5225 = vpop.f32.mrf.mxu0
    %v5226 = vadd.f32 0.0, %v5225
    %v5227 = vpop.f32.mrf.mxu0
    %5228 = vmatprep.mubr.f32.mxu0 0.0
    %5229 = vmatmul.mubr.f32.gmra.mxu0 %v5137
    %v5230 = vpop.f32.mrf.mxu0
    %v5231 = vadd.f32 0.0, %v5230
    %v5232 = vpop.f32.mrf.mxu0
    %5233 = vmatprep.mubr.f32.mxu0 0.0
    %5234 = vmatmul.mubr.f32.gmra.mxu0 %v5140
    %v5235 = vpop.f32.mrf.mxu0
    %v5236 = vadd.f32 0.0, %v5235
    %v5237 = vpop.f32.mrf.mxu0
    %5238 = vmatprep.mubr.f32.mxu0 0.0
    %5239 = vmatmul.mubr.f32.gmra.mxu0 %v5143
    %v5240 = vpop.f32.mrf.mxu0
    %v5241 = vadd.f32 0.0, %v5240
    %v5242 = vpop.f32.mrf.mxu0
    %5243 = vmatprep.mubr.f32.mxu0 0.0
    %5244 = vmatmul.mubr.f32.gmra.mxu0 %v5146
    %v5245 = vpop.f32.mrf.mxu0
    %v5246 = vadd.f32 0.0, %v5245
    %v5247 = vpop.f32.mrf.mxu0
    %5248 = vmatprep.mubr.f32.mxu0 0.0
    %5249 = vmatmul.mubr.f32.gmra.mxu0 %v5149
    %v5250 = vpop.f32.mrf.mxu0
    %v5251 = vadd.f32 0.0, %v5250
    %v5252 = vpop.f32.mrf.mxu0
    %5253 = vmatprep.mubr.f32.mxu0 0.0
    %5254 = vmatmul.mubr.f32.gmra.mxu0 %v5152
    %v5255 = vpop.f32.mrf.mxu0
    %v5256 = vadd.f32 0.0, %v5255
    %v5257 = vpop.f32.mrf.mxu0
    %5258 = vdwg.mxu0
    %5267 = vrot.lane.b32.xlu0 %v5221, 32
    %v5268 = vpop.permute.xlu0 %5267
    %5269 = vrot.lane.b32.xlu0 %v5226, 32
    %v5270 = vpop.permute.xlu0 %5269
    %5271 = vrot.lane.b32.xlu0 %v5231, 32
    %v5272 = vpop.permute.xlu0 %5271
    %5273 = vrot.lane.b32.xlu0 %v5236, 32
    %v5274 = vpop.permute.xlu0 %5273
    %5275 = vrot.lane.b32.xlu0 %v5241, 32
    %v5276 = vpop.permute.xlu0 %5275
    %5277 = vrot.lane.b32.xlu0 %v5246, 32
    %v5278 = vpop.permute.xlu0 %5277
    %5279 = vrot.lane.b32.xlu0 %v5251, 32
    %v5280 = vpop.permute.xlu0 %5279
    %5281 = vrot.lane.b32.xlu0 %v5256, 32
    %v5282 = vpop.permute.xlu0 %5281
    %v5291 = vadd.f32 %v5122, %v5268
    %v5292 = vadd.f32 %v5123, %v5270
    %v5293 = vadd.f32 %v5124, %v5272
    %v5294 = vadd.f32 %v5125, %v5274
    %v5295 = vadd.f32 %v5126, %v5276
    %v5296 = vadd.f32 %v5127, %v5278
    %v5297 = vadd.f32 %v5128, %v5280
    %v5298 = vadd.f32 %v5129, %v5282
    %v5299 = vmax.f32 %v5291, 0.0
    %v5300 = vmax.f32 %v5292, 0.0
    %v5301 = vmax.f32 %v5293, 0.0
    %v5302 = vmax.f32 %v5294, 0.0
    %v5303 = vmax.f32 %v5295, 0.0
    %v5304 = vmax.f32 %v5296, 0.0
    %v5305 = vmax.f32 %v5297, 0.0
    %v5306 = vmax.f32 %v5298, 0.0
    %5307 = vset.pattern.permute.xlu0 3
    %5308 = vperm.xlu0 %5307, %v1534
    %v5309 = vpop.permute.xlu0 %5308
    %v5311 = vmul.f32 %v5299, %v5309
    %v5312 = vmul.f32 %v5300, %v5309
    %v5313 = vmul.f32 %v5301, %v5309
    %v5314 = vmul.f32 %v5302, %v5309
    %v5315 = vmul.f32 %v5303, %v5309
    %v5316 = vmul.f32 %v5304, %v5309
    %v5317 = vmul.f32 %v5305, %v5309
    %v5318 = vmul.f32 %v5306, %v5309
    %v5319 = vmax.f32 %v4827, %v5311
    %v5320 = vmax.f32 %v4828, %v5312
    %v5321 = vmax.f32 %v4829, %v5313
    %v5322 = vmax.f32 %v4830, %v5314
    %v5323 = vmax.f32 %v4831, %v5315
    %v5324 = vmax.f32 %v4832, %v5316
    %v5325 = vmax.f32 %v4833, %v5317
    %v5326 = vmax.f32 %v4834, %v5318
    %s5327 = scalar_lea.vmem %s5, 256
    %v5328 = vld [vmem:[%s5327] sm:$0xff]
    %v5329 = vld [vmem:[%s5327 + $0x8] sm:$0xff]
    %v5330 = vld [vmem:[%s5327 + $0x10] sm:$0xff]
    %v5331 = vld [vmem:[%s5327 + $0x18] sm:$0xff]
    %v5332 = vld [vmem:[%s5327 + $0x20] sm:$0xff]
    %v5333 = vld [vmem:[%s5327 + $0x28] sm:$0xff]
    %v5334 = vld [vmem:[%s5327 + $0x30] sm:$0xff]
    %v5335 = vld [vmem:[%s5327 + $0x38] sm:$0xff]
    %v5337 = vsel %vm3362, %v5328, 0
    %v5340 = vsel %vm3362, %v5329, 0
    %v5343 = vsel %vm3362, %v5330, 0
    %v5346 = vsel %vm3362, %v5331, 0
    %v5349 = vsel %vm3362, %v5332, 0
    %v5352 = vsel %vm3362, %v5333, 0
    %v5355 = vsel %vm3362, %v5334, 0
    %v5358 = vsel %vm3362, %v5335, 0
    %5360 = vmatprep.subr.mxu0 0.0
    %5361 = vmatpush1.msra.mxu0 0.0
    %5362 = vmatprep.subr.mxu0 0.0
    %5363 = vmatpush1.msra.mxu0 0.0
    %5364 = vmatprep.subr.mxu0 0.0
    %5365 = vmatpush1.msra.mxu0 0.0
    %5366 = vmatprep.subr.mxu0 0.0
    %5367 = vmatpush1.msra.mxu0 0.0
    %5368 = vmatprep.subr.mxu0 0.0
    %5369 = vmatpush1.msra.mxu0 0.0
    %5370 = vmatprep.subr.mxu0 0.0
    %5371 = vmatpush1.msra.mxu0 0.0
    %5372 = vmatprep.subr.mxu0 0.0
    %5373 = vmatpush1.msra.mxu0 0.0
    %5374 = vmatprep.subr.mxu0 0.0
    %5375 = vmatpush1.msra.mxu0 0.0
    %5376 = vmatprep.subr.mxu0 0.0
    %5377 = vmatpush1.msra.mxu0 0.0
    %5378 = vmatprep.subr.mxu0 0.0
    %5379 = vmatpush1.msra.mxu0 0.0
    %5380 = vmatprep.subr.mxu0 0.0
    %5381 = vmatpush1.msra.mxu0 0.0
    %5382 = vmatprep.subr.mxu0 0.0
    %5383 = vmatpush1.msra.mxu0 0.0
    %5384 = vmatprep.subr.mxu0 0.0
    %5385 = vmatpush1.msra.mxu0 0.0
    %5386 = vmatprep.subr.mxu0 0.0
    %5387 = vmatpush1.msra.mxu0 0.0
    %5388 = vmatprep.subr.mxu0 0.0
    %5389 = vmatpush1.msra.mxu0 0.0
    %5390 = vmatprep.subr.mxu0 0.0
    %5391 = vmatpush1.msra.mxu0 %v3389
    %5392 = vmatprep.subr.mxu0 0.0
    %5393 = vmatpush2.msra.mxu0 0.0
    %5394 = vmatprep.subr.mxu0 0.0
    %5395 = vmatpush2.msra.mxu0 0.0
    %5396 = vmatprep.subr.mxu0 0.0
    %5397 = vmatpush2.msra.mxu0 0.0
    %5398 = vmatprep.subr.mxu0 0.0
    %5399 = vmatpush2.msra.mxu0 0.0
    %5400 = vmatprep.subr.mxu0 0.0
    %5401 = vmatpush2.msra.mxu0 0.0
    %5402 = vmatprep.subr.mxu0 0.0
    %5403 = vmatpush2.msra.mxu0 0.0
    %5404 = vmatprep.subr.mxu0 0.0
    %5405 = vmatpush2.msra.mxu0 0.0
    %5406 = vmatprep.subr.mxu0 0.0
    %5407 = vmatpush2.msra.mxu0 0.0
    %5408 = vmatprep.subr.mxu0 0.0
    %5409 = vmatpush2.msra.mxu0 0.0
    %5410 = vmatprep.subr.mxu0 0.0
    %5411 = vmatpush2.msra.mxu0 0.0
    %5412 = vmatprep.subr.mxu0 0.0
    %5413 = vmatpush2.msra.mxu0 0.0
    %5414 = vmatprep.subr.mxu0 0.0
    %5415 = vmatpush2.msra.mxu0 0.0
    %5416 = vmatprep.subr.mxu0 0.0
    %5417 = vmatpush2.msra.mxu0 0.0
    %5418 = vmatprep.subr.mxu0 0.0
    %5419 = vmatpush2.msra.mxu0 0.0
    %5420 = vmatprep.subr.mxu0 0.0
    %5421 = vmatpush2.msra.mxu0 0.0
    %5422 = vmatprep.subr.mxu0 0.0
    %5423 = vmatpush2.msra.mxu0 0.0
    %5424 = vmatprep.mubr.f32.mxu0 0.0
    %5425 = vmatmul.mubr.f32.gmra.mxu0 %v5337
    %v5426 = vpop.f32.mrf.mxu0
    %v5427 = vadd.f32 %v3360, %v5426
    %v5428 = vpop.f32.mrf.mxu0
    %5429 = vmatprep.mubr.f32.mxu0 0.0
    %5430 = vmatmul.mubr.f32.gmra.mxu0 %v5340
    %v5431 = vpop.f32.mrf.mxu0
    %v5432 = vadd.f32 %v3360, %v5431
    %v5433 = vpop.f32.mrf.mxu0
    %5434 = vmatprep.mubr.f32.mxu0 0.0
    %5435 = vmatmul.mubr.f32.gmra.mxu0 %v5343
    %v5436 = vpop.f32.mrf.mxu0
    %v5437 = vadd.f32 %v3360, %v5436
    %v5438 = vpop.f32.mrf.mxu0
    %5439 = vmatprep.mubr.f32.mxu0 0.0
    %5440 = vmatmul.mubr.f32.gmra.mxu0 %v5346
    %v5441 = vpop.f32.mrf.mxu0
    %v5442 = vadd.f32 %v3360, %v5441
    %v5443 = vpop.f32.mrf.mxu0
    %5444 = vmatprep.mubr.f32.mxu0 0.0
    %5445 = vmatmul.mubr.f32.gmra.mxu0 %v5349
    %v5446 = vpop.f32.mrf.mxu0
    %v5447 = vadd.f32 %v3360, %v5446
    %v5448 = vpop.f32.mrf.mxu0
    %5449 = vmatprep.mubr.f32.mxu0 0.0
    %5450 = vmatmul.mubr.f32.gmra.mxu0 %v5352
    %v5451 = vpop.f32.mrf.mxu0
    %v5452 = vadd.f32 %v3360, %v5451
    %v5453 = vpop.f32.mrf.mxu0
    %5454 = vmatprep.mubr.f32.mxu0 0.0
    %5455 = vmatmul.mubr.f32.gmra.mxu0 %v5355
    %v5456 = vpop.f32.mrf.mxu0
    %v5457 = vadd.f32 %v3360, %v5456
    %v5458 = vpop.f32.mrf.mxu0
    %5459 = vmatprep.mubr.f32.mxu0 0.0
    %5460 = vmatmul.mubr.f32.gmra.mxu0 %v5358
    %v5461 = vpop.f32.mrf.mxu0
    %v5462 = vadd.f32 %v3360, %v5461
    %v5463 = vpop.f32.mrf.mxu0
    %5464 = vdwg.mxu0
    %v5465 = vmax.f32 %v5427, 0.0
    %v5466 = vmax.f32 %v5432, 0.0
    %v5467 = vmax.f32 %v5437, 0.0
    %v5468 = vmax.f32 %v5442, 0.0
    %v5469 = vmax.f32 %v5447, 0.0
    %v5470 = vmax.f32 %v5452, 0.0
    %v5471 = vmax.f32 %v5457, 0.0
    %v5472 = vmax.f32 %v5462, 0.0
    %v5474 = vsel %vm141, %v5465, 0
    %v5477 = vsel %vm141, %v5466, 0
    %v5480 = vsel %vm141, %v5467, 0
    %v5483 = vsel %vm141, %v5468, 0
    %v5486 = vsel %vm141, %v5469, 0
    %v5489 = vsel %vm141, %v5470, 0
    %v5492 = vsel %vm141, %v5471, 0
    %v5495 = vsel %vm141, %v5472, 0
    %5497 = vmatprep.subr.mxu0 0.0
    %5498 = vmatpush1.msra.mxu0 0.0
    %5499 = vmatprep.subr.mxu0 0.0
    %5500 = vmatpush1.msra.mxu0 0.0
    %5501 = vmatprep.subr.mxu0 0.0
    %5502 = vmatpush1.msra.mxu0 0.0
    %5503 = vmatprep.subr.mxu0 0.0
    %5504 = vmatpush1.msra.mxu0 0.0
    %5505 = vmatprep.subr.mxu0 0.0
    %5506 = vmatpush1.msra.mxu0 0.0
    %5507 = vmatprep.subr.mxu0 0.0
    %5508 = vmatpush1.msra.mxu0 0.0
    %5509 = vmatprep.subr.mxu0 0.0
    %5510 = vmatpush1.msra.mxu0 0.0
    %5511 = vmatprep.subr.mxu0 0.0
    %5512 = vmatpush1.msra.mxu0 0.0
    %5513 = vmatprep.subr.mxu0 0.0
    %5514 = vmatpush1.msra.mxu0 0.0
    %5515 = vmatprep.subr.mxu0 0.0
    %5516 = vmatpush1.msra.mxu0 0.0
    %5517 = vmatprep.subr.mxu0 0.0
    %5518 = vmatpush1.msra.mxu0 0.0
    %5519 = vmatprep.subr.mxu0 0.0
    %5520 = vmatpush1.msra.mxu0 0.0
    %5521 = vmatprep.subr.mxu0 0.0
    %5522 = vmatpush1.msra.mxu0 0.0
    %5523 = vmatprep.subr.mxu0 0.0
    %5524 = vmatpush1.msra.mxu0 0.0
    %5525 = vmatprep.subr.mxu0 0.0
    %5526 = vmatpush1.msra.mxu0 0.0
    %5527 = vmatprep.subr.mxu0 0.0
    %5528 = vmatpush1.msra.mxu0 %v3504
    %5529 = vmatprep.subr.mxu0 0.0
    %5530 = vmatpush2.msra.mxu0 0.0
    %5531 = vmatprep.subr.mxu0 0.0
    %5532 = vmatpush2.msra.mxu0 0.0
    %5533 = vmatprep.subr.mxu0 0.0
    %5534 = vmatpush2.msra.mxu0 0.0
    %5535 = vmatprep.subr.mxu0 0.0
    %5536 = vmatpush2.msra.mxu0 0.0
    %5537 = vmatprep.subr.mxu0 0.0
    %5538 = vmatpush2.msra.mxu0 0.0
    %5539 = vmatprep.subr.mxu0 0.0
    %5540 = vmatpush2.msra.mxu0 0.0
    %5541 = vmatprep.subr.mxu0 0.0
    %5542 = vmatpush2.msra.mxu0 0.0
    %5543 = vmatprep.subr.mxu0 0.0
    %5544 = vmatpush2.msra.mxu0 0.0
    %5545 = vmatprep.subr.mxu0 0.0
    %5546 = vmatpush2.msra.mxu0 0.0
    %5547 = vmatprep.subr.mxu0 0.0
    %5548 = vmatpush2.msra.mxu0 0.0
    %5549 = vmatprep.subr.mxu0 0.0
    %5550 = vmatpush2.msra.mxu0 0.0
    %5551 = vmatprep.subr.mxu0 0.0
    %5552 = vmatpush2.msra.mxu0 0.0
    %5553 = vmatprep.subr.mxu0 0.0
    %5554 = vmatpush2.msra.mxu0 0.0
    %5555 = vmatprep.subr.mxu0 0.0
    %5556 = vmatpush2.msra.mxu0 0.0
    %5557 = vmatprep.subr.mxu0 0.0
    %5558 = vmatpush2.msra.mxu0 0.0
    %5559 = vmatprep.subr.mxu0 0.0
    %5560 = vmatpush2.msra.mxu0 0.0
    %5561 = vmatprep.mubr.f32.mxu0 0.0
    %5562 = vmatmul.mubr.f32.gmra.mxu0 %v5474
    %v5563 = vpop.f32.mrf.mxu0
    %v5564 = vadd.f32 %v3510, %v5563
    %v5565 = vpop.f32.mrf.mxu0
    %5566 = vmatprep.mubr.f32.mxu0 0.0
    %5567 = vmatmul.mubr.f32.gmra.mxu0 %v5477
    %v5568 = vpop.f32.mrf.mxu0
    %v5569 = vadd.f32 %v3510, %v5568
    %v5570 = vpop.f32.mrf.mxu0
    %5571 = vmatprep.mubr.f32.mxu0 0.0
    %5572 = vmatmul.mubr.f32.gmra.mxu0 %v5480
    %v5573 = vpop.f32.mrf.mxu0
    %v5574 = vadd.f32 %v3510, %v5573
    %v5575 = vpop.f32.mrf.mxu0
    %5576 = vmatprep.mubr.f32.mxu0 0.0
    %5577 = vmatmul.mubr.f32.gmra.mxu0 %v5483
    %v5578 = vpop.f32.mrf.mxu0
    %v5579 = vadd.f32 %v3510, %v5578
    %v5580 = vpop.f32.mrf.mxu0
    %5581 = vmatprep.mubr.f32.mxu0 0.0
    %5582 = vmatmul.mubr.f32.gmra.mxu0 %v5486
    %v5583 = vpop.f32.mrf.mxu0
    %v5584 = vadd.f32 %v3510, %v5583
    %v5585 = vpop.f32.mrf.mxu0
    %5586 = vmatprep.mubr.f32.mxu0 0.0
    %5587 = vmatmul.mubr.f32.gmra.mxu0 %v5489
    %v5588 = vpop.f32.mrf.mxu0
    %v5589 = vadd.f32 %v3510, %v5588
    %v5590 = vpop.f32.mrf.mxu0
    %5591 = vmatprep.mubr.f32.mxu0 0.0
    %5592 = vmatmul.mubr.f32.gmra.mxu0 %v5492
    %v5593 = vpop.f32.mrf.mxu0
    %v5594 = vadd.f32 %v3510, %v5593
    %v5595 = vpop.f32.mrf.mxu0
    %5596 = vmatprep.mubr.f32.mxu0 0.0
    %5597 = vmatmul.mubr.f32.gmra.mxu0 %v5495
    %v5598 = vpop.f32.mrf.mxu0
    %v5599 = vadd.f32 %v3510, %v5598
    %v5600 = vpop.f32.mrf.mxu0
    %5601 = vdwg.mxu0
    %v5602 = vmax.f32 %v5564, 0.0
    %v5603 = vmax.f32 %v5569, 0.0
    %v5604 = vmax.f32 %v5574, 0.0
    %v5605 = vmax.f32 %v5579, 0.0
    %v5606 = vmax.f32 %v5584, 0.0
    %v5607 = vmax.f32 %v5589, 0.0
    %v5608 = vmax.f32 %v5594, 0.0
    %v5609 = vmax.f32 %v5599, 0.0
    %5611 = vrot.lane.b32.xlu0 %v1515, 96
    %v5612 = vpop.permute.xlu0 %5611
    %v5614 = vadd.f32 %v1495, %v5612
    %v5615 = vadd.f32 %v1500, %v5612
    %v5616 = vadd.f32 %v1505, %v5612
    %v5617 = vadd.f32 %v1510, %v5612
    %v5618 = vadd.f32 %v1515, %v5612
    %v5619 = vadd.f32 %v1520, %v5612
    %v5620 = vadd.f32 %v1525, %v5612
    %v5621 = vadd.f32 %v1530, %v5612
    %v5623 = vsel %vm711, %v5602, 0
    %v5626 = vsel %vm711, %v5603, 0
    %v5629 = vsel %vm711, %v5604, 0
    %v5632 = vsel %vm711, %v5605, 0
    %v5635 = vsel %vm711, %v5606, 0
    %v5638 = vsel %vm711, %v5607, 0
    %v5641 = vsel %vm711, %v5608, 0
    %v5644 = vsel %vm711, %v5609, 0
    %5646 = vmatprep.subr.mxu0 0.0
    %5647 = vmatpush1.msra.mxu0 0.0
    %5648 = vmatprep.subr.mxu0 0.0
    %5649 = vmatpush1.msra.mxu0 0.0
    %5650 = vmatprep.subr.mxu0 0.0
    %5651 = vmatpush1.msra.mxu0 0.0
    %5652 = vmatprep.subr.mxu0 0.0
    %5653 = vmatpush1.msra.mxu0 0.0
    %5654 = vmatprep.subr.mxu0 0.0
    %5655 = vmatpush1.msra.mxu0 0.0
    %5656 = vmatprep.subr.mxu0 0.0
    %5657 = vmatpush1.msra.mxu0 0.0
    %5658 = vmatprep.subr.mxu0 0.0
    %5659 = vmatpush1.msra.mxu0 0.0
    %5660 = vmatprep.subr.mxu0 0.0
    %5661 = vmatpush1.msra.mxu0 0.0
    %5662 = vmatprep.subr.mxu0 0.0
    %5663 = vmatpush1.msra.mxu0 0.0
    %5664 = vmatprep.subr.mxu0 0.0
    %5665 = vmatpush1.msra.mxu0 0.0
    %5666 = vmatprep.subr.mxu0 0.0
    %5667 = vmatpush1.msra.mxu0 0.0
    %5668 = vmatprep.subr.mxu0 0.0
    %5669 = vmatpush1.msra.mxu0 0.0
    %5670 = vmatprep.subr.mxu0 0.0
    %5671 = vmatpush1.msra.mxu0 %v3345
    %5672 = vmatprep.subr.mxu0 0.0
    %5673 = vmatpush1.msra.mxu0 %v3344
    %5674 = vmatprep.subr.mxu0 0.0
    %5675 = vmatpush1.msra.mxu0 %v3343
    %5676 = vmatprep.subr.mxu0 0.0
    %5677 = vmatpush1.msra.mxu0 %v3342
    %5678 = vmatprep.subr.mxu0 0.0
    %5679 = vmatpush2.msra.mxu0 0.0
    %5680 = vmatprep.subr.mxu0 0.0
    %5681 = vmatpush2.msra.mxu0 0.0
    %5682 = vmatprep.subr.mxu0 0.0
    %5683 = vmatpush2.msra.mxu0 0.0
    %5684 = vmatprep.subr.mxu0 0.0
    %5685 = vmatpush2.msra.mxu0 0.0
    %5686 = vmatprep.subr.mxu0 0.0
    %5687 = vmatpush2.msra.mxu0 0.0
    %5688 = vmatprep.subr.mxu0 0.0
    %5689 = vmatpush2.msra.mxu0 0.0
    %5690 = vmatprep.subr.mxu0 0.0
    %5691 = vmatpush2.msra.mxu0 0.0
    %5692 = vmatprep.subr.mxu0 0.0
    %5693 = vmatpush2.msra.mxu0 0.0
    %5694 = vmatprep.subr.mxu0 0.0
    %5695 = vmatpush2.msra.mxu0 0.0
    %5696 = vmatprep.subr.mxu0 0.0
    %5697 = vmatpush2.msra.mxu0 0.0
    %5698 = vmatprep.subr.mxu0 0.0
    %5699 = vmatpush2.msra.mxu0 0.0
    %5700 = vmatprep.subr.mxu0 0.0
    %5701 = vmatpush2.msra.mxu0 0.0
    %5702 = vmatprep.subr.mxu0 0.0
    %5703 = vmatpush2.msra.mxu0 0.0
    %5704 = vmatprep.subr.mxu0 0.0
    %5705 = vmatpush2.msra.mxu0 0.0
    %5706 = vmatprep.subr.mxu0 0.0
    %5707 = vmatpush2.msra.mxu0 0.0
    %5708 = vmatprep.subr.mxu0 0.0
    %5709 = vmatpush2.msra.mxu0 0.0
    %5710 = vmatprep.mubr.f32.mxu0 0.0
    %5711 = vmatmul.mubr.f32.gmra.mxu0 %v5623
    %v5712 = vpop.f32.mrf.mxu0
    %v5713 = vadd.f32 0.0, %v5712
    %v5714 = vpop.f32.mrf.mxu0
    %5715 = vmatprep.mubr.f32.mxu0 0.0
    %5716 = vmatmul.mubr.f32.gmra.mxu0 %v5626
    %v5717 = vpop.f32.mrf.mxu0
    %v5718 = vadd.f32 0.0, %v5717
    %v5719 = vpop.f32.mrf.mxu0
    %5720 = vmatprep.mubr.f32.mxu0 0.0
    %5721 = vmatmul.mubr.f32.gmra.mxu0 %v5629
    %v5722 = vpop.f32.mrf.mxu0
    %v5723 = vadd.f32 0.0, %v5722
    %v5724 = vpop.f32.mrf.mxu0
    %5725 = vmatprep.mubr.f32.mxu0 0.0
    %5726 = vmatmul.mubr.f32.gmra.mxu0 %v5632
    %v5727 = vpop.f32.mrf.mxu0
    %v5728 = vadd.f32 0.0, %v5727
    %v5729 = vpop.f32.mrf.mxu0
    %5730 = vmatprep.mubr.f32.mxu0 0.0
    %5731 = vmatmul.mubr.f32.gmra.mxu0 %v5635
    %v5732 = vpop.f32.mrf.mxu0
    %v5733 = vadd.f32 0.0, %v5732
    %v5734 = vpop.f32.mrf.mxu0
    %5735 = vmatprep.mubr.f32.mxu0 0.0
    %5736 = vmatmul.mubr.f32.gmra.mxu0 %v5638
    %v5737 = vpop.f32.mrf.mxu0
    %v5738 = vadd.f32 0.0, %v5737
    %v5739 = vpop.f32.mrf.mxu0
    %5740 = vmatprep.mubr.f32.mxu0 0.0
    %5741 = vmatmul.mubr.f32.gmra.mxu0 %v5641
    %v5742 = vpop.f32.mrf.mxu0
    %v5743 = vadd.f32 0.0, %v5742
    %v5744 = vpop.f32.mrf.mxu0
    %5745 = vmatprep.mubr.f32.mxu0 0.0
    %5746 = vmatmul.mubr.f32.gmra.mxu0 %v5644
    %v5747 = vpop.f32.mrf.mxu0
    %v5748 = vadd.f32 0.0, %v5747
    %v5749 = vpop.f32.mrf.mxu0
    %5750 = vdwg.mxu0
    %5759 = vrot.lane.b32.xlu0 %v5713, 32
    %v5760 = vpop.permute.xlu0 %5759
    %5761 = vrot.lane.b32.xlu0 %v5718, 32
    %v5762 = vpop.permute.xlu0 %5761
    %5763 = vrot.lane.b32.xlu0 %v5723, 32
    %v5764 = vpop.permute.xlu0 %5763
    %5765 = vrot.lane.b32.xlu0 %v5728, 32
    %v5766 = vpop.permute.xlu0 %5765
    %5767 = vrot.lane.b32.xlu0 %v5733, 32
    %v5768 = vpop.permute.xlu0 %5767
    %5769 = vrot.lane.b32.xlu0 %v5738, 32
    %v5770 = vpop.permute.xlu0 %5769
    %5771 = vrot.lane.b32.xlu0 %v5743, 32
    %v5772 = vpop.permute.xlu0 %5771
    %5773 = vrot.lane.b32.xlu0 %v5748, 32
    %v5774 = vpop.permute.xlu0 %5773
    %v5783 = vadd.f32 %v5614, %v5760
    %v5784 = vadd.f32 %v5615, %v5762
    %v5785 = vadd.f32 %v5616, %v5764
    %v5786 = vadd.f32 %v5617, %v5766
    %v5787 = vadd.f32 %v5618, %v5768
    %v5788 = vadd.f32 %v5619, %v5770
    %v5789 = vadd.f32 %v5620, %v5772
    %v5790 = vadd.f32 %v5621, %v5774
    %v5791 = vmax.f32 %v5783, 0.0
    %v5792 = vmax.f32 %v5784, 0.0
    %v5793 = vmax.f32 %v5785, 0.0
    %v5794 = vmax.f32 %v5786, 0.0
    %v5795 = vmax.f32 %v5787, 0.0
    %v5796 = vmax.f32 %v5788, 0.0
    %v5797 = vmax.f32 %v5789, 0.0
    %v5798 = vmax.f32 %v5790, 0.0
    %5799 = vset.pattern.permute.xlu0 4
    %5800 = vperm.xlu0 %5799, %v1534
    %v5801 = vpop.permute.xlu0 %5800
    %v5803 = vmul.f32 %v5791, %v5801
    %v5804 = vmul.f32 %v5792, %v5801
    %v5805 = vmul.f32 %v5793, %v5801
    %v5806 = vmul.f32 %v5794, %v5801
    %v5807 = vmul.f32 %v5795, %v5801
    %v5808 = vmul.f32 %v5796, %v5801
    %v5809 = vmul.f32 %v5797, %v5801
    %v5810 = vmul.f32 %v5798, %v5801
    %v5811 = vmax.f32 %v5319, %v5803
    %v5812 = vmax.f32 %v5320, %v5804
    %v5813 = vmax.f32 %v5321, %v5805
    %v5814 = vmax.f32 %v5322, %v5806
    %v5815 = vmax.f32 %v5323, %v5807
    %v5816 = vmax.f32 %v5324, %v5808
    %v5817 = vmax.f32 %v5325, %v5809
    %v5818 = vmax.f32 %v5326, %v5810
    %s5819 = scalar_lea.vmem %s5, 320
    %v5820 = vld [vmem:[%s5819] sm:$0xff]
    %v5821 = vld [vmem:[%s5819 + $0x8] sm:$0xff]
    %v5822 = vld [vmem:[%s5819 + $0x10] sm:$0xff]
    %v5823 = vld [vmem:[%s5819 + $0x18] sm:$0xff]
    %v5824 = vld [vmem:[%s5819 + $0x20] sm:$0xff]
    %v5825 = vld [vmem:[%s5819 + $0x28] sm:$0xff]
    %v5826 = vld [vmem:[%s5819 + $0x30] sm:$0xff]
    %v5827 = vld [vmem:[%s5819 + $0x38] sm:$0xff]
    %v5829 = vsel %vm3362, %v5820, 0
    %v5832 = vsel %vm3362, %v5821, 0
    %v5835 = vsel %vm3362, %v5822, 0
    %v5838 = vsel %vm3362, %v5823, 0
    %v5841 = vsel %vm3362, %v5824, 0
    %v5844 = vsel %vm3362, %v5825, 0
    %v5847 = vsel %vm3362, %v5826, 0
    %v5850 = vsel %vm3362, %v5827, 0
    %5852 = vmatprep.subr.mxu0 0.0
    %5853 = vmatpush1.msra.mxu0 0.0
    %5854 = vmatprep.subr.mxu0 0.0
    %5855 = vmatpush1.msra.mxu0 0.0
    %5856 = vmatprep.subr.mxu0 0.0
    %5857 = vmatpush1.msra.mxu0 0.0
    %5858 = vmatprep.subr.mxu0 0.0
    %5859 = vmatpush1.msra.mxu0 0.0
    %5860 = vmatprep.subr.mxu0 0.0
    %5861 = vmatpush1.msra.mxu0 0.0
    %5862 = vmatprep.subr.mxu0 0.0
    %5863 = vmatpush1.msra.mxu0 0.0
    %5864 = vmatprep.subr.mxu0 0.0
    %5865 = vmatpush1.msra.mxu0 0.0
    %5866 = vmatprep.subr.mxu0 0.0
    %5867 = vmatpush1.msra.mxu0 0.0
    %5868 = vmatprep.subr.mxu0 0.0
    %5869 = vmatpush1.msra.mxu0 0.0
    %5870 = vmatprep.subr.mxu0 0.0
    %5871 = vmatpush1.msra.mxu0 0.0
    %5872 = vmatprep.subr.mxu0 0.0
    %5873 = vmatpush1.msra.mxu0 0.0
    %5874 = vmatprep.subr.mxu0 0.0
    %5875 = vmatpush1.msra.mxu0 0.0
    %5876 = vmatprep.subr.mxu0 0.0
    %5877 = vmatpush1.msra.mxu0 0.0
    %5878 = vmatprep.subr.mxu0 0.0
    %5879 = vmatpush1.msra.mxu0 0.0
    %5880 = vmatprep.subr.mxu0 0.0
    %5881 = vmatpush1.msra.mxu0 0.0
    %5882 = vmatprep.subr.mxu0 0.0
    %5883 = vmatpush1.msra.mxu0 %v3389
    %5884 = vmatprep.subr.mxu0 0.0
    %5885 = vmatpush2.msra.mxu0 0.0
    %5886 = vmatprep.subr.mxu0 0.0
    %5887 = vmatpush2.msra.mxu0 0.0
    %5888 = vmatprep.subr.mxu0 0.0
    %5889 = vmatpush2.msra.mxu0 0.0
    %5890 = vmatprep.subr.mxu0 0.0
    %5891 = vmatpush2.msra.mxu0 0.0
    %5892 = vmatprep.subr.mxu0 0.0
    %5893 = vmatpush2.msra.mxu0 0.0
    %5894 = vmatprep.subr.mxu0 0.0
    %5895 = vmatpush2.msra.mxu0 0.0
    %5896 = vmatprep.subr.mxu0 0.0
    %5897 = vmatpush2.msra.mxu0 0.0
    %5898 = vmatprep.subr.mxu0 0.0
    %5899 = vmatpush2.msra.mxu0 0.0
    %5900 = vmatprep.subr.mxu0 0.0
    %5901 = vmatpush2.msra.mxu0 0.0
    %5902 = vmatprep.subr.mxu0 0.0
    %5903 = vmatpush2.msra.mxu0 0.0
    %5904 = vmatprep.subr.mxu0 0.0
    %5905 = vmatpush2.msra.mxu0 0.0
    %5906 = vmatprep.subr.mxu0 0.0
    %5907 = vmatpush2.msra.mxu0 0.0
    %5908 = vmatprep.subr.mxu0 0.0
    %5909 = vmatpush2.msra.mxu0 0.0
    %5910 = vmatprep.subr.mxu0 0.0
    %5911 = vmatpush2.msra.mxu0 0.0
    %5912 = vmatprep.subr.mxu0 0.0
    %5913 = vmatpush2.msra.mxu0 0.0
    %5914 = vmatprep.subr.mxu0 0.0
    %5915 = vmatpush2.msra.mxu0 0.0
    %5916 = vmatprep.mubr.f32.mxu0 0.0
    %5917 = vmatmul.mubr.f32.gmra.mxu0 %v5829
    %v5918 = vpop.f32.mrf.mxu0
    %v5919 = vadd.f32 %v3360, %v5918
    %v5920 = vpop.f32.mrf.mxu0
    %5921 = vmatprep.mubr.f32.mxu0 0.0
    %5922 = vmatmul.mubr.f32.gmra.mxu0 %v5832
    %v5923 = vpop.f32.mrf.mxu0
    %v5924 = vadd.f32 %v3360, %v5923
    %v5925 = vpop.f32.mrf.mxu0
    %5926 = vmatprep.mubr.f32.mxu0 0.0
    %5927 = vmatmul.mubr.f32.gmra.mxu0 %v5835
    %v5928 = vpop.f32.mrf.mxu0
    %v5929 = vadd.f32 %v3360, %v5928
    %v5930 = vpop.f32.mrf.mxu0
    %5931 = vmatprep.mubr.f32.mxu0 0.0
    %5932 = vmatmul.mubr.f32.gmra.mxu0 %v5838
    %v5933 = vpop.f32.mrf.mxu0
    %v5934 = vadd.f32 %v3360, %v5933
    %v5935 = vpop.f32.mrf.mxu0
    %5936 = vmatprep.mubr.f32.mxu0 0.0
    %5937 = vmatmul.mubr.f32.gmra.mxu0 %v5841
    %v5938 = vpop.f32.mrf.mxu0
    %v5939 = vadd.f32 %v3360, %v5938
    %v5940 = vpop.f32.mrf.mxu0
    %5941 = vmatprep.mubr.f32.mxu0 0.0
    %5942 = vmatmul.mubr.f32.gmra.mxu0 %v5844
    %v5943 = vpop.f32.mrf.mxu0
    %v5944 = vadd.f32 %v3360, %v5943
    %v5945 = vpop.f32.mrf.mxu0
    %5946 = vmatprep.mubr.f32.mxu0 0.0
    %5947 = vmatmul.mubr.f32.gmra.mxu0 %v5847
    %v5948 = vpop.f32.mrf.mxu0
    %v5949 = vadd.f32 %v3360, %v5948
    %v5950 = vpop.f32.mrf.mxu0
    %5951 = vmatprep.mubr.f32.mxu0 0.0
    %5952 = vmatmul.mubr.f32.gmra.mxu0 %v5850
    %v5953 = vpop.f32.mrf.mxu0
    %v5954 = vadd.f32 %v3360, %v5953
    %v5955 = vpop.f32.mrf.mxu0
    %5956 = vdwg.mxu0
    %v5957 = vmax.f32 %v5919, 0.0
    %v5958 = vmax.f32 %v5924, 0.0
    %v5959 = vmax.f32 %v5929, 0.0
    %v5960 = vmax.f32 %v5934, 0.0
    %v5961 = vmax.f32 %v5939, 0.0
    %v5962 = vmax.f32 %v5944, 0.0
    %v5963 = vmax.f32 %v5949, 0.0
    %v5964 = vmax.f32 %v5954, 0.0
    %v5966 = vsel %vm141, %v5957, 0
    %v5969 = vsel %vm141, %v5958, 0
    %v5972 = vsel %vm141, %v5959, 0
    %v5975 = vsel %vm141, %v5960, 0
    %v5978 = vsel %vm141, %v5961, 0
    %v5981 = vsel %vm141, %v5962, 0
    %v5984 = vsel %vm141, %v5963, 0
    %v5987 = vsel %vm141, %v5964, 0
    %5989 = vmatprep.subr.mxu0 0.0
    %5990 = vmatpush1.msra.mxu0 0.0
    %5991 = vmatprep.subr.mxu0 0.0
    %5992 = vmatpush1.msra.mxu0 0.0
    %5993 = vmatprep.subr.mxu0 0.0
    %5994 = vmatpush1.msra.mxu0 0.0
    %5995 = vmatprep.subr.mxu0 0.0
    %5996 = vmatpush1.msra.mxu0 0.0
    %5997 = vmatprep.subr.mxu0 0.0
    %5998 = vmatpush1.msra.mxu0 0.0
    %5999 = vmatprep.subr.mxu0 0.0
    %6000 = vmatpush1.msra.mxu0 0.0
    %6001 = vmatprep.subr.mxu0 0.0
    %6002 = vmatpush1.msra.mxu0 0.0
    %6003 = vmatprep.subr.mxu0 0.0
    %6004 = vmatpush1.msra.mxu0 0.0
    %6005 = vmatprep.subr.mxu0 0.0
    %6006 = vmatpush1.msra.mxu0 0.0
    %6007 = vmatprep.subr.mxu0 0.0
    %6008 = vmatpush1.msra.mxu0 0.0
    %6009 = vmatprep.subr.mxu0 0.0
    %6010 = vmatpush1.msra.mxu0 0.0
    %6011 = vmatprep.subr.mxu0 0.0
    %6012 = vmatpush1.msra.mxu0 0.0
    %6013 = vmatprep.subr.mxu0 0.0
    %6014 = vmatpush1.msra.mxu0 0.0
    %6015 = vmatprep.subr.mxu0 0.0
    %6016 = vmatpush1.msra.mxu0 0.0
    %6017 = vmatprep.subr.mxu0 0.0
    %6018 = vmatpush1.msra.mxu0 0.0
    %6019 = vmatprep.subr.mxu0 0.0
    %6020 = vmatpush1.msra.mxu0 %v3504
    %6021 = vmatprep.subr.mxu0 0.0
    %6022 = vmatpush2.msra.mxu0 0.0
    %6023 = vmatprep.subr.mxu0 0.0
    %6024 = vmatpush2.msra.mxu0 0.0
    %6025 = vmatprep.subr.mxu0 0.0
    %6026 = vmatpush2.msra.mxu0 0.0
    %6027 = vmatprep.subr.mxu0 0.0
    %6028 = vmatpush2.msra.mxu0 0.0
    %6029 = vmatprep.subr.mxu0 0.0
    %6030 = vmatpush2.msra.mxu0 0.0
    %6031 = vmatprep.subr.mxu0 0.0
    %6032 = vmatpush2.msra.mxu0 0.0
    %6033 = vmatprep.subr.mxu0 0.0
    %6034 = vmatpush2.msra.mxu0 0.0
    %6035 = vmatprep.subr.mxu0 0.0
    %6036 = vmatpush2.msra.mxu0 0.0
    %6037 = vmatprep.subr.mxu0 0.0
    %6038 = vmatpush2.msra.mxu0 0.0
    %6039 = vmatprep.subr.mxu0 0.0
    %6040 = vmatpush2.msra.mxu0 0.0
    %6041 = vmatprep.subr.mxu0 0.0
    %6042 = vmatpush2.msra.mxu0 0.0
    %6043 = vmatprep.subr.mxu0 0.0
    %6044 = vmatpush2.msra.mxu0 0.0
    %6045 = vmatprep.subr.mxu0 0.0
    %6046 = vmatpush2.msra.mxu0 0.0
    %6047 = vmatprep.subr.mxu0 0.0
    %6048 = vmatpush2.msra.mxu0 0.0
    %6049 = vmatprep.subr.mxu0 0.0
    %6050 = vmatpush2.msra.mxu0 0.0
    %6051 = vmatprep.subr.mxu0 0.0
    %6052 = vmatpush2.msra.mxu0 0.0
    %6053 = vmatprep.mubr.f32.mxu0 0.0
    %6054 = vmatmul.mubr.f32.gmra.mxu0 %v5966
    %v6055 = vpop.f32.mrf.mxu0
    %v6056 = vadd.f32 %v3510, %v6055
    %v6057 = vpop.f32.mrf.mxu0
    %6058 = vmatprep.mubr.f32.mxu0 0.0
    %6059 = vmatmul.mubr.f32.gmra.mxu0 %v5969
    %v6060 = vpop.f32.mrf.mxu0
    %v6061 = vadd.f32 %v3510, %v6060
    %v6062 = vpop.f32.mrf.mxu0
    %6063 = vmatprep.mubr.f32.mxu0 0.0
    %6064 = vmatmul.mubr.f32.gmra.mxu0 %v5972
    %v6065 = vpop.f32.mrf.mxu0
    %v6066 = vadd.f32 %v3510, %v6065
    %v6067 = vpop.f32.mrf.mxu0
    %6068 = vmatprep.mubr.f32.mxu0 0.0
    %6069 = vmatmul.mubr.f32.gmra.mxu0 %v5975
    %v6070 = vpop.f32.mrf.mxu0
    %v6071 = vadd.f32 %v3510, %v6070
    %v6072 = vpop.f32.mrf.mxu0
    %6073 = vmatprep.mubr.f32.mxu0 0.0
    %6074 = vmatmul.mubr.f32.gmra.mxu0 %v5978
    %v6075 = vpop.f32.mrf.mxu0
    %v6076 = vadd.f32 %v3510, %v6075
    %v6077 = vpop.f32.mrf.mxu0
    %6078 = vmatprep.mubr.f32.mxu0 0.0
    %6079 = vmatmul.mubr.f32.gmra.mxu0 %v5981
    %v6080 = vpop.f32.mrf.mxu0
    %v6081 = vadd.f32 %v3510, %v6080
    %v6082 = vpop.f32.mrf.mxu0
    %6083 = vmatprep.mubr.f32.mxu0 0.0
    %6084 = vmatmul.mubr.f32.gmra.mxu0 %v5984
    %v6085 = vpop.f32.mrf.mxu0
    %v6086 = vadd.f32 %v3510, %v6085
    %v6087 = vpop.f32.mrf.mxu0
    %6088 = vmatprep.mubr.f32.mxu0 0.0
    %6089 = vmatmul.mubr.f32.gmra.mxu0 %v5987
    %v6090 = vpop.f32.mrf.mxu0
    %v6091 = vadd.f32 %v3510, %v6090
    %v6092 = vpop.f32.mrf.mxu0
    %6093 = vdwg.mxu0
    %v6094 = vmax.f32 %v6056, 0.0
    %v6095 = vmax.f32 %v6061, 0.0
    %v6096 = vmax.f32 %v6066, 0.0
    %v6097 = vmax.f32 %v6071, 0.0
    %v6098 = vmax.f32 %v6076, 0.0
    %v6099 = vmax.f32 %v6081, 0.0
    %v6100 = vmax.f32 %v6086, 0.0
    %v6101 = vmax.f32 %v6091, 0.0
    %6103 = vrot.lane.b32.xlu0 %v1520, 96
    %v6104 = vpop.permute.xlu0 %6103
    %v6106 = vadd.f32 %v1495, %v6104
    %v6107 = vadd.f32 %v1500, %v6104
    %v6108 = vadd.f32 %v1505, %v6104
    %v6109 = vadd.f32 %v1510, %v6104
    %v6110 = vadd.f32 %v1515, %v6104
    %v6111 = vadd.f32 %v1520, %v6104
    %v6112 = vadd.f32 %v1525, %v6104
    %v6113 = vadd.f32 %v1530, %v6104
    %v6115 = vsel %vm711, %v6094, 0
    %v6118 = vsel %vm711, %v6095, 0
    %v6121 = vsel %vm711, %v6096, 0
    %v6124 = vsel %vm711, %v6097, 0
    %v6127 = vsel %vm711, %v6098, 0
    %v6130 = vsel %vm711, %v6099, 0
    %v6133 = vsel %vm711, %v6100, 0
    %v6136 = vsel %vm711, %v6101, 0
    %6138 = vmatprep.subr.mxu0 0.0
    %6139 = vmatpush1.msra.mxu0 0.0
    %6140 = vmatprep.subr.mxu0 0.0
    %6141 = vmatpush1.msra.mxu0 0.0
    %6142 = vmatprep.subr.mxu0 0.0
    %6143 = vmatpush1.msra.mxu0 0.0
    %6144 = vmatprep.subr.mxu0 0.0
    %6145 = vmatpush1.msra.mxu0 0.0
    %6146 = vmatprep.subr.mxu0 0.0
    %6147 = vmatpush1.msra.mxu0 0.0
    %6148 = vmatprep.subr.mxu0 0.0
    %6149 = vmatpush1.msra.mxu0 0.0
    %6150 = vmatprep.subr.mxu0 0.0
    %6151 = vmatpush1.msra.mxu0 0.0
    %6152 = vmatprep.subr.mxu0 0.0
    %6153 = vmatpush1.msra.mxu0 0.0
    %6154 = vmatprep.subr.mxu0 0.0
    %6155 = vmatpush1.msra.mxu0 0.0
    %6156 = vmatprep.subr.mxu0 0.0
    %6157 = vmatpush1.msra.mxu0 0.0
    %6158 = vmatprep.subr.mxu0 0.0
    %6159 = vmatpush1.msra.mxu0 0.0
    %6160 = vmatprep.subr.mxu0 0.0
    %6161 = vmatpush1.msra.mxu0 0.0
    %6162 = vmatprep.subr.mxu0 0.0
    %6163 = vmatpush1.msra.mxu0 %v3345
    %6164 = vmatprep.subr.mxu0 0.0
    %6165 = vmatpush1.msra.mxu0 %v3344
    %6166 = vmatprep.subr.mxu0 0.0
    %6167 = vmatpush1.msra.mxu0 %v3343
    %6168 = vmatprep.subr.mxu0 0.0
    %6169 = vmatpush1.msra.mxu0 %v3342
    %6170 = vmatprep.subr.mxu0 0.0
    %6171 = vmatpush2.msra.mxu0 0.0
    %6172 = vmatprep.subr.mxu0 0.0
    %6173 = vmatpush2.msra.mxu0 0.0
    %6174 = vmatprep.subr.mxu0 0.0
    %6175 = vmatpush2.msra.mxu0 0.0
    %6176 = vmatprep.subr.mxu0 0.0
    %6177 = vmatpush2.msra.mxu0 0.0
    %6178 = vmatprep.subr.mxu0 0.0
    %6179 = vmatpush2.msra.mxu0 0.0
    %6180 = vmatprep.subr.mxu0 0.0
    %6181 = vmatpush2.msra.mxu0 0.0
    %6182 = vmatprep.subr.mxu0 0.0
    %6183 = vmatpush2.msra.mxu0 0.0
    %6184 = vmatprep.subr.mxu0 0.0
    %6185 = vmatpush2.msra.mxu0 0.0
    %6186 = vmatprep.subr.mxu0 0.0
    %6187 = vmatpush2.msra.mxu0 0.0
    %6188 = vmatprep.subr.mxu0 0.0
    %6189 = vmatpush2.msra.mxu0 0.0
    %6190 = vmatprep.subr.mxu0 0.0
    %6191 = vmatpush2.msra.mxu0 0.0
    %6192 = vmatprep.subr.mxu0 0.0
    %6193 = vmatpush2.msra.mxu0 0.0
    %6194 = vmatprep.subr.mxu0 0.0
    %6195 = vmatpush2.msra.mxu0 0.0
    %6196 = vmatprep.subr.mxu0 0.0
    %6197 = vmatpush2.msra.mxu0 0.0
    %6198 = vmatprep.subr.mxu0 0.0
    %6199 = vmatpush2.msra.mxu0 0.0
    %6200 = vmatprep.subr.mxu0 0.0
    %6201 = vmatpush2.msra.mxu0 0.0
    %6202 = vmatprep.mubr.f32.mxu0 0.0
    %6203 = vmatmul.mubr.f32.gmra.mxu0 %v6115
    %v6204 = vpop.f32.mrf.mxu0
    %v6205 = vadd.f32 0.0, %v6204
    %v6206 = vpop.f32.mrf.mxu0
    %6207 = vmatprep.mubr.f32.mxu0 0.0
    %6208 = vmatmul.mubr.f32.gmra.mxu0 %v6118
    %v6209 = vpop.f32.mrf.mxu0
    %v6210 = vadd.f32 0.0, %v6209
    %v6211 = vpop.f32.mrf.mxu0
    %6212 = vmatprep.mubr.f32.mxu0 0.0
    %6213 = vmatmul.mubr.f32.gmra.mxu0 %v6121
    %v6214 = vpop.f32.mrf.mxu0
    %v6215 = vadd.f32 0.0, %v6214
    %v6216 = vpop.f32.mrf.mxu0
    %6217 = vmatprep.mubr.f32.mxu0 0.0
    %6218 = vmatmul.mubr.f32.gmra.mxu0 %v6124
    %v6219 = vpop.f32.mrf.mxu0
    %v6220 = vadd.f32 0.0, %v6219
    %v6221 = vpop.f32.mrf.mxu0
    %6222 = vmatprep.mubr.f32.mxu0 0.0
    %6223 = vmatmul.mubr.f32.gmra.mxu0 %v6127
    %v6224 = vpop.f32.mrf.mxu0
    %v6225 = vadd.f32 0.0, %v6224
    %v6226 = vpop.f32.mrf.mxu0
    %6227 = vmatprep.mubr.f32.mxu0 0.0
    %6228 = vmatmul.mubr.f32.gmra.mxu0 %v6130
    %v6229 = vpop.f32.mrf.mxu0
    %v6230 = vadd.f32 0.0, %v6229
    %v6231 = vpop.f32.mrf.mxu0
    %6232 = vmatprep.mubr.f32.mxu0 0.0
    %6233 = vmatmul.mubr.f32.gmra.mxu0 %v6133
    %v6234 = vpop.f32.mrf.mxu0
    %v6235 = vadd.f32 0.0, %v6234
    %v6236 = vpop.f32.mrf.mxu0
    %6237 = vmatprep.mubr.f32.mxu0 0.0
    %6238 = vmatmul.mubr.f32.gmra.mxu0 %v6136
    %v6239 = vpop.f32.mrf.mxu0
    %v6240 = vadd.f32 0.0, %v6239
    %v6241 = vpop.f32.mrf.mxu0
    %6242 = vdwg.mxu0
    %6251 = vrot.lane.b32.xlu0 %v6205, 32
    %v6252 = vpop.permute.xlu0 %6251
    %6253 = vrot.lane.b32.xlu0 %v6210, 32
    %v6254 = vpop.permute.xlu0 %6253
    %6255 = vrot.lane.b32.xlu0 %v6215, 32
    %v6256 = vpop.permute.xlu0 %6255
    %6257 = vrot.lane.b32.xlu0 %v6220, 32
    %v6258 = vpop.permute.xlu0 %6257
    %6259 = vrot.lane.b32.xlu0 %v6225, 32
    %v6260 = vpop.permute.xlu0 %6259
    %6261 = vrot.lane.b32.xlu0 %v6230, 32
    %v6262 = vpop.permute.xlu0 %6261
    %6263 = vrot.lane.b32.xlu0 %v6235, 32
    %v6264 = vpop.permute.xlu0 %6263
    %6265 = vrot.lane.b32.xlu0 %v6240, 32
    %v6266 = vpop.permute.xlu0 %6265
    %v6275 = vadd.f32 %v6106, %v6252
    %v6276 = vadd.f32 %v6107, %v6254
    %v6277 = vadd.f32 %v6108, %v6256
    %v6278 = vadd.f32 %v6109, %v6258
    %v6279 = vadd.f32 %v6110, %v6260
    %v6280 = vadd.f32 %v6111, %v6262
    %v6281 = vadd.f32 %v6112, %v6264
    %v6282 = vadd.f32 %v6113, %v6266
    %v6283 = vmax.f32 %v6275, 0.0
    %v6284 = vmax.f32 %v6276, 0.0
    %v6285 = vmax.f32 %v6277, 0.0
    %v6286 = vmax.f32 %v6278, 0.0
    %v6287 = vmax.f32 %v6279, 0.0
    %v6288 = vmax.f32 %v6280, 0.0
    %v6289 = vmax.f32 %v6281, 0.0
    %v6290 = vmax.f32 %v6282, 0.0
    %6291 = vset.pattern.permute.xlu0 5
    %6292 = vperm.xlu0 %6291, %v1534
    %v6293 = vpop.permute.xlu0 %6292
    %v6295 = vmul.f32 %v6283, %v6293
    %v6296 = vmul.f32 %v6284, %v6293
    %v6297 = vmul.f32 %v6285, %v6293
    %v6298 = vmul.f32 %v6286, %v6293
    %v6299 = vmul.f32 %v6287, %v6293
    %v6300 = vmul.f32 %v6288, %v6293
    %v6301 = vmul.f32 %v6289, %v6293
    %v6302 = vmul.f32 %v6290, %v6293
    %v6303 = vmax.f32 %v5811, %v6295
    %v6304 = vmax.f32 %v5812, %v6296
    %v6305 = vmax.f32 %v5813, %v6297
    %v6306 = vmax.f32 %v5814, %v6298
    %v6307 = vmax.f32 %v5815, %v6299
    %v6308 = vmax.f32 %v5816, %v6300
    %v6309 = vmax.f32 %v5817, %v6301
    %v6310 = vmax.f32 %v5818, %v6302
    %s6311 = scalar_lea.vmem %s5, 384
    %v6312 = vld [vmem:[%s6311] sm:$0xff]
    %v6313 = vld [vmem:[%s6311 + $0x8] sm:$0xff]
    %v6314 = vld [vmem:[%s6311 + $0x10] sm:$0xff]
    %v6315 = vld [vmem:[%s6311 + $0x18] sm:$0xff]
    %v6316 = vld [vmem:[%s6311 + $0x20] sm:$0xff]
    %v6317 = vld [vmem:[%s6311 + $0x28] sm:$0xff]
    %v6318 = vld [vmem:[%s6311 + $0x30] sm:$0xff]
    %v6319 = vld [vmem:[%s6311 + $0x38] sm:$0xff]
    %v6321 = vsel %vm3362, %v6312, 0
    %v6324 = vsel %vm3362, %v6313, 0
    %v6327 = vsel %vm3362, %v6314, 0
    %v6330 = vsel %vm3362, %v6315, 0
    %v6333 = vsel %vm3362, %v6316, 0
    %v6336 = vsel %vm3362, %v6317, 0
    %v6339 = vsel %vm3362, %v6318, 0
    %v6342 = vsel %vm3362, %v6319, 0
    %6344 = vmatprep.subr.mxu0 0.0
    %6345 = vmatpush1.msra.mxu0 0.0
    %6346 = vmatprep.subr.mxu0 0.0
    %6347 = vmatpush1.msra.mxu0 0.0
    %6348 = vmatprep.subr.mxu0 0.0
    %6349 = vmatpush1.msra.mxu0 0.0
    %6350 = vmatprep.subr.mxu0 0.0
    %6351 = vmatpush1.msra.mxu0 0.0
    %6352 = vmatprep.subr.mxu0 0.0
    %6353 = vmatpush1.msra.mxu0 0.0
    %6354 = vmatprep.subr.mxu0 0.0
    %6355 = vmatpush1.msra.mxu0 0.0
    %6356 = vmatprep.subr.mxu0 0.0
    %6357 = vmatpush1.msra.mxu0 0.0
    %6358 = vmatprep.subr.mxu0 0.0
    %6359 = vmatpush1.msra.mxu0 0.0
    %6360 = vmatprep.subr.mxu0 0.0
    %6361 = vmatpush1.msra.mxu0 0.0
    %6362 = vmatprep.subr.mxu0 0.0
    %6363 = vmatpush1.msra.mxu0 0.0
    %6364 = vmatprep.subr.mxu0 0.0
    %6365 = vmatpush1.msra.mxu0 0.0
    %6366 = vmatprep.subr.mxu0 0.0
    %6367 = vmatpush1.msra.mxu0 0.0
    %6368 = vmatprep.subr.mxu0 0.0
    %6369 = vmatpush1.msra.mxu0 0.0
    %6370 = vmatprep.subr.mxu0 0.0
    %6371 = vmatpush1.msra.mxu0 0.0
    %6372 = vmatprep.subr.mxu0 0.0
    %6373 = vmatpush1.msra.mxu0 0.0
    %6374 = vmatprep.subr.mxu0 0.0
    %6375 = vmatpush1.msra.mxu0 %v3389
    %6376 = vmatprep.subr.mxu0 0.0
    %6377 = vmatpush2.msra.mxu0 0.0
    %6378 = vmatprep.subr.mxu0 0.0
    %6379 = vmatpush2.msra.mxu0 0.0
    %6380 = vmatprep.subr.mxu0 0.0
    %6381 = vmatpush2.msra.mxu0 0.0
    %6382 = vmatprep.subr.mxu0 0.0
    %6383 = vmatpush2.msra.mxu0 0.0
    %6384 = vmatprep.subr.mxu0 0.0
    %6385 = vmatpush2.msra.mxu0 0.0
    %6386 = vmatprep.subr.mxu0 0.0
    %6387 = vmatpush2.msra.mxu0 0.0
    %6388 = vmatprep.subr.mxu0 0.0
    %6389 = vmatpush2.msra.mxu0 0.0
    %6390 = vmatprep.subr.mxu0 0.0
    %6391 = vmatpush2.msra.mxu0 0.0
    %6392 = vmatprep.subr.mxu0 0.0
    %6393 = vmatpush2.msra.mxu0 0.0
    %6394 = vmatprep.subr.mxu0 0.0
    %6395 = vmatpush2.msra.mxu0 0.0
    %6396 = vmatprep.subr.mxu0 0.0
    %6397 = vmatpush2.msra.mxu0 0.0
    %6398 = vmatprep.subr.mxu0 0.0
    %6399 = vmatpush2.msra.mxu0 0.0
    %6400 = vmatprep.subr.mxu0 0.0
    %6401 = vmatpush2.msra.mxu0 0.0
    %6402 = vmatprep.subr.mxu0 0.0
    %6403 = vmatpush2.msra.mxu0 0.0
    %6404 = vmatprep.subr.mxu0 0.0
    %6405 = vmatpush2.msra.mxu0 0.0
    %6406 = vmatprep.subr.mxu0 0.0
    %6407 = vmatpush2.msra.mxu0 0.0
    %6408 = vmatprep.mubr.f32.mxu0 0.0
    %6409 = vmatmul.mubr.f32.gmra.mxu0 %v6321
    %v6410 = vpop.f32.mrf.mxu0
    %v6411 = vadd.f32 %v3360, %v6410
    %v6412 = vpop.f32.mrf.mxu0
    %6413 = vmatprep.mubr.f32.mxu0 0.0
    %6414 = vmatmul.mubr.f32.gmra.mxu0 %v6324
    %v6415 = vpop.f32.mrf.mxu0
    %v6416 = vadd.f32 %v3360, %v6415
    %v6417 = vpop.f32.mrf.mxu0
    %6418 = vmatprep.mubr.f32.mxu0 0.0
    %6419 = vmatmul.mubr.f32.gmra.mxu0 %v6327
    %v6420 = vpop.f32.mrf.mxu0
    %v6421 = vadd.f32 %v3360, %v6420
    %v6422 = vpop.f32.mrf.mxu0
    %6423 = vmatprep.mubr.f32.mxu0 0.0
    %6424 = vmatmul.mubr.f32.gmra.mxu0 %v6330
    %v6425 = vpop.f32.mrf.mxu0
    %v6426 = vadd.f32 %v3360, %v6425
    %v6427 = vpop.f32.mrf.mxu0
    %6428 = vmatprep.mubr.f32.mxu0 0.0
    %6429 = vmatmul.mubr.f32.gmra.mxu0 %v6333
    %v6430 = vpop.f32.mrf.mxu0
    %v6431 = vadd.f32 %v3360, %v6430
    %v6432 = vpop.f32.mrf.mxu0
    %6433 = vmatprep.mubr.f32.mxu0 0.0
    %6434 = vmatmul.mubr.f32.gmra.mxu0 %v6336
    %v6435 = vpop.f32.mrf.mxu0
    %v6436 = vadd.f32 %v3360, %v6435
    %v6437 = vpop.f32.mrf.mxu0
    %6438 = vmatprep.mubr.f32.mxu0 0.0
    %6439 = vmatmul.mubr.f32.gmra.mxu0 %v6339
    %v6440 = vpop.f32.mrf.mxu0
    %v6441 = vadd.f32 %v3360, %v6440
    %v6442 = vpop.f32.mrf.mxu0
    %6443 = vmatprep.mubr.f32.mxu0 0.0
    %6444 = vmatmul.mubr.f32.gmra.mxu0 %v6342
    %v6445 = vpop.f32.mrf.mxu0
    %v6446 = vadd.f32 %v3360, %v6445
    %v6447 = vpop.f32.mrf.mxu0
    %6448 = vdwg.mxu0
    %v6449 = vmax.f32 %v6411, 0.0
    %v6450 = vmax.f32 %v6416, 0.0
    %v6451 = vmax.f32 %v6421, 0.0
    %v6452 = vmax.f32 %v6426, 0.0
    %v6453 = vmax.f32 %v6431, 0.0
    %v6454 = vmax.f32 %v6436, 0.0
    %v6455 = vmax.f32 %v6441, 0.0
    %v6456 = vmax.f32 %v6446, 0.0
    %v6458 = vsel %vm141, %v6449, 0
    %v6461 = vsel %vm141, %v6450, 0
    %v6464 = vsel %vm141, %v6451, 0
    %v6467 = vsel %vm141, %v6452, 0
    %v6470 = vsel %vm141, %v6453, 0
    %v6473 = vsel %vm141, %v6454, 0
    %v6476 = vsel %vm141, %v6455, 0
    %v6479 = vsel %vm141, %v6456, 0
    %6481 = vmatprep.subr.mxu0 0.0
    %6482 = vmatpush1.msra.mxu0 0.0
    %6483 = vmatprep.subr.mxu0 0.0
    %6484 = vmatpush1.msra.mxu0 0.0
    %6485 = vmatprep.subr.mxu0 0.0
    %6486 = vmatpush1.msra.mxu0 0.0
    %6487 = vmatprep.subr.mxu0 0.0
    %6488 = vmatpush1.msra.mxu0 0.0
    %6489 = vmatprep.subr.mxu0 0.0
    %6490 = vmatpush1.msra.mxu0 0.0
    %6491 = vmatprep.subr.mxu0 0.0
    %6492 = vmatpush1.msra.mxu0 0.0
    %6493 = vmatprep.subr.mxu0 0.0
    %6494 = vmatpush1.msra.mxu0 0.0
    %6495 = vmatprep.subr.mxu0 0.0
    %6496 = vmatpush1.msra.mxu0 0.0
    %6497 = vmatprep.subr.mxu0 0.0
    %6498 = vmatpush1.msra.mxu0 0.0
    %6499 = vmatprep.subr.mxu0 0.0
    %6500 = vmatpush1.msra.mxu0 0.0
    %6501 = vmatprep.subr.mxu0 0.0
    %6502 = vmatpush1.msra.mxu0 0.0
    %6503 = vmatprep.subr.mxu0 0.0
    %6504 = vmatpush1.msra.mxu0 0.0
    %6505 = vmatprep.subr.mxu0 0.0
    %6506 = vmatpush1.msra.mxu0 0.0
    %6507 = vmatprep.subr.mxu0 0.0
    %6508 = vmatpush1.msra.mxu0 0.0
    %6509 = vmatprep.subr.mxu0 0.0
    %6510 = vmatpush1.msra.mxu0 0.0
    %6511 = vmatprep.subr.mxu0 0.0
    %6512 = vmatpush1.msra.mxu0 %v3504
    %6513 = vmatprep.subr.mxu0 0.0
    %6514 = vmatpush2.msra.mxu0 0.0
    %6515 = vmatprep.subr.mxu0 0.0
    %6516 = vmatpush2.msra.mxu0 0.0
    %6517 = vmatprep.subr.mxu0 0.0
    %6518 = vmatpush2.msra.mxu0 0.0
    %6519 = vmatprep.subr.mxu0 0.0
    %6520 = vmatpush2.msra.mxu0 0.0
    %6521 = vmatprep.subr.mxu0 0.0
    %6522 = vmatpush2.msra.mxu0 0.0
    %6523 = vmatprep.subr.mxu0 0.0
    %6524 = vmatpush2.msra.mxu0 0.0
    %6525 = vmatprep.subr.mxu0 0.0
    %6526 = vmatpush2.msra.mxu0 0.0
    %6527 = vmatprep.subr.mxu0 0.0
    %6528 = vmatpush2.msra.mxu0 0.0
    %6529 = vmatprep.subr.mxu0 0.0
    %6530 = vmatpush2.msra.mxu0 0.0
    %6531 = vmatprep.subr.mxu0 0.0
    %6532 = vmatpush2.msra.mxu0 0.0
    %6533 = vmatprep.subr.mxu0 0.0
    %6534 = vmatpush2.msra.mxu0 0.0
    %6535 = vmatprep.subr.mxu0 0.0
    %6536 = vmatpush2.msra.mxu0 0.0
    %6537 = vmatprep.subr.mxu0 0.0
    %6538 = vmatpush2.msra.mxu0 0.0
    %6539 = vmatprep.subr.mxu0 0.0
    %6540 = vmatpush2.msra.mxu0 0.0
    %6541 = vmatprep.subr.mxu0 0.0
    %6542 = vmatpush2.msra.mxu0 0.0
    %6543 = vmatprep.subr.mxu0 0.0
    %6544 = vmatpush2.msra.mxu0 0.0
    %6545 = vmatprep.mubr.f32.mxu0 0.0
    %6546 = vmatmul.mubr.f32.gmra.mxu0 %v6458
    %v6547 = vpop.f32.mrf.mxu0
    %v6548 = vadd.f32 %v3510, %v6547
    %v6549 = vpop.f32.mrf.mxu0
    %6550 = vmatprep.mubr.f32.mxu0 0.0
    %6551 = vmatmul.mubr.f32.gmra.mxu0 %v6461
    %v6552 = vpop.f32.mrf.mxu0
    %v6553 = vadd.f32 %v3510, %v6552
    %v6554 = vpop.f32.mrf.mxu0
    %6555 = vmatprep.mubr.f32.mxu0 0.0
    %6556 = vmatmul.mubr.f32.gmra.mxu0 %v6464
    %v6557 = vpop.f32.mrf.mxu0
    %v6558 = vadd.f32 %v3510, %v6557
    %v6559 = vpop.f32.mrf.mxu0
    %6560 = vmatprep.mubr.f32.mxu0 0.0
    %6561 = vmatmul.mubr.f32.gmra.mxu0 %v6467
    %v6562 = vpop.f32.mrf.mxu0
    %v6563 = vadd.f32 %v3510, %v6562
    %v6564 = vpop.f32.mrf.mxu0
    %6565 = vmatprep.mubr.f32.mxu0 0.0
    %6566 = vmatmul.mubr.f32.gmra.mxu0 %v6470
    %v6567 = vpop.f32.mrf.mxu0
    %v6568 = vadd.f32 %v3510, %v6567
    %v6569 = vpop.f32.mrf.mxu0
    %6570 = vmatprep.mubr.f32.mxu0 0.0
    %6571 = vmatmul.mubr.f32.gmra.mxu0 %v6473
    %v6572 = vpop.f32.mrf.mxu0
    %v6573 = vadd.f32 %v3510, %v6572
    %v6574 = vpop.f32.mrf.mxu0
    %6575 = vmatprep.mubr.f32.mxu0 0.0
    %6576 = vmatmul.mubr.f32.gmra.mxu0 %v6476
    %v6577 = vpop.f32.mrf.mxu0
    %v6578 = vadd.f32 %v3510, %v6577
    %v6579 = vpop.f32.mrf.mxu0
    %6580 = vmatprep.mubr.f32.mxu0 0.0
    %6581 = vmatmul.mubr.f32.gmra.mxu0 %v6479
    %v6582 = vpop.f32.mrf.mxu0
    %v6583 = vadd.f32 %v3510, %v6582
    %v6584 = vpop.f32.mrf.mxu0
    %6585 = vdwg.mxu0
    %v6586 = vmax.f32 %v6548, 0.0
    %v6587 = vmax.f32 %v6553, 0.0
    %v6588 = vmax.f32 %v6558, 0.0
    %v6589 = vmax.f32 %v6563, 0.0
    %v6590 = vmax.f32 %v6568, 0.0
    %v6591 = vmax.f32 %v6573, 0.0
    %v6592 = vmax.f32 %v6578, 0.0
    %v6593 = vmax.f32 %v6583, 0.0
    %6595 = vrot.lane.b32.xlu0 %v1525, 96
    %v6596 = vpop.permute.xlu0 %6595
    %v6598 = vadd.f32 %v1495, %v6596
    %v6599 = vadd.f32 %v1500, %v6596
    %v6600 = vadd.f32 %v1505, %v6596
    %v6601 = vadd.f32 %v1510, %v6596
    %v6602 = vadd.f32 %v1515, %v6596
    %v6603 = vadd.f32 %v1520, %v6596
    %v6604 = vadd.f32 %v1525, %v6596
    %v6605 = vadd.f32 %v1530, %v6596
    %v6607 = vsel %vm711, %v6586, 0
    %v6610 = vsel %vm711, %v6587, 0
    %v6613 = vsel %vm711, %v6588, 0
    %v6616 = vsel %vm711, %v6589, 0
    %v6619 = vsel %vm711, %v6590, 0
    %v6622 = vsel %vm711, %v6591, 0
    %v6625 = vsel %vm711, %v6592, 0
    %v6628 = vsel %vm711, %v6593, 0
    %6630 = vmatprep.subr.mxu0 0.0
    %6631 = vmatpush1.msra.mxu0 0.0
    %6632 = vmatprep.subr.mxu0 0.0
    %6633 = vmatpush1.msra.mxu0 0.0
    %6634 = vmatprep.subr.mxu0 0.0
    %6635 = vmatpush1.msra.mxu0 0.0
    %6636 = vmatprep.subr.mxu0 0.0
    %6637 = vmatpush1.msra.mxu0 0.0
    %6638 = vmatprep.subr.mxu0 0.0
    %6639 = vmatpush1.msra.mxu0 0.0
    %6640 = vmatprep.subr.mxu0 0.0
    %6641 = vmatpush1.msra.mxu0 0.0
    %6642 = vmatprep.subr.mxu0 0.0
    %6643 = vmatpush1.msra.mxu0 0.0
    %6644 = vmatprep.subr.mxu0 0.0
    %6645 = vmatpush1.msra.mxu0 0.0
    %6646 = vmatprep.subr.mxu0 0.0
    %6647 = vmatpush1.msra.mxu0 0.0
    %6648 = vmatprep.subr.mxu0 0.0
    %6649 = vmatpush1.msra.mxu0 0.0
    %6650 = vmatprep.subr.mxu0 0.0
    %6651 = vmatpush1.msra.mxu0 0.0
    %6652 = vmatprep.subr.mxu0 0.0
    %6653 = vmatpush1.msra.mxu0 0.0
    %6654 = vmatprep.subr.mxu0 0.0
    %6655 = vmatpush1.msra.mxu0 %v3345
    %6656 = vmatprep.subr.mxu0 0.0
    %6657 = vmatpush1.msra.mxu0 %v3344
    %6658 = vmatprep.subr.mxu0 0.0
    %6659 = vmatpush1.msra.mxu0 %v3343
    %6660 = vmatprep.subr.mxu0 0.0
    %6661 = vmatpush1.msra.mxu0 %v3342
    %6662 = vmatprep.subr.mxu0 0.0
    %6663 = vmatpush2.msra.mxu0 0.0
    %6664 = vmatprep.subr.mxu0 0.0
    %6665 = vmatpush2.msra.mxu0 0.0
    %6666 = vmatprep.subr.mxu0 0.0
    %6667 = vmatpush2.msra.mxu0 0.0
    %6668 = vmatprep.subr.mxu0 0.0
    %6669 = vmatpush2.msra.mxu0 0.0
    %6670 = vmatprep.subr.mxu0 0.0
    %6671 = vmatpush2.msra.mxu0 0.0
    %6672 = vmatprep.subr.mxu0 0.0
    %6673 = vmatpush2.msra.mxu0 0.0
    %6674 = vmatprep.subr.mxu0 0.0
    %6675 = vmatpush2.msra.mxu0 0.0
    %6676 = vmatprep.subr.mxu0 0.0
    %6677 = vmatpush2.msra.mxu0 0.0
    %6678 = vmatprep.subr.mxu0 0.0
    %6679 = vmatpush2.msra.mxu0 0.0
    %6680 = vmatprep.subr.mxu0 0.0
    %6681 = vmatpush2.msra.mxu0 0.0
    %6682 = vmatprep.subr.mxu0 0.0
    %6683 = vmatpush2.msra.mxu0 0.0
    %6684 = vmatprep.subr.mxu0 0.0
    %6685 = vmatpush2.msra.mxu0 0.0
    %6686 = vmatprep.subr.mxu0 0.0
    %6687 = vmatpush2.msra.mxu0 0.0
    %6688 = vmatprep.subr.mxu0 0.0
    %6689 = vmatpush2.msra.mxu0 0.0
    %6690 = vmatprep.subr.mxu0 0.0
    %6691 = vmatpush2.msra.mxu0 0.0
    %6692 = vmatprep.subr.mxu0 0.0
    %6693 = vmatpush2.msra.mxu0 0.0
    %6694 = vmatprep.mubr.f32.mxu0 0.0
    %6695 = vmatmul.mubr.f32.gmra.mxu0 %v6607
    %v6696 = vpop.f32.mrf.mxu0
    %v6697 = vadd.f32 0.0, %v6696
    %v6698 = vpop.f32.mrf.mxu0
    %6699 = vmatprep.mubr.f32.mxu0 0.0
    %6700 = vmatmul.mubr.f32.gmra.mxu0 %v6610
    %v6701 = vpop.f32.mrf.mxu0
    %v6702 = vadd.f32 0.0, %v6701
    %v6703 = vpop.f32.mrf.mxu0
    %6704 = vmatprep.mubr.f32.mxu0 0.0
    %6705 = vmatmul.mubr.f32.gmra.mxu0 %v6613
    %v6706 = vpop.f32.mrf.mxu0
    %v6707 = vadd.f32 0.0, %v6706
    %v6708 = vpop.f32.mrf.mxu0
    %6709 = vmatprep.mubr.f32.mxu0 0.0
    %6710 = vmatmul.mubr.f32.gmra.mxu0 %v6616
    %v6711 = vpop.f32.mrf.mxu0
    %v6712 = vadd.f32 0.0, %v6711
    %v6713 = vpop.f32.mrf.mxu0
    %6714 = vmatprep.mubr.f32.mxu0 0.0
    %6715 = vmatmul.mubr.f32.gmra.mxu0 %v6619
    %v6716 = vpop.f32.mrf.mxu0
    %v6717 = vadd.f32 0.0, %v6716
    %v6718 = vpop.f32.mrf.mxu0
    %6719 = vmatprep.mubr.f32.mxu0 0.0
    %6720 = vmatmul.mubr.f32.gmra.mxu0 %v6622
    %v6721 = vpop.f32.mrf.mxu0
    %v6722 = vadd.f32 0.0, %v6721
    %v6723 = vpop.f32.mrf.mxu0
    %6724 = vmatprep.mubr.f32.mxu0 0.0
    %6725 = vmatmul.mubr.f32.gmra.mxu0 %v6625
    %v6726 = vpop.f32.mrf.mxu0
    %v6727 = vadd.f32 0.0, %v6726
    %v6728 = vpop.f32.mrf.mxu0
    %6729 = vmatprep.mubr.f32.mxu0 0.0
    %6730 = vmatmul.mubr.f32.gmra.mxu0 %v6628
    %v6731 = vpop.f32.mrf.mxu0
    %v6732 = vadd.f32 0.0, %v6731
    %v6733 = vpop.f32.mrf.mxu0
    %6734 = vdwg.mxu0
    %6743 = vrot.lane.b32.xlu0 %v6697, 32
    %v6744 = vpop.permute.xlu0 %6743
    %6745 = vrot.lane.b32.xlu0 %v6702, 32
    %v6746 = vpop.permute.xlu0 %6745
    %6747 = vrot.lane.b32.xlu0 %v6707, 32
    %v6748 = vpop.permute.xlu0 %6747
    %6749 = vrot.lane.b32.xlu0 %v6712, 32
    %v6750 = vpop.permute.xlu0 %6749
    %6751 = vrot.lane.b32.xlu0 %v6717, 32
    %v6752 = vpop.permute.xlu0 %6751
    %6753 = vrot.lane.b32.xlu0 %v6722, 32
    %v6754 = vpop.permute.xlu0 %6753
    %6755 = vrot.lane.b32.xlu0 %v6727, 32
    %v6756 = vpop.permute.xlu0 %6755
    %6757 = vrot.lane.b32.xlu0 %v6732, 32
    %v6758 = vpop.permute.xlu0 %6757
    %v6767 = vadd.f32 %v6598, %v6744
    %v6768 = vadd.f32 %v6599, %v6746
    %v6769 = vadd.f32 %v6600, %v6748
    %v6770 = vadd.f32 %v6601, %v6750
    %v6771 = vadd.f32 %v6602, %v6752
    %v6772 = vadd.f32 %v6603, %v6754
    %v6773 = vadd.f32 %v6604, %v6756
    %v6774 = vadd.f32 %v6605, %v6758
    %v6775 = vmax.f32 %v6767, 0.0
    %v6776 = vmax.f32 %v6768, 0.0
    %v6777 = vmax.f32 %v6769, 0.0
    %v6778 = vmax.f32 %v6770, 0.0
    %v6779 = vmax.f32 %v6771, 0.0
    %v6780 = vmax.f32 %v6772, 0.0
    %v6781 = vmax.f32 %v6773, 0.0
    %v6782 = vmax.f32 %v6774, 0.0
    %6783 = vset.pattern.permute.xlu0 6
    %6784 = vperm.xlu0 %6783, %v1534
    %v6785 = vpop.permute.xlu0 %6784
    %v6787 = vmul.f32 %v6775, %v6785
    %v6788 = vmul.f32 %v6776, %v6785
    %v6789 = vmul.f32 %v6777, %v6785
    %v6790 = vmul.f32 %v6778, %v6785
    %v6791 = vmul.f32 %v6779, %v6785
    %v6792 = vmul.f32 %v6780, %v6785
    %v6793 = vmul.f32 %v6781, %v6785
    %v6794 = vmul.f32 %v6782, %v6785
    %v6795 = vmax.f32 %v6303, %v6787
    %v6796 = vmax.f32 %v6304, %v6788
    %v6797 = vmax.f32 %v6305, %v6789
    %v6798 = vmax.f32 %v6306, %v6790
    %v6799 = vmax.f32 %v6307, %v6791
    %v6800 = vmax.f32 %v6308, %v6792
    %v6801 = vmax.f32 %v6309, %v6793
    %v6802 = vmax.f32 %v6310, %v6794
    %s6803 = scalar_lea.vmem %s5, 448
    %v6804 = vld [vmem:[%s6803] sm:$0xff]
    %v6805 = vld [vmem:[%s6803 + $0x8] sm:$0xff]
    %v6806 = vld [vmem:[%s6803 + $0x10] sm:$0xff]
    %v6807 = vld [vmem:[%s6803 + $0x18] sm:$0xff]
    %v6808 = vld [vmem:[%s6803 + $0x20] sm:$0xff]
    %v6809 = vld [vmem:[%s6803 + $0x28] sm:$0xff]
    %v6810 = vld [vmem:[%s6803 + $0x30] sm:$0xff]
    %v6811 = vld [vmem:[%s6803 + $0x38] sm:$0xff]
    %v6813 = vsel %vm3362, %v6804, 0
    %v6816 = vsel %vm3362, %v6805, 0
    %v6819 = vsel %vm3362, %v6806, 0
    %v6822 = vsel %vm3362, %v6807, 0
    %v6825 = vsel %vm3362, %v6808, 0
    %v6828 = vsel %vm3362, %v6809, 0
    %v6831 = vsel %vm3362, %v6810, 0
    %v6834 = vsel %vm3362, %v6811, 0
    %6836 = vmatprep.subr.mxu0 0.0
    %6837 = vmatpush1.msra.mxu0 0.0
    %6838 = vmatprep.subr.mxu0 0.0
    %6839 = vmatpush1.msra.mxu0 0.0
    %6840 = vmatprep.subr.mxu0 0.0
    %6841 = vmatpush1.msra.mxu0 0.0
    %6842 = vmatprep.subr.mxu0 0.0
    %6843 = vmatpush1.msra.mxu0 0.0
    %6844 = vmatprep.subr.mxu0 0.0
    %6845 = vmatpush1.msra.mxu0 0.0
    %6846 = vmatprep.subr.mxu0 0.0
    %6847 = vmatpush1.msra.mxu0 0.0
    %6848 = vmatprep.subr.mxu0 0.0
    %6849 = vmatpush1.msra.mxu0 0.0
    %6850 = vmatprep.subr.mxu0 0.0
    %6851 = vmatpush1.msra.mxu0 0.0
    %6852 = vmatprep.subr.mxu0 0.0
    %6853 = vmatpush1.msra.mxu0 0.0
    %6854 = vmatprep.subr.mxu0 0.0
    %6855 = vmatpush1.msra.mxu0 0.0
    %6856 = vmatprep.subr.mxu0 0.0
    %6857 = vmatpush1.msra.mxu0 0.0
    %6858 = vmatprep.subr.mxu0 0.0
    %6859 = vmatpush1.msra.mxu0 0.0
    %6860 = vmatprep.subr.mxu0 0.0
    %6861 = vmatpush1.msra.mxu0 0.0
    %6862 = vmatprep.subr.mxu0 0.0
    %6863 = vmatpush1.msra.mxu0 0.0
    %6864 = vmatprep.subr.mxu0 0.0
    %6865 = vmatpush1.msra.mxu0 0.0
    %6866 = vmatprep.subr.mxu0 0.0
    %6867 = vmatpush1.msra.mxu0 %v3389
    %6868 = vmatprep.subr.mxu0 0.0
    %6869 = vmatpush2.msra.mxu0 0.0
    %6870 = vmatprep.subr.mxu0 0.0
    %6871 = vmatpush2.msra.mxu0 0.0
    %6872 = vmatprep.subr.mxu0 0.0
    %6873 = vmatpush2.msra.mxu0 0.0
    %6874 = vmatprep.subr.mxu0 0.0
    %6875 = vmatpush2.msra.mxu0 0.0
    %6876 = vmatprep.subr.mxu0 0.0
    %6877 = vmatpush2.msra.mxu0 0.0
    %6878 = vmatprep.subr.mxu0 0.0
    %6879 = vmatpush2.msra.mxu0 0.0
    %6880 = vmatprep.subr.mxu0 0.0
    %6881 = vmatpush2.msra.mxu0 0.0
    %6882 = vmatprep.subr.mxu0 0.0
    %6883 = vmatpush2.msra.mxu0 0.0
    %6884 = vmatprep.subr.mxu0 0.0
    %6885 = vmatpush2.msra.mxu0 0.0
    %6886 = vmatprep.subr.mxu0 0.0
    %6887 = vmatpush2.msra.mxu0 0.0
    %6888 = vmatprep.subr.mxu0 0.0
    %6889 = vmatpush2.msra.mxu0 0.0
    %6890 = vmatprep.subr.mxu0 0.0
    %6891 = vmatpush2.msra.mxu0 0.0
    %6892 = vmatprep.subr.mxu0 0.0
    %6893 = vmatpush2.msra.mxu0 0.0
    %6894 = vmatprep.subr.mxu0 0.0
    %6895 = vmatpush2.msra.mxu0 0.0
    %6896 = vmatprep.subr.mxu0 0.0
    %6897 = vmatpush2.msra.mxu0 0.0
    %6898 = vmatprep.subr.mxu0 0.0
    %6899 = vmatpush2.msra.mxu0 0.0
    %6900 = vmatprep.mubr.f32.mxu0 0.0
    %6901 = vmatmul.mubr.f32.gmra.mxu0 %v6813
    %v6902 = vpop.f32.mrf.mxu0
    %v6903 = vadd.f32 %v3360, %v6902
    %v6904 = vpop.f32.mrf.mxu0
    %6905 = vmatprep.mubr.f32.mxu0 0.0
    %6906 = vmatmul.mubr.f32.gmra.mxu0 %v6816
    %v6907 = vpop.f32.mrf.mxu0
    %v6908 = vadd.f32 %v3360, %v6907
    %v6909 = vpop.f32.mrf.mxu0
    %6910 = vmatprep.mubr.f32.mxu0 0.0
    %6911 = vmatmul.mubr.f32.gmra.mxu0 %v6819
    %v6912 = vpop.f32.mrf.mxu0
    %v6913 = vadd.f32 %v3360, %v6912
    %v6914 = vpop.f32.mrf.mxu0
    %6915 = vmatprep.mubr.f32.mxu0 0.0
    %6916 = vmatmul.mubr.f32.gmra.mxu0 %v6822
    %v6917 = vpop.f32.mrf.mxu0
    %v6918 = vadd.f32 %v3360, %v6917
    %v6919 = vpop.f32.mrf.mxu0
    %6920 = vmatprep.mubr.f32.mxu0 0.0
    %6921 = vmatmul.mubr.f32.gmra.mxu0 %v6825
    %v6922 = vpop.f32.mrf.mxu0
    %v6923 = vadd.f32 %v3360, %v6922
    %v6924 = vpop.f32.mrf.mxu0
    %6925 = vmatprep.mubr.f32.mxu0 0.0
    %6926 = vmatmul.mubr.f32.gmra.mxu0 %v6828
    %v6927 = vpop.f32.mrf.mxu0
    %v6928 = vadd.f32 %v3360, %v6927
    %v6929 = vpop.f32.mrf.mxu0
    %6930 = vmatprep.mubr.f32.mxu0 0.0
    %6931 = vmatmul.mubr.f32.gmra.mxu0 %v6831
    %v6932 = vpop.f32.mrf.mxu0
    %v6933 = vadd.f32 %v3360, %v6932
    %v6934 = vpop.f32.mrf.mxu0
    %6935 = vmatprep.mubr.f32.mxu0 0.0
    %6936 = vmatmul.mubr.f32.gmra.mxu0 %v6834
    %v6937 = vpop.f32.mrf.mxu0
    %v6938 = vadd.f32 %v3360, %v6937
    %v6939 = vpop.f32.mrf.mxu0
    %6940 = vdwg.mxu0
    %v6941 = vmax.f32 %v6903, 0.0
    %v6942 = vmax.f32 %v6908, 0.0
    %v6943 = vmax.f32 %v6913, 0.0
    %v6944 = vmax.f32 %v6918, 0.0
    %v6945 = vmax.f32 %v6923, 0.0
    %v6946 = vmax.f32 %v6928, 0.0
    %v6947 = vmax.f32 %v6933, 0.0
    %v6948 = vmax.f32 %v6938, 0.0
    %v6950 = vsel %vm141, %v6941, 0
    %v6953 = vsel %vm141, %v6942, 0
    %v6956 = vsel %vm141, %v6943, 0
    %v6959 = vsel %vm141, %v6944, 0
    %v6962 = vsel %vm141, %v6945, 0
    %v6965 = vsel %vm141, %v6946, 0
    %v6968 = vsel %vm141, %v6947, 0
    %v6971 = vsel %vm141, %v6948, 0
    %6973 = vmatprep.subr.mxu0 0.0
    %6974 = vmatpush1.msra.mxu0 0.0
    %6975 = vmatprep.subr.mxu0 0.0
    %6976 = vmatpush1.msra.mxu0 0.0
    %6977 = vmatprep.subr.mxu0 0.0
    %6978 = vmatpush1.msra.mxu0 0.0
    %6979 = vmatprep.subr.mxu0 0.0
    %6980 = vmatpush1.msra.mxu0 0.0
    %6981 = vmatprep.subr.mxu0 0.0
    %6982 = vmatpush1.msra.mxu0 0.0
    %6983 = vmatprep.subr.mxu0 0.0
    %6984 = vmatpush1.msra.mxu0 0.0
    %6985 = vmatprep.subr.mxu0 0.0
    %6986 = vmatpush1.msra.mxu0 0.0
    %6987 = vmatprep.subr.mxu0 0.0
    %6988 = vmatpush1.msra.mxu0 0.0
    %6989 = vmatprep.subr.mxu0 0.0
    %6990 = vmatpush1.msra.mxu0 0.0
    %6991 = vmatprep.subr.mxu0 0.0
    %6992 = vmatpush1.msra.mxu0 0.0
    %6993 = vmatprep.subr.mxu0 0.0
    %6994 = vmatpush1.msra.mxu0 0.0
    %6995 = vmatprep.subr.mxu0 0.0
    %6996 = vmatpush1.msra.mxu0 0.0
    %6997 = vmatprep.subr.mxu0 0.0
    %6998 = vmatpush1.msra.mxu0 0.0
    %6999 = vmatprep.subr.mxu0 0.0
    %7000 = vmatpush1.msra.mxu0 0.0
    %7001 = vmatprep.subr.mxu0 0.0
    %7002 = vmatpush1.msra.mxu0 0.0
    %7003 = vmatprep.subr.mxu0 0.0
    %7004 = vmatpush1.msra.mxu0 %v3504
    %7005 = vmatprep.subr.mxu0 0.0
    %7006 = vmatpush2.msra.mxu0 0.0
    %7007 = vmatprep.subr.mxu0 0.0
    %7008 = vmatpush2.msra.mxu0 0.0
    %7009 = vmatprep.subr.mxu0 0.0
    %7010 = vmatpush2.msra.mxu0 0.0
    %7011 = vmatprep.subr.mxu0 0.0
    %7012 = vmatpush2.msra.mxu0 0.0
    %7013 = vmatprep.subr.mxu0 0.0
    %7014 = vmatpush2.msra.mxu0 0.0
    %7015 = vmatprep.subr.mxu0 0.0
    %7016 = vmatpush2.msra.mxu0 0.0
    %7017 = vmatprep.subr.mxu0 0.0
    %7018 = vmatpush2.msra.mxu0 0.0
    %7019 = vmatprep.subr.mxu0 0.0
    %7020 = vmatpush2.msra.mxu0 0.0
    %7021 = vmatprep.subr.mxu0 0.0
    %7022 = vmatpush2.msra.mxu0 0.0
    %7023 = vmatprep.subr.mxu0 0.0
    %7024 = vmatpush2.msra.mxu0 0.0
    %7025 = vmatprep.subr.mxu0 0.0
    %7026 = vmatpush2.msra.mxu0 0.0
    %7027 = vmatprep.subr.mxu0 0.0
    %7028 = vmatpush2.msra.mxu0 0.0
    %7029 = vmatprep.subr.mxu0 0.0
    %7030 = vmatpush2.msra.mxu0 0.0
    %7031 = vmatprep.subr.mxu0 0.0
    %7032 = vmatpush2.msra.mxu0 0.0
    %7033 = vmatprep.subr.mxu0 0.0
    %7034 = vmatpush2.msra.mxu0 0.0
    %7035 = vmatprep.subr.mxu0 0.0
    %7036 = vmatpush2.msra.mxu0 0.0
    %7037 = vmatprep.mubr.f32.mxu0 0.0
    %7038 = vmatmul.mubr.f32.gmra.mxu0 %v6950
    %v7039 = vpop.f32.mrf.mxu0
    %v7040 = vadd.f32 %v3510, %v7039
    %v7041 = vpop.f32.mrf.mxu0
    %7042 = vmatprep.mubr.f32.mxu0 0.0
    %7043 = vmatmul.mubr.f32.gmra.mxu0 %v6953
    %v7044 = vpop.f32.mrf.mxu0
    %v7045 = vadd.f32 %v3510, %v7044
    %v7046 = vpop.f32.mrf.mxu0
    %7047 = vmatprep.mubr.f32.mxu0 0.0
    %7048 = vmatmul.mubr.f32.gmra.mxu0 %v6956
    %v7049 = vpop.f32.mrf.mxu0
    %v7050 = vadd.f32 %v3510, %v7049
    %v7051 = vpop.f32.mrf.mxu0
    %7052 = vmatprep.mubr.f32.mxu0 0.0
    %7053 = vmatmul.mubr.f32.gmra.mxu0 %v6959
    %v7054 = vpop.f32.mrf.mxu0
    %v7055 = vadd.f32 %v3510, %v7054
    %v7056 = vpop.f32.mrf.mxu0
    %7057 = vmatprep.mubr.f32.mxu0 0.0
    %7058 = vmatmul.mubr.f32.gmra.mxu0 %v6962
    %v7059 = vpop.f32.mrf.mxu0
    %v7060 = vadd.f32 %v3510, %v7059
    %v7061 = vpop.f32.mrf.mxu0
    %7062 = vmatprep.mubr.f32.mxu0 0.0
    %7063 = vmatmul.mubr.f32.gmra.mxu0 %v6965
    %v7064 = vpop.f32.mrf.mxu0
    %v7065 = vadd.f32 %v3510, %v7064
    %v7066 = vpop.f32.mrf.mxu0
    %7067 = vmatprep.mubr.f32.mxu0 0.0
    %7068 = vmatmul.mubr.f32.gmra.mxu0 %v6968
    %v7069 = vpop.f32.mrf.mxu0
    %v7070 = vadd.f32 %v3510, %v7069
    %v7071 = vpop.f32.mrf.mxu0
    %7072 = vmatprep.mubr.f32.mxu0 0.0
    %7073 = vmatmul.mubr.f32.gmra.mxu0 %v6971
    %v7074 = vpop.f32.mrf.mxu0
    %v7075 = vadd.f32 %v3510, %v7074
    %v7076 = vpop.f32.mrf.mxu0
    %7077 = vdwg.mxu0
    %v7078 = vmax.f32 %v7040, 0.0
    %v7079 = vmax.f32 %v7045, 0.0
    %v7080 = vmax.f32 %v7050, 0.0
    %v7081 = vmax.f32 %v7055, 0.0
    %v7082 = vmax.f32 %v7060, 0.0
    %v7083 = vmax.f32 %v7065, 0.0
    %v7084 = vmax.f32 %v7070, 0.0
    %v7085 = vmax.f32 %v7075, 0.0
    %7087 = vrot.lane.b32.xlu0 %v1530, 96
    %v7088 = vpop.permute.xlu0 %7087
    %v7090 = vadd.f32 %v1495, %v7088
    %v7091 = vadd.f32 %v1500, %v7088
    %v7092 = vadd.f32 %v1505, %v7088
    %v7093 = vadd.f32 %v1510, %v7088
    %v7094 = vadd.f32 %v1515, %v7088
    %v7095 = vadd.f32 %v1520, %v7088
    %v7096 = vadd.f32 %v1525, %v7088
    %v7097 = vadd.f32 %v1530, %v7088
    %v7099 = vsel %vm711, %v7078, 0
    %v7102 = vsel %vm711, %v7079, 0
    %v7105 = vsel %vm711, %v7080, 0
    %v7108 = vsel %vm711, %v7081, 0
    %v7111 = vsel %vm711, %v7082, 0
    %v7114 = vsel %vm711, %v7083, 0
    %v7117 = vsel %vm711, %v7084, 0
    %v7120 = vsel %vm711, %v7085, 0
    %7122 = vmatprep.subr.mxu0 0.0
    %7123 = vmatpush1.msra.mxu0 0.0
    %7124 = vmatprep.subr.mxu0 0.0
    %7125 = vmatpush1.msra.mxu0 0.0
    %7126 = vmatprep.subr.mxu0 0.0
    %7127 = vmatpush1.msra.mxu0 0.0
    %7128 = vmatprep.subr.mxu0 0.0
    %7129 = vmatpush1.msra.mxu0 0.0
    %7130 = vmatprep.subr.mxu0 0.0
    %7131 = vmatpush1.msra.mxu0 0.0
    %7132 = vmatprep.subr.mxu0 0.0
    %7133 = vmatpush1.msra.mxu0 0.0
    %7134 = vmatprep.subr.mxu0 0.0
    %7135 = vmatpush1.msra.mxu0 0.0
    %7136 = vmatprep.subr.mxu0 0.0
    %7137 = vmatpush1.msra.mxu0 0.0
    %7138 = vmatprep.subr.mxu0 0.0
    %7139 = vmatpush1.msra.mxu0 0.0
    %7140 = vmatprep.subr.mxu0 0.0
    %7141 = vmatpush1.msra.mxu0 0.0
    %7142 = vmatprep.subr.mxu0 0.0
    %7143 = vmatpush1.msra.mxu0 0.0
    %7144 = vmatprep.subr.mxu0 0.0
    %7145 = vmatpush1.msra.mxu0 0.0
    %7146 = vmatprep.subr.mxu0 0.0
    %7147 = vmatpush1.msra.mxu0 %v3345
    %7148 = vmatprep.subr.mxu0 0.0
    %7149 = vmatpush1.msra.mxu0 %v3344
    %7150 = vmatprep.subr.mxu0 0.0
    %7151 = vmatpush1.msra.mxu0 %v3343
    %7152 = vmatprep.subr.mxu0 0.0
    %7153 = vmatpush1.msra.mxu0 %v3342
    %7154 = vmatprep.subr.mxu0 0.0
    %7155 = vmatpush2.msra.mxu0 0.0
    %7156 = vmatprep.subr.mxu0 0.0
    %7157 = vmatpush2.msra.mxu0 0.0
    %7158 = vmatprep.subr.mxu0 0.0
    %7159 = vmatpush2.msra.mxu0 0.0
    %7160 = vmatprep.subr.mxu0 0.0
    %7161 = vmatpush2.msra.mxu0 0.0
    %7162 = vmatprep.subr.mxu0 0.0
    %7163 = vmatpush2.msra.mxu0 0.0
    %7164 = vmatprep.subr.mxu0 0.0
    %7165 = vmatpush2.msra.mxu0 0.0
    %7166 = vmatprep.subr.mxu0 0.0
    %7167 = vmatpush2.msra.mxu0 0.0
    %7168 = vmatprep.subr.mxu0 0.0
    %7169 = vmatpush2.msra.mxu0 0.0
    %7170 = vmatprep.subr.mxu0 0.0
    %7171 = vmatpush2.msra.mxu0 0.0
    %7172 = vmatprep.subr.mxu0 0.0
    %7173 = vmatpush2.msra.mxu0 0.0
    %7174 = vmatprep.subr.mxu0 0.0
    %7175 = vmatpush2.msra.mxu0 0.0
    %7176 = vmatprep.subr.mxu0 0.0
    %7177 = vmatpush2.msra.mxu0 0.0
    %7178 = vmatprep.subr.mxu0 0.0
    %7179 = vmatpush2.msra.mxu0 0.0
    %7180 = vmatprep.subr.mxu0 0.0
    %7181 = vmatpush2.msra.mxu0 0.0
    %7182 = vmatprep.subr.mxu0 0.0
    %7183 = vmatpush2.msra.mxu0 0.0
    %7184 = vmatprep.subr.mxu0 0.0
    %7185 = vmatpush2.msra.mxu0 0.0
    %7186 = vmatprep.mubr.f32.mxu0 0.0
    %7187 = vmatmul.mubr.f32.gmra.mxu0 %v7099
    %v7188 = vpop.f32.mrf.mxu0
    %v7189 = vadd.f32 0.0, %v7188
    %v7190 = vpop.f32.mrf.mxu0
    %7191 = vmatprep.mubr.f32.mxu0 0.0
    %7192 = vmatmul.mubr.f32.gmra.mxu0 %v7102
    %v7193 = vpop.f32.mrf.mxu0
    %v7194 = vadd.f32 0.0, %v7193
    %v7195 = vpop.f32.mrf.mxu0
    %7196 = vmatprep.mubr.f32.mxu0 0.0
    %7197 = vmatmul.mubr.f32.gmra.mxu0 %v7105
    %v7198 = vpop.f32.mrf.mxu0
    %v7199 = vadd.f32 0.0, %v7198
    %v7200 = vpop.f32.mrf.mxu0
    %7201 = vmatprep.mubr.f32.mxu0 0.0
    %7202 = vmatmul.mubr.f32.gmra.mxu0 %v7108
    %v7203 = vpop.f32.mrf.mxu0
    %v7204 = vadd.f32 0.0, %v7203
    %v7205 = vpop.f32.mrf.mxu0
    %7206 = vmatprep.mubr.f32.mxu0 0.0
    %7207 = vmatmul.mubr.f32.gmra.mxu0 %v7111
    %v7208 = vpop.f32.mrf.mxu0
    %v7209 = vadd.f32 0.0, %v7208
    %v7210 = vpop.f32.mrf.mxu0
    %7211 = vmatprep.mubr.f32.mxu0 0.0
    %7212 = vmatmul.mubr.f32.gmra.mxu0 %v7114
    %v7213 = vpop.f32.mrf.mxu0
    %v7214 = vadd.f32 0.0, %v7213
    %v7215 = vpop.f32.mrf.mxu0
    %7216 = vmatprep.mubr.f32.mxu0 0.0
    %7217 = vmatmul.mubr.f32.gmra.mxu0 %v7117
    %v7218 = vpop.f32.mrf.mxu0
    %v7219 = vadd.f32 0.0, %v7218
    %v7220 = vpop.f32.mrf.mxu0
    %7221 = vmatprep.mubr.f32.mxu0 0.0
    %7222 = vmatmul.mubr.f32.gmra.mxu0 %v7120
    %v7223 = vpop.f32.mrf.mxu0
    %v7224 = vadd.f32 0.0, %v7223
    %v7225 = vpop.f32.mrf.mxu0
    %7226 = vdwg.mxu0
    %7235 = vrot.lane.b32.xlu0 %v7189, 32
    %v7236 = vpop.permute.xlu0 %7235
    %7237 = vrot.lane.b32.xlu0 %v7194, 32
    %v7238 = vpop.permute.xlu0 %7237
    %7239 = vrot.lane.b32.xlu0 %v7199, 32
    %v7240 = vpop.permute.xlu0 %7239
    %7241 = vrot.lane.b32.xlu0 %v7204, 32
    %v7242 = vpop.permute.xlu0 %7241
    %7243 = vrot.lane.b32.xlu0 %v7209, 32
    %v7244 = vpop.permute.xlu0 %7243
    %7245 = vrot.lane.b32.xlu0 %v7214, 32
    %v7246 = vpop.permute.xlu0 %7245
    %7247 = vrot.lane.b32.xlu0 %v7219, 32
    %v7248 = vpop.permute.xlu0 %7247
    %7249 = vrot.lane.b32.xlu0 %v7224, 32
    %v7250 = vpop.permute.xlu0 %7249
    %v7259 = vadd.f32 %v7090, %v7236
    %v7260 = vadd.f32 %v7091, %v7238
    %v7261 = vadd.f32 %v7092, %v7240
    %v7262 = vadd.f32 %v7093, %v7242
    %v7263 = vadd.f32 %v7094, %v7244
    %v7264 = vadd.f32 %v7095, %v7246
    %v7265 = vadd.f32 %v7096, %v7248
    %v7266 = vadd.f32 %v7097, %v7250
    %v7267 = vmax.f32 %v7259, 0.0
    %v7268 = vmax.f32 %v7260, 0.0
    %v7269 = vmax.f32 %v7261, 0.0
    %v7270 = vmax.f32 %v7262, 0.0
    %v7271 = vmax.f32 %v7263, 0.0
    %v7272 = vmax.f32 %v7264, 0.0
    %v7273 = vmax.f32 %v7265, 0.0
    %v7274 = vmax.f32 %v7266, 0.0
    %7275 = vset.pattern.permute.xlu0 7
    %7276 = vperm.xlu0 %7275, %v1534
    %v7277 = vpop.permute.xlu0 %7276
    %v7279 = vmul.f32 %v7267, %v7277
    %v7280 = vmul.f32 %v7268, %v7277
    %v7281 = vmul.f32 %v7269, %v7277
    %v7282 = vmul.f32 %v7270, %v7277
    %v7283 = vmul.f32 %v7271, %v7277
    %v7284 = vmul.f32 %v7272, %v7277
    %v7285 = vmul.f32 %v7273, %v7277
    %v7286 = vmul.f32 %v7274, %v7277
    %v7287 = vmax.f32 %v6795, %v7279
    %v7288 = vmax.f32 %v6796, %v7280
    %v7289 = vmax.f32 %v6797, %v7281
    %v7290 = vmax.f32 %v6798, %v7282
    %v7291 = vmax.f32 %v6799, %v7283
    %v7292 = vmax.f32 %v6800, %v7284
    %v7293 = vmax.f32 %v6801, %v7285
    %v7294 = vmax.f32 %v6802, %v7286
    %v7295 = vld [vmem:[%s8 + $0x78] sm:$0xff]
    %v7296 = vld [vmem:[%s8 + $0x140] sm:$0xff]
    %v7297 = vld [vmem:[%s8 + $0x208] sm:$0xff]
    %v7298 = vld [vmem:[%s8 + $0x2d0] sm:$0xff]
    %v7300 = vsel %vm711, %v1082, 0
    %v7303 = vsel %vm711, %v1083, 0
    %v7306 = vsel %vm711, %v1084, 0
    %v7309 = vsel %vm711, %v1085, 0
    %v7312 = vsel %vm711, %v1086, 0
    %v7315 = vsel %vm711, %v1087, 0
    %v7318 = vsel %vm711, %v1088, 0
    %v7321 = vsel %vm711, %v1089, 0
    %7323 = vmatprep.subr.mxu0 0.0
    %7324 = vmatpush1.msra.mxu0 0.0
    %7325 = vmatprep.subr.mxu0 0.0
    %7326 = vmatpush1.msra.mxu0 0.0
    %7327 = vmatprep.subr.mxu0 0.0
    %7328 = vmatpush1.msra.mxu0 0.0
    %7329 = vmatprep.subr.mxu0 0.0
    %7330 = vmatpush1.msra.mxu0 0.0
    %7331 = vmatprep.subr.mxu0 0.0
    %7332 = vmatpush1.msra.mxu0 0.0
    %7333 = vmatprep.subr.mxu0 0.0
    %7334 = vmatpush1.msra.mxu0 0.0
    %7335 = vmatprep.subr.mxu0 0.0
    %7336 = vmatpush1.msra.mxu0 0.0
    %7337 = vmatprep.subr.mxu0 0.0
    %7338 = vmatpush1.msra.mxu0 0.0
    %7339 = vmatprep.subr.mxu0 0.0
    %7340 = vmatpush1.msra.mxu0 0.0
    %7341 = vmatprep.subr.mxu0 0.0
    %7342 = vmatpush1.msra.mxu0 0.0
    %7343 = vmatprep.subr.mxu0 0.0
    %7344 = vmatpush1.msra.mxu0 0.0
    %7345 = vmatprep.subr.mxu0 0.0
    %7346 = vmatpush1.msra.mxu0 0.0
    %7347 = vmatprep.subr.mxu0 0.0
    %7348 = vmatpush1.msra.mxu0 %v7298
    %7349 = vmatprep.subr.mxu0 0.0
    %7350 = vmatpush1.msra.mxu0 %v7297
    %7351 = vmatprep.subr.mxu0 0.0
    %7352 = vmatpush1.msra.mxu0 %v7296
    %7353 = vmatprep.subr.mxu0 0.0
    %7354 = vmatpush1.msra.mxu0 %v7295
    %7355 = vmatprep.subr.mxu0 0.0
    %7356 = vmatpush2.msra.mxu0 0.0
    %7357 = vmatprep.subr.mxu0 0.0
    %7358 = vmatpush2.msra.mxu0 0.0
    %7359 = vmatprep.subr.mxu0 0.0
    %7360 = vmatpush2.msra.mxu0 0.0
    %7361 = vmatprep.subr.mxu0 0.0
    %7362 = vmatpush2.msra.mxu0 0.0
    %7363 = vmatprep.subr.mxu0 0.0
    %7364 = vmatpush2.msra.mxu0 0.0
    %7365 = vmatprep.subr.mxu0 0.0
    %7366 = vmatpush2.msra.mxu0 0.0
    %7367 = vmatprep.subr.mxu0 0.0
    %7368 = vmatpush2.msra.mxu0 0.0
    %7369 = vmatprep.subr.mxu0 0.0
    %7370 = vmatpush2.msra.mxu0 0.0
    %7371 = vmatprep.subr.mxu0 0.0
    %7372 = vmatpush2.msra.mxu0 0.0
    %7373 = vmatprep.subr.mxu0 0.0
    %7374 = vmatpush2.msra.mxu0 0.0
    %7375 = vmatprep.subr.mxu0 0.0
    %7376 = vmatpush2.msra.mxu0 0.0
    %7377 = vmatprep.subr.mxu0 0.0
    %7378 = vmatpush2.msra.mxu0 0.0
    %7379 = vmatprep.subr.mxu0 0.0
    %7380 = vmatpush2.msra.mxu0 0.0
    %7381 = vmatprep.subr.mxu0 0.0
    %7382 = vmatpush2.msra.mxu0 0.0
    %7383 = vmatprep.subr.mxu0 0.0
    %7384 = vmatpush2.msra.mxu0 0.0
    %7385 = vmatprep.subr.mxu0 0.0
    %7386 = vmatpush2.msra.mxu0 0.0
    %7387 = vmatprep.mubr.f32.mxu0 0.0
    %7388 = vmatmul.mubr.f32.gmra.mxu0 %v7300
    %v7389 = vpop.f32.mrf.mxu0
    %v7390 = vadd.f32 0.0, %v7389
    %v7391 = vpop.f32.mrf.mxu0
    %7392 = vmatprep.mubr.f32.mxu0 0.0
    %7393 = vmatmul.mubr.f32.gmra.mxu0 %v7303
    %v7394 = vpop.f32.mrf.mxu0
    %v7395 = vadd.f32 0.0, %v7394
    %v7396 = vpop.f32.mrf.mxu0
    %7397 = vmatprep.mubr.f32.mxu0 0.0
    %7398 = vmatmul.mubr.f32.gmra.mxu0 %v7306
    %v7399 = vpop.f32.mrf.mxu0
    %v7400 = vadd.f32 0.0, %v7399
    %v7401 = vpop.f32.mrf.mxu0
    %7402 = vmatprep.mubr.f32.mxu0 0.0
    %7403 = vmatmul.mubr.f32.gmra.mxu0 %v7309
    %v7404 = vpop.f32.mrf.mxu0
    %v7405 = vadd.f32 0.0, %v7404
    %v7406 = vpop.f32.mrf.mxu0
    %7407 = vmatprep.mubr.f32.mxu0 0.0
    %7408 = vmatmul.mubr.f32.gmra.mxu0 %v7312
    %v7409 = vpop.f32.mrf.mxu0
    %v7410 = vadd.f32 0.0, %v7409
    %v7411 = vpop.f32.mrf.mxu0
    %7412 = vmatprep.mubr.f32.mxu0 0.0
    %7413 = vmatmul.mubr.f32.gmra.mxu0 %v7315
    %v7414 = vpop.f32.mrf.mxu0
    %v7415 = vadd.f32 0.0, %v7414
    %v7416 = vpop.f32.mrf.mxu0
    %7417 = vmatprep.mubr.f32.mxu0 0.0
    %7418 = vmatmul.mubr.f32.gmra.mxu0 %v7318
    %v7419 = vpop.f32.mrf.mxu0
    %v7420 = vadd.f32 0.0, %v7419
    %v7421 = vpop.f32.mrf.mxu0
    %7422 = vmatprep.mubr.f32.mxu0 0.0
    %7423 = vmatmul.mubr.f32.gmra.mxu0 %v7321
    %v7424 = vpop.f32.mrf.mxu0
    %v7425 = vadd.f32 0.0, %v7424
    %v7426 = vpop.f32.mrf.mxu0
    %7427 = vdwg.mxu0
    %7436 = vrot.lane.b32.xlu0 %v7390, 96
    %v7437 = vpop.permute.xlu0 %7436
    %7438 = vrot.lane.b32.xlu0 %v7395, 96
    %v7439 = vpop.permute.xlu0 %7438
    %7440 = vrot.lane.b32.xlu0 %v7400, 96
    %v7441 = vpop.permute.xlu0 %7440
    %7442 = vrot.lane.b32.xlu0 %v7405, 96
    %v7443 = vpop.permute.xlu0 %7442
    %7444 = vrot.lane.b32.xlu0 %v7410, 96
    %v7445 = vpop.permute.xlu0 %7444
    %7446 = vrot.lane.b32.xlu0 %v7415, 96
    %v7447 = vpop.permute.xlu0 %7446
    %7448 = vrot.lane.b32.xlu0 %v7420, 96
    %v7449 = vpop.permute.xlu0 %7448
    %7450 = vrot.lane.b32.xlu0 %v7425, 96
    %v7451 = vpop.permute.xlu0 %7450
    %v7460 = vadd.f32 %v1495, %v7437
    %v7461 = vadd.f32 %v1500, %v7439
    %v7462 = vadd.f32 %v1505, %v7441
    %v7463 = vadd.f32 %v1510, %v7443
    %v7464 = vadd.f32 %v1515, %v7445
    %v7465 = vadd.f32 %v1520, %v7447
    %v7466 = vadd.f32 %v1525, %v7449
    %v7467 = vadd.f32 %v1530, %v7451
    %v7468 = vld [vmem:[%s8 + $0x80] sm:$0xff]
    %v7469 = vld [vmem:[%s8 + $0x148] sm:$0xff]
    %v7470 = vld [vmem:[%s8 + $0x210] sm:$0xff]
    %v7471 = vld [vmem:[%s8 + $0x2d8] sm:$0xff]
    %v7473 = vsel %vm711, %v3334, 0
    %v7476 = vsel %vm711, %v3335, 0
    %v7479 = vsel %vm711, %v3336, 0
    %v7482 = vsel %vm711, %v3337, 0
    %v7485 = vsel %vm711, %v3338, 0
    %v7488 = vsel %vm711, %v3339, 0
    %v7491 = vsel %vm711, %v3340, 0
    %v7494 = vsel %vm711, %v3341, 0
    %7496 = vmatprep.subr.mxu0 0.0
    %7497 = vmatpush1.msra.mxu0 0.0
    %7498 = vmatprep.subr.mxu0 0.0
    %7499 = vmatpush1.msra.mxu0 0.0
    %7500 = vmatprep.subr.mxu0 0.0
    %7501 = vmatpush1.msra.mxu0 0.0
    %7502 = vmatprep.subr.mxu0 0.0
    %7503 = vmatpush1.msra.mxu0 0.0
    %7504 = vmatprep.subr.mxu0 0.0
    %7505 = vmatpush1.msra.mxu0 0.0
    %7506 = vmatprep.subr.mxu0 0.0
    %7507 = vmatpush1.msra.mxu0 0.0
    %7508 = vmatprep.subr.mxu0 0.0
    %7509 = vmatpush1.msra.mxu0 0.0
    %7510 = vmatprep.subr.mxu0 0.0
    %7511 = vmatpush1.msra.mxu0 0.0
    %7512 = vmatprep.subr.mxu0 0.0
    %7513 = vmatpush1.msra.mxu0 0.0
    %7514 = vmatprep.subr.mxu0 0.0
    %7515 = vmatpush1.msra.mxu0 0.0
    %7516 = vmatprep.subr.mxu0 0.0
    %7517 = vmatpush1.msra.mxu0 0.0
    %7518 = vmatprep.subr.mxu0 0.0
    %7519 = vmatpush1.msra.mxu0 0.0
    %7520 = vmatprep.subr.mxu0 0.0
    %7521 = vmatpush1.msra.mxu0 %v7471
    %7522 = vmatprep.subr.mxu0 0.0
    %7523 = vmatpush1.msra.mxu0 %v7470
    %7524 = vmatprep.subr.mxu0 0.0
    %7525 = vmatpush1.msra.mxu0 %v7469
    %7526 = vmatprep.subr.mxu0 0.0
    %7527 = vmatpush1.msra.mxu0 %v7468
    %7528 = vmatprep.subr.mxu0 0.0
    %7529 = vmatpush2.msra.mxu0 0.0
    %7530 = vmatprep.subr.mxu0 0.0
    %7531 = vmatpush2.msra.mxu0 0.0
    %7532 = vmatprep.subr.mxu0 0.0
    %7533 = vmatpush2.msra.mxu0 0.0
    %7534 = vmatprep.subr.mxu0 0.0
    %7535 = vmatpush2.msra.mxu0 0.0
    %7536 = vmatprep.subr.mxu0 0.0
    %7537 = vmatpush2.msra.mxu0 0.0
    %7538 = vmatprep.subr.mxu0 0.0
    %7539 = vmatpush2.msra.mxu0 0.0
    %7540 = vmatprep.subr.mxu0 0.0
    %7541 = vmatpush2.msra.mxu0 0.0
    %7542 = vmatprep.subr.mxu0 0.0
    %7543 = vmatpush2.msra.mxu0 0.0
    %7544 = vmatprep.subr.mxu0 0.0
    %7545 = vmatpush2.msra.mxu0 0.0
    %7546 = vmatprep.subr.mxu0 0.0
    %7547 = vmatpush2.msra.mxu0 0.0
    %7548 = vmatprep.subr.mxu0 0.0
    %7549 = vmatpush2.msra.mxu0 0.0
    %7550 = vmatprep.subr.mxu0 0.0
    %7551 = vmatpush2.msra.mxu0 0.0
    %7552 = vmatprep.subr.mxu0 0.0
    %7553 = vmatpush2.msra.mxu0 0.0
    %7554 = vmatprep.subr.mxu0 0.0
    %7555 = vmatpush2.msra.mxu0 0.0
    %7556 = vmatprep.subr.mxu0 0.0
    %7557 = vmatpush2.msra.mxu0 0.0
    %7558 = vmatprep.subr.mxu0 0.0
    %7559 = vmatpush2.msra.mxu0 0.0
    %7560 = vmatprep.mubr.f32.mxu0 0.0
    %7561 = vmatmul.mubr.f32.gmra.mxu0 %v7473
    %v7562 = vpop.f32.mrf.mxu0
    %v7563 = vadd.f32 0.0, %v7562
    %v7564 = vpop.f32.mrf.mxu0
    %7565 = vmatprep.mubr.f32.mxu0 0.0
    %7566 = vmatmul.mubr.f32.gmra.mxu0 %v7476
    %v7567 = vpop.f32.mrf.mxu0
    %v7568 = vadd.f32 0.0, %v7567
    %v7569 = vpop.f32.mrf.mxu0
    %7570 = vmatprep.mubr.f32.mxu0 0.0
    %7571 = vmatmul.mubr.f32.gmra.mxu0 %v7479
    %v7572 = vpop.f32.mrf.mxu0
    %v7573 = vadd.f32 0.0, %v7572
    %v7574 = vpop.f32.mrf.mxu0
    %7575 = vmatprep.mubr.f32.mxu0 0.0
    %7576 = vmatmul.mubr.f32.gmra.mxu0 %v7482
    %v7577 = vpop.f32.mrf.mxu0
    %v7578 = vadd.f32 0.0, %v7577
    %v7579 = vpop.f32.mrf.mxu0
    %7580 = vmatprep.mubr.f32.mxu0 0.0
    %7581 = vmatmul.mubr.f32.gmra.mxu0 %v7485
    %v7582 = vpop.f32.mrf.mxu0
    %v7583 = vadd.f32 0.0, %v7582
    %v7584 = vpop.f32.mrf.mxu0
    %7585 = vmatprep.mubr.f32.mxu0 0.0
    %7586 = vmatmul.mubr.f32.gmra.mxu0 %v7488
    %v7587 = vpop.f32.mrf.mxu0
    %v7588 = vadd.f32 0.0, %v7587
    %v7589 = vpop.f32.mrf.mxu0
    %7590 = vmatprep.mubr.f32.mxu0 0.0
    %7591 = vmatmul.mubr.f32.gmra.mxu0 %v7491
    %v7592 = vpop.f32.mrf.mxu0
    %v7593 = vadd.f32 0.0, %v7592
    %v7594 = vpop.f32.mrf.mxu0
    %7595 = vmatprep.mubr.f32.mxu0 0.0
    %7596 = vmatmul.mubr.f32.gmra.mxu0 %v7494
    %v7597 = vpop.f32.mrf.mxu0
    %v7598 = vadd.f32 0.0, %v7597
    %v7599 = vpop.f32.mrf.mxu0
    %7600 = vdwg.mxu0
    %7609 = vrot.lane.b32.xlu0 %v7563, 96
    %v7610 = vpop.permute.xlu0 %7609
    %7611 = vrot.lane.b32.xlu0 %v7568, 96
    %v7612 = vpop.permute.xlu0 %7611
    %7613 = vrot.lane.b32.xlu0 %v7573, 96
    %v7614 = vpop.permute.xlu0 %7613
    %7615 = vrot.lane.b32.xlu0 %v7578, 96
    %v7616 = vpop.permute.xlu0 %7615
    %7617 = vrot.lane.b32.xlu0 %v7583, 96
    %v7618 = vpop.permute.xlu0 %7617
    %7619 = vrot.lane.b32.xlu0 %v7588, 96
    %v7620 = vpop.permute.xlu0 %7619
    %7621 = vrot.lane.b32.xlu0 %v7593, 96
    %v7622 = vpop.permute.xlu0 %7621
    %7623 = vrot.lane.b32.xlu0 %v7598, 96
    %v7624 = vpop.permute.xlu0 %7623
    %v7633 = vadd.f32 %v7460, %v7610
    %v7634 = vadd.f32 %v7461, %v7612
    %v7635 = vadd.f32 %v7462, %v7614
    %v7636 = vadd.f32 %v7463, %v7616
    %v7637 = vadd.f32 %v7464, %v7618
    %v7638 = vadd.f32 %v7465, %v7620
    %v7639 = vadd.f32 %v7466, %v7622
    %v7640 = vadd.f32 %v7467, %v7624
    %v7641 = vld [vmem:[%s8 + $0x88] sm:$0xff]
    %v7642 = vld [vmem:[%s8 + $0x150] sm:$0xff]
    %v7643 = vld [vmem:[%s8 + $0x218] sm:$0xff]
    %v7644 = vld [vmem:[%s8 + $0x2e0] sm:$0xff]
    %7653 = vrot.lane.b32.xlu0 %v7287, 96
    %v7654 = vpop.permute.xlu0 %7653
    %7655 = vrot.lane.b32.xlu0 %v7288, 96
    %v7656 = vpop.permute.xlu0 %7655
    %7657 = vrot.lane.b32.xlu0 %v7289, 96
    %v7658 = vpop.permute.xlu0 %7657
    %7659 = vrot.lane.b32.xlu0 %v7290, 96
    %v7660 = vpop.permute.xlu0 %7659
    %7661 = vrot.lane.b32.xlu0 %v7291, 96
    %v7662 = vpop.permute.xlu0 %7661
    %7663 = vrot.lane.b32.xlu0 %v7292, 96
    %v7664 = vpop.permute.xlu0 %7663
    %7665 = vrot.lane.b32.xlu0 %v7293, 96
    %v7666 = vpop.permute.xlu0 %7665
    %7667 = vrot.lane.b32.xlu0 %v7294, 96
    %v7668 = vpop.permute.xlu0 %7667
    %v7669 = vsel %vm711, %v7654, 0
    %v7671 = vsel %vm711, %v7656, 0
    %v7673 = vsel %vm711, %v7658, 0
    %v7675 = vsel %vm711, %v7660, 0
    %v7677 = vsel %vm711, %v7662, 0
    %v7679 = vsel %vm711, %v7664, 0
    %v7681 = vsel %vm711, %v7666, 0
    %v7683 = vsel %vm711, %v7668, 0
    %7685 = vmatprep.subr.mxu0 0.0
    %7686 = vmatpush1.msra.mxu0 0.0
    %7687 = vmatprep.subr.mxu0 0.0
    %7688 = vmatpush1.msra.mxu0 0.0
    %7689 = vmatprep.subr.mxu0 0.0
    %7690 = vmatpush1.msra.mxu0 0.0
    %7691 = vmatprep.subr.mxu0 0.0
    %7692 = vmatpush1.msra.mxu0 0.0
    %7693 = vmatprep.subr.mxu0 0.0
    %7694 = vmatpush1.msra.mxu0 0.0
    %7695 = vmatprep.subr.mxu0 0.0
    %7696 = vmatpush1.msra.mxu0 0.0
    %7697 = vmatprep.subr.mxu0 0.0
    %7698 = vmatpush1.msra.mxu0 0.0
    %7699 = vmatprep.subr.mxu0 0.0
    %7700 = vmatpush1.msra.mxu0 0.0
    %7701 = vmatprep.subr.mxu0 0.0
    %7702 = vmatpush1.msra.mxu0 0.0
    %7703 = vmatprep.subr.mxu0 0.0
    %7704 = vmatpush1.msra.mxu0 0.0
    %7705 = vmatprep.subr.mxu0 0.0
    %7706 = vmatpush1.msra.mxu0 0.0
    %7707 = vmatprep.subr.mxu0 0.0
    %7708 = vmatpush1.msra.mxu0 0.0
    %7709 = vmatprep.subr.mxu0 0.0
    %7710 = vmatpush1.msra.mxu0 %v7644
    %7711 = vmatprep.subr.mxu0 0.0
    %7712 = vmatpush1.msra.mxu0 %v7643
    %7713 = vmatprep.subr.mxu0 0.0
    %7714 = vmatpush1.msra.mxu0 %v7642
    %7715 = vmatprep.subr.mxu0 0.0
    %7716 = vmatpush1.msra.mxu0 %v7641
    %7717 = vmatprep.subr.mxu0 0.0
    %7718 = vmatpush2.msra.mxu0 0.0
    %7719 = vmatprep.subr.mxu0 0.0
    %7720 = vmatpush2.msra.mxu0 0.0
    %7721 = vmatprep.subr.mxu0 0.0
    %7722 = vmatpush2.msra.mxu0 0.0
    %7723 = vmatprep.subr.mxu0 0.0
    %7724 = vmatpush2.msra.mxu0 0.0
    %7725 = vmatprep.subr.mxu0 0.0
    %7726 = vmatpush2.msra.mxu0 0.0
    %7727 = vmatprep.subr.mxu0 0.0
    %7728 = vmatpush2.msra.mxu0 0.0
    %7729 = vmatprep.subr.mxu0 0.0
    %7730 = vmatpush2.msra.mxu0 0.0
    %7731 = vmatprep.subr.mxu0 0.0
    %7732 = vmatpush2.msra.mxu0 0.0
    %7733 = vmatprep.subr.mxu0 0.0
    %7734 = vmatpush2.msra.mxu0 0.0
    %7735 = vmatprep.subr.mxu0 0.0
    %7736 = vmatpush2.msra.mxu0 0.0
    %7737 = vmatprep.subr.mxu0 0.0
    %7738 = vmatpush2.msra.mxu0 0.0
    %7739 = vmatprep.subr.mxu0 0.0
    %7740 = vmatpush2.msra.mxu0 0.0
    %7741 = vmatprep.subr.mxu0 0.0
    %7742 = vmatpush2.msra.mxu0 0.0
    %7743 = vmatprep.subr.mxu0 0.0
    %7744 = vmatpush2.msra.mxu0 0.0
    %7745 = vmatprep.subr.mxu0 0.0
    %7746 = vmatpush2.msra.mxu0 0.0
    %7747 = vmatprep.subr.mxu0 0.0
    %7748 = vmatpush2.msra.mxu0 0.0
    %7749 = vmatprep.mubr.f32.mxu0 0.0
    %7750 = vmatmul.mubr.f32.gmra.mxu0 %v7669
    %v7751 = vpop.f32.mrf.mxu0
    %v7752 = vadd.f32 0.0, %v7751
    %v7753 = vpop.f32.mrf.mxu0
    %7754 = vmatprep.mubr.f32.mxu0 0.0
    %7755 = vmatmul.mubr.f32.gmra.mxu0 %v7671
    %v7756 = vpop.f32.mrf.mxu0
    %v7757 = vadd.f32 0.0, %v7756
    %v7758 = vpop.f32.mrf.mxu0
    %7759 = vmatprep.mubr.f32.mxu0 0.0
    %7760 = vmatmul.mubr.f32.gmra.mxu0 %v7673
    %v7761 = vpop.f32.mrf.mxu0
    %v7762 = vadd.f32 0.0, %v7761
    %v7763 = vpop.f32.mrf.mxu0
    %7764 = vmatprep.mubr.f32.mxu0 0.0
    %7765 = vmatmul.mubr.f32.gmra.mxu0 %v7675
    %v7766 = vpop.f32.mrf.mxu0
    %v7767 = vadd.f32 0.0, %v7766
    %v7768 = vpop.f32.mrf.mxu0
    %7769 = vmatprep.mubr.f32.mxu0 0.0
    %7770 = vmatmul.mubr.f32.gmra.mxu0 %v7677
    %v7771 = vpop.f32.mrf.mxu0
    %v7772 = vadd.f32 0.0, %v7771
    %v7773 = vpop.f32.mrf.mxu0
    %7774 = vmatprep.mubr.f32.mxu0 0.0
    %7775 = vmatmul.mubr.f32.gmra.mxu0 %v7679
    %v7776 = vpop.f32.mrf.mxu0
    %v7777 = vadd.f32 0.0, %v7776
    %v7778 = vpop.f32.mrf.mxu0
    %7779 = vmatprep.mubr.f32.mxu0 0.0
    %7780 = vmatmul.mubr.f32.gmra.mxu0 %v7681
    %v7781 = vpop.f32.mrf.mxu0
    %v7782 = vadd.f32 0.0, %v7781
    %v7783 = vpop.f32.mrf.mxu0
    %7784 = vmatprep.mubr.f32.mxu0 0.0
    %7785 = vmatmul.mubr.f32.gmra.mxu0 %v7683
    %v7786 = vpop.f32.mrf.mxu0
    %v7787 = vadd.f32 0.0, %v7786
    %v7788 = vpop.f32.mrf.mxu0
    %7789 = vdwg.mxu0
    %7798 = vrot.lane.b32.xlu0 %v7752, 96
    %v7799 = vpop.permute.xlu0 %7798
    %7800 = vrot.lane.b32.xlu0 %v7757, 96
    %v7801 = vpop.permute.xlu0 %7800
    %7802 = vrot.lane.b32.xlu0 %v7762, 96
    %v7803 = vpop.permute.xlu0 %7802
    %7804 = vrot.lane.b32.xlu0 %v7767, 96
    %v7805 = vpop.permute.xlu0 %7804
    %7806 = vrot.lane.b32.xlu0 %v7772, 96
    %v7807 = vpop.permute.xlu0 %7806
    %7808 = vrot.lane.b32.xlu0 %v7777, 96
    %v7809 = vpop.permute.xlu0 %7808
    %7810 = vrot.lane.b32.xlu0 %v7782, 96
    %v7811 = vpop.permute.xlu0 %7810
    %7812 = vrot.lane.b32.xlu0 %v7787, 96
    %v7813 = vpop.permute.xlu0 %7812
    %v7822 = vadd.f32 %v7633, %v7799
    %v7823 = vadd.f32 %v7634, %v7801
    %v7824 = vadd.f32 %v7635, %v7803
    %v7825 = vadd.f32 %v7636, %v7805
    %v7826 = vadd.f32 %v7637, %v7807
    %v7827 = vadd.f32 %v7638, %v7809
    %v7828 = vadd.f32 %v7639, %v7811
    %v7829 = vadd.f32 %v7640, %v7813
    %v7830 = vmax.f32 %v7822, 0.0
    %v7831 = vmax.f32 %v7823, 0.0
    %v7832 = vmax.f32 %v7824, 0.0
    %v7833 = vmax.f32 %v7825, 0.0
    %v7834 = vmax.f32 %v7826, 0.0
    %v7835 = vmax.f32 %v7827, 0.0
    %v7836 = vmax.f32 %v7828, 0.0
    %v7837 = vmax.f32 %v7829, 0.0
    %7846 = vrot.lane.b32.xlu0 %v7830, 32
    %v7847 = vpop.permute.xlu0 %7846
    %7848 = vrot.lane.b32.xlu0 %v7831, 32
    %v7849 = vpop.permute.xlu0 %7848
    %7850 = vrot.lane.b32.xlu0 %v7832, 32
    %v7851 = vpop.permute.xlu0 %7850
    %7852 = vrot.lane.b32.xlu0 %v7833, 32
    %v7853 = vpop.permute.xlu0 %7852
    %7854 = vrot.lane.b32.xlu0 %v7834, 32
    %v7855 = vpop.permute.xlu0 %7854
    %7856 = vrot.lane.b32.xlu0 %v7835, 32
    %v7857 = vpop.permute.xlu0 %7856
    %7858 = vrot.lane.b32.xlu0 %v7836, 32
    %v7859 = vpop.permute.xlu0 %7858
    %7860 = vrot.lane.b32.xlu0 %v7837, 32
    %v7861 = vpop.permute.xlu0 %7860
    %v7870 = vadd.f32 %v1385, %v7847
    %v7871 = vadd.f32 %v1386, %v7849
    %v7872 = vadd.f32 %v1387, %v7851
    %v7873 = vadd.f32 %v1388, %v7853
    %v7874 = vadd.f32 %v1389, %v7855
    %v7875 = vadd.f32 %v1390, %v7857
    %v7876 = vadd.f32 %v1391, %v7859
    %v7877 = vadd.f32 %v1392, %v7861
    %v7878 = vmul.f32 %v7870, %v3841
    %v7879 = vmul.f32 %v7871, %v4325
    %v7880 = vmax.f32 %v7878, %v7879
    %v7881 = vmul.f32 %v7872, %v4817
    %v7882 = vmax.f32 %v7880, %v7881
    %v7883 = vmul.f32 %v7873, %v5309
    %v7884 = vmax.f32 %v7882, %v7883
    %v7885 = vmul.f32 %v7874, %v5801
    %v7886 = vmax.f32 %v7884, %v7885
    %v7887 = vmul.f32 %v7875, %v6293
    %v7888 = vmax.f32 %v7886, %v7887
    %v7889 = vmul.f32 %v7876, %v6785
    %v7890 = vmax.f32 %v7888, %v7889
    %v7891 = vmul.f32 %v7877, %v7277
    %v7892 = vmax.f32 %v7890, %v7891
    %v7893 = vld [vmem:[%s8 + $0x90] sm:$0xff]
    %v7894 = vld [vmem:[%s8 + $0x158] sm:$0xff]
    %v7895 = vld [vmem:[%s8 + $0x220] sm:$0xff]
    %v7896 = vld [vmem:[%s8 + $0x2e8] sm:$0xff]
    %v7897 = vld [vmem:[%s8 + $0x98] sm:$0xff]
    %v7898 = vld [vmem:[%s8 + $0x160] sm:$0xff]
    %v7899 = vld [vmem:[%s8 + $0x228] sm:$0xff]
    %v7900 = vld [vmem:[%s8 + $0x2f0] sm:$0xff]
    %v7902 = vsel %vm711, %v785, 0
    %7904 = vmatprep.subr.mxu0 0.0
    %7905 = vmatpush1.msra.mxu0 0.0
    %7906 = vmatprep.subr.mxu0 0.0
    %7907 = vmatpush1.msra.mxu0 0.0
    %7908 = vmatprep.subr.mxu0 0.0
    %7909 = vmatpush1.msra.mxu0 0.0
    %7910 = vmatprep.subr.mxu0 0.0
    %7911 = vmatpush1.msra.mxu0 0.0
    %7912 = vmatprep.subr.mxu0 0.0
    %7913 = vmatpush1.msra.mxu0 0.0
    %7914 = vmatprep.subr.mxu0 0.0
    %7915 = vmatpush1.msra.mxu0 0.0
    %7916 = vmatprep.subr.mxu0 0.0
    %7917 = vmatpush1.msra.mxu0 0.0
    %7918 = vmatprep.subr.mxu0 0.0
    %7919 = vmatpush1.msra.mxu0 0.0
    %7920 = vmatprep.subr.mxu0 0.0
    %7921 = vmatpush1.msra.mxu0 0.0
    %7922 = vmatprep.subr.mxu0 0.0
    %7923 = vmatpush1.msra.mxu0 0.0
    %7924 = vmatprep.subr.mxu0 0.0
    %7925 = vmatpush1.msra.mxu0 0.0
    %7926 = vmatprep.subr.mxu0 0.0
    %7927 = vmatpush1.msra.mxu0 0.0
    %7928 = vmatprep.subr.mxu0 0.0
    %7929 = vmatpush1.msra.mxu0 %v7900
    %7930 = vmatprep.subr.mxu0 0.0
    %7931 = vmatpush1.msra.mxu0 %v7899
    %7932 = vmatprep.subr.mxu0 0.0
    %7933 = vmatpush1.msra.mxu0 %v7898
    %7934 = vmatprep.subr.mxu0 0.0
    %7935 = vmatpush1.msra.mxu0 %v7897
    %7936 = vmatprep.subr.mxu0 0.0
    %7937 = vmatpush2.msra.mxu0 0.0
    %7938 = vmatprep.subr.mxu0 0.0
    %7939 = vmatpush2.msra.mxu0 0.0
    %7940 = vmatprep.subr.mxu0 0.0
    %7941 = vmatpush2.msra.mxu0 0.0
    %7942 = vmatprep.subr.mxu0 0.0
    %7943 = vmatpush2.msra.mxu0 0.0
    %7944 = vmatprep.subr.mxu0 0.0
    %7945 = vmatpush2.msra.mxu0 0.0
    %7946 = vmatprep.subr.mxu0 0.0
    %7947 = vmatpush2.msra.mxu0 0.0
    %7948 = vmatprep.subr.mxu0 0.0
    %7949 = vmatpush2.msra.mxu0 0.0
    %7950 = vmatprep.subr.mxu0 0.0
    %7951 = vmatpush2.msra.mxu0 0.0
    %7952 = vmatprep.subr.mxu0 0.0
    %7953 = vmatpush2.msra.mxu0 0.0
    %7954 = vmatprep.subr.mxu0 0.0
    %7955 = vmatpush2.msra.mxu0 0.0
    %7956 = vmatprep.subr.mxu0 0.0
    %7957 = vmatpush2.msra.mxu0 0.0
    %7958 = vmatprep.subr.mxu0 0.0
    %7959 = vmatpush2.msra.mxu0 0.0
    %7960 = vmatprep.subr.mxu0 0.0
    %7961 = vmatpush2.msra.mxu0 0.0
    %7962 = vmatprep.subr.mxu0 0.0
    %7963 = vmatpush2.msra.mxu0 0.0
    %7964 = vmatprep.subr.mxu0 0.0
    %7965 = vmatpush2.msra.mxu0 0.0
    %7966 = vmatprep.subr.mxu0 0.0
    %7967 = vmatpush2.msra.mxu0 0.0
    %7968 = vmatprep.mubr.f32.mxu0 0.0
    %7969 = vmatmul.mubr.f32.gmra.mxu0 %v7902
    %v7970 = vpop.f32.mrf.mxu0
    %v7971 = vadd.f32 0.0, %v7970
    %v7972 = vpop.f32.mrf.mxu0
    %7973 = vdwg.mxu0
    %v7975 = vsel %vm711, %v215, 0
    %7977 = vmatprep.subr.mxu0 0.0
    %7978 = vmatpush1.msra.mxu0 0.0
    %7979 = vmatprep.subr.mxu0 0.0
    %7980 = vmatpush1.msra.mxu0 0.0
    %7981 = vmatprep.subr.mxu0 0.0
    %7982 = vmatpush1.msra.mxu0 0.0
    %7983 = vmatprep.subr.mxu0 0.0
    %7984 = vmatpush1.msra.mxu0 0.0
    %7985 = vmatprep.subr.mxu0 0.0
    %7986 = vmatpush1.msra.mxu0 0.0
    %7987 = vmatprep.subr.mxu0 0.0
    %7988 = vmatpush1.msra.mxu0 0.0
    %7989 = vmatprep.subr.mxu0 0.0
    %7990 = vmatpush1.msra.mxu0 0.0
    %7991 = vmatprep.subr.mxu0 0.0
    %7992 = vmatpush1.msra.mxu0 0.0
    %7993 = vmatprep.subr.mxu0 0.0
    %7994 = vmatpush1.msra.mxu0 0.0
    %7995 = vmatprep.subr.mxu0 0.0
    %7996 = vmatpush1.msra.mxu0 0.0
    %7997 = vmatprep.subr.mxu0 0.0
    %7998 = vmatpush1.msra.mxu0 0.0
    %7999 = vmatprep.subr.mxu0 0.0
    %8000 = vmatpush1.msra.mxu0 0.0
    %8001 = vmatprep.subr.mxu0 0.0
    %8002 = vmatpush1.msra.mxu0 %v7896
    %8003 = vmatprep.subr.mxu0 0.0
    %8004 = vmatpush1.msra.mxu0 %v7895
    %8005 = vmatprep.subr.mxu0 0.0
    %8006 = vmatpush1.msra.mxu0 %v7894
    %8007 = vmatprep.subr.mxu0 0.0
    %8008 = vmatpush1.msra.mxu0 %v7893
    %8009 = vmatprep.subr.mxu0 0.0
    %8010 = vmatpush2.msra.mxu0 0.0
    %8011 = vmatprep.subr.mxu0 0.0
    %8012 = vmatpush2.msra.mxu0 0.0
    %8013 = vmatprep.subr.mxu0 0.0
    %8014 = vmatpush2.msra.mxu0 0.0
    %8015 = vmatprep.subr.mxu0 0.0
    %8016 = vmatpush2.msra.mxu0 0.0
    %8017 = vmatprep.subr.mxu0 0.0
    %8018 = vmatpush2.msra.mxu0 0.0
    %8019 = vmatprep.subr.mxu0 0.0
    %8020 = vmatpush2.msra.mxu0 0.0
    %8021 = vmatprep.subr.mxu0 0.0
    %8022 = vmatpush2.msra.mxu0 0.0
    %8023 = vmatprep.subr.mxu0 0.0
    %8024 = vmatpush2.msra.mxu0 0.0
    %8025 = vmatprep.subr.mxu0 0.0
    %8026 = vmatpush2.msra.mxu0 0.0
    %8027 = vmatprep.subr.mxu0 0.0
    %8028 = vmatpush2.msra.mxu0 0.0
    %8029 = vmatprep.subr.mxu0 0.0
    %8030 = vmatpush2.msra.mxu0 0.0
    %8031 = vmatprep.subr.mxu0 0.0
    %8032 = vmatpush2.msra.mxu0 0.0
    %8033 = vmatprep.subr.mxu0 0.0
    %8034 = vmatpush2.msra.mxu0 0.0
    %8035 = vmatprep.subr.mxu0 0.0
    %8036 = vmatpush2.msra.mxu0 0.0
    %8037 = vmatprep.subr.mxu0 0.0
    %8038 = vmatpush2.msra.mxu0 0.0
    %8039 = vmatprep.subr.mxu0 0.0
    %8040 = vmatpush2.msra.mxu0 0.0
    %8041 = vmatprep.mubr.f32.mxu0 0.0
    %8042 = vmatmul.mubr.f32.gmra.mxu0 %v7975
    %v8043 = vpop.f32.mrf.mxu0
    %v8044 = vadd.f32 %v7971, %v8043
    %v8045 = vpop.f32.mrf.mxu0
    %8046 = vdwg.mxu0
    %v8047 = vld [vmem:[%s8 + $0xa0] sm:$0xff]
    %v8048 = vld [vmem:[%s8 + $0x168] sm:$0xff]
    %v8049 = vld [vmem:[%s8 + $0x230] sm:$0xff]
    %v8050 = vld [vmem:[%s8 + $0x2f8] sm:$0xff]
    %v8052 = vsel %vm711, %v7892, 0
    %8054 = vmatprep.subr.mxu0 0.0
    %8055 = vmatpush1.msra.mxu0 0.0
    %8056 = vmatprep.subr.mxu0 0.0
    %8057 = vmatpush1.msra.mxu0 0.0
    %8058 = vmatprep.subr.mxu0 0.0
    %8059 = vmatpush1.msra.mxu0 0.0
    %8060 = vmatprep.subr.mxu0 0.0
    %8061 = vmatpush1.msra.mxu0 0.0
    %8062 = vmatprep.subr.mxu0 0.0
    %8063 = vmatpush1.msra.mxu0 0.0
    %8064 = vmatprep.subr.mxu0 0.0
    %8065 = vmatpush1.msra.mxu0 0.0
    %8066 = vmatprep.subr.mxu0 0.0
    %8067 = vmatpush1.msra.mxu0 0.0
    %8068 = vmatprep.subr.mxu0 0.0
    %8069 = vmatpush1.msra.mxu0 0.0
    %8070 = vmatprep.subr.mxu0 0.0
    %8071 = vmatpush1.msra.mxu0 0.0
    %8072 = vmatprep.subr.mxu0 0.0
    %8073 = vmatpush1.msra.mxu0 0.0
    %8074 = vmatprep.subr.mxu0 0.0
    %8075 = vmatpush1.msra.mxu0 0.0
    %8076 = vmatprep.subr.mxu0 0.0
    %8077 = vmatpush1.msra.mxu0 0.0
    %8078 = vmatprep.subr.mxu0 0.0
    %8079 = vmatpush1.msra.mxu0 %v8050
    %8080 = vmatprep.subr.mxu0 0.0
    %8081 = vmatpush1.msra.mxu0 %v8049
    %8082 = vmatprep.subr.mxu0 0.0
    %8083 = vmatpush1.msra.mxu0 %v8048
    %8084 = vmatprep.subr.mxu0 0.0
    %8085 = vmatpush1.msra.mxu0 %v8047
    %8086 = vmatprep.subr.mxu0 0.0
    %8087 = vmatpush2.msra.mxu0 0.0
    %8088 = vmatprep.subr.mxu0 0.0
    %8089 = vmatpush2.msra.mxu0 0.0
    %8090 = vmatprep.subr.mxu0 0.0
    %8091 = vmatpush2.msra.mxu0 0.0
    %8092 = vmatprep.subr.mxu0 0.0
    %8093 = vmatpush2.msra.mxu0 0.0
    %8094 = vmatprep.subr.mxu0 0.0
    %8095 = vmatpush2.msra.mxu0 0.0
    %8096 = vmatprep.subr.mxu0 0.0
    %8097 = vmatpush2.msra.mxu0 0.0
    %8098 = vmatprep.subr.mxu0 0.0
    %8099 = vmatpush2.msra.mxu0 0.0
    %8100 = vmatprep.subr.mxu0 0.0
    %8101 = vmatpush2.msra.mxu0 0.0
    %8102 = vmatprep.subr.mxu0 0.0
    %8103 = vmatpush2.msra.mxu0 0.0
    %8104 = vmatprep.subr.mxu0 0.0
    %8105 = vmatpush2.msra.mxu0 0.0
    %8106 = vmatprep.subr.mxu0 0.0
    %8107 = vmatpush2.msra.mxu0 0.0
    %8108 = vmatprep.subr.mxu0 0.0
    %8109 = vmatpush2.msra.mxu0 0.0
    %8110 = vmatprep.subr.mxu0 0.0
    %8111 = vmatpush2.msra.mxu0 0.0
    %8112 = vmatprep.subr.mxu0 0.0
    %8113 = vmatpush2.msra.mxu0 0.0
    %8114 = vmatprep.subr.mxu0 0.0
    %8115 = vmatpush2.msra.mxu0 0.0
    %8116 = vmatprep.subr.mxu0 0.0
    %8117 = vmatpush2.msra.mxu0 0.0
    %8118 = vmatprep.mubr.f32.mxu0 0.0
    %8119 = vmatmul.mubr.f32.gmra.mxu0 %v8052
    %v8120 = vpop.f32.mrf.mxu0
    %v8121 = vadd.f32 0.0, %v8120
    %v8122 = vpop.f32.mrf.mxu0
    %8123 = vdwg.mxu0
    %v8124 = vadd.f32 %v8044, %v8121
    %v8125 = vld [vmem:[%s9 + $0x10] sm:$0x1]
    %v8127 = vlaneseq
    %v8128 = vshrl.u32 %v8127, 7
    %v8129 = vsub.s32 0, %v8128
    %v8130 = vrot.slane %v8125, %v8129
    %v8132 = vadd.f32 %v8124, %v8130
    %v8133 = vmax.f32 %v8132, 0.0
    %v8134 = vld [vmem:[%s8 + $0xa8] sm:$0xff]
    %v8135 = vld [vmem:[%s8 + $0x170] sm:$0xff]
    %v8136 = vld [vmem:[%s8 + $0x238] sm:$0xff]
    %v8137 = vld [vmem:[%s8 + $0x300] sm:$0xff]
    %v8138 = vld [vmem:[%s9 + $0x11] sm:$0x1]
    %v8140 = vlaneseq
    %v8141 = vshrl.u32 %v8140, 7
    %v8142 = vsub.s32 0, %v8141
    %v8143 = vrot.slane %v8138, %v8142
    %v8146 = vsel %vm711, %v8133, 0
    %8148 = vmatprep.subr.mxu0 0.0
    %8149 = vmatpush1.msra.mxu0 0.0
    %8150 = vmatprep.subr.mxu0 0.0
    %8151 = vmatpush1.msra.mxu0 0.0
    %8152 = vmatprep.subr.mxu0 0.0
    %8153 = vmatpush1.msra.mxu0 0.0
    %8154 = vmatprep.subr.mxu0 0.0
    %8155 = vmatpush1.msra.mxu0 0.0
    %8156 = vmatprep.subr.mxu0 0.0
    %8157 = vmatpush1.msra.mxu0 0.0
    %8158 = vmatprep.subr.mxu0 0.0
    %8159 = vmatpush1.msra.mxu0 0.0
    %8160 = vmatprep.subr.mxu0 0.0
    %8161 = vmatpush1.msra.mxu0 0.0
    %8162 = vmatprep.subr.mxu0 0.0
    %8163 = vmatpush1.msra.mxu0 0.0
    %8164 = vmatprep.subr.mxu0 0.0
    %8165 = vmatpush1.msra.mxu0 0.0
    %8166 = vmatprep.subr.mxu0 0.0
    %8167 = vmatpush1.msra.mxu0 0.0
    %8168 = vmatprep.subr.mxu0 0.0
    %8169 = vmatpush1.msra.mxu0 0.0
    %8170 = vmatprep.subr.mxu0 0.0
    %8171 = vmatpush1.msra.mxu0 0.0
    %8172 = vmatprep.subr.mxu0 0.0
    %8173 = vmatpush1.msra.mxu0 %v8137
    %8174 = vmatprep.subr.mxu0 0.0
    %8175 = vmatpush1.msra.mxu0 %v8136
    %8176 = vmatprep.subr.mxu0 0.0
    %8177 = vmatpush1.msra.mxu0 %v8135
    %8178 = vmatprep.subr.mxu0 0.0
    %8179 = vmatpush1.msra.mxu0 %v8134
    %8180 = vmatprep.subr.mxu0 0.0
    %8181 = vmatpush2.msra.mxu0 0.0
    %8182 = vmatprep.subr.mxu0 0.0
    %8183 = vmatpush2.msra.mxu0 0.0
    %8184 = vmatprep.subr.mxu0 0.0
    %8185 = vmatpush2.msra.mxu0 0.0
    %8186 = vmatprep.subr.mxu0 0.0
    %8187 = vmatpush2.msra.mxu0 0.0
    %8188 = vmatprep.subr.mxu0 0.0
    %8189 = vmatpush2.msra.mxu0 0.0
    %8190 = vmatprep.subr.mxu0 0.0
    %8191 = vmatpush2.msra.mxu0 0.0
    %8192 = vmatprep.subr.mxu0 0.0
    %8193 = vmatpush2.msra.mxu0 0.0
    %8194 = vmatprep.subr.mxu0 0.0
    %8195 = vmatpush2.msra.mxu0 0.0
    %8196 = vmatprep.subr.mxu0 0.0
    %8197 = vmatpush2.msra.mxu0 0.0
    %8198 = vmatprep.subr.mxu0 0.0
    %8199 = vmatpush2.msra.mxu0 0.0
    %8200 = vmatprep.subr.mxu0 0.0
    %8201 = vmatpush2.msra.mxu0 0.0
    %8202 = vmatprep.subr.mxu0 0.0
    %8203 = vmatpush2.msra.mxu0 0.0
    %8204 = vmatprep.subr.mxu0 0.0
    %8205 = vmatpush2.msra.mxu0 0.0
    %8206 = vmatprep.subr.mxu0 0.0
    %8207 = vmatpush2.msra.mxu0 0.0
    %8208 = vmatprep.subr.mxu0 0.0
    %8209 = vmatpush2.msra.mxu0 0.0
    %8210 = vmatprep.subr.mxu0 0.0
    %8211 = vmatpush2.msra.mxu0 0.0
    %8212 = vmatprep.mubr.f32.mxu0 0.0
    %8213 = vmatmul.mubr.f32.gmra.mxu0 %v8146
    %v8214 = vpop.f32.mrf.mxu0
    %v8215 = vadd.f32 %v8143, %v8214
    %v8216 = vpop.f32.mrf.mxu0
    %8217 = vdwg.mxu0
    %v8218 = vmax.f32 %v8215, 0.0
    %v8219 = vld [vmem:[%s8 + $0xb0] sm:$0xff]
    %v8220 = vld [vmem:[%s8 + $0x178] sm:$0xff]
    %v8221 = vld [vmem:[%s8 + $0x240] sm:$0xff]
    %v8222 = vld [vmem:[%s8 + $0x308] sm:$0xff]
    %v8223 = vld [vmem:[%s9 + $0x12] sm:$0x1]
    %v8225 = vlaneseq
    %v8226 = vshrl.u32 %v8225, 7
    %v8227 = vsub.s32 0, %v8226
    %v8228 = vrot.slane %v8223, %v8227
    %v8231 = vsel %vm711, %v8218, 0
    %8233 = vmatprep.subr.mxu0 0.0
    %8234 = vmatpush1.msra.mxu0 0.0
    %8235 = vmatprep.subr.mxu0 0.0
    %8236 = vmatpush1.msra.mxu0 0.0
    %8237 = vmatprep.subr.mxu0 0.0
    %8238 = vmatpush1.msra.mxu0 0.0
    %8239 = vmatprep.subr.mxu0 0.0
    %8240 = vmatpush1.msra.mxu0 0.0
    %8241 = vmatprep.subr.mxu0 0.0
    %8242 = vmatpush1.msra.mxu0 0.0
    %8243 = vmatprep.subr.mxu0 0.0
    %8244 = vmatpush1.msra.mxu0 0.0
    %8245 = vmatprep.subr.mxu0 0.0
    %8246 = vmatpush1.msra.mxu0 0.0
    %8247 = vmatprep.subr.mxu0 0.0
    %8248 = vmatpush1.msra.mxu0 0.0
    %8249 = vmatprep.subr.mxu0 0.0
    %8250 = vmatpush1.msra.mxu0 0.0
    %8251 = vmatprep.subr.mxu0 0.0
    %8252 = vmatpush1.msra.mxu0 0.0
    %8253 = vmatprep.subr.mxu0 0.0
    %8254 = vmatpush1.msra.mxu0 0.0
    %8255 = vmatprep.subr.mxu0 0.0
    %8256 = vmatpush1.msra.mxu0 0.0
    %8257 = vmatprep.subr.mxu0 0.0
    %8258 = vmatpush1.msra.mxu0 %v8222
    %8259 = vmatprep.subr.mxu0 0.0
    %8260 = vmatpush1.msra.mxu0 %v8221
    %8261 = vmatprep.subr.mxu0 0.0
    %8262 = vmatpush1.msra.mxu0 %v8220
    %8263 = vmatprep.subr.mxu0 0.0
    %8264 = vmatpush1.msra.mxu0 %v8219
    %8265 = vmatprep.subr.mxu0 0.0
    %8266 = vmatpush2.msra.mxu0 0.0
    %8267 = vmatprep.subr.mxu0 0.0
    %8268 = vmatpush2.msra.mxu0 0.0
    %8269 = vmatprep.subr.mxu0 0.0
    %8270 = vmatpush2.msra.mxu0 0.0
    %8271 = vmatprep.subr.mxu0 0.0
    %8272 = vmatpush2.msra.mxu0 0.0
    %8273 = vmatprep.subr.mxu0 0.0
    %8274 = vmatpush2.msra.mxu0 0.0
    %8275 = vmatprep.subr.mxu0 0.0
    %8276 = vmatpush2.msra.mxu0 0.0
    %8277 = vmatprep.subr.mxu0 0.0
    %8278 = vmatpush2.msra.mxu0 0.0
    %8279 = vmatprep.subr.mxu0 0.0
    %8280 = vmatpush2.msra.mxu0 0.0
    %8281 = vmatprep.subr.mxu0 0.0
    %8282 = vmatpush2.msra.mxu0 0.0
    %8283 = vmatprep.subr.mxu0 0.0
    %8284 = vmatpush2.msra.mxu0 0.0
    %8285 = vmatprep.subr.mxu0 0.0
    %8286 = vmatpush2.msra.mxu0 0.0
    %8287 = vmatprep.subr.mxu0 0.0
    %8288 = vmatpush2.msra.mxu0 0.0
    %8289 = vmatprep.subr.mxu0 0.0
    %8290 = vmatpush2.msra.mxu0 0.0
    %8291 = vmatprep.subr.mxu0 0.0
    %8292 = vmatpush2.msra.mxu0 0.0
    %8293 = vmatprep.subr.mxu0 0.0
    %8294 = vmatpush2.msra.mxu0 0.0
    %8295 = vmatprep.subr.mxu0 0.0
    %8296 = vmatpush2.msra.mxu0 0.0
    %8297 = vmatprep.mubr.f32.mxu0 0.0
    %8298 = vmatmul.mubr.f32.gmra.mxu0 %v8231
    %v8299 = vpop.f32.mrf.mxu0
    %v8300 = vadd.f32 %v8228, %v8299
    %v8301 = vpop.f32.mrf.mxu0
    %8302 = vdwg.mxu0
    %v8303 = vmax.f32 %v8300, 0.0
    %v8304 = vld [vmem:[%s8 + $0xb8] sm:$0xff]
    %v8305 = vld [vmem:[%s8 + $0x180] sm:$0xff]
    %v8306 = vld [vmem:[%s8 + $0x248] sm:$0xff]
    %v8307 = vld [vmem:[%s8 + $0x310] sm:$0xff]
    %v8308 = vld [vmem:[%s9 + $0x13] sm:$0x1]
    %v8310 = vlaneseq
    %v8311 = vshrl.u32 %v8310, 7
    %v8312 = vsub.s32 0, %v8311
    %v8313 = vrot.slane %v8308, %v8312
    %v8316 = vsel %vm711, %v8303, 0
    %8318 = vmatprep.subr.mxu0 0.0
    %8319 = vmatpush1.msra.mxu0 0.0
    %8320 = vmatprep.subr.mxu0 0.0
    %8321 = vmatpush1.msra.mxu0 0.0
    %8322 = vmatprep.subr.mxu0 0.0
    %8323 = vmatpush1.msra.mxu0 0.0
    %8324 = vmatprep.subr.mxu0 0.0
    %8325 = vmatpush1.msra.mxu0 0.0
    %8326 = vmatprep.subr.mxu0 0.0
    %8327 = vmatpush1.msra.mxu0 0.0
    %8328 = vmatprep.subr.mxu0 0.0
    %8329 = vmatpush1.msra.mxu0 0.0
    %8330 = vmatprep.subr.mxu0 0.0
    %8331 = vmatpush1.msra.mxu0 0.0
    %8332 = vmatprep.subr.mxu0 0.0
    %8333 = vmatpush1.msra.mxu0 0.0
    %8334 = vmatprep.subr.mxu0 0.0
    %8335 = vmatpush1.msra.mxu0 0.0
    %8336 = vmatprep.subr.mxu0 0.0
    %8337 = vmatpush1.msra.mxu0 0.0
    %8338 = vmatprep.subr.mxu0 0.0
    %8339 = vmatpush1.msra.mxu0 0.0
    %8340 = vmatprep.subr.mxu0 0.0
    %8341 = vmatpush1.msra.mxu0 0.0
    %8342 = vmatprep.subr.mxu0 0.0
    %8343 = vmatpush1.msra.mxu0 %v8307
    %8344 = vmatprep.subr.mxu0 0.0
    %8345 = vmatpush1.msra.mxu0 %v8306
    %8346 = vmatprep.subr.mxu0 0.0
    %8347 = vmatpush1.msra.mxu0 %v8305
    %8348 = vmatprep.subr.mxu0 0.0
    %8349 = vmatpush1.msra.mxu0 %v8304
    %8350 = vmatprep.subr.mxu0 0.0
    %8351 = vmatpush2.msra.mxu0 0.0
    %8352 = vmatprep.subr.mxu0 0.0
    %8353 = vmatpush2.msra.mxu0 0.0
    %8354 = vmatprep.subr.mxu0 0.0
    %8355 = vmatpush2.msra.mxu0 0.0
    %8356 = vmatprep.subr.mxu0 0.0
    %8357 = vmatpush2.msra.mxu0 0.0
    %8358 = vmatprep.subr.mxu0 0.0
    %8359 = vmatpush2.msra.mxu0 0.0
    %8360 = vmatprep.subr.mxu0 0.0
    %8361 = vmatpush2.msra.mxu0 0.0
    %8362 = vmatprep.subr.mxu0 0.0
    %8363 = vmatpush2.msra.mxu0 0.0
    %8364 = vmatprep.subr.mxu0 0.0
    %8365 = vmatpush2.msra.mxu0 0.0
    %8366 = vmatprep.subr.mxu0 0.0
    %8367 = vmatpush2.msra.mxu0 0.0
    %8368 = vmatprep.subr.mxu0 0.0
    %8369 = vmatpush2.msra.mxu0 0.0
    %8370 = vmatprep.subr.mxu0 0.0
    %8371 = vmatpush2.msra.mxu0 0.0
    %8372 = vmatprep.subr.mxu0 0.0
    %8373 = vmatpush2.msra.mxu0 0.0
    %8374 = vmatprep.subr.mxu0 0.0
    %8375 = vmatpush2.msra.mxu0 0.0
    %8376 = vmatprep.subr.mxu0 0.0
    %8377 = vmatpush2.msra.mxu0 0.0
    %8378 = vmatprep.subr.mxu0 0.0
    %8379 = vmatpush2.msra.mxu0 0.0
    %8380 = vmatprep.subr.mxu0 0.0
    %8381 = vmatpush2.msra.mxu0 0.0
    %8382 = vmatprep.mubr.f32.mxu0 0.0
    %8383 = vmatmul.mubr.f32.gmra.mxu0 %v8316
    %v8384 = vpop.f32.mrf.mxu0
    %v8385 = vadd.f32 %v8313, %v8384
    %v8386 = vpop.f32.mrf.mxu0
    %8387 = vdwg.mxu0
    %v8388 = vmax.f32 %v8385, 0.0
    %v8389 = vld [vmem:[%s8 + $0xc0] sm:$0xff]
    %v8390 = vld [vmem:[%s8 + $0x188] sm:$0xff]
    %v8391 = vld [vmem:[%s8 + $0x250] sm:$0xff]
    %v8392 = vld [vmem:[%s8 + $0x318] sm:$0xff]
    %v8393 = vld [vmem:[%s9 + $0x14] sm:$0x1]
    %v8395 = vlaneseq
    %v8396 = vshrl.u32 %v8395, 7
    %v8397 = vsub.s32 0, %v8396
    %v8398 = vrot.slane %v8393, %v8397
    %v8401 = vsel %vm711, %v8388, 0
    %8403 = vmatprep.subr.mxu0 0.0
    %8404 = vmatpush1.msra.mxu0 0.0
    %8405 = vmatprep.subr.mxu0 0.0
    %8406 = vmatpush1.msra.mxu0 0.0
    %8407 = vmatprep.subr.mxu0 0.0
    %8408 = vmatpush1.msra.mxu0 0.0
    %8409 = vmatprep.subr.mxu0 0.0
    %8410 = vmatpush1.msra.mxu0 0.0
    %8411 = vmatprep.subr.mxu0 0.0
    %8412 = vmatpush1.msra.mxu0 0.0
    %8413 = vmatprep.subr.mxu0 0.0
    %8414 = vmatpush1.msra.mxu0 0.0
    %8415 = vmatprep.subr.mxu0 0.0
    %8416 = vmatpush1.msra.mxu0 0.0
    %8417 = vmatprep.subr.mxu0 0.0
    %8418 = vmatpush1.msra.mxu0 0.0
    %8419 = vmatprep.subr.mxu0 0.0
    %8420 = vmatpush1.msra.mxu0 0.0
    %8421 = vmatprep.subr.mxu0 0.0
    %8422 = vmatpush1.msra.mxu0 0.0
    %8423 = vmatprep.subr.mxu0 0.0
    %8424 = vmatpush1.msra.mxu0 0.0
    %8425 = vmatprep.subr.mxu0 0.0
    %8426 = vmatpush1.msra.mxu0 0.0
    %8427 = vmatprep.subr.mxu0 0.0
    %8428 = vmatpush1.msra.mxu0 %v8392
    %8429 = vmatprep.subr.mxu0 0.0
    %8430 = vmatpush1.msra.mxu0 %v8391
    %8431 = vmatprep.subr.mxu0 0.0
    %8432 = vmatpush1.msra.mxu0 %v8390
    %8433 = vmatprep.subr.mxu0 0.0
    %8434 = vmatpush1.msra.mxu0 %v8389
    %8435 = vmatprep.subr.mxu0 0.0
    %8436 = vmatpush2.msra.mxu0 0.0
    %8437 = vmatprep.subr.mxu0 0.0
    %8438 = vmatpush2.msra.mxu0 0.0
    %8439 = vmatprep.subr.mxu0 0.0
    %8440 = vmatpush2.msra.mxu0 0.0
    %8441 = vmatprep.subr.mxu0 0.0
    %8442 = vmatpush2.msra.mxu0 0.0
    %8443 = vmatprep.subr.mxu0 0.0
    %8444 = vmatpush2.msra.mxu0 0.0
    %8445 = vmatprep.subr.mxu0 0.0
    %8446 = vmatpush2.msra.mxu0 0.0
    %8447 = vmatprep.subr.mxu0 0.0
    %8448 = vmatpush2.msra.mxu0 0.0
    %8449 = vmatprep.subr.mxu0 0.0
    %8450 = vmatpush2.msra.mxu0 0.0
    %8451 = vmatprep.subr.mxu0 0.0
    %8452 = vmatpush2.msra.mxu0 0.0
    %8453 = vmatprep.subr.mxu0 0.0
    %8454 = vmatpush2.msra.mxu0 0.0
    %8455 = vmatprep.subr.mxu0 0.0
    %8456 = vmatpush2.msra.mxu0 0.0
    %8457 = vmatprep.subr.mxu0 0.0
    %8458 = vmatpush2.msra.mxu0 0.0
    %8459 = vmatprep.subr.mxu0 0.0
    %8460 = vmatpush2.msra.mxu0 0.0
    %8461 = vmatprep.subr.mxu0 0.0
    %8462 = vmatpush2.msra.mxu0 0.0
    %8463 = vmatprep.subr.mxu0 0.0
    %8464 = vmatpush2.msra.mxu0 0.0
    %8465 = vmatprep.subr.mxu0 0.0
    %8466 = vmatpush2.msra.mxu0 0.0
    %8467 = vmatprep.mubr.f32.mxu0 0.0
    %8468 = vmatmul.mubr.f32.gmra.mxu0 %v8401
    %v8469 = vpop.f32.mrf.mxu0
    %v8470 = vadd.f32 %v8398, %v8469
    %v8471 = vpop.f32.mrf.mxu0
    %8472 = vdwg.mxu0
    %8473 = vst [vmem:[#allocation2] sm:$0xff] %v8470
    // Predicated region
    $region54: #{forward.1} parent=1 // pred_check
      _
    $region55: #{forward.1} parent=1 // pred_check_branch
      %8475 = sbr.rel (0) target = $region57
    $region56: #{forward.1} parent=1 // pred_region
      %s8477 = ssub.s32 128, 128
      %8478 = vsyncadd [#allocation3], %s8477
      %s8480 = sshll.u32 [#allocation2], 4
      %s8481 = int_to_ptr.vmem [resolvable:$true] %s8480
      %8483 = dma.vmem_to_hbm [thread:$0]  %s8481, 128, %s13, [#allocation3]
    $region57: #{forward.1} parent=1 // pred_fallthru
      _
    // Predicated region
    $region58: #{forward.1} parent=1 // pred_check
      _
    $region59: #{forward.1} parent=1 // pred_check_branch
      %8485 = sbr.rel (0) target = $region61
    $region60: #{forward.1} parent=1 // pred_region
      %8486 = dma.done [#allocation3], 128
    $region61: #{forward.1} parent=1 // pred_fallthru
      _
    %8487 = vsyncpa [#allocation3], 1

</llo_original>
